<compile_context>
chip_gen: v5e
topology: v5e:2x2
jax: 0.10.0
libtpu: 0.0.40
codegen_flags: <defaults>
</compile_context>

<pallas_src>
import functools

import jax
import jax.numpy as jnp
from jax.experimental import pallas as pl
from jax.experimental.pallas import tpu as pltpu

EPS = 1e-5     # nn.BatchNorm2d default eps
LANE = 128     # TPU lane width


def _round_up(x, m):
    return (x + m - 1) // m * m


def residual_block_kernel(x_ref, w1_ref, w2_ref, g1_ref, b1_ref, g2_ref,
                          b2_ref, out_ref, pad_ref):
    N, H, W, Cp = x_ref.shape
    M = N * H * W
    Wp = pad_ref.shape[2]          # W + 16: 8 left pad + W + 8 right pad
    cdt = pad_ref.dtype            # matmul operand dtype (bf16 or f32)
    X0 = 8                         # interior W offset (sublane aligned)

    # Zero the halo once (reused by both convs).  The left/right 8-wide pad
    # blocks cover the real 1-wide halo columns (X0-1 and X0+W) with fully
    # aligned stores; the spare columns inside them are never read.
    zrow = jnp.zeros((N, 1, Wp, Cp), cdt)
    zcol = jnp.zeros((N, H + 2, 8, Cp), cdt)
    pad_ref[:, 0:1, :, :] = zrow
    pad_ref[:, H + 1:H + 2, :, :] = zrow
    pad_ref[:, :, 0:8, :] = zcol
    pad_ref[:, :, X0 + W:Wp, :] = zcol

    def conv3x3(w_ref):
        # 9 accumulating K=Cp matmuls; each operand is a shifted view of
        # pad_ref feeding the MXU directly (no im2col scratch), f32 accum.
        acc = None
        for k in range(9):
            dy, dx = divmod(k, 3)
            patch = pad_ref[:, dy:dy + H, X0 - 1 + dx:X0 - 1 + dx + W, :]
            part = jnp.dot(patch.reshape(M, Cp), w_ref[k],
                           preferred_element_type=jnp.float32)
            acc = part if acc is None else acc + part
        return acc                                            # (M, Cp) f32

    def batchnorm(y, g, b):
        # Training-mode BN, single-pass moments (var = E[y^2] - E[y]^2) folded
        # into one scale/shift pass; rsqrt goes to the EUP slot.
        # NOTE: single-pass variance can cancel if |mean| >> std; fine at
        # these scales -- switch to a two-pass variance once the kernel is
        # tiled and sums are accumulated across tiles.
        inv_m = 1.0 / M
        mean = jnp.sum(y, axis=0, keepdims=True) * inv_m
        mean_sq = jnp.sum(y * y, axis=0, keepdims=True) * inv_m
        var = mean_sq - mean * mean
        scale = jax.lax.rsqrt(var + EPS) * g
        shift = b - mean * scale
        return y * scale + shift

    # conv1 -> bn1 -> relu  (x is cast to the compute dtype once, in the store)
    pad_ref[:, 1:H + 1, X0:X0 + W, :] = x_ref[...].astype(cdt)
    h1 = jnp.maximum(batchnorm(conv3x3(w1_ref), g1_ref[...], b1_ref[...]), 0.0)

    # conv2 -> bn2 (halo of pad_ref is still zero; only the interior changes)
    pad_ref[:, 1:H + 1, X0:X0 + W, :] = h1.reshape(N, H, W, Cp).astype(cdt)
    h2 = batchnorm(conv3x3(w2_ref), g2_ref[...], b2_ref[...])

    # + residual (stride=1, downsample=None -> residual = x, exact f32) -> relu
    residual = x_ref[...].reshape(M, Cp)
    out_ref[...] = jnp.maximum(h2 + residual, 0.0)


@functools.partial(jax.jit, static_argnames=("compute_dtype",))
def residual_block(x_nchw, w1, w2, g1, b1, g2, b2,
                   compute_dtype=jnp.bfloat16):
    """x_nchw: (N, C, H, W); w*: (3, 3, Cin, Cout); g*/b*: (Cout,)."""
    N, C, H, W = x_nchw.shape
    Cout = w1.shape[-1]
    assert C == Cout, "stride=1 / downsample=None requires Cin == Cout"
    Cp = _round_up(Cout, LANE)   # channels padded to the lane width
    M = N * H * W
    Wp = W + 16                  # 8 left pad (alignment) + W + 8 right pad

    # NCHW -> NHWC (channels on the lane axis), zero-pad channels to Cp.
    # x stays f32: the kernel casts it to compute_dtype only on the conv path,
    # so the residual add is exact.  Padded channels stay exactly zero through
    # conv/BN/ReLU/residual, so slicing them off recovers the unpadded result.
    x = jnp.transpose(x_nchw, (0, 2, 3, 1))
    x = jnp.pad(x, ((0, 0), (0, 0), (0, 0), (0, Cp - C))).astype(jnp.float32)

    def prep_w(w):               # (3,3,Cin,Cout) -> (9, Cp, Cp): one tap each
        wp = jnp.pad(w, ((0, 0), (0, 0), (0, Cp - C), (0, Cp - Cout)))
        return wp.reshape(9, Cp, Cp).astype(compute_dtype)

    def prep_vec(v, fill):       # (Cout,) -> (1, Cp)
        return jnp.pad(v.astype(jnp.float32), (0, Cp - Cout),
                       constant_values=fill).reshape(1, Cp)

    w1r, w2r = prep_w(w1), prep_w(w2)
    # gamma padded with 1.0 keeps rsqrt(var+eps) finite on padded lanes so
    # they remain exactly 0 (invariant required for the channel padding).
    g1p, b1p = prep_vec(g1, 1.0), prep_vec(b1, 0.0)
    g2p, b2p = prep_vec(g2, 1.0), prep_vec(b2, 0.0)

    # Explicit scoped-VMEM limit: declared buffers plus a generous allowance
    # for compiler-managed f32 (M, Cp) temporaries, clamped to 32..64 MiB so
    # the request is valid on v5e/v6e (128 MiB physical) and v7x (64 MiB).
    cd = jnp.dtype(compute_dtype).itemsize
    est = (2 * M * Cp * 4                       # x in (f32) + out (f32)
           + 2 * 9 * Cp * Cp * cd               # both conv weights
           + N * (H + 2) * Wp * Cp * cd         # pad_ref scratch
           + 8 * M * Cp * 4)                    # compiler temps (acc/y/h1/h2/..)
    vmem_limit = int(min(max(2 * est, 32 * 2**20), 64 * 2**20))

    vmem = pl.BlockSpec(memory_space=pltpu.MemorySpace.VMEM)
    out_flat = pl.pallas_call(
        residual_block_kernel,
        out_shape=jax.ShapeDtypeStruct((M, Cp), jnp.float32),   # lane-dense
        in_specs=[vmem] * 7,
        out_specs=vmem,
        scratch_shapes=[
            pltpu.VMEM((N, H + 2, Wp, Cp), compute_dtype),  # padded act (reused)
        ],
        compiler_params=pltpu.CompilerParams(vmem_limit_bytes=vmem_limit),
    )(x, w1r, w2r, g1p, b1p, g2p, b2p)

    out = out_flat.reshape(N, H, W, Cp)[..., :C]
    # TODO(synk): callers that can consume NHWC (and/or bf16) activations
    # should take out_flat directly and skip this slice + transpose, which is
    # an extra HBM round trip outside the kernel.
    return jnp.transpose(out, (0, 3, 1, 2))                  # back to NCHW


def reference(x_nchw, w1, w2, g1, b1, g2, b2):
    """Pure-JAX NCHW reference mirroring the PyTorch module (training BN)."""
    def conv(x, w):
        wt = jnp.transpose(w, (3, 2, 0, 1))  # (Cout, Cin, 3, 3)
        return jax.lax.conv_general_dilated(
            x, wt, (1, 1), ((1, 1), (1, 1)),
            dimension_numbers=('NCHW', 'OIHW', 'NCHW'))

    def bn(y, g, b):
        mean = jnp.mean(y, axis=(0, 2, 3), keepdims=True)
        var = jnp.mean((y - mean) ** 2, axis=(0, 2, 3), keepdims=True)
        return ((y - mean) * jax.lax.rsqrt(var + EPS)
                * g.reshape(1, -1, 1, 1) + b.reshape(1, -1, 1, 1))

    out = jnp.maximum(bn(conv(x_nchw, w1), g1, b1), 0.0)
    out = bn(conv(out, w2), g2, b2)
    return jnp.maximum(out + x_nchw, 0.0)


if __name__ == "__main__":
    key = jax.random.PRNGKey(0)
    k1, k2, k3 = jax.random.split(key, 3)

    N, C, H, W = 2, 4, 16, 16
    x = jax.random.normal(k1, (N, C, H, W), jnp.float32)
    # conv3x3 weights stored (kh, kw, Cin, Cout); BN affine at PyTorch defaults.
    w1 = 0.1 * jax.random.normal(k2, (3, 3, C, C), jnp.float32)
    w2 = 0.1 * jax.random.normal(k3, (3, 3, C, C), jnp.float32)
    g1 = jnp.ones((C,), jnp.float32)
    b1 = jnp.zeros((C,), jnp.float32)
    g2 = jnp.ones((C,), jnp.float32)
    b2 = jnp.zeros((C,), jnp.float32)

    ref = reference(x, w1, w2, g1, b1, g2, b2)

    # Exact-arithmetic path (f32 operands everywhere): tight tolerance.
    out_f32 = jax.block_until_ready(
        residual_block(x, w1, w2, g1, b1, g2, b2, compute_dtype=jnp.float32))
    assert out_f32.shape == (N, C, H, W)
    assert jnp.allclose(out_f32, ref, rtol=1e-3, atol=1e-3), float(
        jnp.max(jnp.abs(out_f32 - ref)))

    # Default fast path (bf16 MXU operands, f32 accumulation, f32 residual).
    out_bf16 = jax.block_until_ready(residual_block(x, w1, w2, g1, b1, g2, b2))
    assert out_bf16.shape == (N, C, H, W)
    assert jnp.allclose(out_bf16, ref, rtol=3e-2, atol=3e-2), float(
        jnp.max(jnp.abs(out_bf16 - ref)))

    print("KERNEL_OK")
</pallas_src>

<mosaic_0001>
module attributes {stable_mosaic.version = 11 : i64} {
  func.func @residual_block_kernel(%arg0: memref<2x16x16x128xf32, #tpu.memory_space<vmem>>, %arg1: memref<9x128x128xf32, #tpu.memory_space<vmem>>, %arg2: memref<9x128x128xf32, #tpu.memory_space<vmem>>, %arg3: memref<1x128xf32, #tpu.memory_space<vmem>>, %arg4: memref<1x128xf32, #tpu.memory_space<vmem>>, %arg5: memref<1x128xf32, #tpu.memory_space<vmem>>, %arg6: memref<1x128xf32, #tpu.memory_space<vmem>>, %arg7: memref<512x128xf32, #tpu.memory_space<vmem>>, %arg8: memref<2x18x32x128xf32, #tpu.memory_space<vmem>>) attributes {dimension_semantics = [], scalar_prefetch = 0 : i64, scratch_operands = 1 : i64, tpu.core_type = #tpu.core_type<tc>} {
    %cst = arith.constant 0.000000e+00 : f32
    %0 = vector.broadcast %cst : f32 to vector<2x1x32x128xf32>
    %cst_0 = arith.constant 0.000000e+00 : f32
    %1 = vector.broadcast %cst_0 : f32 to vector<2x18x8x128xf32>
    %c0 = arith.constant 0 : index
    %c0_1 = arith.constant 0 : index
    %c0_2 = arith.constant 0 : index
    %c0_3 = arith.constant 0 : index
    %2 = vector.load %arg8[%c0, %c0_1, %c0_2, %c0_3] : memref<2x18x32x128xf32, #tpu.memory_space<vmem>>, vector<2x1x32x128xf32>
    tpu.vector_store %arg8[%c0, %c0_1, %c0_2, %c0_3], %0 {strides = array<i32>} : memref<2x18x32x128xf32, #tpu.memory_space<vmem>>, vector<2x1x32x128xf32>,
    %c0_4 = arith.constant 0 : index
    %c17 = arith.constant 17 : index
    %c0_5 = arith.constant 0 : index
    %c0_6 = arith.constant 0 : index
    %3 = vector.load %arg8[%c0_4, %c17, %c0_5, %c0_6] : memref<2x18x32x128xf32, #tpu.memory_space<vmem>>, vector<2x1x32x128xf32>
    tpu.vector_store %arg8[%c0_4, %c17, %c0_5, %c0_6], %0 {strides = array<i32>} : memref<2x18x32x128xf32, #tpu.memory_space<vmem>>, vector<2x1x32x128xf32>,
    %c0_7 = arith.constant 0 : index
    %c0_8 = arith.constant 0 : index
    %c0_9 = arith.constant 0 : index
    %c0_10 = arith.constant 0 : index
    %4 = vector.load %arg8[%c0_7, %c0_8, %c0_9, %c0_10] : memref<2x18x32x128xf32, #tpu.memory_space<vmem>>, vector<2x18x8x128xf32>
    tpu.vector_store %arg8[%c0_7, %c0_8, %c0_9, %c0_10], %1 {strides = array<i32>} : memref<2x18x32x128xf32, #tpu.memory_space<vmem>>, vector<2x18x8x128xf32>,
    %c0_11 = arith.constant 0 : index
    %c0_12 = arith.constant 0 : index
    %c24 = arith.constant 24 : index
    %c0_13 = arith.constant 0 : index
    %5 = vector.load %arg8[%c0_11, %c0_12, %c24, %c0_13] : memref<2x18x32x128xf32, #tpu.memory_space<vmem>>, vector<2x18x8x128xf32>
    tpu.vector_store %arg8[%c0_11, %c0_12, %c24, %c0_13], %1 {strides = array<i32>} : memref<2x18x32x128xf32, #tpu.memory_space<vmem>>, vector<2x18x8x128xf32>,
    %c0_14 = arith.constant 0 : index
    %c0_15 = arith.constant 0 : index
    %c0_16 = arith.constant 0 : index
    %c0_17 = arith.constant 0 : index
    %6 = vector.load %arg0[%c0_14, %c0_15, %c0_16, %c0_17] : memref<2x16x16x128xf32, #tpu.memory_space<vmem>>, vector<2x16x16x128xf32>
    %c0_18 = arith.constant 0 : index
    %c1 = arith.constant 1 : index
    %c8 = arith.constant 8 : index
    %c0_19 = arith.constant 0 : index
    %7 = vector.load %arg8[%c0_18, %c1, %c8, %c0_19] : memref<2x18x32x128xf32, #tpu.memory_space<vmem>>, vector<2x16x16x128xf32>
    tpu.vector_store %arg8[%c0_18, %c1, %c8, %c0_19], %6 {strides = array<i32>} : memref<2x18x32x128xf32, #tpu.memory_space<vmem>>, vector<2x16x16x128xf32>,
    %c0_20 = arith.constant 0 : index
    %c0_21 = arith.constant 0 : index
    %c7 = arith.constant 7 : index
    %c0_22 = arith.constant 0 : index
    %8 = vector.load %arg8[%c0_20, %c0_21, %c7, %c0_22] : memref<2x18x32x128xf32, #tpu.memory_space<vmem>>, vector<2x16x16x128xf32>
    %9 = vector.shape_cast %8 : vector<2x16x16x128xf32> to vector<512x128xf32>
    %c0_23 = arith.constant 0 : index
    %c0_24 = arith.constant 0 : index
    %c0_25 = arith.constant 0 : index
    %10 = vector.load %arg1[%c0_23, %c0_24, %c0_25] : memref<9x128x128xf32, #tpu.memory_space<vmem>>, vector<1x128x128xf32>
    %11 = vector.shape_cast %10 : vector<1x128x128xf32> to vector<128x128xf32>
    %cst_26 = arith.constant dense<0.000000e+00> : vector<512x128xf32>
    %12 = tpu.matmul %9, %11, %cst_26 {dimension_numbers = #tpu.dot_dimension_numbers<[1], [0], [0], [1], [0, 0, 1, 1], [], []>} : vector<512x128xf32>, vector<128x128xf32>, vector<512x128xf32> -> vector<512x128xf32>
    %c0_27 = arith.constant 0 : index
    %c0_28 = arith.constant 0 : index
    %c8_29 = arith.constant 8 : index
    %c0_30 = arith.constant 0 : index
    %13 = vector.load %arg8[%c0_27, %c0_28, %c8_29, %c0_30] : memref<2x18x32x128xf32, #tpu.memory_space<vmem>>, vector<2x16x16x128xf32>
    %14 = vector.shape_cast %13 : vector<2x16x16x128xf32> to vector<512x128xf32>
    %c1_31 = arith.constant 1 : index
    %c0_32 = arith.constant 0 : index
    %c0_33 = arith.constant 0 : index
    %15 = vector.load %arg1[%c1_31, %c0_32, %c0_33] : memref<9x128x128xf32, #tpu.memory_space<vmem>>, vector<1x128x128xf32>
    %16 = vector.shape_cast %15 : vector<1x128x128xf32> to vector<128x128xf32>
    %cst_34 = arith.constant dense<0.000000e+00> : vector<512x128xf32>
    %17 = tpu.matmul %14, %16, %cst_34 {dimension_numbers = #tpu.dot_dimension_numbers<[1], [0], [0], [1], [0, 0, 1, 1], [], []>} : vector<512x128xf32>, vector<128x128xf32>, vector<512x128xf32> -> vector<512x128xf32>
    %18 = arith.addf %12, %17 : vector<512x128xf32>
    %c0_35 = arith.constant 0 : index
    %c0_36 = arith.constant 0 : index
    %c9 = arith.constant 9 : index
    %c0_37 = arith.constant 0 : index
    %19 = vector.load %arg8[%c0_35, %c0_36, %c9, %c0_37] : memref<2x18x32x128xf32, #tpu.memory_space<vmem>>, vector<2x16x16x128xf32>
    %20 = vector.shape_cast %19 : vector<2x16x16x128xf32> to vector<512x128xf32>
    %c2 = arith.constant 2 : index
    %c0_38 = arith.constant 0 : index
    %c0_39 = arith.constant 0 : index
    %21 = vector.load %arg1[%c2, %c0_38, %c0_39] : memref<9x128x128xf32, #tpu.memory_space<vmem>>, vector<1x128x128xf32>
    %22 = vector.shape_cast %21 : vector<1x128x128xf32> to vector<128x128xf32>
    %cst_40 = arith.constant dense<0.000000e+00> : vector<512x128xf32>
    %23 = tpu.matmul %20, %22, %cst_40 {dimension_numbers = #tpu.dot_dimension_numbers<[1], [0], [0], [1], [0, 0, 1, 1], [], []>} : vector<512x128xf32>, vector<128x128xf32>, vector<512x128xf32> -> vector<512x128xf32>
    %24 = arith.addf %18, %23 : vector<512x128xf32>
    %c0_41 = arith.constant 0 : index
    %c1_42 = arith.constant 1 : index
    %c7_43 = arith.constant 7 : index
    %c0_44 = arith.constant 0 : index
    %25 = vector.load %arg8[%c0_41, %c1_42, %c7_43, %c0_44] : memref<2x18x32x128xf32, #tpu.memory_space<vmem>>, vector<2x16x16x128xf32>
    %26 = vector.shape_cast %25 : vector<2x16x16x128xf32> to vector<512x128xf32>
    %c3 = arith.constant 3 : index
    %c0_45 = arith.constant 0 : index
    %c0_46 = arith.constant 0 : index
    %27 = vector.load %arg1[%c3, %c0_45, %c0_46] : memref<9x128x128xf32, #tpu.memory_space<vmem>>, vector<1x128x128xf32>
    %28 = vector.shape_cast %27 : vector<1x128x128xf32> to vector<128x128xf32>
    %cst_47 = arith.constant dense<0.000000e+00> : vector<512x128xf32>
    %29 = tpu.matmul %26, %28, %cst_47 {dimension_numbers = #tpu.dot_dimension_numbers<[1], [0], [0], [1], [0, 0, 1, 1], [], []>} : vector<512x128xf32>, vector<128x128xf32>, vector<512x128xf32> -> vector<512x128xf32>
    %30 = arith.addf %24, %29 : vector<512x128xf32>
    %c0_48 = arith.constant 0 : index
    %c1_49 = arith.constant 1 : index
    %c8_50 = arith.constant 8 : index
    %c0_51 = arith.constant 0 : index
    %31 = vector.load %arg8[%c0_48, %c1_49, %c8_50, %c0_51] : memref<2x18x32x128xf32, #tpu.memory_space<vmem>>, vector<2x16x16x128xf32>
    %32 = vector.shape_cast %31 : vector<2x16x16x128xf32> to vector<512x128xf32>
    %c4 = arith.constant 4 : index
    %c0_52 = arith.constant 0 : index
    %c0_53 = arith.constant 0 : index
    %33 = vector.load %arg1[%c4, %c0_52, %c0_53] : memref<9x128x128xf32, #tpu.memory_space<vmem>>, vector<1x128x128xf32>
    %34 = vector.shape_cast %33 : vector<1x128x128xf32> to vector<128x128xf32>
    %cst_54 = arith.constant dense<0.000000e+00> : vector<512x128xf32>
    %35 = tpu.matmul %32, %34, %cst_54 {dimension_numbers = #tpu.dot_dimension_numbers<[1], [0], [0], [1], [0, 0, 1, 1], [], []>} : vector<512x128xf32>, vector<128x128xf32>, vector<512x128xf32> -> vector<512x128xf32>
    %36 = arith.addf %30, %35 : vector<512x128xf32>
    %c0_55 = arith.constant 0 : index
    %c1_56 = arith.constant 1 : index
    %c9_57 = arith.constant 9 : index
    %c0_58 = arith.constant 0 : index
    %37 = vector.load %arg8[%c0_55, %c1_56, %c9_57, %c0_58] : memref<2x18x32x128xf32, #tpu.memory_space<vmem>>, vector<2x16x16x128xf32>
    %38 = vector.shape_cast %37 : vector<2x16x16x128xf32> to vector<512x128xf32>
    %c5 = arith.constant 5 : index
    %c0_59 = arith.constant 0 : index
    %c0_60 = arith.constant 0 : index
    %39 = vector.load %arg1[%c5, %c0_59, %c0_60] : memref<9x128x128xf32, #tpu.memory_space<vmem>>, vector<1x128x128xf32>
    %40 = vector.shape_cast %39 : vector<1x128x128xf32> to vector<128x128xf32>
    %cst_61 = arith.constant dense<0.000000e+00> : vector<512x128xf32>
    %41 = tpu.matmul %38, %40, %cst_61 {dimension_numbers = #tpu.dot_dimension_numbers<[1], [0], [0], [1], [0, 0, 1, 1], [], []>} : vector<512x128xf32>, vector<128x128xf32>, vector<512x128xf32> -> vector<512x128xf32>
    %42 = arith.addf %36, %41 : vector<512x128xf32>
    %c0_62 = arith.constant 0 : index
    %c2_63 = arith.constant 2 : index
    %c7_64 = arith.constant 7 : index
    %c0_65 = arith.constant 0 : index
    %43 = vector.load %arg8[%c0_62, %c2_63, %c7_64, %c0_65] : memref<2x18x32x128xf32, #tpu.memory_space<vmem>>, vector<2x16x16x128xf32>
    %44 = vector.shape_cast %43 : vector<2x16x16x128xf32> to vector<512x128xf32>
    %c6 = arith.constant 6 : index
    %c0_66 = arith.constant 0 : index
    %c0_67 = arith.constant 0 : index
    %45 = vector.load %arg1[%c6, %c0_66, %c0_67] : memref<9x128x128xf32, #tpu.memory_space<vmem>>, vector<1x128x128xf32>
    %46 = vector.shape_cast %45 : vector<1x128x128xf32> to vector<128x128xf32>
    %cst_68 = arith.constant dense<0.000000e+00> : vector<512x128xf32>
    %47 = tpu.matmul %44, %46, %cst_68 {dimension_numbers = #tpu.dot_dimension_numbers<[1], [0], [0], [1], [0, 0, 1, 1], [], []>} : vector<512x128xf32>, vector<128x128xf32>, vector<512x128xf32> -> vector<512x128xf32>
    %48 = arith.addf %42, %47 : vector<512x128xf32>
    %c0_69 = arith.constant 0 : index
    %c2_70 = arith.constant 2 : index
    %c8_71 = arith.constant 8 : index
    %c0_72 = arith.constant 0 : index
    %49 = vector.load %arg8[%c0_69, %c2_70, %c8_71, %c0_72] : memref<2x18x32x128xf32, #tpu.memory_space<vmem>>, vector<2x16x16x128xf32>
    %50 = vector.shape_cast %49 : vector<2x16x16x128xf32> to vector<512x128xf32>
    %c7_73 = arith.constant 7 : index
    %c0_74 = arith.constant 0 : index
    %c0_75 = arith.constant 0 : index
    %51 = vector.load %arg1[%c7_73, %c0_74, %c0_75] : memref<9x128x128xf32, #tpu.memory_space<vmem>>, vector<1x128x128xf32>
    %52 = vector.shape_cast %51 : vector<1x128x128xf32> to vector<128x128xf32>
    %cst_76 = arith.constant dense<0.000000e+00> : vector<512x128xf32>
    %53 = tpu.matmul %50, %52, %cst_76 {dimension_numbers = #tpu.dot_dimension_numbers<[1], [0], [0], [1], [0, 0, 1, 1], [], []>} : vector<512x128xf32>, vector<128x128xf32>, vector<512x128xf32> -> vector<512x128xf32>
    %54 = arith.addf %48, %53 : vector<512x128xf32>
    %c0_77 = arith.constant 0 : index
    %c2_78 = arith.constant 2 : index
    %c9_79 = arith.constant 9 : index
    %c0_80 = arith.constant 0 : index
    %55 = vector.load %arg8[%c0_77, %c2_78, %c9_79, %c0_80] : memref<2x18x32x128xf32, #tpu.memory_space<vmem>>, vector<2x16x16x128xf32>
    %56 = vector.shape_cast %55 : vector<2x16x16x128xf32> to vector<512x128xf32>
    %c8_81 = arith.constant 8 : index
    %c0_82 = arith.constant 0 : index
    %c0_83 = arith.constant 0 : index
    %57 = vector.load %arg1[%c8_81, %c0_82, %c0_83] : memref<9x128x128xf32, #tpu.memory_space<vmem>>, vector<1x128x128xf32>
    %58 = vector.shape_cast %57 : vector<1x128x128xf32> to vector<128x128xf32>
    %cst_84 = arith.constant dense<0.000000e+00> : vector<512x128xf32>
    %59 = tpu.matmul %56, %58, %cst_84 {dimension_numbers = #tpu.dot_dimension_numbers<[1], [0], [0], [1], [0, 0, 1, 1], [], []>} : vector<512x128xf32>, vector<128x128xf32>, vector<512x128xf32> -> vector<512x128xf32>
    %60 = arith.addf %54, %59 : vector<512x128xf32>
    %c0_85 = arith.constant 0 : index
    %c0_86 = arith.constant 0 : index
    %61 = vector.load %arg3[%c0_85, %c0_86] : memref<1x128xf32, #tpu.memory_space<vmem>>, vector<1x128xf32>
    %c0_87 = arith.constant 0 : index
    %c0_88 = arith.constant 0 : index
    %62 = vector.load %arg4[%c0_87, %c0_88] : memref<1x128xf32, #tpu.memory_space<vmem>>, vector<1x128xf32>
    %cst_89 = arith.constant dense<0.000000e+00> : vector<128xf32>
    %63 = vector.multi_reduction <add>, %60, %cst_89 [0] : vector<512x128xf32> to vector<128xf32>
    %64 = vector.shape_cast %63 : vector<128xf32> to vector<1x128xf32>
    %cst_90 = arith.constant 0.001953125 : f32
    %65 = vector.broadcast %cst_90 : f32 to vector<1x128xf32>
    %66 = arith.mulf %64, %65 : vector<1x128xf32>
    %67 = arith.mulf %60, %60 : vector<512x128xf32>
    %cst_91 = arith.constant dense<0.000000e+00> : vector<128xf32>
    %68 = vector.multi_reduction <add>, %67, %cst_91 [0] : vector<512x128xf32> to vector<128xf32>
    %69 = vector.shape_cast %68 : vector<128xf32> to vector<1x128xf32>
    %cst_92 = arith.constant 0.001953125 : f32
    %70 = vector.broadcast %cst_92 : f32 to vector<1x128xf32>
    %71 = arith.mulf %69, %70 : vector<1x128xf32>
    %72 = arith.mulf %66, %66 : vector<1x128xf32>
    %73 = arith.subf %71, %72 : vector<1x128xf32>
    %cst_93 = arith.constant 9.99999974E-6 : f32
    %74 = vector.broadcast %cst_93 : f32 to vector<1x128xf32>
    %75 = arith.addf %73, %74 : vector<1x128xf32>
    %76 = math.rsqrt %75 : vector<1x128xf32>
    %77 = arith.mulf %76, %61 : vector<1x128xf32>
    %78 = arith.mulf %66, %77 : vector<1x128xf32>
    %79 = arith.subf %62, %78 : vector<1x128xf32>
    %80 = vector.broadcast %77 : vector<1x128xf32> to vector<512x128xf32>
    %81 = arith.mulf %60, %80 : vector<512x128xf32>
    %82 = vector.broadcast %79 : vector<1x128xf32> to vector<512x128xf32>
    %83 = arith.addf %81, %82 : vector<512x128xf32>
    %cst_94 = arith.constant 0.000000e+00 : f32
    %84 = vector.broadcast %cst_94 : f32 to vector<512x128xf32>
    %85 = arith.maximumf %83, %84 : vector<512x128xf32>
    %86 = vector.shape_cast %85 : vector<512x128xf32> to vector<2x16x16x128xf32>
    %c0_95 = arith.constant 0 : index
    %c1_96 = arith.constant 1 : index
    %c8_97 = arith.constant 8 : index
    %c0_98 = arith.constant 0 : index
    %87 = vector.load %arg8[%c0_95, %c1_96, %c8_97, %c0_98] : memref<2x18x32x128xf32, #tpu.memory_space<vmem>>, vector<2x16x16x128xf32>
    tpu.vector_store %arg8[%c0_95, %c1_96, %c8_97, %c0_98], %86 {strides = array<i32>} : memref<2x18x32x128xf32, #tpu.memory_space<vmem>>, vector<2x16x16x128xf32>,
    %c0_99 = arith.constant 0 : index
    %c0_100 = arith.constant 0 : index
    %c7_101 = arith.constant 7 : index
    %c0_102 = arith.constant 0 : index
    %88 = vector.load %arg8[%c0_99, %c0_100, %c7_101, %c0_102] : memref<2x18x32x128xf32, #tpu.memory_space<vmem>>, vector<2x16x16x128xf32>
    %89 = vector.shape_cast %88 : vector<2x16x16x128xf32> to vector<512x128xf32>
    %c0_103 = arith.constant 0 : index
    %c0_104 = arith.constant 0 : index
    %c0_105 = arith.constant 0 : index
    %90 = vector.load %arg2[%c0_103, %c0_104, %c0_105] : memref<9x128x128xf32, #tpu.memory_space<vmem>>, vector<1x128x128xf32>
    %91 = vector.shape_cast %90 : vector<1x128x128xf32> to vector<128x128xf32>
    %cst_106 = arith.constant dense<0.000000e+00> : vector<512x128xf32>
    %92 = tpu.matmul %89, %91, %cst_106 {dimension_numbers = #tpu.dot_dimension_numbers<[1], [0], [0], [1], [0, 0, 1, 1], [], []>} : vector<512x128xf32>, vector<128x128xf32>, vector<512x128xf32> -> vector<512x128xf32>
    %c0_107 = arith.constant 0 : index
    %c0_108 = arith.constant 0 : index
    %c8_109 = arith.constant 8 : index
    %c0_110 = arith.constant 0 : index
    %93 = vector.load %arg8[%c0_107, %c0_108, %c8_109, %c0_110] : memref<2x18x32x128xf32, #tpu.memory_space<vmem>>, vector<2x16x16x128xf32>
    %94 = vector.shape_cast %93 : vector<2x16x16x128xf32> to vector<512x128xf32>
    %c1_111 = arith.constant 1 : index
    %c0_112 = arith.constant 0 : index
    %c0_113 = arith.constant 0 : index
    %95 = vector.load %arg2[%c1_111, %c0_112, %c0_113] : memref<9x128x128xf32, #tpu.memory_space<vmem>>, vector<1x128x128xf32>
    %96 = vector.shape_cast %95 : vector<1x128x128xf32> to vector<128x128xf32>
    %cst_114 = arith.constant dense<0.000000e+00> : vector<512x128xf32>
    %97 = tpu.matmul %94, %96, %cst_114 {dimension_numbers = #tpu.dot_dimension_numbers<[1], [0], [0], [1], [0, 0, 1, 1], [], []>} : vector<512x128xf32>, vector<128x128xf32>, vector<512x128xf32> -> vector<512x128xf32>
    %98 = arith.addf %92, %97 : vector<512x128xf32>
    %c0_115 = arith.constant 0 : index
    %c0_116 = arith.constant 0 : index
    %c9_117 = arith.constant 9 : index
    %c0_118 = arith.constant 0 : index
    %99 = vector.load %arg8[%c0_115, %c0_116, %c9_117, %c0_118] : memref<2x18x32x128xf32, #tpu.memory_space<vmem>>, vector<2x16x16x128xf32>
    %100 = vector.shape_cast %99 : vector<2x16x16x128xf32> to vector<512x128xf32>
    %c2_119 = arith.constant 2 : index
    %c0_120 = arith.constant 0 : index
    %c0_121 = arith.constant 0 : index
    %101 = vector.load %arg2[%c2_119, %c0_120, %c0_121] : memref<9x128x128xf32, #tpu.memory_space<vmem>>, vector<1x128x128xf32>
    %102 = vector.shape_cast %101 : vector<1x128x128xf32> to vector<128x128xf32>
    %cst_122 = arith.constant dense<0.000000e+00> : vector<512x128xf32>
    %103 = tpu.matmul %100, %102, %cst_122 {dimension_numbers = #tpu.dot_dimension_numbers<[1], [0], [0], [1], [0, 0, 1, 1], [], []>} : vector<512x128xf32>, vector<128x128xf32>, vector<512x128xf32> -> vector<512x128xf32>
    %104 = arith.addf %98, %103 : vector<512x128xf32>
    %c0_123 = arith.constant 0 : index
    %c1_124 = arith.constant 1 : index
    %c7_125 = arith.constant 7 : index
    %c0_126 = arith.constant 0 : index
    %105 = vector.load %arg8[%c0_123, %c1_124, %c7_125, %c0_126] : memref<2x18x32x128xf32, #tpu.memory_space<vmem>>, vector<2x16x16x128xf32>
    %106 = vector.shape_cast %105 : vector<2x16x16x128xf32> to vector<512x128xf32>
    %c3_127 = arith.constant 3 : index
    %c0_128 = arith.constant 0 : index
    %c0_129 = arith.constant 0 : index
    %107 = vector.load %arg2[%c3_127, %c0_128, %c0_129] : memref<9x128x128xf32, #tpu.memory_space<vmem>>, vector<1x128x128xf32>
    %108 = vector.shape_cast %107 : vector<1x128x128xf32> to vector<128x128xf32>
    %cst_130 = arith.constant dense<0.000000e+00> : vector<512x128xf32>
    %109 = tpu.matmul %106, %108, %cst_130 {dimension_numbers = #tpu.dot_dimension_numbers<[1], [0], [0], [1], [0, 0, 1, 1], [], []>} : vector<512x128xf32>, vector<128x128xf32>, vector<512x128xf32> -> vector<512x128xf32>
    %110 = arith.addf %104, %109 : vector<512x128xf32>
    %c0_131 = arith.constant 0 : index
    %c1_132 = arith.constant 1 : index
    %c8_133 = arith.constant 8 : index
    %c0_134 = arith.constant 0 : index
    %111 = vector.load %arg8[%c0_131, %c1_132, %c8_133, %c0_134] : memref<2x18x32x128xf32, #tpu.memory_space<vmem>>, vector<2x16x16x128xf32>
    %112 = vector.shape_cast %111 : vector<2x16x16x128xf32> to vector<512x128xf32>
    %c4_135 = arith.constant 4 : index
    %c0_136 = arith.constant 0 : index
    %c0_137 = arith.constant 0 : index
    %113 = vector.load %arg2[%c4_135, %c0_136, %c0_137] : memref<9x128x128xf32, #tpu.memory_space<vmem>>, vector<1x128x128xf32>
    %114 = vector.shape_cast %113 : vector<1x128x128xf32> to vector<128x128xf32>
    %cst_138 = arith.constant dense<0.000000e+00> : vector<512x128xf32>
    %115 = tpu.matmul %112, %114, %cst_138 {dimension_numbers = #tpu.dot_dimension_numbers<[1], [0], [0], [1], [0, 0, 1, 1], [], []>} : vector<512x128xf32>, vector<128x128xf32>, vector<512x128xf32> -> vector<512x128xf32>
    %116 = arith.addf %110, %115 : vector<512x128xf32>
    %c0_139 = arith.constant 0 : index
    %c1_140 = arith.constant 1 : index
    %c9_141 = arith.constant 9 : index
    %c0_142 = arith.constant 0 : index
    %117 = vector.load %arg8[%c0_139, %c1_140, %c9_141, %c0_142] : memref<2x18x32x128xf32, #tpu.memory_space<vmem>>, vector<2x16x16x128xf32>
    %118 = vector.shape_cast %117 : vector<2x16x16x128xf32> to vector<512x128xf32>
    %c5_143 = arith.constant 5 : index
    %c0_144 = arith.constant 0 : index
    %c0_145 = arith.constant 0 : index
    %119 = vector.load %arg2[%c5_143, %c0_144, %c0_145] : memref<9x128x128xf32, #tpu.memory_space<vmem>>, vector<1x128x128xf32>
    %120 = vector.shape_cast %119 : vector<1x128x128xf32> to vector<128x128xf32>
    %cst_146 = arith.constant dense<0.000000e+00> : vector<512x128xf32>
    %121 = tpu.matmul %118, %120, %cst_146 {dimension_numbers = #tpu.dot_dimension_numbers<[1], [0], [0], [1], [0, 0, 1, 1], [], []>} : vector<512x128xf32>, vector<128x128xf32>, vector<512x128xf32> -> vector<512x128xf32>
    %122 = arith.addf %116, %121 : vector<512x128xf32>
    %c0_147 = arith.constant 0 : index
    %c2_148 = arith.constant 2 : index
    %c7_149 = arith.constant 7 : index
    %c0_150 = arith.constant 0 : index
    %123 = vector.load %arg8[%c0_147, %c2_148, %c7_149, %c0_150] : memref<2x18x32x128xf32, #tpu.memory_space<vmem>>, vector<2x16x16x128xf32>
    %124 = vector.shape_cast %123 : vector<2x16x16x128xf32> to vector<512x128xf32>
    %c6_151 = arith.constant 6 : index
    %c0_152 = arith.constant 0 : index
    %c0_153 = arith.constant 0 : index
    %125 = vector.load %arg2[%c6_151, %c0_152, %c0_153] : memref<9x128x128xf32, #tpu.memory_space<vmem>>, vector<1x128x128xf32>
    %126 = vector.shape_cast %125 : vector<1x128x128xf32> to vector<128x128xf32>
    %cst_154 = arith.constant dense<0.000000e+00> : vector<512x128xf32>
    %127 = tpu.matmul %124, %126, %cst_154 {dimension_numbers = #tpu.dot_dimension_numbers<[1], [0], [0], [1], [0, 0, 1, 1], [], []>} : vector<512x128xf32>, vector<128x128xf32>, vector<512x128xf32> -> vector<512x128xf32>
    %128 = arith.addf %122, %127 : vector<512x128xf32>
    %c0_155 = arith.constant 0 : index
    %c2_156 = arith.constant 2 : index
    %c8_157 = arith.constant 8 : index
    %c0_158 = arith.constant 0 : index
    %129 = vector.load %arg8[%c0_155, %c2_156, %c8_157, %c0_158] : memref<2x18x32x128xf32, #tpu.memory_space<vmem>>, vector<2x16x16x128xf32>
    %130 = vector.shape_cast %129 : vector<2x16x16x128xf32> to vector<512x128xf32>
    %c7_159 = arith.constant 7 : index
    %c0_160 = arith.constant 0 : index
    %c0_161 = arith.constant 0 : index
    %131 = vector.load %arg2[%c7_159, %c0_160, %c0_161] : memref<9x128x128xf32, #tpu.memory_space<vmem>>, vector<1x128x128xf32>
    %132 = vector.shape_cast %131 : vector<1x128x128xf32> to vector<128x128xf32>
    %cst_162 = arith.constant dense<0.000000e+00> : vector<512x128xf32>
    %133 = tpu.matmul %130, %132, %cst_162 {dimension_numbers = #tpu.dot_dimension_numbers<[1], [0], [0], [1], [0, 0, 1, 1], [], []>} : vector<512x128xf32>, vector<128x128xf32>, vector<512x128xf32> -> vector<512x128xf32>
    %134 = arith.addf %128, %133 : vector<512x128xf32>
    %c0_163 = arith.constant 0 : index
    %c2_164 = arith.constant 2 : index
    %c9_165 = arith.constant 9 : index
    %c0_166 = arith.constant 0 : index
    %135 = vector.load %arg8[%c0_163, %c2_164, %c9_165, %c0_166] : memref<2x18x32x128xf32, #tpu.memory_space<vmem>>, vector<2x16x16x128xf32>
    %136 = vector.shape_cast %135 : vector<2x16x16x128xf32> to vector<512x128xf32>
    %c8_167 = arith.constant 8 : index
    %c0_168 = arith.constant 0 : index
    %c0_169 = arith.constant 0 : index
    %137 = vector.load %arg2[%c8_167, %c0_168, %c0_169] : memref<9x128x128xf32, #tpu.memory_space<vmem>>, vector<1x128x128xf32>
    %138 = vector.shape_cast %137 : vector<1x128x128xf32> to vector<128x128xf32>
    %cst_170 = arith.constant dense<0.000000e+00> : vector<512x128xf32>
    %139 = tpu.matmul %136, %138, %cst_170 {dimension_numbers = #tpu.dot_dimension_numbers<[1], [0], [0], [1], [0, 0, 1, 1], [], []>} : vector<512x128xf32>, vector<128x128xf32>, vector<512x128xf32> -> vector<512x128xf32>
    %140 = arith.addf %134, %139 : vector<512x128xf32>
    %c0_171 = arith.constant 0 : index
    %c0_172 = arith.constant 0 : index
    %141 = vector.load %arg5[%c0_171, %c0_172] : memref<1x128xf32, #tpu.memory_space<vmem>>, vector<1x128xf32>
    %c0_173 = arith.constant 0 : index
    %c0_174 = arith.constant 0 : index
    %142 = vector.load %arg6[%c0_173, %c0_174] : memref<1x128xf32, #tpu.memory_space<vmem>>, vector<1x128xf32>
    %cst_175 = arith.constant dense<0.000000e+00> : vector<128xf32>
    %143 = vector.multi_reduction <add>, %140, %cst_175 [0] : vector<512x128xf32> to vector<128xf32>
    %144 = vector.shape_cast %143 : vector<128xf32> to vector<1x128xf32>
    %cst_176 = arith.constant 0.001953125 : f32
    %145 = vector.broadcast %cst_176 : f32 to vector<1x128xf32>
    %146 = arith.mulf %144, %145 : vector<1x128xf32>
    %147 = arith.mulf %140, %140 : vector<512x128xf32>
    %cst_177 = arith.constant dense<0.000000e+00> : vector<128xf32>
    %148 = vector.multi_reduction <add>, %147, %cst_177 [0] : vector<512x128xf32> to vector<128xf32>
    %149 = vector.shape_cast %148 : vector<128xf32> to vector<1x128xf32>
    %cst_178 = arith.constant 0.001953125 : f32
    %150 = vector.broadcast %cst_178 : f32 to vector<1x128xf32>
    %151 = arith.mulf %149, %150 : vector<1x128xf32>
    %152 = arith.mulf %146, %146 : vector<1x128xf32>
    %153 = arith.subf %151, %152 : vector<1x128xf32>
    %cst_179 = arith.constant 9.99999974E-6 : f32
    %154 = vector.broadcast %cst_179 : f32 to vector<1x128xf32>
    %155 = arith.addf %153, %154 : vector<1x128xf32>
    %156 = math.rsqrt %155 : vector<1x128xf32>
    %157 = arith.mulf %156, %141 : vector<1x128xf32>
    %158 = arith.mulf %146, %157 : vector<1x128xf32>
    %159 = arith.subf %142, %158 : vector<1x128xf32>
    %160 = vector.broadcast %157 : vector<1x128xf32> to vector<512x128xf32>
    %161 = arith.mulf %140, %160 : vector<512x128xf32>
    %162 = vector.broadcast %159 : vector<1x128xf32> to vector<512x128xf32>
    %163 = arith.addf %161, %162 : vector<512x128xf32>
    %c0_180 = arith.constant 0 : index
    %c0_181 = arith.constant 0 : index
    %c0_182 = arith.constant 0 : index
    %c0_183 = arith.constant 0 : index
    %164 = vector.load %arg0[%c0_180, %c0_181, %c0_182, %c0_183] : memref<2x16x16x128xf32, #tpu.memory_space<vmem>>, vector<2x16x16x128xf32>
    %165 = vector.shape_cast %164 : vector<2x16x16x128xf32> to vector<512x128xf32>
    %166 = arith.addf %163, %165 : vector<512x128xf32>
    %cst_184 = arith.constant 0.000000e+00 : f32
    %167 = vector.broadcast %cst_184 : f32 to vector<512x128xf32>
    %168 = arith.maximumf %166, %167 : vector<512x128xf32>
    %c0_185 = arith.constant 0 : index
    %c0_186 = arith.constant 0 : index
    %169 = vector.load %arg7[%c0_185, %c0_186] : memref<512x128xf32, #tpu.memory_space<vmem>>, vector<512x128xf32>
    tpu.vector_store %arg7[%c0_185, %c0_186], %168 {strides = array<i32>} : memref<512x128xf32, #tpu.memory_space<vmem>>, vector<512x128xf32>,
    return
  }
}

</mosaic_0001>

<llo_original>
// kernel: residual_block.1
$region0: #{residual_block.1}
  #allocation0 [shape = 'u32[]', space=smem, size = 0x4, offset = 0x4, fixed_abs, tag = 'smem constant byte address 0x4 - core index']
  #allocation1 [shape = 'u32[72,128]{1,0:T(1,128)}', space=vmem, size = 0x9000, scoped, tag = 'internal scratch']
  #allocation2 [shape = 'f32[2,18,32,128]{3,2,1,0:T(8,128)}', space=vmem, size = 0x90000, scoped, tag = 'scratch operand']
  %s0 = inlined_call_operand.vmem [shape: f32[2,16,16,128], index: 0, kind: input, shape index: {}]
  %s1 = inlined_call_operand.vmem [shape: f32[9,128,128], index: 1, kind: input, shape index: {}]
  %s2 = inlined_call_operand.vmem [shape: f32[9,128,128], index: 2, kind: input, shape index: {}]
  %s3 = inlined_call_operand.vmem [shape: f32[1,128], index: 3, kind: input, shape index: {}]
  %s4 = inlined_call_operand.vmem [shape: f32[1,128], index: 4, kind: input, shape index: {}]
  %s5 = inlined_call_operand.vmem [shape: f32[1,128], index: 5, kind: input, shape index: {}]
  %s6 = inlined_call_operand.vmem [shape: f32[1,128], index: 6, kind: input, shape index: {}]
  %s7 = inlined_call_operand.vmem [shape: f32[512,128], index: 7, kind: output, shape index: {}]
  %s8 = sld [smem:[#allocation0]]
  $region38: #{residual_block.1} parent=0
    _
  %s10 = ssub.s32 1, %s8
  %s11 = scalar_select 0, %s10, %s8
  // Predicated region
  $region2: #{residual_block.1} parent=0 // pred_check
    _
  $region3: #{residual_block.1} parent=0 // pred_check_branch
    %13 = sbr.rel (0) target = $region5
  $region4: #{residual_block.1} parent=0 // pred_region
    _
  $region5: #{residual_block.1} parent=0 // pred_fallthru
    _
  // Predicated region
  $region6: #{residual_block.1} parent=0 // pred_check
    _
  $region7: #{residual_block.1} parent=0 // pred_check_branch
    %15 = sbr.rel (0) target = $region9
  $region8: #{residual_block.1} parent=0 // pred_region
    _
  $region9: #{residual_block.1} parent=0 // pred_fallthru
    _
  // Predicated region
  $region10: #{residual_block.1} parent=0 // pred_check
    _
  $region11: #{residual_block.1} parent=0 // pred_check_branch
    %17 = sbr.rel (0) target = $region13
  $region12: #{residual_block.1} parent=0 // pred_region
    _
  $region13: #{residual_block.1} parent=0 // pred_fallthru
    _
  // Predicated region
  $region14: #{residual_block.1} parent=0 // pred_check
    _
  $region15: #{residual_block.1} parent=0 // pred_check_branch
    %19 = sbr.rel (0) target = $region17
  $region16: #{residual_block.1} parent=0 // pred_region
    _
  $region17: #{residual_block.1} parent=0 // pred_fallthru
    _
  // Predicated region
  $region18: #{residual_block.1} parent=0 // pred_check
    _
  $region19: #{residual_block.1} parent=0 // pred_check_branch
    %21 = sbr.rel (0) target = $region21
  $region20: #{residual_block.1} parent=0 // pred_region
    _
  $region21: #{residual_block.1} parent=0 // pred_fallthru
    _
  // Predicated region
  $region22: #{residual_block.1} parent=0 // pred_check
    _
  $region23: #{residual_block.1} parent=0 // pred_check_branch
    %23 = sbr.rel (0) target = $region25
  $region24: #{residual_block.1} parent=0 // pred_region
    _
  $region25: #{residual_block.1} parent=0 // pred_fallthru
    _
  // Predicated region
  $region26: #{residual_block.1} parent=0 // pred_check
    _
  $region27: #{residual_block.1} parent=0 // pred_check_branch
    %25 = sbr.rel (0) target = $region29
  $region28: #{residual_block.1} parent=0 // pred_region
    _
  $region29: #{residual_block.1} parent=0 // pred_fallthru
    _
  %26 = vst [vmem:[#allocation2] sm:$0xff] 0.0
  %27 = vst [vmem:[#allocation2 + $0x8] sm:$0xff] 0.0
  %28 = vst [vmem:[#allocation2 + $0x10] sm:$0xff] 0.0
  %29 = vst [vmem:[#allocation2 + $0x18] sm:$0xff] 0.0
  %30 = vst [vmem:[#allocation2 + $0x240] sm:$0xff] 0.0
  %31 = vst [vmem:[#allocation2 + $0x248] sm:$0xff] 0.0
  %32 = vst [vmem:[#allocation2 + $0x250] sm:$0xff] 0.0
  %33 = vst [vmem:[#allocation2 + $0x258] sm:$0xff] 0.0
  %s34 = scalar_lea.vmem [#allocation2], 544
  %35 = vst [vmem:[%s34] sm:$0xff] 0.0
  %36 = vst [vmem:[%s34 + $0x8] sm:$0xff] 0.0
  %37 = vst [vmem:[%s34 + $0x10] sm:$0xff] 0.0
  %38 = vst [vmem:[%s34 + $0x18] sm:$0xff] 0.0
  %39 = vst [vmem:[%s34 + $0x240] sm:$0xff] 0.0
  %40 = vst [vmem:[%s34 + $0x248] sm:$0xff] 0.0
  %41 = vst [vmem:[%s34 + $0x250] sm:$0xff] 0.0
  %42 = vst [vmem:[%s34 + $0x258] sm:$0xff] 0.0
  %43 = vst [vmem:[#allocation2] sm:$0xff] 0.0
  %44 = vst [vmem:[#allocation2 + $0x20] sm:$0xff] 0.0
  %45 = vst [vmem:[#allocation2 + $0x40] sm:$0xff] 0.0
  %46 = vst [vmem:[#allocation2 + $0x60] sm:$0xff] 0.0
  %47 = vst [vmem:[#allocation2 + $0x80] sm:$0xff] 0.0
  %48 = vst [vmem:[#allocation2 + $0xa0] sm:$0xff] 0.0
  %49 = vst [vmem:[#allocation2 + $0xc0] sm:$0xff] 0.0
  %50 = vst [vmem:[#allocation2 + $0xe0] sm:$0xff] 0.0
  %51 = vst [vmem:[#allocation2 + $0x100] sm:$0xff] 0.0
  %52 = vst [vmem:[#allocation2 + $0x120] sm:$0xff] 0.0
  %53 = vst [vmem:[#allocation2 + $0x140] sm:$0xff] 0.0
  %54 = vst [vmem:[#allocation2 + $0x160] sm:$0xff] 0.0
  %55 = vst [vmem:[#allocation2 + $0x180] sm:$0xff] 0.0
  %56 = vst [vmem:[#allocation2 + $0x1a0] sm:$0xff] 0.0
  %57 = vst [vmem:[#allocation2 + $0x1c0] sm:$0xff] 0.0
  %58 = vst [vmem:[#allocation2 + $0x1e0] sm:$0xff] 0.0
  %59 = vst [vmem:[#allocation2 + $0x200] sm:$0xff] 0.0
  %60 = vst [vmem:[#allocation2 + $0x220] sm:$0xff] 0.0
  %61 = vst [vmem:[#allocation2 + $0x240] sm:$0xff] 0.0
  %62 = vst [vmem:[#allocation2 + $0x260] sm:$0xff] 0.0
  %63 = vst [vmem:[#allocation2 + $0x280] sm:$0xff] 0.0
  %64 = vst [vmem:[#allocation2 + $0x2a0] sm:$0xff] 0.0
  %65 = vst [vmem:[#allocation2 + $0x2c0] sm:$0xff] 0.0
  %66 = vst [vmem:[#allocation2 + $0x2e0] sm:$0xff] 0.0
  %67 = vst [vmem:[#allocation2 + $0x300] sm:$0xff] 0.0
  %68 = vst [vmem:[#allocation2 + $0x320] sm:$0xff] 0.0
  %69 = vst [vmem:[#allocation2 + $0x340] sm:$0xff] 0.0
  %70 = vst [vmem:[#allocation2 + $0x360] sm:$0xff] 0.0
  %71 = vst [vmem:[#allocation2 + $0x380] sm:$0xff] 0.0
  %72 = vst [vmem:[#allocation2 + $0x3a0] sm:$0xff] 0.0
  %73 = vst [vmem:[#allocation2 + $0x3c0] sm:$0xff] 0.0
  %74 = vst [vmem:[#allocation2 + $0x3e0] sm:$0xff] 0.0
  %75 = vst [vmem:[#allocation2 + $0x400] sm:$0xff] 0.0
  %76 = vst [vmem:[#allocation2 + $0x420] sm:$0xff] 0.0
  %77 = vst [vmem:[#allocation2 + $0x440] sm:$0xff] 0.0
  %78 = vst [vmem:[#allocation2 + $0x460] sm:$0xff] 0.0
  %79 = vst [vmem:[#allocation2 + $0x18] sm:$0xff] 0.0
  %80 = vst [vmem:[#allocation2 + $0x38] sm:$0xff] 0.0
  %81 = vst [vmem:[#allocation2 + $0x58] sm:$0xff] 0.0
  %82 = vst [vmem:[#allocation2 + $0x78] sm:$0xff] 0.0
  %83 = vst [vmem:[#allocation2 + $0x98] sm:$0xff] 0.0
  %84 = vst [vmem:[#allocation2 + $0xb8] sm:$0xff] 0.0
  %85 = vst [vmem:[#allocation2 + $0xd8] sm:$0xff] 0.0
  %86 = vst [vmem:[#allocation2 + $0xf8] sm:$0xff] 0.0
  %87 = vst [vmem:[#allocation2 + $0x118] sm:$0xff] 0.0
  %88 = vst [vmem:[#allocation2 + $0x138] sm:$0xff] 0.0
  %89 = vst [vmem:[#allocation2 + $0x158] sm:$0xff] 0.0
  %90 = vst [vmem:[#allocation2 + $0x178] sm:$0xff] 0.0
  %91 = vst [vmem:[#allocation2 + $0x198] sm:$0xff] 0.0
  %92 = vst [vmem:[#allocation2 + $0x1b8] sm:$0xff] 0.0
  %93 = vst [vmem:[#allocation2 + $0x1d8] sm:$0xff] 0.0
  %94 = vst [vmem:[#allocation2 + $0x1f8] sm:$0xff] 0.0
  %95 = vst [vmem:[#allocation2 + $0x218] sm:$0xff] 0.0
  %96 = vst [vmem:[#allocation2 + $0x238] sm:$0xff] 0.0
  %97 = vst [vmem:[#allocation2 + $0x258] sm:$0xff] 0.0
  %98 = vst [vmem:[#allocation2 + $0x278] sm:$0xff] 0.0
  %99 = vst [vmem:[#allocation2 + $0x298] sm:$0xff] 0.0
  %100 = vst [vmem:[#allocation2 + $0x2b8] sm:$0xff] 0.0
  %101 = vst [vmem:[#allocation2 + $0x2d8] sm:$0xff] 0.0
  %102 = vst [vmem:[#allocation2 + $0x2f8] sm:$0xff] 0.0
  %103 = vst [vmem:[#allocation2 + $0x318] sm:$0xff] 0.0
  %104 = vst [vmem:[#allocation2 + $0x338] sm:$0xff] 0.0
  %105 = vst [vmem:[#allocation2 + $0x358] sm:$0xff] 0.0
  %106 = vst [vmem:[#allocation2 + $0x378] sm:$0xff] 0.0
  %107 = vst [vmem:[#allocation2 + $0x398] sm:$0xff] 0.0
  %108 = vst [vmem:[#allocation2 + $0x3b8] sm:$0xff] 0.0
  %109 = vst [vmem:[#allocation2 + $0x3d8] sm:$0xff] 0.0
  %110 = vst [vmem:[#allocation2 + $0x3f8] sm:$0xff] 0.0
  %111 = vst [vmem:[#allocation2 + $0x418] sm:$0xff] 0.0
  %112 = vst [vmem:[#allocation2 + $0x438] sm:$0xff] 0.0
  %113 = vst [vmem:[#allocation2 + $0x458] sm:$0xff] 0.0
  %114 = vst [vmem:[#allocation2 + $0x478] sm:$0xff] 0.0
  %v115 = vld [vmem:[%s0] sm:$0xff]
  %v116 = vld [vmem:[%s0 + $0x8] sm:$0xff]
  %v117 = vld [vmem:[%s0 + $0x10] sm:$0xff]
  %v118 = vld [vmem:[%s0 + $0x18] sm:$0xff]
  %v119 = vld [vmem:[%s0 + $0x20] sm:$0xff]
  %v120 = vld [vmem:[%s0 + $0x28] sm:$0xff]
  %v121 = vld [vmem:[%s0 + $0x30] sm:$0xff]
  %v122 = vld [vmem:[%s0 + $0x38] sm:$0xff]
  %v123 = vld [vmem:[%s0 + $0x40] sm:$0xff]
  %v124 = vld [vmem:[%s0 + $0x48] sm:$0xff]
  %v125 = vld [vmem:[%s0 + $0x50] sm:$0xff]
  %v126 = vld [vmem:[%s0 + $0x58] sm:$0xff]
  %v127 = vld [vmem:[%s0 + $0x60] sm:$0xff]
  %v128 = vld [vmem:[%s0 + $0x68] sm:$0xff]
  %v129 = vld [vmem:[%s0 + $0x70] sm:$0xff]
  %v130 = vld [vmem:[%s0 + $0x78] sm:$0xff]
  %v131 = vld [vmem:[%s0 + $0x80] sm:$0xff]
  %v132 = vld [vmem:[%s0 + $0x88] sm:$0xff]
  %v133 = vld [vmem:[%s0 + $0x90] sm:$0xff]
  %v134 = vld [vmem:[%s0 + $0x98] sm:$0xff]
  %v135 = vld [vmem:[%s0 + $0xa0] sm:$0xff]
  %v136 = vld [vmem:[%s0 + $0xa8] sm:$0xff]
  %v137 = vld [vmem:[%s0 + $0xb0] sm:$0xff]
  %v138 = vld [vmem:[%s0 + $0xb8] sm:$0xff]
  %v139 = vld [vmem:[%s0 + $0xc0] sm:$0xff]
  %v140 = vld [vmem:[%s0 + $0xc8] sm:$0xff]
  %v141 = vld [vmem:[%s0 + $0xd0] sm:$0xff]
  %v142 = vld [vmem:[%s0 + $0xd8] sm:$0xff]
  %v143 = vld [vmem:[%s0 + $0xe0] sm:$0xff]
  %v144 = vld [vmem:[%s0 + $0xe8] sm:$0xff]
  %v145 = vld [vmem:[%s0 + $0xf0] sm:$0xff]
  %v146 = vld [vmem:[%s0 + $0xf8] sm:$0xff]
  %v147 = vld [vmem:[%s0 + $0x100] sm:$0xff]
  %v148 = vld [vmem:[%s0 + $0x108] sm:$0xff]
  %v149 = vld [vmem:[%s0 + $0x110] sm:$0xff]
  %v150 = vld [vmem:[%s0 + $0x118] sm:$0xff]
  %v151 = vld [vmem:[%s0 + $0x120] sm:$0xff]
  %v152 = vld [vmem:[%s0 + $0x128] sm:$0xff]
  %v153 = vld [vmem:[%s0 + $0x130] sm:$0xff]
  %v154 = vld [vmem:[%s0 + $0x138] sm:$0xff]
  %v155 = vld [vmem:[%s0 + $0x140] sm:$0xff]
  %v156 = vld [vmem:[%s0 + $0x148] sm:$0xff]
  %v157 = vld [vmem:[%s0 + $0x150] sm:$0xff]
  %v158 = vld [vmem:[%s0 + $0x158] sm:$0xff]
  %v159 = vld [vmem:[%s0 + $0x160] sm:$0xff]
  %v160 = vld [vmem:[%s0 + $0x168] sm:$0xff]
  %v161 = vld [vmem:[%s0 + $0x170] sm:$0xff]
  %v162 = vld [vmem:[%s0 + $0x178] sm:$0xff]
  %v163 = vld [vmem:[%s0 + $0x180] sm:$0xff]
  %v164 = vld [vmem:[%s0 + $0x188] sm:$0xff]
  %v165 = vld [vmem:[%s0 + $0x190] sm:$0xff]
  %v166 = vld [vmem:[%s0 + $0x198] sm:$0xff]
  %v167 = vld [vmem:[%s0 + $0x1a0] sm:$0xff]
  %v168 = vld [vmem:[%s0 + $0x1a8] sm:$0xff]
  %v169 = vld [vmem:[%s0 + $0x1b0] sm:$0xff]
  %v170 = vld [vmem:[%s0 + $0x1b8] sm:$0xff]
  %v171 = vld [vmem:[%s0 + $0x1c0] sm:$0xff]
  %v172 = vld [vmem:[%s0 + $0x1c8] sm:$0xff]
  %v173 = vld [vmem:[%s0 + $0x1d0] sm:$0xff]
  %v174 = vld [vmem:[%s0 + $0x1d8] sm:$0xff]
  %v175 = vld [vmem:[%s0 + $0x1e0] sm:$0xff]
  %v176 = vld [vmem:[%s0 + $0x1e8] sm:$0xff]
  %v177 = vld [vmem:[%s0 + $0x1f0] sm:$0xff]
  %v178 = vld [vmem:[%s0 + $0x1f8] sm:$0xff]
  %s179 = scalar_lea.vmem [#allocation2], 32
  %180 = vst [vmem:[%s179 + $0x8] sm:$0xff] %v115
  %181 = vst [vmem:[%s179 + $0x10] sm:$0xff] %v116
  %182 = vst [vmem:[%s179 + $0x28] sm:$0xff] %v117
  %183 = vst [vmem:[%s179 + $0x30] sm:$0xff] %v118
  %184 = vst [vmem:[%s179 + $0x48] sm:$0xff] %v119
  %185 = vst [vmem:[%s179 + $0x50] sm:$0xff] %v120
  %186 = vst [vmem:[%s179 + $0x68] sm:$0xff] %v121
  %187 = vst [vmem:[%s179 + $0x70] sm:$0xff] %v122
  %188 = vst [vmem:[%s179 + $0x88] sm:$0xff] %v123
  %189 = vst [vmem:[%s179 + $0x90] sm:$0xff] %v124
  %190 = vst [vmem:[%s179 + $0xa8] sm:$0xff] %v125
  %191 = vst [vmem:[%s179 + $0xb0] sm:$0xff] %v126
  %192 = vst [vmem:[%s179 + $0xc8] sm:$0xff] %v127
  %193 = vst [vmem:[%s179 + $0xd0] sm:$0xff] %v128
  %194 = vst [vmem:[%s179 + $0xe8] sm:$0xff] %v129
  %195 = vst [vmem:[%s179 + $0xf0] sm:$0xff] %v130
  %196 = vst [vmem:[%s179 + $0x108] sm:$0xff] %v131
  %197 = vst [vmem:[%s179 + $0x110] sm:$0xff] %v132
  %198 = vst [vmem:[%s179 + $0x128] sm:$0xff] %v133
  %199 = vst [vmem:[%s179 + $0x130] sm:$0xff] %v134
  %200 = vst [vmem:[%s179 + $0x148] sm:$0xff] %v135
  %201 = vst [vmem:[%s179 + $0x150] sm:$0xff] %v136
  %202 = vst [vmem:[%s179 + $0x168] sm:$0xff] %v137
  %203 = vst [vmem:[%s179 + $0x170] sm:$0xff] %v138
  %204 = vst [vmem:[%s179 + $0x188] sm:$0xff] %v139
  %205 = vst [vmem:[%s179 + $0x190] sm:$0xff] %v140
  %206 = vst [vmem:[%s179 + $0x1a8] sm:$0xff] %v141
  %207 = vst [vmem:[%s179 + $0x1b0] sm:$0xff] %v142
  %208 = vst [vmem:[%s179 + $0x1c8] sm:$0xff] %v143
  %209 = vst [vmem:[%s179 + $0x1d0] sm:$0xff] %v144
  %210 = vst [vmem:[%s179 + $0x1e8] sm:$0xff] %v145
  %211 = vst [vmem:[%s179 + $0x1f0] sm:$0xff] %v146
  %212 = vst [vmem:[%s179 + $0x248] sm:$0xff] %v147
  %213 = vst [vmem:[%s179 + $0x250] sm:$0xff] %v148
  %214 = vst [vmem:[%s179 + $0x268] sm:$0xff] %v149
  %215 = vst [vmem:[%s179 + $0x270] sm:$0xff] %v150
  %216 = vst [vmem:[%s179 + $0x288] sm:$0xff] %v151
  %217 = vst [vmem:[%s179 + $0x290] sm:$0xff] %v152
  %218 = vst [vmem:[%s179 + $0x2a8] sm:$0xff] %v153
  %219 = vst [vmem:[%s179 + $0x2b0] sm:$0xff] %v154
  %220 = vst [vmem:[%s179 + $0x2c8] sm:$0xff] %v155
  %221 = vst [vmem:[%s179 + $0x2d0] sm:$0xff] %v156
  %222 = vst [vmem:[%s179 + $0x2e8] sm:$0xff] %v157
  %223 = vst [vmem:[%s179 + $0x2f0] sm:$0xff] %v158
  %224 = vst [vmem:[%s179 + $0x308] sm:$0xff] %v159
  %225 = vst [vmem:[%s179 + $0x310] sm:$0xff] %v160
  %226 = vst [vmem:[%s179 + $0x328] sm:$0xff] %v161
  %227 = vst [vmem:[%s179 + $0x330] sm:$0xff] %v162
  %228 = vst [vmem:[%s179 + $0x348] sm:$0xff] %v163
  %229 = vst [vmem:[%s179 + $0x350] sm:$0xff] %v164
  %230 = vst [vmem:[%s179 + $0x368] sm:$0xff] %v165
  %231 = vst [vmem:[%s179 + $0x370] sm:$0xff] %v166
  %232 = vst [vmem:[%s179 + $0x388] sm:$0xff] %v167
  %233 = vst [vmem:[%s179 + $0x390] sm:$0xff] %v168
  %234 = vst [vmem:[%s179 + $0x3a8] sm:$0xff] %v169
  %235 = vst [vmem:[%s179 + $0x3b0] sm:$0xff] %v170
  %236 = vst [vmem:[%s179 + $0x3c8] sm:$0xff] %v171
  %237 = vst [vmem:[%s179 + $0x3d0] sm:$0xff] %v172
  %238 = vst [vmem:[%s179 + $0x3e8] sm:$0xff] %v173
  %239 = vst [vmem:[%s179 + $0x3f0] sm:$0xff] %v174
  %240 = vst [vmem:[%s179 + $0x408] sm:$0xff] %v175
  %241 = vst [vmem:[%s179 + $0x410] sm:$0xff] %v176
  %242 = vst [vmem:[%s179 + $0x428] sm:$0xff] %v177
  %243 = vst [vmem:[%s179 + $0x430] sm:$0xff] %v178
  %v244 = vld [vmem:[#allocation2 + $0x7] sm:$0xff]
  %v245 = vld [vmem:[#allocation2 + $0xf] sm:$0xff]
  %v246 = vld [vmem:[#allocation2 + $0x27] sm:$0xff]
  %v247 = vld [vmem:[#allocation2 + $0x2f] sm:$0xff]
  %v248 = vld [vmem:[#allocation2 + $0x47] sm:$0xff]
  %v249 = vld [vmem:[#allocation2 + $0x4f] sm:$0xff]
  %v250 = vld [vmem:[#allocation2 + $0x67] sm:$0xff]
  %v251 = vld [vmem:[#allocation2 + $0x6f] sm:$0xff]
  %v252 = vld [vmem:[#allocation2 + $0x87] sm:$0xff]
  %v253 = vld [vmem:[#allocation2 + $0x8f] sm:$0xff]
  %v254 = vld [vmem:[#allocation2 + $0xa7] sm:$0xff]
  %v255 = vld [vmem:[#allocation2 + $0xaf] sm:$0xff]
  %v256 = vld [vmem:[#allocation2 + $0xc7] sm:$0xff]
  %v257 = vld [vmem:[#allocation2 + $0xcf] sm:$0xff]
  %v258 = vld [vmem:[#allocation2 + $0xe7] sm:$0xff]
  %v259 = vld [vmem:[#allocation2 + $0xef] sm:$0xff]
  %v260 = vld [vmem:[#allocation2 + $0x107] sm:$0xff]
  %v261 = vld [vmem:[#allocation2 + $0x10f] sm:$0xff]
  %v262 = vld [vmem:[#allocation2 + $0x127] sm:$0xff]
  %v263 = vld [vmem:[#allocation2 + $0x12f] sm:$0xff]
  %v264 = vld [vmem:[#allocation2 + $0x147] sm:$0xff]
  %v265 = vld [vmem:[#allocation2 + $0x14f] sm:$0xff]
  %v266 = vld [vmem:[#allocation2 + $0x167] sm:$0xff]
  %v267 = vld [vmem:[#allocation2 + $0x16f] sm:$0xff]
  %v268 = vld [vmem:[#allocation2 + $0x187] sm:$0xff]
  %v269 = vld [vmem:[#allocation2 + $0x18f] sm:$0xff]
  %v270 = vld [vmem:[#allocation2 + $0x1a7] sm:$0xff]
  %v271 = vld [vmem:[#allocation2 + $0x1af] sm:$0xff]
  %v272 = vld [vmem:[#allocation2 + $0x1c7] sm:$0xff]
  %v273 = vld [vmem:[#allocation2 + $0x1cf] sm:$0xff]
  %v274 = vld [vmem:[#allocation2 + $0x1e7] sm:$0xff]
  %v275 = vld [vmem:[#allocation2 + $0x1ef] sm:$0xff]
  %v276 = vld [vmem:[#allocation2 + $0x247] sm:$0xff]
  %v277 = vld [vmem:[#allocation2 + $0x24f] sm:$0xff]
  %v278 = vld [vmem:[#allocation2 + $0x267] sm:$0xff]
  %v279 = vld [vmem:[#allocation2 + $0x26f] sm:$0xff]
  %v280 = vld [vmem:[#allocation2 + $0x287] sm:$0xff]
  %v281 = vld [vmem:[#allocation2 + $0x28f] sm:$0xff]
  %v282 = vld [vmem:[#allocation2 + $0x2a7] sm:$0xff]
  %v283 = vld [vmem:[#allocation2 + $0x2af] sm:$0xff]
  %v284 = vld [vmem:[#allocation2 + $0x2c7] sm:$0xff]
  %v285 = vld [vmem:[#allocation2 + $0x2cf] sm:$0xff]
  %v286 = vld [vmem:[#allocation2 + $0x2e7] sm:$0xff]
  %v287 = vld [vmem:[#allocation2 + $0x2ef] sm:$0xff]
  %v288 = vld [vmem:[#allocation2 + $0x307] sm:$0xff]
  %v289 = vld [vmem:[#allocation2 + $0x30f] sm:$0xff]
  %v290 = vld [vmem:[#allocation2 + $0x327] sm:$0xff]
  %v291 = vld [vmem:[#allocation2 + $0x32f] sm:$0xff]
  %v292 = vld [vmem:[#allocation2 + $0x347] sm:$0xff]
  %v293 = vld [vmem:[#allocation2 + $0x34f] sm:$0xff]
  %v294 = vld [vmem:[#allocation2 + $0x367] sm:$0xff]
  %v295 = vld [vmem:[#allocation2 + $0x36f] sm:$0xff]
  %v296 = vld [vmem:[#allocation2 + $0x387] sm:$0xff]
  %v297 = vld [vmem:[#allocation2 + $0x38f] sm:$0xff]
  %v298 = vld [vmem:[#allocation2 + $0x3a7] sm:$0xff]
  %v299 = vld [vmem:[#allocation2 + $0x3af] sm:$0xff]
  %v300 = vld [vmem:[#allocation2 + $0x3c7] sm:$0xff]
  %v301 = vld [vmem:[#allocation2 + $0x3cf] sm:$0xff]
  %v302 = vld [vmem:[#allocation2 + $0x3e7] sm:$0xff]
  %v303 = vld [vmem:[#allocation2 + $0x3ef] sm:$0xff]
  %v304 = vld [vmem:[#allocation2 + $0x407] sm:$0xff]
  %v305 = vld [vmem:[#allocation2 + $0x40f] sm:$0xff]
  %v306 = vld [vmem:[#allocation2 + $0x427] sm:$0xff]
  %v307 = vld [vmem:[#allocation2 + $0x42f] sm:$0xff]
  %v308 = vld [vmem:[%s1] sm:$0xff]
  %v309 = vld [vmem:[%s1 + $0x8] sm:$0xff]
  %v310 = vld [vmem:[%s1 + $0x10] sm:$0xff]
  %v311 = vld [vmem:[%s1 + $0x18] sm:$0xff]
  %v312 = vld [vmem:[%s1 + $0x20] sm:$0xff]
  %v313 = vld [vmem:[%s1 + $0x28] sm:$0xff]
  %v314 = vld [vmem:[%s1 + $0x30] sm:$0xff]
  %v315 = vld [vmem:[%s1 + $0x38] sm:$0xff]
  %v316 = vld [vmem:[%s1 + $0x40] sm:$0xff]
  %v317 = vld [vmem:[%s1 + $0x48] sm:$0xff]
  %v318 = vld [vmem:[%s1 + $0x50] sm:$0xff]
  %v319 = vld [vmem:[%s1 + $0x58] sm:$0xff]
  %v320 = vld [vmem:[%s1 + $0x60] sm:$0xff]
  %v321 = vld [vmem:[%s1 + $0x68] sm:$0xff]
  %v322 = vld [vmem:[%s1 + $0x70] sm:$0xff]
  %v323 = vld [vmem:[%s1 + $0x78] sm:$0xff]
  %v324 = vld [vmem:[#allocation2 + $0x8] sm:$0xff]
  %v325 = vld [vmem:[#allocation2 + $0x10] sm:$0xff]
  %v326 = vld [vmem:[#allocation2 + $0x28] sm:$0xff]
  %v327 = vld [vmem:[#allocation2 + $0x30] sm:$0xff]
  %v328 = vld [vmem:[#allocation2 + $0x48] sm:$0xff]
  %v329 = vld [vmem:[#allocation2 + $0x50] sm:$0xff]
  %v330 = vld [vmem:[#allocation2 + $0x68] sm:$0xff]
  %v331 = vld [vmem:[#allocation2 + $0x70] sm:$0xff]
  %v332 = vld [vmem:[#allocation2 + $0x88] sm:$0xff]
  %v333 = vld [vmem:[#allocation2 + $0x90] sm:$0xff]
  %v334 = vld [vmem:[#allocation2 + $0xa8] sm:$0xff]
  %v335 = vld [vmem:[#allocation2 + $0xb0] sm:$0xff]
  %v336 = vld [vmem:[#allocation2 + $0xc8] sm:$0xff]
  %v337 = vld [vmem:[#allocation2 + $0xd0] sm:$0xff]
  %v338 = vld [vmem:[#allocation2 + $0xe8] sm:$0xff]
  %v339 = vld [vmem:[#allocation2 + $0xf0] sm:$0xff]
  %v340 = vld [vmem:[#allocation2 + $0x108] sm:$0xff]
  %v341 = vld [vmem:[#allocation2 + $0x110] sm:$0xff]
  %v342 = vld [vmem:[#allocation2 + $0x128] sm:$0xff]
  %v343 = vld [vmem:[#allocation2 + $0x130] sm:$0xff]
  %v344 = vld [vmem:[#allocation2 + $0x148] sm:$0xff]
  %v345 = vld [vmem:[#allocation2 + $0x150] sm:$0xff]
  %v346 = vld [vmem:[#allocation2 + $0x168] sm:$0xff]
  %v347 = vld [vmem:[#allocation2 + $0x170] sm:$0xff]
  %v348 = vld [vmem:[#allocation2 + $0x188] sm:$0xff]
  %v349 = vld [vmem:[#allocation2 + $0x190] sm:$0xff]
  %v350 = vld [vmem:[#allocation2 + $0x1a8] sm:$0xff]
  %v351 = vld [vmem:[#allocation2 + $0x1b0] sm:$0xff]
  %v352 = vld [vmem:[#allocation2 + $0x1c8] sm:$0xff]
  %v353 = vld [vmem:[#allocation2 + $0x1d0] sm:$0xff]
  %v354 = vld [vmem:[#allocation2 + $0x1e8] sm:$0xff]
  %v355 = vld [vmem:[#allocation2 + $0x1f0] sm:$0xff]
  %v356 = vld [vmem:[#allocation2 + $0x248] sm:$0xff]
  %v357 = vld [vmem:[#allocation2 + $0x250] sm:$0xff]
  %v358 = vld [vmem:[#allocation2 + $0x268] sm:$0xff]
  %v359 = vld [vmem:[#allocation2 + $0x270] sm:$0xff]
  %v360 = vld [vmem:[#allocation2 + $0x288] sm:$0xff]
  %v361 = vld [vmem:[#allocation2 + $0x290] sm:$0xff]
  %v362 = vld [vmem:[#allocation2 + $0x2a8] sm:$0xff]
  %v363 = vld [vmem:[#allocation2 + $0x2b0] sm:$0xff]
  %v364 = vld [vmem:[#allocation2 + $0x2c8] sm:$0xff]
  %v365 = vld [vmem:[#allocation2 + $0x2d0] sm:$0xff]
  %v366 = vld [vmem:[#allocation2 + $0x2e8] sm:$0xff]
  %v367 = vld [vmem:[#allocation2 + $0x2f0] sm:$0xff]
  %v368 = vld [vmem:[#allocation2 + $0x308] sm:$0xff]
  %v369 = vld [vmem:[#allocation2 + $0x310] sm:$0xff]
  %v370 = vld [vmem:[#allocation2 + $0x328] sm:$0xff]
  %v371 = vld [vmem:[#allocation2 + $0x330] sm:$0xff]
  %v372 = vld [vmem:[#allocation2 + $0x348] sm:$0xff]
  %v373 = vld [vmem:[#allocation2 + $0x350] sm:$0xff]
  %v374 = vld [vmem:[#allocation2 + $0x368] sm:$0xff]
  %v375 = vld [vmem:[#allocation2 + $0x370] sm:$0xff]
  %v376 = vld [vmem:[#allocation2 + $0x388] sm:$0xff]
  %v377 = vld [vmem:[#allocation2 + $0x390] sm:$0xff]
  %v378 = vld [vmem:[#allocation2 + $0x3a8] sm:$0xff]
  %v379 = vld [vmem:[#allocation2 + $0x3b0] sm:$0xff]
  %v380 = vld [vmem:[#allocation2 + $0x3c8] sm:$0xff]
  %v381 = vld [vmem:[#allocation2 + $0x3d0] sm:$0xff]
  %v382 = vld [vmem:[#allocation2 + $0x3e8] sm:$0xff]
  %v383 = vld [vmem:[#allocation2 + $0x3f0] sm:$0xff]
  %v384 = vld [vmem:[#allocation2 + $0x408] sm:$0xff]
  %v385 = vld [vmem:[#allocation2 + $0x410] sm:$0xff]
  %v386 = vld [vmem:[#allocation2 + $0x428] sm:$0xff]
  %v387 = vld [vmem:[#allocation2 + $0x430] sm:$0xff]
  %s388 = scalar_lea.vmem %s1, 128
  %v389 = vld [vmem:[%s388] sm:$0xff]
  %v390 = vld [vmem:[%s388 + $0x8] sm:$0xff]
  %v391 = vld [vmem:[%s388 + $0x10] sm:$0xff]
  %v392 = vld [vmem:[%s388 + $0x18] sm:$0xff]
  %v393 = vld [vmem:[%s388 + $0x20] sm:$0xff]
  %v394 = vld [vmem:[%s388 + $0x28] sm:$0xff]
  %v395 = vld [vmem:[%s388 + $0x30] sm:$0xff]
  %v396 = vld [vmem:[%s388 + $0x38] sm:$0xff]
  %v397 = vld [vmem:[%s388 + $0x40] sm:$0xff]
  %v398 = vld [vmem:[%s388 + $0x48] sm:$0xff]
  %v399 = vld [vmem:[%s388 + $0x50] sm:$0xff]
  %v400 = vld [vmem:[%s388 + $0x58] sm:$0xff]
  %v401 = vld [vmem:[%s388 + $0x60] sm:$0xff]
  %v402 = vld [vmem:[%s388 + $0x68] sm:$0xff]
  %v403 = vld [vmem:[%s388 + $0x70] sm:$0xff]
  %v404 = vld [vmem:[%s388 + $0x78] sm:$0xff]
  %405 = vmatpush.msra.mxu0 %v404
  %406 = vmatpush.msra.mxu0 %v403
  %407 = vmatpush.msra.mxu0 %v402
  %408 = vmatpush.msra.mxu0 %v401
  %409 = vmatpush.msra.mxu0 %v400
  %410 = vmatpush.msra.mxu0 %v399
  %411 = vmatpush.msra.mxu0 %v398
  %412 = vmatpush.msra.mxu0 %v397
  %413 = vmatpush.msra.mxu0 %v396
  %414 = vmatpush.msra.mxu0 %v395
  %415 = vmatpush.msra.mxu0 %v394
  %416 = vmatpush.msra.mxu0 %v393
  %417 = vmatpush.msra.mxu0 %v392
  %418 = vmatpush.msra.mxu0 %v391
  %419 = vmatpush.msra.mxu0 %v390
  %420 = vmatpush.msra.mxu0 %v389
  %421 = vmatmul.f32.gmra.mxu0 %v324
  %v422 = vpop.f32.mrf.mxu0
  %v423 = vadd.f32 0.0, %v422
  %424 = vmatmul.f32.gmra.mxu0 %v325
  %v425 = vpop.f32.mrf.mxu0
  %v426 = vadd.f32 0.0, %v425
  %427 = vmatmul.f32.gmra.mxu0 %v326
  %v428 = vpop.f32.mrf.mxu0
  %v429 = vadd.f32 0.0, %v428
  %430 = vmatmul.f32.gmra.mxu0 %v327
  %v431 = vpop.f32.mrf.mxu0
  %v432 = vadd.f32 0.0, %v431
  %433 = vmatmul.f32.gmra.mxu0 %v328
  %v434 = vpop.f32.mrf.mxu0
  %v435 = vadd.f32 0.0, %v434
  %436 = vmatmul.f32.gmra.mxu0 %v329
  %v437 = vpop.f32.mrf.mxu0
  %v438 = vadd.f32 0.0, %v437
  %439 = vmatmul.f32.gmra.mxu0 %v330
  %v440 = vpop.f32.mrf.mxu0
  %v441 = vadd.f32 0.0, %v440
  %442 = vmatmul.f32.gmra.mxu0 %v331
  %v443 = vpop.f32.mrf.mxu0
  %v444 = vadd.f32 0.0, %v443
  %445 = vmatmul.f32.gmra.mxu0 %v332
  %v446 = vpop.f32.mrf.mxu0
  %v447 = vadd.f32 0.0, %v446
  %448 = vmatmul.f32.gmra.mxu0 %v333
  %v449 = vpop.f32.mrf.mxu0
  %v450 = vadd.f32 0.0, %v449
  %451 = vmatmul.f32.gmra.mxu0 %v334
  %v452 = vpop.f32.mrf.mxu0
  %v453 = vadd.f32 0.0, %v452
  %454 = vmatmul.f32.gmra.mxu0 %v335
  %v455 = vpop.f32.mrf.mxu0
  %v456 = vadd.f32 0.0, %v455
  %457 = vmatmul.f32.gmra.mxu0 %v336
  %v458 = vpop.f32.mrf.mxu0
  %v459 = vadd.f32 0.0, %v458
  %460 = vmatmul.f32.gmra.mxu0 %v337
  %v461 = vpop.f32.mrf.mxu0
  %v462 = vadd.f32 0.0, %v461
  %463 = vmatmul.f32.gmra.mxu0 %v338
  %v464 = vpop.f32.mrf.mxu0
  %v465 = vadd.f32 0.0, %v464
  %466 = vmatmul.f32.gmra.mxu0 %v339
  %v467 = vpop.f32.mrf.mxu0
  %v468 = vadd.f32 0.0, %v467
  %469 = vmatmul.f32.gmra.mxu0 %v340
  %v470 = vpop.f32.mrf.mxu0
  %v471 = vadd.f32 0.0, %v470
  %472 = vmatmul.f32.gmra.mxu0 %v341
  %v473 = vpop.f32.mrf.mxu0
  %v474 = vadd.f32 0.0, %v473
  %475 = vmatmul.f32.gmra.mxu0 %v342
  %v476 = vpop.f32.mrf.mxu0
  %v477 = vadd.f32 0.0, %v476
  %478 = vmatmul.f32.gmra.mxu0 %v343
  %v479 = vpop.f32.mrf.mxu0
  %v480 = vadd.f32 0.0, %v479
  %481 = vmatmul.f32.gmra.mxu0 %v344
  %v482 = vpop.f32.mrf.mxu0
  %v483 = vadd.f32 0.0, %v482
  %484 = vmatmul.f32.gmra.mxu0 %v345
  %v485 = vpop.f32.mrf.mxu0
  %v486 = vadd.f32 0.0, %v485
  %487 = vmatmul.f32.gmra.mxu0 %v346
  %v488 = vpop.f32.mrf.mxu0
  %v489 = vadd.f32 0.0, %v488
  %490 = vmatmul.f32.gmra.mxu0 %v347
  %v491 = vpop.f32.mrf.mxu0
  %v492 = vadd.f32 0.0, %v491
  %493 = vmatmul.f32.gmra.mxu0 %v348
  %v494 = vpop.f32.mrf.mxu0
  %v495 = vadd.f32 0.0, %v494
  %496 = vmatmul.f32.gmra.mxu0 %v349
  %v497 = vpop.f32.mrf.mxu0
  %v498 = vadd.f32 0.0, %v497
  %499 = vmatmul.f32.gmra.mxu0 %v350
  %v500 = vpop.f32.mrf.mxu0
  %v501 = vadd.f32 0.0, %v500
  %502 = vmatmul.f32.gmra.mxu0 %v351
  %v503 = vpop.f32.mrf.mxu0
  %v504 = vadd.f32 0.0, %v503
  %505 = vmatmul.f32.gmra.mxu0 %v352
  %v506 = vpop.f32.mrf.mxu0
  %v507 = vadd.f32 0.0, %v506
  %508 = vmatmul.f32.gmra.mxu0 %v353
  %v509 = vpop.f32.mrf.mxu0
  %v510 = vadd.f32 0.0, %v509
  %511 = vmatmul.f32.gmra.mxu0 %v354
  %v512 = vpop.f32.mrf.mxu0
  %v513 = vadd.f32 0.0, %v512
  %514 = vmatmul.f32.gmra.mxu0 %v355
  %v515 = vpop.f32.mrf.mxu0
  %v516 = vadd.f32 0.0, %v515
  %517 = vmatmul.f32.gmra.mxu0 %v356
  %v518 = vpop.f32.mrf.mxu0
  %v519 = vadd.f32 0.0, %v518
  %520 = vmatmul.f32.gmra.mxu0 %v357
  %v521 = vpop.f32.mrf.mxu0
  %v522 = vadd.f32 0.0, %v521
  %523 = vmatmul.f32.gmra.mxu0 %v358
  %v524 = vpop.f32.mrf.mxu0
  %v525 = vadd.f32 0.0, %v524
  %526 = vmatmul.f32.gmra.mxu0 %v359
  %v527 = vpop.f32.mrf.mxu0
  %v528 = vadd.f32 0.0, %v527
  %529 = vmatmul.f32.gmra.mxu0 %v360
  %v530 = vpop.f32.mrf.mxu0
  %v531 = vadd.f32 0.0, %v530
  %532 = vmatmul.f32.gmra.mxu0 %v361
  %v533 = vpop.f32.mrf.mxu0
  %v534 = vadd.f32 0.0, %v533
  %535 = vmatmul.f32.gmra.mxu0 %v362
  %v536 = vpop.f32.mrf.mxu0
  %v537 = vadd.f32 0.0, %v536
  %538 = vmatmul.f32.gmra.mxu0 %v363
  %v539 = vpop.f32.mrf.mxu0
  %v540 = vadd.f32 0.0, %v539
  %541 = vmatmul.f32.gmra.mxu0 %v364
  %v542 = vpop.f32.mrf.mxu0
  %v543 = vadd.f32 0.0, %v542
  %544 = vmatmul.f32.gmra.mxu0 %v365
  %v545 = vpop.f32.mrf.mxu0
  %v546 = vadd.f32 0.0, %v545
  %547 = vmatmul.f32.gmra.mxu0 %v366
  %v548 = vpop.f32.mrf.mxu0
  %v549 = vadd.f32 0.0, %v548
  %550 = vmatmul.f32.gmra.mxu0 %v367
  %v551 = vpop.f32.mrf.mxu0
  %v552 = vadd.f32 0.0, %v551
  %553 = vmatmul.f32.gmra.mxu0 %v368
  %v554 = vpop.f32.mrf.mxu0
  %v555 = vadd.f32 0.0, %v554
  %556 = vmatmul.f32.gmra.mxu0 %v369
  %v557 = vpop.f32.mrf.mxu0
  %v558 = vadd.f32 0.0, %v557
  %559 = vmatmul.f32.gmra.mxu0 %v370
  %v560 = vpop.f32.mrf.mxu0
  %v561 = vadd.f32 0.0, %v560
  %562 = vmatmul.f32.gmra.mxu0 %v371
  %v563 = vpop.f32.mrf.mxu0
  %v564 = vadd.f32 0.0, %v563
  %565 = vmatmul.f32.gmra.mxu0 %v372
  %v566 = vpop.f32.mrf.mxu0
  %v567 = vadd.f32 0.0, %v566
  %568 = vmatmul.f32.gmra.mxu0 %v373
  %v569 = vpop.f32.mrf.mxu0
  %v570 = vadd.f32 0.0, %v569
  %571 = vmatmul.f32.gmra.mxu0 %v374
  %v572 = vpop.f32.mrf.mxu0
  %v573 = vadd.f32 0.0, %v572
  %574 = vmatmul.f32.gmra.mxu0 %v375
  %v575 = vpop.f32.mrf.mxu0
  %v576 = vadd.f32 0.0, %v575
  %577 = vmatmul.f32.gmra.mxu0 %v376
  %v578 = vpop.f32.mrf.mxu0
  %v579 = vadd.f32 0.0, %v578
  %580 = vmatmul.f32.gmra.mxu0 %v377
  %v581 = vpop.f32.mrf.mxu0
  %v582 = vadd.f32 0.0, %v581
  %583 = vmatmul.f32.gmra.mxu0 %v378
  %v584 = vpop.f32.mrf.mxu0
  %v585 = vadd.f32 0.0, %v584
  %586 = vmatmul.f32.gmra.mxu0 %v379
  %v587 = vpop.f32.mrf.mxu0
  %v588 = vadd.f32 0.0, %v587
  %589 = vmatmul.f32.gmra.mxu0 %v380
  %v590 = vpop.f32.mrf.mxu0
  %v591 = vadd.f32 0.0, %v590
  %592 = vmatmul.f32.gmra.mxu0 %v381
  %v593 = vpop.f32.mrf.mxu0
  %v594 = vadd.f32 0.0, %v593
  %595 = vmatmul.f32.gmra.mxu0 %v382
  %v596 = vpop.f32.mrf.mxu0
  %v597 = vadd.f32 0.0, %v596
  %598 = vmatmul.f32.gmra.mxu0 %v383
  %v599 = vpop.f32.mrf.mxu0
  %v600 = vadd.f32 0.0, %v599
  %601 = vmatmul.f32.gmra.mxu0 %v384
  %v602 = vpop.f32.mrf.mxu0
  %v603 = vadd.f32 0.0, %v602
  %604 = vmatmul.f32.gmra.mxu0 %v385
  %v605 = vpop.f32.mrf.mxu0
  %v606 = vadd.f32 0.0, %v605
  %607 = vmatmul.f32.gmra.mxu0 %v386
  %v608 = vpop.f32.mrf.mxu0
  %v609 = vadd.f32 0.0, %v608
  %610 = vmatmul.f32.gmra.mxu0 %v387
  %v611 = vpop.f32.mrf.mxu0
  %v612 = vadd.f32 0.0, %v611
  %613 = vdwg.mxu0
  %614 = vmatpush.msra.mxu0 %v323
  %615 = vmatpush.msra.mxu0 %v322
  %616 = vmatpush.msra.mxu0 %v321
  %617 = vmatpush.msra.mxu0 %v320
  %618 = vmatpush.msra.mxu0 %v319
  %619 = vmatpush.msra.mxu0 %v318
  %620 = vmatpush.msra.mxu0 %v317
  %621 = vmatpush.msra.mxu0 %v316
  %622 = vmatpush.msra.mxu0 %v315
  %623 = vmatpush.msra.mxu0 %v314
  %624 = vmatpush.msra.mxu0 %v313
  %625 = vmatpush.msra.mxu0 %v312
  %626 = vmatpush.msra.mxu0 %v311
  %627 = vmatpush.msra.mxu0 %v310
  %628 = vmatpush.msra.mxu0 %v309
  %629 = vmatpush.msra.mxu0 %v308
  %630 = vmatmul.f32.gmra.mxu0 %v244
  %v631 = vpop.f32.mrf.mxu0
  %v632 = vadd.f32 %v423, %v631
  %633 = vmatmul.f32.gmra.mxu0 %v245
  %v634 = vpop.f32.mrf.mxu0
  %v635 = vadd.f32 %v426, %v634
  %636 = vmatmul.f32.gmra.mxu0 %v246
  %v637 = vpop.f32.mrf.mxu0
  %v638 = vadd.f32 %v429, %v637
  %639 = vmatmul.f32.gmra.mxu0 %v247
  %v640 = vpop.f32.mrf.mxu0
  %v641 = vadd.f32 %v432, %v640
  %642 = vmatmul.f32.gmra.mxu0 %v248
  %v643 = vpop.f32.mrf.mxu0
  %v644 = vadd.f32 %v435, %v643
  %645 = vmatmul.f32.gmra.mxu0 %v249
  %v646 = vpop.f32.mrf.mxu0
  %v647 = vadd.f32 %v438, %v646
  %648 = vmatmul.f32.gmra.mxu0 %v250
  %v649 = vpop.f32.mrf.mxu0
  %v650 = vadd.f32 %v441, %v649
  %651 = vmatmul.f32.gmra.mxu0 %v251
  %v652 = vpop.f32.mrf.mxu0
  %v653 = vadd.f32 %v444, %v652
  %654 = vmatmul.f32.gmra.mxu0 %v252
  %v655 = vpop.f32.mrf.mxu0
  %v656 = vadd.f32 %v447, %v655
  %657 = vmatmul.f32.gmra.mxu0 %v253
  %v658 = vpop.f32.mrf.mxu0
  %v659 = vadd.f32 %v450, %v658
  %660 = vmatmul.f32.gmra.mxu0 %v254
  %v661 = vpop.f32.mrf.mxu0
  %v662 = vadd.f32 %v453, %v661
  %663 = vmatmul.f32.gmra.mxu0 %v255
  %v664 = vpop.f32.mrf.mxu0
  %v665 = vadd.f32 %v456, %v664
  %666 = vmatmul.f32.gmra.mxu0 %v256
  %v667 = vpop.f32.mrf.mxu0
  %v668 = vadd.f32 %v459, %v667
  %669 = vmatmul.f32.gmra.mxu0 %v257
  %v670 = vpop.f32.mrf.mxu0
  %v671 = vadd.f32 %v462, %v670
  %672 = vmatmul.f32.gmra.mxu0 %v258
  %v673 = vpop.f32.mrf.mxu0
  %v674 = vadd.f32 %v465, %v673
  %675 = vmatmul.f32.gmra.mxu0 %v259
  %v676 = vpop.f32.mrf.mxu0
  %v677 = vadd.f32 %v468, %v676
  %678 = vmatmul.f32.gmra.mxu0 %v260
  %v679 = vpop.f32.mrf.mxu0
  %v680 = vadd.f32 %v471, %v679
  %681 = vmatmul.f32.gmra.mxu0 %v261
  %v682 = vpop.f32.mrf.mxu0
  %v683 = vadd.f32 %v474, %v682
  %684 = vmatmul.f32.gmra.mxu0 %v262
  %v685 = vpop.f32.mrf.mxu0
  %v686 = vadd.f32 %v477, %v685
  %687 = vmatmul.f32.gmra.mxu0 %v263
  %v688 = vpop.f32.mrf.mxu0
  %v689 = vadd.f32 %v480, %v688
  %690 = vmatmul.f32.gmra.mxu0 %v264
  %v691 = vpop.f32.mrf.mxu0
  %v692 = vadd.f32 %v483, %v691
  %693 = vmatmul.f32.gmra.mxu0 %v265
  %v694 = vpop.f32.mrf.mxu0
  %v695 = vadd.f32 %v486, %v694
  %696 = vmatmul.f32.gmra.mxu0 %v266
  %v697 = vpop.f32.mrf.mxu0
  %v698 = vadd.f32 %v489, %v697
  %699 = vmatmul.f32.gmra.mxu0 %v267
  %v700 = vpop.f32.mrf.mxu0
  %v701 = vadd.f32 %v492, %v700
  %702 = vmatmul.f32.gmra.mxu0 %v268
  %v703 = vpop.f32.mrf.mxu0
  %v704 = vadd.f32 %v495, %v703
  %705 = vmatmul.f32.gmra.mxu0 %v269
  %v706 = vpop.f32.mrf.mxu0
  %v707 = vadd.f32 %v498, %v706
  %708 = vmatmul.f32.gmra.mxu0 %v270
  %v709 = vpop.f32.mrf.mxu0
  %v710 = vadd.f32 %v501, %v709
  %711 = vmatmul.f32.gmra.mxu0 %v271
  %v712 = vpop.f32.mrf.mxu0
  %v713 = vadd.f32 %v504, %v712
  %714 = vmatmul.f32.gmra.mxu0 %v272
  %v715 = vpop.f32.mrf.mxu0
  %v716 = vadd.f32 %v507, %v715
  %717 = vmatmul.f32.gmra.mxu0 %v273
  %v718 = vpop.f32.mrf.mxu0
  %v719 = vadd.f32 %v510, %v718
  %720 = vmatmul.f32.gmra.mxu0 %v274
  %v721 = vpop.f32.mrf.mxu0
  %v722 = vadd.f32 %v513, %v721
  %723 = vmatmul.f32.gmra.mxu0 %v275
  %v724 = vpop.f32.mrf.mxu0
  %v725 = vadd.f32 %v516, %v724
  %726 = vmatmul.f32.gmra.mxu0 %v276
  %v727 = vpop.f32.mrf.mxu0
  %v728 = vadd.f32 %v519, %v727
  %729 = vmatmul.f32.gmra.mxu0 %v277
  %v730 = vpop.f32.mrf.mxu0
  %v731 = vadd.f32 %v522, %v730
  %732 = vmatmul.f32.gmra.mxu0 %v278
  %v733 = vpop.f32.mrf.mxu0
  %v734 = vadd.f32 %v525, %v733
  %735 = vmatmul.f32.gmra.mxu0 %v279
  %v736 = vpop.f32.mrf.mxu0
  %v737 = vadd.f32 %v528, %v736
  %738 = vmatmul.f32.gmra.mxu0 %v280
  %v739 = vpop.f32.mrf.mxu0
  %v740 = vadd.f32 %v531, %v739
  %741 = vmatmul.f32.gmra.mxu0 %v281
  %v742 = vpop.f32.mrf.mxu0
  %v743 = vadd.f32 %v534, %v742
  %744 = vmatmul.f32.gmra.mxu0 %v282
  %v745 = vpop.f32.mrf.mxu0
  %v746 = vadd.f32 %v537, %v745
  %747 = vmatmul.f32.gmra.mxu0 %v283
  %v748 = vpop.f32.mrf.mxu0
  %v749 = vadd.f32 %v540, %v748
  %750 = vmatmul.f32.gmra.mxu0 %v284
  %v751 = vpop.f32.mrf.mxu0
  %v752 = vadd.f32 %v543, %v751
  %753 = vmatmul.f32.gmra.mxu0 %v285
  %v754 = vpop.f32.mrf.mxu0
  %v755 = vadd.f32 %v546, %v754
  %756 = vmatmul.f32.gmra.mxu0 %v286
  %v757 = vpop.f32.mrf.mxu0
  %v758 = vadd.f32 %v549, %v757
  %759 = vmatmul.f32.gmra.mxu0 %v287
  %v760 = vpop.f32.mrf.mxu0
  %v761 = vadd.f32 %v552, %v760
  %762 = vmatmul.f32.gmra.mxu0 %v288
  %v763 = vpop.f32.mrf.mxu0
  %v764 = vadd.f32 %v555, %v763
  %765 = vmatmul.f32.gmra.mxu0 %v289
  %v766 = vpop.f32.mrf.mxu0
  %v767 = vadd.f32 %v558, %v766
  %768 = vmatmul.f32.gmra.mxu0 %v290
  %v769 = vpop.f32.mrf.mxu0
  %v770 = vadd.f32 %v561, %v769
  %771 = vmatmul.f32.gmra.mxu0 %v291
  %v772 = vpop.f32.mrf.mxu0
  %v773 = vadd.f32 %v564, %v772
  %774 = vmatmul.f32.gmra.mxu0 %v292
  %v775 = vpop.f32.mrf.mxu0
  %v776 = vadd.f32 %v567, %v775
  %777 = vmatmul.f32.gmra.mxu0 %v293
  %v778 = vpop.f32.mrf.mxu0
  %v779 = vadd.f32 %v570, %v778
  %780 = vmatmul.f32.gmra.mxu0 %v294
  %v781 = vpop.f32.mrf.mxu0
  %v782 = vadd.f32 %v573, %v781
  %783 = vmatmul.f32.gmra.mxu0 %v295
  %v784 = vpop.f32.mrf.mxu0
  %v785 = vadd.f32 %v576, %v784
  %786 = vmatmul.f32.gmra.mxu0 %v296
  %v787 = vpop.f32.mrf.mxu0
  %v788 = vadd.f32 %v579, %v787
  %789 = vmatmul.f32.gmra.mxu0 %v297
  %v790 = vpop.f32.mrf.mxu0
  %v791 = vadd.f32 %v582, %v790
  %792 = vmatmul.f32.gmra.mxu0 %v298
  %v793 = vpop.f32.mrf.mxu0
  %v794 = vadd.f32 %v585, %v793
  %795 = vmatmul.f32.gmra.mxu0 %v299
  %v796 = vpop.f32.mrf.mxu0
  %v797 = vadd.f32 %v588, %v796
  %798 = vmatmul.f32.gmra.mxu0 %v300
  %v799 = vpop.f32.mrf.mxu0
  %v800 = vadd.f32 %v591, %v799
  %801 = vmatmul.f32.gmra.mxu0 %v301
  %v802 = vpop.f32.mrf.mxu0
  %v803 = vadd.f32 %v594, %v802
  %804 = vmatmul.f32.gmra.mxu0 %v302
  %v805 = vpop.f32.mrf.mxu0
  %v806 = vadd.f32 %v597, %v805
  %807 = vmatmul.f32.gmra.mxu0 %v303
  %v808 = vpop.f32.mrf.mxu0
  %v809 = vadd.f32 %v600, %v808
  %810 = vmatmul.f32.gmra.mxu0 %v304
  %v811 = vpop.f32.mrf.mxu0
  %v812 = vadd.f32 %v603, %v811
  %813 = vmatmul.f32.gmra.mxu0 %v305
  %v814 = vpop.f32.mrf.mxu0
  %v815 = vadd.f32 %v606, %v814
  %816 = vmatmul.f32.gmra.mxu0 %v306
  %v817 = vpop.f32.mrf.mxu0
  %v818 = vadd.f32 %v609, %v817
  %819 = vmatmul.f32.gmra.mxu0 %v307
  %v820 = vpop.f32.mrf.mxu0
  %v821 = vadd.f32 %v612, %v820
  %822 = vdwg.mxu0
  %v823 = vld [vmem:[#allocation2 + $0x9] sm:$0xff]
  %v824 = vld [vmem:[#allocation2 + $0x11] sm:$0xff]
  %v825 = vld [vmem:[#allocation2 + $0x29] sm:$0xff]
  %v826 = vld [vmem:[#allocation2 + $0x31] sm:$0xff]
  %v827 = vld [vmem:[#allocation2 + $0x49] sm:$0xff]
  %v828 = vld [vmem:[#allocation2 + $0x51] sm:$0xff]
  %v829 = vld [vmem:[#allocation2 + $0x69] sm:$0xff]
  %v830 = vld [vmem:[#allocation2 + $0x71] sm:$0xff]
  %v831 = vld [vmem:[#allocation2 + $0x89] sm:$0xff]
  %v832 = vld [vmem:[#allocation2 + $0x91] sm:$0xff]
  %v833 = vld [vmem:[#allocation2 + $0xa9] sm:$0xff]
  %v834 = vld [vmem:[#allocation2 + $0xb1] sm:$0xff]
  %v835 = vld [vmem:[#allocation2 + $0xc9] sm:$0xff]
  %v836 = vld [vmem:[#allocation2 + $0xd1] sm:$0xff]
  %v837 = vld [vmem:[#allocation2 + $0xe9] sm:$0xff]
  %v838 = vld [vmem:[#allocation2 + $0xf1] sm:$0xff]
  %v839 = vld [vmem:[#allocation2 + $0x109] sm:$0xff]
  %v840 = vld [vmem:[#allocation2 + $0x111] sm:$0xff]
  %v841 = vld [vmem:[#allocation2 + $0x129] sm:$0xff]
  %v842 = vld [vmem:[#allocation2 + $0x131] sm:$0xff]
  %v843 = vld [vmem:[#allocation2 + $0x149] sm:$0xff]
  %v844 = vld [vmem:[#allocation2 + $0x151] sm:$0xff]
  %v845 = vld [vmem:[#allocation2 + $0x169] sm:$0xff]
  %v846 = vld [vmem:[#allocation2 + $0x171] sm:$0xff]
  %v847 = vld [vmem:[#allocation2 + $0x189] sm:$0xff]
  %v848 = vld [vmem:[#allocation2 + $0x191] sm:$0xff]
  %v849 = vld [vmem:[#allocation2 + $0x1a9] sm:$0xff]
  %v850 = vld [vmem:[#allocation2 + $0x1b1] sm:$0xff]
  %v851 = vld [vmem:[#allocation2 + $0x1c9] sm:$0xff]
  %v852 = vld [vmem:[#allocation2 + $0x1d1] sm:$0xff]
  %v853 = vld [vmem:[#allocation2 + $0x1e9] sm:$0xff]
  %v854 = vld [vmem:[#allocation2 + $0x1f1] sm:$0xff]
  %v855 = vld [vmem:[#allocation2 + $0x249] sm:$0xff]
  %v856 = vld [vmem:[#allocation2 + $0x251] sm:$0xff]
  %v857 = vld [vmem:[#allocation2 + $0x269] sm:$0xff]
  %v858 = vld [vmem:[#allocation2 + $0x271] sm:$0xff]
  %v859 = vld [vmem:[#allocation2 + $0x289] sm:$0xff]
  %v860 = vld [vmem:[#allocation2 + $0x291] sm:$0xff]
  %v861 = vld [vmem:[#allocation2 + $0x2a9] sm:$0xff]
  %v862 = vld [vmem:[#allocation2 + $0x2b1] sm:$0xff]
  %v863 = vld [vmem:[#allocation2 + $0x2c9] sm:$0xff]
  %v864 = vld [vmem:[#allocation2 + $0x2d1] sm:$0xff]
  %v865 = vld [vmem:[#allocation2 + $0x2e9] sm:$0xff]
  %v866 = vld [vmem:[#allocation2 + $0x2f1] sm:$0xff]
  %v867 = vld [vmem:[#allocation2 + $0x309] sm:$0xff]
  %v868 = vld [vmem:[#allocation2 + $0x311] sm:$0xff]
  %v869 = vld [vmem:[#allocation2 + $0x329] sm:$0xff]
  %v870 = vld [vmem:[#allocation2 + $0x331] sm:$0xff]
  %v871 = vld [vmem:[#allocation2 + $0x349] sm:$0xff]
  %v872 = vld [vmem:[#allocation2 + $0x351] sm:$0xff]
  %v873 = vld [vmem:[#allocation2 + $0x369] sm:$0xff]
  %v874 = vld [vmem:[#allocation2 + $0x371] sm:$0xff]
  %v875 = vld [vmem:[#allocation2 + $0x389] sm:$0xff]
  %v876 = vld [vmem:[#allocation2 + $0x391] sm:$0xff]
  %v877 = vld [vmem:[#allocation2 + $0x3a9] sm:$0xff]
  %v878 = vld [vmem:[#allocation2 + $0x3b1] sm:$0xff]
  %v879 = vld [vmem:[#allocation2 + $0x3c9] sm:$0xff]
  %v880 = vld [vmem:[#allocation2 + $0x3d1] sm:$0xff]
  %v881 = vld [vmem:[#allocation2 + $0x3e9] sm:$0xff]
  %v882 = vld [vmem:[#allocation2 + $0x3f1] sm:$0xff]
  %v883 = vld [vmem:[#allocation2 + $0x409] sm:$0xff]
  %v884 = vld [vmem:[#allocation2 + $0x411] sm:$0xff]
  %v885 = vld [vmem:[#allocation2 + $0x429] sm:$0xff]
  %v886 = vld [vmem:[#allocation2 + $0x431] sm:$0xff]
  %s887 = scalar_lea.vmem %s1, 256
  %v888 = vld [vmem:[%s887] sm:$0xff]
  %v889 = vld [vmem:[%s887 + $0x8] sm:$0xff]
  %v890 = vld [vmem:[%s887 + $0x10] sm:$0xff]
  %v891 = vld [vmem:[%s887 + $0x18] sm:$0xff]
  %v892 = vld [vmem:[%s887 + $0x20] sm:$0xff]
  %v893 = vld [vmem:[%s887 + $0x28] sm:$0xff]
  %v894 = vld [vmem:[%s887 + $0x30] sm:$0xff]
  %v895 = vld [vmem:[%s887 + $0x38] sm:$0xff]
  %v896 = vld [vmem:[%s887 + $0x40] sm:$0xff]
  %v897 = vld [vmem:[%s887 + $0x48] sm:$0xff]
  %v898 = vld [vmem:[%s887 + $0x50] sm:$0xff]
  %v899 = vld [vmem:[%s887 + $0x58] sm:$0xff]
  %v900 = vld [vmem:[%s887 + $0x60] sm:$0xff]
  %v901 = vld [vmem:[%s887 + $0x68] sm:$0xff]
  %v902 = vld [vmem:[%s887 + $0x70] sm:$0xff]
  %v903 = vld [vmem:[%s887 + $0x78] sm:$0xff]
  %904 = vmatpush.msra.mxu0 %v903
  %905 = vmatpush.msra.mxu0 %v902
  %906 = vmatpush.msra.mxu0 %v901
  %907 = vmatpush.msra.mxu0 %v900
  %908 = vmatpush.msra.mxu0 %v899
  %909 = vmatpush.msra.mxu0 %v898
  %910 = vmatpush.msra.mxu0 %v897
  %911 = vmatpush.msra.mxu0 %v896
  %912 = vmatpush.msra.mxu0 %v895
  %913 = vmatpush.msra.mxu0 %v894
  %914 = vmatpush.msra.mxu0 %v893
  %915 = vmatpush.msra.mxu0 %v892
  %916 = vmatpush.msra.mxu0 %v891
  %917 = vmatpush.msra.mxu0 %v890
  %918 = vmatpush.msra.mxu0 %v889
  %919 = vmatpush.msra.mxu0 %v888
  %920 = vmatmul.f32.gmra.mxu0 %v823
  %v921 = vpop.f32.mrf.mxu0
  %v922 = vadd.f32 0.0, %v921
  %923 = vmatmul.f32.gmra.mxu0 %v824
  %v924 = vpop.f32.mrf.mxu0
  %v925 = vadd.f32 0.0, %v924
  %926 = vmatmul.f32.gmra.mxu0 %v825
  %v927 = vpop.f32.mrf.mxu0
  %v928 = vadd.f32 0.0, %v927
  %929 = vmatmul.f32.gmra.mxu0 %v826
  %v930 = vpop.f32.mrf.mxu0
  %v931 = vadd.f32 0.0, %v930
  %932 = vmatmul.f32.gmra.mxu0 %v827
  %v933 = vpop.f32.mrf.mxu0
  %v934 = vadd.f32 0.0, %v933
  %935 = vmatmul.f32.gmra.mxu0 %v828
  %v936 = vpop.f32.mrf.mxu0
  %v937 = vadd.f32 0.0, %v936
  %938 = vmatmul.f32.gmra.mxu0 %v829
  %v939 = vpop.f32.mrf.mxu0
  %v940 = vadd.f32 0.0, %v939
  %941 = vmatmul.f32.gmra.mxu0 %v830
  %v942 = vpop.f32.mrf.mxu0
  %v943 = vadd.f32 0.0, %v942
  %944 = vmatmul.f32.gmra.mxu0 %v831
  %v945 = vpop.f32.mrf.mxu0
  %v946 = vadd.f32 0.0, %v945
  %947 = vmatmul.f32.gmra.mxu0 %v832
  %v948 = vpop.f32.mrf.mxu0
  %v949 = vadd.f32 0.0, %v948
  %950 = vmatmul.f32.gmra.mxu0 %v833
  %v951 = vpop.f32.mrf.mxu0
  %v952 = vadd.f32 0.0, %v951
  %953 = vmatmul.f32.gmra.mxu0 %v834
  %v954 = vpop.f32.mrf.mxu0
  %v955 = vadd.f32 0.0, %v954
  %956 = vmatmul.f32.gmra.mxu0 %v835
  %v957 = vpop.f32.mrf.mxu0
  %v958 = vadd.f32 0.0, %v957
  %959 = vmatmul.f32.gmra.mxu0 %v836
  %v960 = vpop.f32.mrf.mxu0
  %v961 = vadd.f32 0.0, %v960
  %962 = vmatmul.f32.gmra.mxu0 %v837
  %v963 = vpop.f32.mrf.mxu0
  %v964 = vadd.f32 0.0, %v963
  %965 = vmatmul.f32.gmra.mxu0 %v838
  %v966 = vpop.f32.mrf.mxu0
  %v967 = vadd.f32 0.0, %v966
  %968 = vmatmul.f32.gmra.mxu0 %v839
  %v969 = vpop.f32.mrf.mxu0
  %v970 = vadd.f32 0.0, %v969
  %971 = vmatmul.f32.gmra.mxu0 %v840
  %v972 = vpop.f32.mrf.mxu0
  %v973 = vadd.f32 0.0, %v972
  %974 = vmatmul.f32.gmra.mxu0 %v841
  %v975 = vpop.f32.mrf.mxu0
  %v976 = vadd.f32 0.0, %v975
  %977 = vmatmul.f32.gmra.mxu0 %v842
  %v978 = vpop.f32.mrf.mxu0
  %v979 = vadd.f32 0.0, %v978
  %980 = vmatmul.f32.gmra.mxu0 %v843
  %v981 = vpop.f32.mrf.mxu0
  %v982 = vadd.f32 0.0, %v981
  %983 = vmatmul.f32.gmra.mxu0 %v844
  %v984 = vpop.f32.mrf.mxu0
  %v985 = vadd.f32 0.0, %v984
  %986 = vmatmul.f32.gmra.mxu0 %v845
  %v987 = vpop.f32.mrf.mxu0
  %v988 = vadd.f32 0.0, %v987
  %989 = vmatmul.f32.gmra.mxu0 %v846
  %v990 = vpop.f32.mrf.mxu0
  %v991 = vadd.f32 0.0, %v990
  %992 = vmatmul.f32.gmra.mxu0 %v847
  %v993 = vpop.f32.mrf.mxu0
  %v994 = vadd.f32 0.0, %v993
  %995 = vmatmul.f32.gmra.mxu0 %v848
  %v996 = vpop.f32.mrf.mxu0
  %v997 = vadd.f32 0.0, %v996
  %998 = vmatmul.f32.gmra.mxu0 %v849
  %v999 = vpop.f32.mrf.mxu0
  %v1000 = vadd.f32 0.0, %v999
  %1001 = vmatmul.f32.gmra.mxu0 %v850
  %v1002 = vpop.f32.mrf.mxu0
  %v1003 = vadd.f32 0.0, %v1002
  %1004 = vmatmul.f32.gmra.mxu0 %v851
  %v1005 = vpop.f32.mrf.mxu0
  %v1006 = vadd.f32 0.0, %v1005
  %1007 = vmatmul.f32.gmra.mxu0 %v852
  %v1008 = vpop.f32.mrf.mxu0
  %v1009 = vadd.f32 0.0, %v1008
  %1010 = vmatmul.f32.gmra.mxu0 %v853
  %v1011 = vpop.f32.mrf.mxu0
  %v1012 = vadd.f32 0.0, %v1011
  %1013 = vmatmul.f32.gmra.mxu0 %v854
  %v1014 = vpop.f32.mrf.mxu0
  %v1015 = vadd.f32 0.0, %v1014
  %1016 = vmatmul.f32.gmra.mxu0 %v855
  %v1017 = vpop.f32.mrf.mxu0
  %v1018 = vadd.f32 0.0, %v1017
  %1019 = vmatmul.f32.gmra.mxu0 %v856
  %v1020 = vpop.f32.mrf.mxu0
  %v1021 = vadd.f32 0.0, %v1020
  %1022 = vmatmul.f32.gmra.mxu0 %v857
  %v1023 = vpop.f32.mrf.mxu0
  %v1024 = vadd.f32 0.0, %v1023
  %1025 = vmatmul.f32.gmra.mxu0 %v858
  %v1026 = vpop.f32.mrf.mxu0
  %v1027 = vadd.f32 0.0, %v1026
  %1028 = vmatmul.f32.gmra.mxu0 %v859
  %v1029 = vpop.f32.mrf.mxu0
  %v1030 = vadd.f32 0.0, %v1029
  %1031 = vmatmul.f32.gmra.mxu0 %v860
  %v1032 = vpop.f32.mrf.mxu0
  %v1033 = vadd.f32 0.0, %v1032
  %1034 = vmatmul.f32.gmra.mxu0 %v861
  %v1035 = vpop.f32.mrf.mxu0
  %v1036 = vadd.f32 0.0, %v1035
  %1037 = vmatmul.f32.gmra.mxu0 %v862
  %v1038 = vpop.f32.mrf.mxu0
  %v1039 = vadd.f32 0.0, %v1038
  %1040 = vmatmul.f32.gmra.mxu0 %v863
  %v1041 = vpop.f32.mrf.mxu0
  %v1042 = vadd.f32 0.0, %v1041
  %1043 = vmatmul.f32.gmra.mxu0 %v864
  %v1044 = vpop.f32.mrf.mxu0
  %v1045 = vadd.f32 0.0, %v1044
  %1046 = vmatmul.f32.gmra.mxu0 %v865
  %v1047 = vpop.f32.mrf.mxu0
  %v1048 = vadd.f32 0.0, %v1047
  %1049 = vmatmul.f32.gmra.mxu0 %v866
  %v1050 = vpop.f32.mrf.mxu0
  %v1051 = vadd.f32 0.0, %v1050
  %1052 = vmatmul.f32.gmra.mxu0 %v867
  %v1053 = vpop.f32.mrf.mxu0
  %v1054 = vadd.f32 0.0, %v1053
  %1055 = vmatmul.f32.gmra.mxu0 %v868
  %v1056 = vpop.f32.mrf.mxu0
  %v1057 = vadd.f32 0.0, %v1056
  %1058 = vmatmul.f32.gmra.mxu0 %v869
  %v1059 = vpop.f32.mrf.mxu0
  %v1060 = vadd.f32 0.0, %v1059
  %1061 = vmatmul.f32.gmra.mxu0 %v870
  %v1062 = vpop.f32.mrf.mxu0
  %v1063 = vadd.f32 0.0, %v1062
  %1064 = vmatmul.f32.gmra.mxu0 %v871
  %v1065 = vpop.f32.mrf.mxu0
  %v1066 = vadd.f32 0.0, %v1065
  %1067 = vmatmul.f32.gmra.mxu0 %v872
  %v1068 = vpop.f32.mrf.mxu0
  %v1069 = vadd.f32 0.0, %v1068
  %1070 = vmatmul.f32.gmra.mxu0 %v873
  %v1071 = vpop.f32.mrf.mxu0
  %v1072 = vadd.f32 0.0, %v1071
  %1073 = vmatmul.f32.gmra.mxu0 %v874
  %v1074 = vpop.f32.mrf.mxu0
  %v1075 = vadd.f32 0.0, %v1074
  %1076 = vmatmul.f32.gmra.mxu0 %v875
  %v1077 = vpop.f32.mrf.mxu0
  %v1078 = vadd.f32 0.0, %v1077
  %1079 = vmatmul.f32.gmra.mxu0 %v876
  %v1080 = vpop.f32.mrf.mxu0
  %v1081 = vadd.f32 0.0, %v1080
  %1082 = vmatmul.f32.gmra.mxu0 %v877
  %v1083 = vpop.f32.mrf.mxu0
  %v1084 = vadd.f32 0.0, %v1083
  %1085 = vmatmul.f32.gmra.mxu0 %v878
  %v1086 = vpop.f32.mrf.mxu0
  %v1087 = vadd.f32 0.0, %v1086
  %1088 = vmatmul.f32.gmra.mxu0 %v879
  %v1089 = vpop.f32.mrf.mxu0
  %v1090 = vadd.f32 0.0, %v1089
  %1091 = vmatmul.f32.gmra.mxu0 %v880
  %v1092 = vpop.f32.mrf.mxu0
  %v1093 = vadd.f32 0.0, %v1092
  %1094 = vmatmul.f32.gmra.mxu0 %v881
  %v1095 = vpop.f32.mrf.mxu0
  %v1096 = vadd.f32 0.0, %v1095
  %1097 = vmatmul.f32.gmra.mxu0 %v882
  %v1098 = vpop.f32.mrf.mxu0
  %v1099 = vadd.f32 0.0, %v1098
  %1100 = vmatmul.f32.gmra.mxu0 %v883
  %v1101 = vpop.f32.mrf.mxu0
  %v1102 = vadd.f32 0.0, %v1101
  %1103 = vmatmul.f32.gmra.mxu0 %v884
  %v1104 = vpop.f32.mrf.mxu0
  %v1105 = vadd.f32 0.0, %v1104
  %1106 = vmatmul.f32.gmra.mxu0 %v885
  %v1107 = vpop.f32.mrf.mxu0
  %v1108 = vadd.f32 0.0, %v1107
  %1109 = vmatmul.f32.gmra.mxu0 %v886
  %v1110 = vpop.f32.mrf.mxu0
  %v1111 = vadd.f32 0.0, %v1110
  %1112 = vdwg.mxu0
  %v1113 = vadd.f32 %v632, %v922
  %v1114 = vadd.f32 %v635, %v925
  %v1115 = vadd.f32 %v638, %v928
  %v1116 = vadd.f32 %v641, %v931
  %v1117 = vadd.f32 %v644, %v934
  %v1118 = vadd.f32 %v647, %v937
  %v1119 = vadd.f32 %v650, %v940
  %v1120 = vadd.f32 %v653, %v943
  %v1121 = vadd.f32 %v656, %v946
  %v1122 = vadd.f32 %v659, %v949
  %v1123 = vadd.f32 %v662, %v952
  %v1124 = vadd.f32 %v665, %v955
  %v1125 = vadd.f32 %v668, %v958
  %v1126 = vadd.f32 %v671, %v961
  %v1127 = vadd.f32 %v674, %v964
  %v1128 = vadd.f32 %v677, %v967
  %v1129 = vadd.f32 %v680, %v970
  %v1130 = vadd.f32 %v683, %v973
  %v1131 = vadd.f32 %v686, %v976
  %v1132 = vadd.f32 %v689, %v979
  %v1133 = vadd.f32 %v692, %v982
  %v1134 = vadd.f32 %v695, %v985
  %v1135 = vadd.f32 %v698, %v988
  %v1136 = vadd.f32 %v701, %v991
  %v1137 = vadd.f32 %v704, %v994
  %v1138 = vadd.f32 %v707, %v997
  %v1139 = vadd.f32 %v710, %v1000
  %v1140 = vadd.f32 %v713, %v1003
  %v1141 = vadd.f32 %v716, %v1006
  %v1142 = vadd.f32 %v719, %v1009
  %v1143 = vadd.f32 %v722, %v1012
  %v1144 = vadd.f32 %v725, %v1015
  %v1145 = vadd.f32 %v728, %v1018
  %v1146 = vadd.f32 %v731, %v1021
  %v1147 = vadd.f32 %v734, %v1024
  %v1148 = vadd.f32 %v737, %v1027
  %v1149 = vadd.f32 %v740, %v1030
  %v1150 = vadd.f32 %v743, %v1033
  %v1151 = vadd.f32 %v746, %v1036
  %v1152 = vadd.f32 %v749, %v1039
  %v1153 = vadd.f32 %v752, %v1042
  %v1154 = vadd.f32 %v755, %v1045
  %v1155 = vadd.f32 %v758, %v1048
  %v1156 = vadd.f32 %v761, %v1051
  %v1157 = vadd.f32 %v764, %v1054
  %v1158 = vadd.f32 %v767, %v1057
  %v1159 = vadd.f32 %v770, %v1060
  %v1160 = vadd.f32 %v773, %v1063
  %v1161 = vadd.f32 %v776, %v1066
  %v1162 = vadd.f32 %v779, %v1069
  %v1163 = vadd.f32 %v782, %v1072
  %v1164 = vadd.f32 %v785, %v1075
  %v1165 = vadd.f32 %v788, %v1078
  %v1166 = vadd.f32 %v791, %v1081
  %v1167 = vadd.f32 %v794, %v1084
  %v1168 = vadd.f32 %v797, %v1087
  %v1169 = vadd.f32 %v800, %v1090
  %v1170 = vadd.f32 %v803, %v1093
  %v1171 = vadd.f32 %v806, %v1096
  %v1172 = vadd.f32 %v809, %v1099
  %v1173 = vadd.f32 %v812, %v1102
  %v1174 = vadd.f32 %v815, %v1105
  %v1175 = vadd.f32 %v818, %v1108
  %v1176 = vadd.f32 %v821, %v1111
  %v1177 = vld [vmem:[%s179 + $0x7] sm:$0xff]
  %v1178 = vld [vmem:[%s179 + $0xf] sm:$0xff]
  %v1179 = vld [vmem:[%s179 + $0x27] sm:$0xff]
  %v1180 = vld [vmem:[%s179 + $0x2f] sm:$0xff]
  %v1181 = vld [vmem:[%s179 + $0x47] sm:$0xff]
  %v1182 = vld [vmem:[%s179 + $0x4f] sm:$0xff]
  %v1183 = vld [vmem:[%s179 + $0x67] sm:$0xff]
  %v1184 = vld [vmem:[%s179 + $0x6f] sm:$0xff]
  %v1185 = vld [vmem:[%s179 + $0x87] sm:$0xff]
  %v1186 = vld [vmem:[%s179 + $0x8f] sm:$0xff]
  %v1187 = vld [vmem:[%s179 + $0xa7] sm:$0xff]
  %v1188 = vld [vmem:[%s179 + $0xaf] sm:$0xff]
  %v1189 = vld [vmem:[%s179 + $0xc7] sm:$0xff]
  %v1190 = vld [vmem:[%s179 + $0xcf] sm:$0xff]
  %v1191 = vld [vmem:[%s179 + $0xe7] sm:$0xff]
  %v1192 = vld [vmem:[%s179 + $0xef] sm:$0xff]
  %v1193 = vld [vmem:[%s179 + $0x107] sm:$0xff]
  %v1194 = vld [vmem:[%s179 + $0x10f] sm:$0xff]
  %v1195 = vld [vmem:[%s179 + $0x127] sm:$0xff]
  %v1196 = vld [vmem:[%s179 + $0x12f] sm:$0xff]
  %v1197 = vld [vmem:[%s179 + $0x147] sm:$0xff]
  %v1198 = vld [vmem:[%s179 + $0x14f] sm:$0xff]
  %v1199 = vld [vmem:[%s179 + $0x167] sm:$0xff]
  %v1200 = vld [vmem:[%s179 + $0x16f] sm:$0xff]
  %v1201 = vld [vmem:[%s179 + $0x187] sm:$0xff]
  %v1202 = vld [vmem:[%s179 + $0x18f] sm:$0xff]
  %v1203 = vld [vmem:[%s179 + $0x1a7] sm:$0xff]
  %v1204 = vld [vmem:[%s179 + $0x1af] sm:$0xff]
  %v1205 = vld [vmem:[%s179 + $0x1c7] sm:$0xff]
  %v1206 = vld [vmem:[%s179 + $0x1cf] sm:$0xff]
  %v1207 = vld [vmem:[%s179 + $0x1e7] sm:$0xff]
  %v1208 = vld [vmem:[%s179 + $0x1ef] sm:$0xff]
  %v1209 = vld [vmem:[%s179 + $0x247] sm:$0xff]
  %v1210 = vld [vmem:[%s179 + $0x24f] sm:$0xff]
  %v1211 = vld [vmem:[%s179 + $0x267] sm:$0xff]
  %v1212 = vld [vmem:[%s179 + $0x26f] sm:$0xff]
  %v1213 = vld [vmem:[%s179 + $0x287] sm:$0xff]
  %v1214 = vld [vmem:[%s179 + $0x28f] sm:$0xff]
  %v1215 = vld [vmem:[%s179 + $0x2a7] sm:$0xff]
  %v1216 = vld [vmem:[%s179 + $0x2af] sm:$0xff]
  %v1217 = vld [vmem:[%s179 + $0x2c7] sm:$0xff]
  %v1218 = vld [vmem:[%s179 + $0x2cf] sm:$0xff]
  %v1219 = vld [vmem:[%s179 + $0x2e7] sm:$0xff]
  %v1220 = vld [vmem:[%s179 + $0x2ef] sm:$0xff]
  %v1221 = vld [vmem:[%s179 + $0x307] sm:$0xff]
  %v1222 = vld [vmem:[%s179 + $0x30f] sm:$0xff]
  %v1223 = vld [vmem:[%s179 + $0x327] sm:$0xff]
  %v1224 = vld [vmem:[%s179 + $0x32f] sm:$0xff]
  %v1225 = vld [vmem:[%s179 + $0x347] sm:$0xff]
  %v1226 = vld [vmem:[%s179 + $0x34f] sm:$0xff]
  %v1227 = vld [vmem:[%s179 + $0x367] sm:$0xff]
  %v1228 = vld [vmem:[%s179 + $0x36f] sm:$0xff]
  %v1229 = vld [vmem:[%s179 + $0x387] sm:$0xff]
  %v1230 = vld [vmem:[%s179 + $0x38f] sm:$0xff]
  %v1231 = vld [vmem:[%s179 + $0x3a7] sm:$0xff]
  %v1232 = vld [vmem:[%s179 + $0x3af] sm:$0xff]
  %v1233 = vld [vmem:[%s179 + $0x3c7] sm:$0xff]
  %v1234 = vld [vmem:[%s179 + $0x3cf] sm:$0xff]
  %v1235 = vld [vmem:[%s179 + $0x3e7] sm:$0xff]
  %v1236 = vld [vmem:[%s179 + $0x3ef] sm:$0xff]
  %v1237 = vld [vmem:[%s179 + $0x407] sm:$0xff]
  %v1238 = vld [vmem:[%s179 + $0x40f] sm:$0xff]
  %v1239 = vld [vmem:[%s179 + $0x427] sm:$0xff]
  %v1240 = vld [vmem:[%s179 + $0x42f] sm:$0xff]
  %s1241 = scalar_lea.vmem %s1, 384
  %v1242 = vld [vmem:[%s1241] sm:$0xff]
  %v1243 = vld [vmem:[%s1241 + $0x8] sm:$0xff]
  %v1244 = vld [vmem:[%s1241 + $0x10] sm:$0xff]
  %v1245 = vld [vmem:[%s1241 + $0x18] sm:$0xff]
  %v1246 = vld [vmem:[%s1241 + $0x20] sm:$0xff]
  %v1247 = vld [vmem:[%s1241 + $0x28] sm:$0xff]
  %v1248 = vld [vmem:[%s1241 + $0x30] sm:$0xff]
  %v1249 = vld [vmem:[%s1241 + $0x38] sm:$0xff]
  %v1250 = vld [vmem:[%s1241 + $0x40] sm:$0xff]
  %v1251 = vld [vmem:[%s1241 + $0x48] sm:$0xff]
  %v1252 = vld [vmem:[%s1241 + $0x50] sm:$0xff]
  %v1253 = vld [vmem:[%s1241 + $0x58] sm:$0xff]
  %v1254 = vld [vmem:[%s1241 + $0x60] sm:$0xff]
  %v1255 = vld [vmem:[%s1241 + $0x68] sm:$0xff]
  %v1256 = vld [vmem:[%s1241 + $0x70] sm:$0xff]
  %v1257 = vld [vmem:[%s1241 + $0x78] sm:$0xff]
  %1258 = vmatpush.msra.mxu0 %v1257
  %1259 = vmatpush.msra.mxu0 %v1256
  %1260 = vmatpush.msra.mxu0 %v1255
  %1261 = vmatpush.msra.mxu0 %v1254
  %1262 = vmatpush.msra.mxu0 %v1253
  %1263 = vmatpush.msra.mxu0 %v1252
  %1264 = vmatpush.msra.mxu0 %v1251
  %1265 = vmatpush.msra.mxu0 %v1250
  %1266 = vmatpush.msra.mxu0 %v1249
  %1267 = vmatpush.msra.mxu0 %v1248
  %1268 = vmatpush.msra.mxu0 %v1247
  %1269 = vmatpush.msra.mxu0 %v1246
  %1270 = vmatpush.msra.mxu0 %v1245
  %1271 = vmatpush.msra.mxu0 %v1244
  %1272 = vmatpush.msra.mxu0 %v1243
  %1273 = vmatpush.msra.mxu0 %v1242
  %1274 = vmatmul.f32.gmra.mxu0 %v1177
  %v1275 = vpop.f32.mrf.mxu0
  %v1276 = vadd.f32 0.0, %v1275
  %1277 = vmatmul.f32.gmra.mxu0 %v1178
  %v1278 = vpop.f32.mrf.mxu0
  %v1279 = vadd.f32 0.0, %v1278
  %1280 = vmatmul.f32.gmra.mxu0 %v1179
  %v1281 = vpop.f32.mrf.mxu0
  %v1282 = vadd.f32 0.0, %v1281
  %1283 = vmatmul.f32.gmra.mxu0 %v1180
  %v1284 = vpop.f32.mrf.mxu0
  %v1285 = vadd.f32 0.0, %v1284
  %1286 = vmatmul.f32.gmra.mxu0 %v1181
  %v1287 = vpop.f32.mrf.mxu0
  %v1288 = vadd.f32 0.0, %v1287
  %1289 = vmatmul.f32.gmra.mxu0 %v1182
  %v1290 = vpop.f32.mrf.mxu0
  %v1291 = vadd.f32 0.0, %v1290
  %1292 = vmatmul.f32.gmra.mxu0 %v1183
  %v1293 = vpop.f32.mrf.mxu0
  %v1294 = vadd.f32 0.0, %v1293
  %1295 = vmatmul.f32.gmra.mxu0 %v1184
  %v1296 = vpop.f32.mrf.mxu0
  %v1297 = vadd.f32 0.0, %v1296
  %1298 = vmatmul.f32.gmra.mxu0 %v1185
  %v1299 = vpop.f32.mrf.mxu0
  %v1300 = vadd.f32 0.0, %v1299
  %1301 = vmatmul.f32.gmra.mxu0 %v1186
  %v1302 = vpop.f32.mrf.mxu0
  %v1303 = vadd.f32 0.0, %v1302
  %1304 = vmatmul.f32.gmra.mxu0 %v1187
  %v1305 = vpop.f32.mrf.mxu0
  %v1306 = vadd.f32 0.0, %v1305
  %1307 = vmatmul.f32.gmra.mxu0 %v1188
  %v1308 = vpop.f32.mrf.mxu0
  %v1309 = vadd.f32 0.0, %v1308
  %1310 = vmatmul.f32.gmra.mxu0 %v1189
  %v1311 = vpop.f32.mrf.mxu0
  %v1312 = vadd.f32 0.0, %v1311
  %1313 = vmatmul.f32.gmra.mxu0 %v1190
  %v1314 = vpop.f32.mrf.mxu0
  %v1315 = vadd.f32 0.0, %v1314
  %1316 = vmatmul.f32.gmra.mxu0 %v1191
  %v1317 = vpop.f32.mrf.mxu0
  %v1318 = vadd.f32 0.0, %v1317
  %1319 = vmatmul.f32.gmra.mxu0 %v1192
  %v1320 = vpop.f32.mrf.mxu0
  %v1321 = vadd.f32 0.0, %v1320
  %1322 = vmatmul.f32.gmra.mxu0 %v1193
  %v1323 = vpop.f32.mrf.mxu0
  %v1324 = vadd.f32 0.0, %v1323
  %1325 = vmatmul.f32.gmra.mxu0 %v1194
  %v1326 = vpop.f32.mrf.mxu0
  %v1327 = vadd.f32 0.0, %v1326
  %1328 = vmatmul.f32.gmra.mxu0 %v1195
  %v1329 = vpop.f32.mrf.mxu0
  %v1330 = vadd.f32 0.0, %v1329
  %1331 = vmatmul.f32.gmra.mxu0 %v1196
  %v1332 = vpop.f32.mrf.mxu0
  %v1333 = vadd.f32 0.0, %v1332
  %1334 = vmatmul.f32.gmra.mxu0 %v1197
  %v1335 = vpop.f32.mrf.mxu0
  %v1336 = vadd.f32 0.0, %v1335
  %1337 = vmatmul.f32.gmra.mxu0 %v1198
  %v1338 = vpop.f32.mrf.mxu0
  %v1339 = vadd.f32 0.0, %v1338
  %1340 = vmatmul.f32.gmra.mxu0 %v1199
  %v1341 = vpop.f32.mrf.mxu0
  %v1342 = vadd.f32 0.0, %v1341
  %1343 = vmatmul.f32.gmra.mxu0 %v1200
  %v1344 = vpop.f32.mrf.mxu0
  %v1345 = vadd.f32 0.0, %v1344
  %1346 = vmatmul.f32.gmra.mxu0 %v1201
  %v1347 = vpop.f32.mrf.mxu0
  %v1348 = vadd.f32 0.0, %v1347
  %1349 = vmatmul.f32.gmra.mxu0 %v1202
  %v1350 = vpop.f32.mrf.mxu0
  %v1351 = vadd.f32 0.0, %v1350
  %1352 = vmatmul.f32.gmra.mxu0 %v1203
  %v1353 = vpop.f32.mrf.mxu0
  %v1354 = vadd.f32 0.0, %v1353
  %1355 = vmatmul.f32.gmra.mxu0 %v1204
  %v1356 = vpop.f32.mrf.mxu0
  %v1357 = vadd.f32 0.0, %v1356
  %1358 = vmatmul.f32.gmra.mxu0 %v1205
  %v1359 = vpop.f32.mrf.mxu0
  %v1360 = vadd.f32 0.0, %v1359
  %1361 = vmatmul.f32.gmra.mxu0 %v1206
  %v1362 = vpop.f32.mrf.mxu0
  %v1363 = vadd.f32 0.0, %v1362
  %1364 = vmatmul.f32.gmra.mxu0 %v1207
  %v1365 = vpop.f32.mrf.mxu0
  %v1366 = vadd.f32 0.0, %v1365
  %1367 = vmatmul.f32.gmra.mxu0 %v1208
  %v1368 = vpop.f32.mrf.mxu0
  %v1369 = vadd.f32 0.0, %v1368
  %1370 = vmatmul.f32.gmra.mxu0 %v1209
  %v1371 = vpop.f32.mrf.mxu0
  %v1372 = vadd.f32 0.0, %v1371
  %1373 = vmatmul.f32.gmra.mxu0 %v1210
  %v1374 = vpop.f32.mrf.mxu0
  %v1375 = vadd.f32 0.0, %v1374
  %1376 = vmatmul.f32.gmra.mxu0 %v1211
  %v1377 = vpop.f32.mrf.mxu0
  %v1378 = vadd.f32 0.0, %v1377
  %1379 = vmatmul.f32.gmra.mxu0 %v1212
  %v1380 = vpop.f32.mrf.mxu0
  %v1381 = vadd.f32 0.0, %v1380
  %1382 = vmatmul.f32.gmra.mxu0 %v1213
  %v1383 = vpop.f32.mrf.mxu0
  %v1384 = vadd.f32 0.0, %v1383
  %1385 = vmatmul.f32.gmra.mxu0 %v1214
  %v1386 = vpop.f32.mrf.mxu0
  %v1387 = vadd.f32 0.0, %v1386
  %1388 = vmatmul.f32.gmra.mxu0 %v1215
  %v1389 = vpop.f32.mrf.mxu0
  %v1390 = vadd.f32 0.0, %v1389
  %1391 = vmatmul.f32.gmra.mxu0 %v1216
  %v1392 = vpop.f32.mrf.mxu0
  %v1393 = vadd.f32 0.0, %v1392
  %1394 = vmatmul.f32.gmra.mxu0 %v1217
  %v1395 = vpop.f32.mrf.mxu0
  %v1396 = vadd.f32 0.0, %v1395
  %1397 = vmatmul.f32.gmra.mxu0 %v1218
  %v1398 = vpop.f32.mrf.mxu0
  %v1399 = vadd.f32 0.0, %v1398
  %1400 = vmatmul.f32.gmra.mxu0 %v1219
  %v1401 = vpop.f32.mrf.mxu0
  %v1402 = vadd.f32 0.0, %v1401
  %1403 = vmatmul.f32.gmra.mxu0 %v1220
  %v1404 = vpop.f32.mrf.mxu0
  %v1405 = vadd.f32 0.0, %v1404
  %1406 = vmatmul.f32.gmra.mxu0 %v1221
  %v1407 = vpop.f32.mrf.mxu0
  %v1408 = vadd.f32 0.0, %v1407
  %1409 = vmatmul.f32.gmra.mxu0 %v1222
  %v1410 = vpop.f32.mrf.mxu0
  %v1411 = vadd.f32 0.0, %v1410
  %1412 = vmatmul.f32.gmra.mxu0 %v1223
  %v1413 = vpop.f32.mrf.mxu0
  %v1414 = vadd.f32 0.0, %v1413
  %1415 = vmatmul.f32.gmra.mxu0 %v1224
  %v1416 = vpop.f32.mrf.mxu0
  %v1417 = vadd.f32 0.0, %v1416
  %1418 = vmatmul.f32.gmra.mxu0 %v1225
  %v1419 = vpop.f32.mrf.mxu0
  %v1420 = vadd.f32 0.0, %v1419
  %1421 = vmatmul.f32.gmra.mxu0 %v1226
  %v1422 = vpop.f32.mrf.mxu0
  %v1423 = vadd.f32 0.0, %v1422
  %1424 = vmatmul.f32.gmra.mxu0 %v1227
  %v1425 = vpop.f32.mrf.mxu0
  %v1426 = vadd.f32 0.0, %v1425
  %1427 = vmatmul.f32.gmra.mxu0 %v1228
  %v1428 = vpop.f32.mrf.mxu0
  %v1429 = vadd.f32 0.0, %v1428
  %1430 = vmatmul.f32.gmra.mxu0 %v1229
  %v1431 = vpop.f32.mrf.mxu0
  %v1432 = vadd.f32 0.0, %v1431
  %1433 = vmatmul.f32.gmra.mxu0 %v1230
  %v1434 = vpop.f32.mrf.mxu0
  %v1435 = vadd.f32 0.0, %v1434
  %1436 = vmatmul.f32.gmra.mxu0 %v1231
  %v1437 = vpop.f32.mrf.mxu0
  %v1438 = vadd.f32 0.0, %v1437
  %1439 = vmatmul.f32.gmra.mxu0 %v1232
  %v1440 = vpop.f32.mrf.mxu0
  %v1441 = vadd.f32 0.0, %v1440
  %1442 = vmatmul.f32.gmra.mxu0 %v1233
  %v1443 = vpop.f32.mrf.mxu0
  %v1444 = vadd.f32 0.0, %v1443
  %1445 = vmatmul.f32.gmra.mxu0 %v1234
  %v1446 = vpop.f32.mrf.mxu0
  %v1447 = vadd.f32 0.0, %v1446
  %1448 = vmatmul.f32.gmra.mxu0 %v1235
  %v1449 = vpop.f32.mrf.mxu0
  %v1450 = vadd.f32 0.0, %v1449
  %1451 = vmatmul.f32.gmra.mxu0 %v1236
  %v1452 = vpop.f32.mrf.mxu0
  %v1453 = vadd.f32 0.0, %v1452
  %1454 = vmatmul.f32.gmra.mxu0 %v1237
  %v1455 = vpop.f32.mrf.mxu0
  %v1456 = vadd.f32 0.0, %v1455
  %1457 = vmatmul.f32.gmra.mxu0 %v1238
  %v1458 = vpop.f32.mrf.mxu0
  %v1459 = vadd.f32 0.0, %v1458
  %1460 = vmatmul.f32.gmra.mxu0 %v1239
  %v1461 = vpop.f32.mrf.mxu0
  %v1462 = vadd.f32 0.0, %v1461
  %1463 = vmatmul.f32.gmra.mxu0 %v1240
  %v1464 = vpop.f32.mrf.mxu0
  %v1465 = vadd.f32 0.0, %v1464
  %1466 = vdwg.mxu0
  %v1467 = vadd.f32 %v1113, %v1276
  %v1468 = vadd.f32 %v1114, %v1279
  %v1469 = vadd.f32 %v1115, %v1282
  %v1470 = vadd.f32 %v1116, %v1285
  %v1471 = vadd.f32 %v1117, %v1288
  %v1472 = vadd.f32 %v1118, %v1291
  %v1473 = vadd.f32 %v1119, %v1294
  %v1474 = vadd.f32 %v1120, %v1297
  %v1475 = vadd.f32 %v1121, %v1300
  %v1476 = vadd.f32 %v1122, %v1303
  %v1477 = vadd.f32 %v1123, %v1306
  %v1478 = vadd.f32 %v1124, %v1309
  %v1479 = vadd.f32 %v1125, %v1312
  %v1480 = vadd.f32 %v1126, %v1315
  %v1481 = vadd.f32 %v1127, %v1318
  %v1482 = vadd.f32 %v1128, %v1321
  %v1483 = vadd.f32 %v1129, %v1324
  %v1484 = vadd.f32 %v1130, %v1327
  %v1485 = vadd.f32 %v1131, %v1330
  %v1486 = vadd.f32 %v1132, %v1333
  %v1487 = vadd.f32 %v1133, %v1336
  %v1488 = vadd.f32 %v1134, %v1339
  %v1489 = vadd.f32 %v1135, %v1342
  %v1490 = vadd.f32 %v1136, %v1345
  %v1491 = vadd.f32 %v1137, %v1348
  %v1492 = vadd.f32 %v1138, %v1351
  %v1493 = vadd.f32 %v1139, %v1354
  %v1494 = vadd.f32 %v1140, %v1357
  %v1495 = vadd.f32 %v1141, %v1360
  %v1496 = vadd.f32 %v1142, %v1363
  %v1497 = vadd.f32 %v1143, %v1366
  %v1498 = vadd.f32 %v1144, %v1369
  %v1499 = vadd.f32 %v1145, %v1372
  %v1500 = vadd.f32 %v1146, %v1375
  %v1501 = vadd.f32 %v1147, %v1378
  %v1502 = vadd.f32 %v1148, %v1381
  %v1503 = vadd.f32 %v1149, %v1384
  %v1504 = vadd.f32 %v1150, %v1387
  %v1505 = vadd.f32 %v1151, %v1390
  %v1506 = vadd.f32 %v1152, %v1393
  %v1507 = vadd.f32 %v1153, %v1396
  %v1508 = vadd.f32 %v1154, %v1399
  %v1509 = vadd.f32 %v1155, %v1402
  %v1510 = vadd.f32 %v1156, %v1405
  %v1511 = vadd.f32 %v1157, %v1408
  %v1512 = vadd.f32 %v1158, %v1411
  %v1513 = vadd.f32 %v1159, %v1414
  %v1514 = vadd.f32 %v1160, %v1417
  %v1515 = vadd.f32 %v1161, %v1420
  %v1516 = vadd.f32 %v1162, %v1423
  %v1517 = vadd.f32 %v1163, %v1426
  %v1518 = vadd.f32 %v1164, %v1429
  %v1519 = vadd.f32 %v1165, %v1432
  %v1520 = vadd.f32 %v1166, %v1435
  %v1521 = vadd.f32 %v1167, %v1438
  %v1522 = vadd.f32 %v1168, %v1441
  %v1523 = vadd.f32 %v1169, %v1444
  %v1524 = vadd.f32 %v1170, %v1447
  %v1525 = vadd.f32 %v1171, %v1450
  %v1526 = vadd.f32 %v1172, %v1453
  %v1527 = vadd.f32 %v1173, %v1456
  %v1528 = vadd.f32 %v1174, %v1459
  %v1529 = vadd.f32 %v1175, %v1462
  %v1530 = vadd.f32 %v1176, %v1465
  %v1531 = vld [vmem:[%s179 + $0x8] sm:$0xff]
  %v1532 = vld [vmem:[%s179 + $0x10] sm:$0xff]
  %v1533 = vld [vmem:[%s179 + $0x28] sm:$0xff]
  %v1534 = vld [vmem:[%s179 + $0x30] sm:$0xff]
  %v1535 = vld [vmem:[%s179 + $0x48] sm:$0xff]
  %v1536 = vld [vmem:[%s179 + $0x50] sm:$0xff]
  %v1537 = vld [vmem:[%s179 + $0x68] sm:$0xff]
  %v1538 = vld [vmem:[%s179 + $0x70] sm:$0xff]
  %v1539 = vld [vmem:[%s179 + $0x88] sm:$0xff]
  %v1540 = vld [vmem:[%s179 + $0x90] sm:$0xff]
  %v1541 = vld [vmem:[%s179 + $0xa8] sm:$0xff]
  %v1542 = vld [vmem:[%s179 + $0xb0] sm:$0xff]
  %v1543 = vld [vmem:[%s179 + $0xc8] sm:$0xff]
  %v1544 = vld [vmem:[%s179 + $0xd0] sm:$0xff]
  %v1545 = vld [vmem:[%s179 + $0xe8] sm:$0xff]
  %v1546 = vld [vmem:[%s179 + $0xf0] sm:$0xff]
  %v1547 = vld [vmem:[%s179 + $0x108] sm:$0xff]
  %v1548 = vld [vmem:[%s179 + $0x110] sm:$0xff]
  %v1549 = vld [vmem:[%s179 + $0x128] sm:$0xff]
  %v1550 = vld [vmem:[%s179 + $0x130] sm:$0xff]
  %v1551 = vld [vmem:[%s179 + $0x148] sm:$0xff]
  %v1552 = vld [vmem:[%s179 + $0x150] sm:$0xff]
  %v1553 = vld [vmem:[%s179 + $0x168] sm:$0xff]
  %v1554 = vld [vmem:[%s179 + $0x170] sm:$0xff]
  %v1555 = vld [vmem:[%s179 + $0x188] sm:$0xff]
  %v1556 = vld [vmem:[%s179 + $0x190] sm:$0xff]
  %v1557 = vld [vmem:[%s179 + $0x1a8] sm:$0xff]
  %v1558 = vld [vmem:[%s179 + $0x1b0] sm:$0xff]
  %v1559 = vld [vmem:[%s179 + $0x1c8] sm:$0xff]
  %v1560 = vld [vmem:[%s179 + $0x1d0] sm:$0xff]
  %v1561 = vld [vmem:[%s179 + $0x1e8] sm:$0xff]
  %v1562 = vld [vmem:[%s179 + $0x1f0] sm:$0xff]
  %v1563 = vld [vmem:[%s179 + $0x248] sm:$0xff]
  %v1564 = vld [vmem:[%s179 + $0x250] sm:$0xff]
  %v1565 = vld [vmem:[%s179 + $0x268] sm:$0xff]
  %v1566 = vld [vmem:[%s179 + $0x270] sm:$0xff]
  %v1567 = vld [vmem:[%s179 + $0x288] sm:$0xff]
  %v1568 = vld [vmem:[%s179 + $0x290] sm:$0xff]
  %v1569 = vld [vmem:[%s179 + $0x2a8] sm:$0xff]
  %v1570 = vld [vmem:[%s179 + $0x2b0] sm:$0xff]
  %v1571 = vld [vmem:[%s179 + $0x2c8] sm:$0xff]
  %v1572 = vld [vmem:[%s179 + $0x2d0] sm:$0xff]
  %v1573 = vld [vmem:[%s179 + $0x2e8] sm:$0xff]
  %v1574 = vld [vmem:[%s179 + $0x2f0] sm:$0xff]
  %v1575 = vld [vmem:[%s179 + $0x308] sm:$0xff]
  %v1576 = vld [vmem:[%s179 + $0x310] sm:$0xff]
  %v1577 = vld [vmem:[%s179 + $0x328] sm:$0xff]
  %v1578 = vld [vmem:[%s179 + $0x330] sm:$0xff]
  %v1579 = vld [vmem:[%s179 + $0x348] sm:$0xff]
  %v1580 = vld [vmem:[%s179 + $0x350] sm:$0xff]
  %v1581 = vld [vmem:[%s179 + $0x368] sm:$0xff]
  %v1582 = vld [vmem:[%s179 + $0x370] sm:$0xff]
  %v1583 = vld [vmem:[%s179 + $0x388] sm:$0xff]
  %v1584 = vld [vmem:[%s179 + $0x390] sm:$0xff]
  %v1585 = vld [vmem:[%s179 + $0x3a8] sm:$0xff]
  %v1586 = vld [vmem:[%s179 + $0x3b0] sm:$0xff]
  %v1587 = vld [vmem:[%s179 + $0x3c8] sm:$0xff]
  %v1588 = vld [vmem:[%s179 + $0x3d0] sm:$0xff]
  %v1589 = vld [vmem:[%s179 + $0x3e8] sm:$0xff]
  %v1590 = vld [vmem:[%s179 + $0x3f0] sm:$0xff]
  %v1591 = vld [vmem:[%s179 + $0x408] sm:$0xff]
  %v1592 = vld [vmem:[%s179 + $0x410] sm:$0xff]
  %v1593 = vld [vmem:[%s179 + $0x428] sm:$0xff]
  %v1594 = vld [vmem:[%s179 + $0x430] sm:$0xff]
  %s1595 = scalar_lea.vmem %s1, 512
  %v1596 = vld [vmem:[%s1595] sm:$0xff]
  %v1597 = vld [vmem:[%s1595 + $0x8] sm:$0xff]
  %v1598 = vld [vmem:[%s1595 + $0x10] sm:$0xff]
  %v1599 = vld [vmem:[%s1595 + $0x18] sm:$0xff]
  %v1600 = vld [vmem:[%s1595 + $0x20] sm:$0xff]
  %v1601 = vld [vmem:[%s1595 + $0x28] sm:$0xff]
  %v1602 = vld [vmem:[%s1595 + $0x30] sm:$0xff]
  %v1603 = vld [vmem:[%s1595 + $0x38] sm:$0xff]
  %v1604 = vld [vmem:[%s1595 + $0x40] sm:$0xff]
  %v1605 = vld [vmem:[%s1595 + $0x48] sm:$0xff]
  %v1606 = vld [vmem:[%s1595 + $0x50] sm:$0xff]
  %v1607 = vld [vmem:[%s1595 + $0x58] sm:$0xff]
  %v1608 = vld [vmem:[%s1595 + $0x60] sm:$0xff]
  %v1609 = vld [vmem:[%s1595 + $0x68] sm:$0xff]
  %v1610 = vld [vmem:[%s1595 + $0x70] sm:$0xff]
  %v1611 = vld [vmem:[%s1595 + $0x78] sm:$0xff]
  %1612 = vmatpush.msra.mxu0 %v1611
  %1613 = vmatpush.msra.mxu0 %v1610
  %1614 = vmatpush.msra.mxu0 %v1609
  %1615 = vmatpush.msra.mxu0 %v1608
  %1616 = vmatpush.msra.mxu0 %v1607
  %1617 = vmatpush.msra.mxu0 %v1606
  %1618 = vmatpush.msra.mxu0 %v1605
  %1619 = vmatpush.msra.mxu0 %v1604
  %1620 = vmatpush.msra.mxu0 %v1603
  %1621 = vmatpush.msra.mxu0 %v1602
  %1622 = vmatpush.msra.mxu0 %v1601
  %1623 = vmatpush.msra.mxu0 %v1600
  %1624 = vmatpush.msra.mxu0 %v1599
  %1625 = vmatpush.msra.mxu0 %v1598
  %1626 = vmatpush.msra.mxu0 %v1597
  %1627 = vmatpush.msra.mxu0 %v1596
  %1628 = vmatmul.f32.gmra.mxu0 %v1531
  %v1629 = vpop.f32.mrf.mxu0
  %v1630 = vadd.f32 0.0, %v1629
  %1631 = vmatmul.f32.gmra.mxu0 %v1532
  %v1632 = vpop.f32.mrf.mxu0
  %v1633 = vadd.f32 0.0, %v1632
  %1634 = vmatmul.f32.gmra.mxu0 %v1533
  %v1635 = vpop.f32.mrf.mxu0
  %v1636 = vadd.f32 0.0, %v1635
  %1637 = vmatmul.f32.gmra.mxu0 %v1534
  %v1638 = vpop.f32.mrf.mxu0
  %v1639 = vadd.f32 0.0, %v1638
  %1640 = vmatmul.f32.gmra.mxu0 %v1535
  %v1641 = vpop.f32.mrf.mxu0
  %v1642 = vadd.f32 0.0, %v1641
  %1643 = vmatmul.f32.gmra.mxu0 %v1536
  %v1644 = vpop.f32.mrf.mxu0
  %v1645 = vadd.f32 0.0, %v1644
  %1646 = vmatmul.f32.gmra.mxu0 %v1537
  %v1647 = vpop.f32.mrf.mxu0
  %v1648 = vadd.f32 0.0, %v1647
  %1649 = vmatmul.f32.gmra.mxu0 %v1538
  %v1650 = vpop.f32.mrf.mxu0
  %v1651 = vadd.f32 0.0, %v1650
  %1652 = vmatmul.f32.gmra.mxu0 %v1539
  %v1653 = vpop.f32.mrf.mxu0
  %v1654 = vadd.f32 0.0, %v1653
  %1655 = vmatmul.f32.gmra.mxu0 %v1540
  %v1656 = vpop.f32.mrf.mxu0
  %v1657 = vadd.f32 0.0, %v1656
  %1658 = vmatmul.f32.gmra.mxu0 %v1541
  %v1659 = vpop.f32.mrf.mxu0
  %v1660 = vadd.f32 0.0, %v1659
  %1661 = vmatmul.f32.gmra.mxu0 %v1542
  %v1662 = vpop.f32.mrf.mxu0
  %v1663 = vadd.f32 0.0, %v1662
  %1664 = vmatmul.f32.gmra.mxu0 %v1543
  %v1665 = vpop.f32.mrf.mxu0
  %v1666 = vadd.f32 0.0, %v1665
  %1667 = vmatmul.f32.gmra.mxu0 %v1544
  %v1668 = vpop.f32.mrf.mxu0
  %v1669 = vadd.f32 0.0, %v1668
  %1670 = vmatmul.f32.gmra.mxu0 %v1545
  %v1671 = vpop.f32.mrf.mxu0
  %v1672 = vadd.f32 0.0, %v1671
  %1673 = vmatmul.f32.gmra.mxu0 %v1546
  %v1674 = vpop.f32.mrf.mxu0
  %v1675 = vadd.f32 0.0, %v1674
  %1676 = vmatmul.f32.gmra.mxu0 %v1547
  %v1677 = vpop.f32.mrf.mxu0
  %v1678 = vadd.f32 0.0, %v1677
  %1679 = vmatmul.f32.gmra.mxu0 %v1548
  %v1680 = vpop.f32.mrf.mxu0
  %v1681 = vadd.f32 0.0, %v1680
  %1682 = vmatmul.f32.gmra.mxu0 %v1549
  %v1683 = vpop.f32.mrf.mxu0
  %v1684 = vadd.f32 0.0, %v1683
  %1685 = vmatmul.f32.gmra.mxu0 %v1550
  %v1686 = vpop.f32.mrf.mxu0
  %v1687 = vadd.f32 0.0, %v1686
  %1688 = vmatmul.f32.gmra.mxu0 %v1551
  %v1689 = vpop.f32.mrf.mxu0
  %v1690 = vadd.f32 0.0, %v1689
  %1691 = vmatmul.f32.gmra.mxu0 %v1552
  %v1692 = vpop.f32.mrf.mxu0
  %v1693 = vadd.f32 0.0, %v1692
  %1694 = vmatmul.f32.gmra.mxu0 %v1553
  %v1695 = vpop.f32.mrf.mxu0
  %v1696 = vadd.f32 0.0, %v1695
  %1697 = vmatmul.f32.gmra.mxu0 %v1554
  %v1698 = vpop.f32.mrf.mxu0
  %v1699 = vadd.f32 0.0, %v1698
  %1700 = vmatmul.f32.gmra.mxu0 %v1555
  %v1701 = vpop.f32.mrf.mxu0
  %v1702 = vadd.f32 0.0, %v1701
  %1703 = vmatmul.f32.gmra.mxu0 %v1556
  %v1704 = vpop.f32.mrf.mxu0
  %v1705 = vadd.f32 0.0, %v1704
  %1706 = vmatmul.f32.gmra.mxu0 %v1557
  %v1707 = vpop.f32.mrf.mxu0
  %v1708 = vadd.f32 0.0, %v1707
  %1709 = vmatmul.f32.gmra.mxu0 %v1558
  %v1710 = vpop.f32.mrf.mxu0
  %v1711 = vadd.f32 0.0, %v1710
  %1712 = vmatmul.f32.gmra.mxu0 %v1559
  %v1713 = vpop.f32.mrf.mxu0
  %v1714 = vadd.f32 0.0, %v1713
  %1715 = vmatmul.f32.gmra.mxu0 %v1560
  %v1716 = vpop.f32.mrf.mxu0
  %v1717 = vadd.f32 0.0, %v1716
  %1718 = vmatmul.f32.gmra.mxu0 %v1561
  %v1719 = vpop.f32.mrf.mxu0
  %v1720 = vadd.f32 0.0, %v1719
  %1721 = vmatmul.f32.gmra.mxu0 %v1562
  %v1722 = vpop.f32.mrf.mxu0
  %v1723 = vadd.f32 0.0, %v1722
  %1724 = vmatmul.f32.gmra.mxu0 %v1563
  %v1725 = vpop.f32.mrf.mxu0
  %v1726 = vadd.f32 0.0, %v1725
  %1727 = vmatmul.f32.gmra.mxu0 %v1564
  %v1728 = vpop.f32.mrf.mxu0
  %v1729 = vadd.f32 0.0, %v1728
  %1730 = vmatmul.f32.gmra.mxu0 %v1565
  %v1731 = vpop.f32.mrf.mxu0
  %v1732 = vadd.f32 0.0, %v1731
  %1733 = vmatmul.f32.gmra.mxu0 %v1566
  %v1734 = vpop.f32.mrf.mxu0
  %v1735 = vadd.f32 0.0, %v1734
  %1736 = vmatmul.f32.gmra.mxu0 %v1567
  %v1737 = vpop.f32.mrf.mxu0
  %v1738 = vadd.f32 0.0, %v1737
  %1739 = vmatmul.f32.gmra.mxu0 %v1568
  %v1740 = vpop.f32.mrf.mxu0
  %v1741 = vadd.f32 0.0, %v1740
  %1742 = vmatmul.f32.gmra.mxu0 %v1569
  %v1743 = vpop.f32.mrf.mxu0
  %v1744 = vadd.f32 0.0, %v1743
  %1745 = vmatmul.f32.gmra.mxu0 %v1570
  %v1746 = vpop.f32.mrf.mxu0
  %v1747 = vadd.f32 0.0, %v1746
  %1748 = vmatmul.f32.gmra.mxu0 %v1571
  %v1749 = vpop.f32.mrf.mxu0
  %v1750 = vadd.f32 0.0, %v1749
  %1751 = vmatmul.f32.gmra.mxu0 %v1572
  %v1752 = vpop.f32.mrf.mxu0
  %v1753 = vadd.f32 0.0, %v1752
  %1754 = vmatmul.f32.gmra.mxu0 %v1573
  %v1755 = vpop.f32.mrf.mxu0
  %v1756 = vadd.f32 0.0, %v1755
  %1757 = vmatmul.f32.gmra.mxu0 %v1574
  %v1758 = vpop.f32.mrf.mxu0
  %v1759 = vadd.f32 0.0, %v1758
  %1760 = vmatmul.f32.gmra.mxu0 %v1575
  %v1761 = vpop.f32.mrf.mxu0
  %v1762 = vadd.f32 0.0, %v1761
  %1763 = vmatmul.f32.gmra.mxu0 %v1576
  %v1764 = vpop.f32.mrf.mxu0
  %v1765 = vadd.f32 0.0, %v1764
  %1766 = vmatmul.f32.gmra.mxu0 %v1577
  %v1767 = vpop.f32.mrf.mxu0
  %v1768 = vadd.f32 0.0, %v1767
  %1769 = vmatmul.f32.gmra.mxu0 %v1578
  %v1770 = vpop.f32.mrf.mxu0
  %v1771 = vadd.f32 0.0, %v1770
  %1772 = vmatmul.f32.gmra.mxu0 %v1579
  %v1773 = vpop.f32.mrf.mxu0
  %v1774 = vadd.f32 0.0, %v1773
  %1775 = vmatmul.f32.gmra.mxu0 %v1580
  %v1776 = vpop.f32.mrf.mxu0
  %v1777 = vadd.f32 0.0, %v1776
  %1778 = vmatmul.f32.gmra.mxu0 %v1581
  %v1779 = vpop.f32.mrf.mxu0
  %v1780 = vadd.f32 0.0, %v1779
  %1781 = vmatmul.f32.gmra.mxu0 %v1582
  %v1782 = vpop.f32.mrf.mxu0
  %v1783 = vadd.f32 0.0, %v1782
  %1784 = vmatmul.f32.gmra.mxu0 %v1583
  %v1785 = vpop.f32.mrf.mxu0
  %v1786 = vadd.f32 0.0, %v1785
  %1787 = vmatmul.f32.gmra.mxu0 %v1584
  %v1788 = vpop.f32.mrf.mxu0
  %v1789 = vadd.f32 0.0, %v1788
  %1790 = vmatmul.f32.gmra.mxu0 %v1585
  %v1791 = vpop.f32.mrf.mxu0
  %v1792 = vadd.f32 0.0, %v1791
  %1793 = vmatmul.f32.gmra.mxu0 %v1586
  %v1794 = vpop.f32.mrf.mxu0
  %v1795 = vadd.f32 0.0, %v1794
  %1796 = vmatmul.f32.gmra.mxu0 %v1587
  %v1797 = vpop.f32.mrf.mxu0
  %v1798 = vadd.f32 0.0, %v1797
  %1799 = vmatmul.f32.gmra.mxu0 %v1588
  %v1800 = vpop.f32.mrf.mxu0
  %v1801 = vadd.f32 0.0, %v1800
  %1802 = vmatmul.f32.gmra.mxu0 %v1589
  %v1803 = vpop.f32.mrf.mxu0
  %v1804 = vadd.f32 0.0, %v1803
  %1805 = vmatmul.f32.gmra.mxu0 %v1590
  %v1806 = vpop.f32.mrf.mxu0
  %v1807 = vadd.f32 0.0, %v1806
  %1808 = vmatmul.f32.gmra.mxu0 %v1591
  %v1809 = vpop.f32.mrf.mxu0
  %v1810 = vadd.f32 0.0, %v1809
  %1811 = vmatmul.f32.gmra.mxu0 %v1592
  %v1812 = vpop.f32.mrf.mxu0
  %v1813 = vadd.f32 0.0, %v1812
  %1814 = vmatmul.f32.gmra.mxu0 %v1593
  %v1815 = vpop.f32.mrf.mxu0
  %v1816 = vadd.f32 0.0, %v1815
  %1817 = vmatmul.f32.gmra.mxu0 %v1594
  %v1818 = vpop.f32.mrf.mxu0
  %v1819 = vadd.f32 0.0, %v1818
  %1820 = vdwg.mxu0
  %v1821 = vadd.f32 %v1467, %v1630
  %v1822 = vadd.f32 %v1468, %v1633
  %v1823 = vadd.f32 %v1469, %v1636
  %v1824 = vadd.f32 %v1470, %v1639
  %v1825 = vadd.f32 %v1471, %v1642
  %v1826 = vadd.f32 %v1472, %v1645
  %v1827 = vadd.f32 %v1473, %v1648
  %v1828 = vadd.f32 %v1474, %v1651
  %v1829 = vadd.f32 %v1475, %v1654
  %v1830 = vadd.f32 %v1476, %v1657
  %v1831 = vadd.f32 %v1477, %v1660
  %v1832 = vadd.f32 %v1478, %v1663
  %v1833 = vadd.f32 %v1479, %v1666
  %v1834 = vadd.f32 %v1480, %v1669
  %v1835 = vadd.f32 %v1481, %v1672
  %v1836 = vadd.f32 %v1482, %v1675
  %v1837 = vadd.f32 %v1483, %v1678
  %v1838 = vadd.f32 %v1484, %v1681
  %v1839 = vadd.f32 %v1485, %v1684
  %v1840 = vadd.f32 %v1486, %v1687
  %v1841 = vadd.f32 %v1487, %v1690
  %v1842 = vadd.f32 %v1488, %v1693
  %v1843 = vadd.f32 %v1489, %v1696
  %v1844 = vadd.f32 %v1490, %v1699
  %v1845 = vadd.f32 %v1491, %v1702
  %v1846 = vadd.f32 %v1492, %v1705
  %v1847 = vadd.f32 %v1493, %v1708
  %v1848 = vadd.f32 %v1494, %v1711
  %v1849 = vadd.f32 %v1495, %v1714
  %v1850 = vadd.f32 %v1496, %v1717
  %v1851 = vadd.f32 %v1497, %v1720
  %v1852 = vadd.f32 %v1498, %v1723
  %v1853 = vadd.f32 %v1499, %v1726
  %v1854 = vadd.f32 %v1500, %v1729
  %v1855 = vadd.f32 %v1501, %v1732
  %v1856 = vadd.f32 %v1502, %v1735
  %v1857 = vadd.f32 %v1503, %v1738
  %v1858 = vadd.f32 %v1504, %v1741
  %v1859 = vadd.f32 %v1505, %v1744
  %v1860 = vadd.f32 %v1506, %v1747
  %v1861 = vadd.f32 %v1507, %v1750
  %v1862 = vadd.f32 %v1508, %v1753
  %v1863 = vadd.f32 %v1509, %v1756
  %v1864 = vadd.f32 %v1510, %v1759
  %v1865 = vadd.f32 %v1511, %v1762
  %v1866 = vadd.f32 %v1512, %v1765
  %v1867 = vadd.f32 %v1513, %v1768
  %v1868 = vadd.f32 %v1514, %v1771
  %v1869 = vadd.f32 %v1515, %v1774
  %v1870 = vadd.f32 %v1516, %v1777
  %v1871 = vadd.f32 %v1517, %v1780
  %v1872 = vadd.f32 %v1518, %v1783
  %v1873 = vadd.f32 %v1519, %v1786
  %v1874 = vadd.f32 %v1520, %v1789
  %v1875 = vadd.f32 %v1521, %v1792
  %v1876 = vadd.f32 %v1522, %v1795
  %v1877 = vadd.f32 %v1523, %v1798
  %v1878 = vadd.f32 %v1524, %v1801
  %v1879 = vadd.f32 %v1525, %v1804
  %v1880 = vadd.f32 %v1526, %v1807
  %v1881 = vadd.f32 %v1527, %v1810
  %v1882 = vadd.f32 %v1528, %v1813
  %v1883 = vadd.f32 %v1529, %v1816
  %v1884 = vadd.f32 %v1530, %v1819
  %v1885 = vld [vmem:[%s179 + $0x9] sm:$0xff]
  %v1886 = vld [vmem:[%s179 + $0x11] sm:$0xff]
  %v1887 = vld [vmem:[%s179 + $0x29] sm:$0xff]
  %v1888 = vld [vmem:[%s179 + $0x31] sm:$0xff]
  %v1889 = vld [vmem:[%s179 + $0x49] sm:$0xff]
  %v1890 = vld [vmem:[%s179 + $0x51] sm:$0xff]
  %v1891 = vld [vmem:[%s179 + $0x69] sm:$0xff]
  %v1892 = vld [vmem:[%s179 + $0x71] sm:$0xff]
  %v1893 = vld [vmem:[%s179 + $0x89] sm:$0xff]
  %v1894 = vld [vmem:[%s179 + $0x91] sm:$0xff]
  %v1895 = vld [vmem:[%s179 + $0xa9] sm:$0xff]
  %v1896 = vld [vmem:[%s179 + $0xb1] sm:$0xff]
  %v1897 = vld [vmem:[%s179 + $0xc9] sm:$0xff]
  %v1898 = vld [vmem:[%s179 + $0xd1] sm:$0xff]
  %v1899 = vld [vmem:[%s179 + $0xe9] sm:$0xff]
  %v1900 = vld [vmem:[%s179 + $0xf1] sm:$0xff]
  %v1901 = vld [vmem:[%s179 + $0x109] sm:$0xff]
  %v1902 = vld [vmem:[%s179 + $0x111] sm:$0xff]
  %v1903 = vld [vmem:[%s179 + $0x129] sm:$0xff]
  %v1904 = vld [vmem:[%s179 + $0x131] sm:$0xff]
  %v1905 = vld [vmem:[%s179 + $0x149] sm:$0xff]
  %v1906 = vld [vmem:[%s179 + $0x151] sm:$0xff]
  %v1907 = vld [vmem:[%s179 + $0x169] sm:$0xff]
  %v1908 = vld [vmem:[%s179 + $0x171] sm:$0xff]
  %v1909 = vld [vmem:[%s179 + $0x189] sm:$0xff]
  %v1910 = vld [vmem:[%s179 + $0x191] sm:$0xff]
  %v1911 = vld [vmem:[%s179 + $0x1a9] sm:$0xff]
  %v1912 = vld [vmem:[%s179 + $0x1b1] sm:$0xff]
  %v1913 = vld [vmem:[%s179 + $0x1c9] sm:$0xff]
  %v1914 = vld [vmem:[%s179 + $0x1d1] sm:$0xff]
  %v1915 = vld [vmem:[%s179 + $0x1e9] sm:$0xff]
  %v1916 = vld [vmem:[%s179 + $0x1f1] sm:$0xff]
  %v1917 = vld [vmem:[%s179 + $0x249] sm:$0xff]
  %v1918 = vld [vmem:[%s179 + $0x251] sm:$0xff]
  %v1919 = vld [vmem:[%s179 + $0x269] sm:$0xff]
  %v1920 = vld [vmem:[%s179 + $0x271] sm:$0xff]
  %v1921 = vld [vmem:[%s179 + $0x289] sm:$0xff]
  %v1922 = vld [vmem:[%s179 + $0x291] sm:$0xff]
  %v1923 = vld [vmem:[%s179 + $0x2a9] sm:$0xff]
  %v1924 = vld [vmem:[%s179 + $0x2b1] sm:$0xff]
  %v1925 = vld [vmem:[%s179 + $0x2c9] sm:$0xff]
  %v1926 = vld [vmem:[%s179 + $0x2d1] sm:$0xff]
  %v1927 = vld [vmem:[%s179 + $0x2e9] sm:$0xff]
  %v1928 = vld [vmem:[%s179 + $0x2f1] sm:$0xff]
  %v1929 = vld [vmem:[%s179 + $0x309] sm:$0xff]
  %v1930 = vld [vmem:[%s179 + $0x311] sm:$0xff]
  %v1931 = vld [vmem:[%s179 + $0x329] sm:$0xff]
  %v1932 = vld [vmem:[%s179 + $0x331] sm:$0xff]
  %v1933 = vld [vmem:[%s179 + $0x349] sm:$0xff]
  %v1934 = vld [vmem:[%s179 + $0x351] sm:$0xff]
  %v1935 = vld [vmem:[%s179 + $0x369] sm:$0xff]
  %v1936 = vld [vmem:[%s179 + $0x371] sm:$0xff]
  %v1937 = vld [vmem:[%s179 + $0x389] sm:$0xff]
  %v1938 = vld [vmem:[%s179 + $0x391] sm:$0xff]
  %v1939 = vld [vmem:[%s179 + $0x3a9] sm:$0xff]
  %v1940 = vld [vmem:[%s179 + $0x3b1] sm:$0xff]
  %v1941 = vld [vmem:[%s179 + $0x3c9] sm:$0xff]
  %v1942 = vld [vmem:[%s179 + $0x3d1] sm:$0xff]
  %v1943 = vld [vmem:[%s179 + $0x3e9] sm:$0xff]
  %v1944 = vld [vmem:[%s179 + $0x3f1] sm:$0xff]
  %v1945 = vld [vmem:[%s179 + $0x409] sm:$0xff]
  %v1946 = vld [vmem:[%s179 + $0x411] sm:$0xff]
  %v1947 = vld [vmem:[%s179 + $0x429] sm:$0xff]
  %v1948 = vld [vmem:[%s179 + $0x431] sm:$0xff]
  %s1949 = scalar_lea.vmem %s1, 640
  %v1950 = vld [vmem:[%s1949] sm:$0xff]
  %v1951 = vld [vmem:[%s1949 + $0x8] sm:$0xff]
  %v1952 = vld [vmem:[%s1949 + $0x10] sm:$0xff]
  %v1953 = vld [vmem:[%s1949 + $0x18] sm:$0xff]
  %v1954 = vld [vmem:[%s1949 + $0x20] sm:$0xff]
  %v1955 = vld [vmem:[%s1949 + $0x28] sm:$0xff]
  %v1956 = vld [vmem:[%s1949 + $0x30] sm:$0xff]
  %v1957 = vld [vmem:[%s1949 + $0x38] sm:$0xff]
  %v1958 = vld [vmem:[%s1949 + $0x40] sm:$0xff]
  %v1959 = vld [vmem:[%s1949 + $0x48] sm:$0xff]
  %v1960 = vld [vmem:[%s1949 + $0x50] sm:$0xff]
  %v1961 = vld [vmem:[%s1949 + $0x58] sm:$0xff]
  %v1962 = vld [vmem:[%s1949 + $0x60] sm:$0xff]
  %v1963 = vld [vmem:[%s1949 + $0x68] sm:$0xff]
  %v1964 = vld [vmem:[%s1949 + $0x70] sm:$0xff]
  %v1965 = vld [vmem:[%s1949 + $0x78] sm:$0xff]
  %1966 = vmatpush.msra.mxu0 %v1965
  %1967 = vmatpush.msra.mxu0 %v1964
  %1968 = vmatpush.msra.mxu0 %v1963
  %1969 = vmatpush.msra.mxu0 %v1962
  %1970 = vmatpush.msra.mxu0 %v1961
  %1971 = vmatpush.msra.mxu0 %v1960
  %1972 = vmatpush.msra.mxu0 %v1959
  %1973 = vmatpush.msra.mxu0 %v1958
  %1974 = vmatpush.msra.mxu0 %v1957
  %1975 = vmatpush.msra.mxu0 %v1956
  %1976 = vmatpush.msra.mxu0 %v1955
  %1977 = vmatpush.msra.mxu0 %v1954
  %1978 = vmatpush.msra.mxu0 %v1953
  %1979 = vmatpush.msra.mxu0 %v1952
  %1980 = vmatpush.msra.mxu0 %v1951
  %1981 = vmatpush.msra.mxu0 %v1950
  %1982 = vmatmul.f32.gmra.mxu0 %v1885
  %v1983 = vpop.f32.mrf.mxu0
  %v1984 = vadd.f32 0.0, %v1983
  %1985 = vmatmul.f32.gmra.mxu0 %v1886
  %v1986 = vpop.f32.mrf.mxu0
  %v1987 = vadd.f32 0.0, %v1986
  %1988 = vmatmul.f32.gmra.mxu0 %v1887
  %v1989 = vpop.f32.mrf.mxu0
  %v1990 = vadd.f32 0.0, %v1989
  %1991 = vmatmul.f32.gmra.mxu0 %v1888
  %v1992 = vpop.f32.mrf.mxu0
  %v1993 = vadd.f32 0.0, %v1992
  %1994 = vmatmul.f32.gmra.mxu0 %v1889
  %v1995 = vpop.f32.mrf.mxu0
  %v1996 = vadd.f32 0.0, %v1995
  %1997 = vmatmul.f32.gmra.mxu0 %v1890
  %v1998 = vpop.f32.mrf.mxu0
  %v1999 = vadd.f32 0.0, %v1998
  %2000 = vmatmul.f32.gmra.mxu0 %v1891
  %v2001 = vpop.f32.mrf.mxu0
  %v2002 = vadd.f32 0.0, %v2001
  %2003 = vmatmul.f32.gmra.mxu0 %v1892
  %v2004 = vpop.f32.mrf.mxu0
  %v2005 = vadd.f32 0.0, %v2004
  %2006 = vmatmul.f32.gmra.mxu0 %v1893
  %v2007 = vpop.f32.mrf.mxu0
  %v2008 = vadd.f32 0.0, %v2007
  %2009 = vmatmul.f32.gmra.mxu0 %v1894
  %v2010 = vpop.f32.mrf.mxu0
  %v2011 = vadd.f32 0.0, %v2010
  %2012 = vmatmul.f32.gmra.mxu0 %v1895
  %v2013 = vpop.f32.mrf.mxu0
  %v2014 = vadd.f32 0.0, %v2013
  %2015 = vmatmul.f32.gmra.mxu0 %v1896
  %v2016 = vpop.f32.mrf.mxu0
  %v2017 = vadd.f32 0.0, %v2016
  %2018 = vmatmul.f32.gmra.mxu0 %v1897
  %v2019 = vpop.f32.mrf.mxu0
  %v2020 = vadd.f32 0.0, %v2019
  %2021 = vmatmul.f32.gmra.mxu0 %v1898
  %v2022 = vpop.f32.mrf.mxu0
  %v2023 = vadd.f32 0.0, %v2022
  %2024 = vmatmul.f32.gmra.mxu0 %v1899
  %v2025 = vpop.f32.mrf.mxu0
  %v2026 = vadd.f32 0.0, %v2025
  %2027 = vmatmul.f32.gmra.mxu0 %v1900
  %v2028 = vpop.f32.mrf.mxu0
  %v2029 = vadd.f32 0.0, %v2028
  %2030 = vmatmul.f32.gmra.mxu0 %v1901
  %v2031 = vpop.f32.mrf.mxu0
  %v2032 = vadd.f32 0.0, %v2031
  %2033 = vmatmul.f32.gmra.mxu0 %v1902
  %v2034 = vpop.f32.mrf.mxu0
  %v2035 = vadd.f32 0.0, %v2034
  %2036 = vmatmul.f32.gmra.mxu0 %v1903
  %v2037 = vpop.f32.mrf.mxu0
  %v2038 = vadd.f32 0.0, %v2037
  %2039 = vmatmul.f32.gmra.mxu0 %v1904
  %v2040 = vpop.f32.mrf.mxu0
  %v2041 = vadd.f32 0.0, %v2040
  %2042 = vmatmul.f32.gmra.mxu0 %v1905
  %v2043 = vpop.f32.mrf.mxu0
  %v2044 = vadd.f32 0.0, %v2043
  %2045 = vmatmul.f32.gmra.mxu0 %v1906
  %v2046 = vpop.f32.mrf.mxu0
  %v2047 = vadd.f32 0.0, %v2046
  %2048 = vmatmul.f32.gmra.mxu0 %v1907
  %v2049 = vpop.f32.mrf.mxu0
  %v2050 = vadd.f32 0.0, %v2049
  %2051 = vmatmul.f32.gmra.mxu0 %v1908
  %v2052 = vpop.f32.mrf.mxu0
  %v2053 = vadd.f32 0.0, %v2052
  %2054 = vmatmul.f32.gmra.mxu0 %v1909
  %v2055 = vpop.f32.mrf.mxu0
  %v2056 = vadd.f32 0.0, %v2055
  %2057 = vmatmul.f32.gmra.mxu0 %v1910
  %v2058 = vpop.f32.mrf.mxu0
  %v2059 = vadd.f32 0.0, %v2058
  %2060 = vmatmul.f32.gmra.mxu0 %v1911
  %v2061 = vpop.f32.mrf.mxu0
  %v2062 = vadd.f32 0.0, %v2061
  %2063 = vmatmul.f32.gmra.mxu0 %v1912
  %v2064 = vpop.f32.mrf.mxu0
  %v2065 = vadd.f32 0.0, %v2064
  %2066 = vmatmul.f32.gmra.mxu0 %v1913
  %v2067 = vpop.f32.mrf.mxu0
  %v2068 = vadd.f32 0.0, %v2067
  %2069 = vmatmul.f32.gmra.mxu0 %v1914
  %v2070 = vpop.f32.mrf.mxu0
  %v2071 = vadd.f32 0.0, %v2070
  %2072 = vmatmul.f32.gmra.mxu0 %v1915
  %v2073 = vpop.f32.mrf.mxu0
  %v2074 = vadd.f32 0.0, %v2073
  %2075 = vmatmul.f32.gmra.mxu0 %v1916
  %v2076 = vpop.f32.mrf.mxu0
  %v2077 = vadd.f32 0.0, %v2076
  %2078 = vmatmul.f32.gmra.mxu0 %v1917
  %v2079 = vpop.f32.mrf.mxu0
  %v2080 = vadd.f32 0.0, %v2079
  %2081 = vmatmul.f32.gmra.mxu0 %v1918
  %v2082 = vpop.f32.mrf.mxu0
  %v2083 = vadd.f32 0.0, %v2082
  %2084 = vmatmul.f32.gmra.mxu0 %v1919
  %v2085 = vpop.f32.mrf.mxu0
  %v2086 = vadd.f32 0.0, %v2085
  %2087 = vmatmul.f32.gmra.mxu0 %v1920
  %v2088 = vpop.f32.mrf.mxu0
  %v2089 = vadd.f32 0.0, %v2088
  %2090 = vmatmul.f32.gmra.mxu0 %v1921
  %v2091 = vpop.f32.mrf.mxu0
  %v2092 = vadd.f32 0.0, %v2091
  %2093 = vmatmul.f32.gmra.mxu0 %v1922
  %v2094 = vpop.f32.mrf.mxu0
  %v2095 = vadd.f32 0.0, %v2094
  %2096 = vmatmul.f32.gmra.mxu0 %v1923
  %v2097 = vpop.f32.mrf.mxu0
  %v2098 = vadd.f32 0.0, %v2097
  %2099 = vmatmul.f32.gmra.mxu0 %v1924
  %v2100 = vpop.f32.mrf.mxu0
  %v2101 = vadd.f32 0.0, %v2100
  %2102 = vmatmul.f32.gmra.mxu0 %v1925
  %v2103 = vpop.f32.mrf.mxu0
  %v2104 = vadd.f32 0.0, %v2103
  %2105 = vmatmul.f32.gmra.mxu0 %v1926
  %v2106 = vpop.f32.mrf.mxu0
  %v2107 = vadd.f32 0.0, %v2106
  %2108 = vmatmul.f32.gmra.mxu0 %v1927
  %v2109 = vpop.f32.mrf.mxu0
  %v2110 = vadd.f32 0.0, %v2109
  %2111 = vmatmul.f32.gmra.mxu0 %v1928
  %v2112 = vpop.f32.mrf.mxu0
  %v2113 = vadd.f32 0.0, %v2112
  %2114 = vmatmul.f32.gmra.mxu0 %v1929
  %v2115 = vpop.f32.mrf.mxu0
  %v2116 = vadd.f32 0.0, %v2115
  %2117 = vmatmul.f32.gmra.mxu0 %v1930
  %v2118 = vpop.f32.mrf.mxu0
  %v2119 = vadd.f32 0.0, %v2118
  %2120 = vmatmul.f32.gmra.mxu0 %v1931
  %v2121 = vpop.f32.mrf.mxu0
  %v2122 = vadd.f32 0.0, %v2121
  %2123 = vmatmul.f32.gmra.mxu0 %v1932
  %v2124 = vpop.f32.mrf.mxu0
  %v2125 = vadd.f32 0.0, %v2124
  %2126 = vmatmul.f32.gmra.mxu0 %v1933
  %v2127 = vpop.f32.mrf.mxu0
  %v2128 = vadd.f32 0.0, %v2127
  %2129 = vmatmul.f32.gmra.mxu0 %v1934
  %v2130 = vpop.f32.mrf.mxu0
  %v2131 = vadd.f32 0.0, %v2130
  %2132 = vmatmul.f32.gmra.mxu0 %v1935
  %v2133 = vpop.f32.mrf.mxu0
  %v2134 = vadd.f32 0.0, %v2133
  %2135 = vmatmul.f32.gmra.mxu0 %v1936
  %v2136 = vpop.f32.mrf.mxu0
  %v2137 = vadd.f32 0.0, %v2136
  %2138 = vmatmul.f32.gmra.mxu0 %v1937
  %v2139 = vpop.f32.mrf.mxu0
  %v2140 = vadd.f32 0.0, %v2139
  %2141 = vmatmul.f32.gmra.mxu0 %v1938
  %v2142 = vpop.f32.mrf.mxu0
  %v2143 = vadd.f32 0.0, %v2142
  %2144 = vmatmul.f32.gmra.mxu0 %v1939
  %v2145 = vpop.f32.mrf.mxu0
  %v2146 = vadd.f32 0.0, %v2145
  %2147 = vmatmul.f32.gmra.mxu0 %v1940
  %v2148 = vpop.f32.mrf.mxu0
  %v2149 = vadd.f32 0.0, %v2148
  %2150 = vmatmul.f32.gmra.mxu0 %v1941
  %v2151 = vpop.f32.mrf.mxu0
  %v2152 = vadd.f32 0.0, %v2151
  %2153 = vmatmul.f32.gmra.mxu0 %v1942
  %v2154 = vpop.f32.mrf.mxu0
  %v2155 = vadd.f32 0.0, %v2154
  %2156 = vmatmul.f32.gmra.mxu0 %v1943
  %v2157 = vpop.f32.mrf.mxu0
  %v2158 = vadd.f32 0.0, %v2157
  %2159 = vmatmul.f32.gmra.mxu0 %v1944
  %v2160 = vpop.f32.mrf.mxu0
  %v2161 = vadd.f32 0.0, %v2160
  %2162 = vmatmul.f32.gmra.mxu0 %v1945
  %v2163 = vpop.f32.mrf.mxu0
  %v2164 = vadd.f32 0.0, %v2163
  %2165 = vmatmul.f32.gmra.mxu0 %v1946
  %v2166 = vpop.f32.mrf.mxu0
  %v2167 = vadd.f32 0.0, %v2166
  %2168 = vmatmul.f32.gmra.mxu0 %v1947
  %v2169 = vpop.f32.mrf.mxu0
  %v2170 = vadd.f32 0.0, %v2169
  %2171 = vmatmul.f32.gmra.mxu0 %v1948
  %v2172 = vpop.f32.mrf.mxu0
  %v2173 = vadd.f32 0.0, %v2172
  %2174 = vdwg.mxu0
  %v2175 = vadd.f32 %v1821, %v1984
  %v2176 = vadd.f32 %v1822, %v1987
  %v2177 = vadd.f32 %v1823, %v1990
  %v2178 = vadd.f32 %v1824, %v1993
  %v2179 = vadd.f32 %v1825, %v1996
  %v2180 = vadd.f32 %v1826, %v1999
  %v2181 = vadd.f32 %v1827, %v2002
  %v2182 = vadd.f32 %v1828, %v2005
  %v2183 = vadd.f32 %v1829, %v2008
  %v2184 = vadd.f32 %v1830, %v2011
  %v2185 = vadd.f32 %v1831, %v2014
  %v2186 = vadd.f32 %v1832, %v2017
  %v2187 = vadd.f32 %v1833, %v2020
  %v2188 = vadd.f32 %v1834, %v2023
  %v2189 = vadd.f32 %v1835, %v2026
  %v2190 = vadd.f32 %v1836, %v2029
  %v2191 = vadd.f32 %v1837, %v2032
  %v2192 = vadd.f32 %v1838, %v2035
  %v2193 = vadd.f32 %v1839, %v2038
  %v2194 = vadd.f32 %v1840, %v2041
  %v2195 = vadd.f32 %v1841, %v2044
  %v2196 = vadd.f32 %v1842, %v2047
  %v2197 = vadd.f32 %v1843, %v2050
  %v2198 = vadd.f32 %v1844, %v2053
  %v2199 = vadd.f32 %v1845, %v2056
  %v2200 = vadd.f32 %v1846, %v2059
  %v2201 = vadd.f32 %v1847, %v2062
  %v2202 = vadd.f32 %v1848, %v2065
  %v2203 = vadd.f32 %v1849, %v2068
  %v2204 = vadd.f32 %v1850, %v2071
  %v2205 = vadd.f32 %v1851, %v2074
  %v2206 = vadd.f32 %v1852, %v2077
  %v2207 = vadd.f32 %v1853, %v2080
  %v2208 = vadd.f32 %v1854, %v2083
  %v2209 = vadd.f32 %v1855, %v2086
  %v2210 = vadd.f32 %v1856, %v2089
  %v2211 = vadd.f32 %v1857, %v2092
  %v2212 = vadd.f32 %v1858, %v2095
  %v2213 = vadd.f32 %v1859, %v2098
  %v2214 = vadd.f32 %v1860, %v2101
  %v2215 = vadd.f32 %v1861, %v2104
  %v2216 = vadd.f32 %v1862, %v2107
  %v2217 = vadd.f32 %v1863, %v2110
  %v2218 = vadd.f32 %v1864, %v2113
  %v2219 = vadd.f32 %v1865, %v2116
  %v2220 = vadd.f32 %v1866, %v2119
  %v2221 = vadd.f32 %v1867, %v2122
  %v2222 = vadd.f32 %v1868, %v2125
  %v2223 = vadd.f32 %v1869, %v2128
  %v2224 = vadd.f32 %v1870, %v2131
  %v2225 = vadd.f32 %v1871, %v2134
  %v2226 = vadd.f32 %v1872, %v2137
  %v2227 = vadd.f32 %v1873, %v2140
  %v2228 = vadd.f32 %v1874, %v2143
  %v2229 = vadd.f32 %v1875, %v2146
  %v2230 = vadd.f32 %v1876, %v2149
  %v2231 = vadd.f32 %v1877, %v2152
  %v2232 = vadd.f32 %v1878, %v2155
  %v2233 = vadd.f32 %v1879, %v2158
  %v2234 = vadd.f32 %v1880, %v2161
  %v2235 = vadd.f32 %v1881, %v2164
  %v2236 = vadd.f32 %v1882, %v2167
  %v2237 = vadd.f32 %v1883, %v2170
  %v2238 = vadd.f32 %v1884, %v2173
  %s2239 = scalar_lea.vmem [#allocation2], 64
  %v2240 = vld [vmem:[%s2239 + $0x7] sm:$0xff]
  %v2241 = vld [vmem:[%s2239 + $0xf] sm:$0xff]
  %v2242 = vld [vmem:[%s2239 + $0x27] sm:$0xff]
  %v2243 = vld [vmem:[%s2239 + $0x2f] sm:$0xff]
  %v2244 = vld [vmem:[%s2239 + $0x47] sm:$0xff]
  %v2245 = vld [vmem:[%s2239 + $0x4f] sm:$0xff]
  %v2246 = vld [vmem:[%s2239 + $0x67] sm:$0xff]
  %v2247 = vld [vmem:[%s2239 + $0x6f] sm:$0xff]
  %v2248 = vld [vmem:[%s2239 + $0x87] sm:$0xff]
  %v2249 = vld [vmem:[%s2239 + $0x8f] sm:$0xff]
  %v2250 = vld [vmem:[%s2239 + $0xa7] sm:$0xff]
  %v2251 = vld [vmem:[%s2239 + $0xaf] sm:$0xff]
  %v2252 = vld [vmem:[%s2239 + $0xc7] sm:$0xff]
  %v2253 = vld [vmem:[%s2239 + $0xcf] sm:$0xff]
  %v2254 = vld [vmem:[%s2239 + $0xe7] sm:$0xff]
  %v2255 = vld [vmem:[%s2239 + $0xef] sm:$0xff]
  %v2256 = vld [vmem:[%s2239 + $0x107] sm:$0xff]
  %v2257 = vld [vmem:[%s2239 + $0x10f] sm:$0xff]
  %v2258 = vld [vmem:[%s2239 + $0x127] sm:$0xff]
  %v2259 = vld [vmem:[%s2239 + $0x12f] sm:$0xff]
  %v2260 = vld [vmem:[%s2239 + $0x147] sm:$0xff]
  %v2261 = vld [vmem:[%s2239 + $0x14f] sm:$0xff]
  %v2262 = vld [vmem:[%s2239 + $0x167] sm:$0xff]
  %v2263 = vld [vmem:[%s2239 + $0x16f] sm:$0xff]
  %v2264 = vld [vmem:[%s2239 + $0x187] sm:$0xff]
  %v2265 = vld [vmem:[%s2239 + $0x18f] sm:$0xff]
  %v2266 = vld [vmem:[%s2239 + $0x1a7] sm:$0xff]
  %v2267 = vld [vmem:[%s2239 + $0x1af] sm:$0xff]
  %v2268 = vld [vmem:[%s2239 + $0x1c7] sm:$0xff]
  %v2269 = vld [vmem:[%s2239 + $0x1cf] sm:$0xff]
  %v2270 = vld [vmem:[%s2239 + $0x1e7] sm:$0xff]
  %v2271 = vld [vmem:[%s2239 + $0x1ef] sm:$0xff]
  %v2272 = vld [vmem:[%s2239 + $0x247] sm:$0xff]
  %v2273 = vld [vmem:[%s2239 + $0x24f] sm:$0xff]
  %v2274 = vld [vmem:[%s2239 + $0x267] sm:$0xff]
  %v2275 = vld [vmem:[%s2239 + $0x26f] sm:$0xff]
  %v2276 = vld [vmem:[%s2239 + $0x287] sm:$0xff]
  %v2277 = vld [vmem:[%s2239 + $0x28f] sm:$0xff]
  %v2278 = vld [vmem:[%s2239 + $0x2a7] sm:$0xff]
  %v2279 = vld [vmem:[%s2239 + $0x2af] sm:$0xff]
  %v2280 = vld [vmem:[%s2239 + $0x2c7] sm:$0xff]
  %v2281 = vld [vmem:[%s2239 + $0x2cf] sm:$0xff]
  %v2282 = vld [vmem:[%s2239 + $0x2e7] sm:$0xff]
  %v2283 = vld [vmem:[%s2239 + $0x2ef] sm:$0xff]
  %v2284 = vld [vmem:[%s2239 + $0x307] sm:$0xff]
  %v2285 = vld [vmem:[%s2239 + $0x30f] sm:$0xff]
  %v2286 = vld [vmem:[%s2239 + $0x327] sm:$0xff]
  %v2287 = vld [vmem:[%s2239 + $0x32f] sm:$0xff]
  %v2288 = vld [vmem:[%s2239 + $0x347] sm:$0xff]
  %v2289 = vld [vmem:[%s2239 + $0x34f] sm:$0xff]
  %v2290 = vld [vmem:[%s2239 + $0x367] sm:$0xff]
  %v2291 = vld [vmem:[%s2239 + $0x36f] sm:$0xff]
  %v2292 = vld [vmem:[%s2239 + $0x387] sm:$0xff]
  %v2293 = vld [vmem:[%s2239 + $0x38f] sm:$0xff]
  %v2294 = vld [vmem:[%s2239 + $0x3a7] sm:$0xff]
  %v2295 = vld [vmem:[%s2239 + $0x3af] sm:$0xff]
  %v2296 = vld [vmem:[%s2239 + $0x3c7] sm:$0xff]
  %v2297 = vld [vmem:[%s2239 + $0x3cf] sm:$0xff]
  %v2298 = vld [vmem:[%s2239 + $0x3e7] sm:$0xff]
  %v2299 = vld [vmem:[%s2239 + $0x3ef] sm:$0xff]
  %v2300 = vld [vmem:[%s2239 + $0x407] sm:$0xff]
  %v2301 = vld [vmem:[%s2239 + $0x40f] sm:$0xff]
  %v2302 = vld [vmem:[%s2239 + $0x427] sm:$0xff]
  %v2303 = vld [vmem:[%s2239 + $0x42f] sm:$0xff]
  %s2304 = scalar_lea.vmem %s1, 768
  %v2305 = vld [vmem:[%s2304] sm:$0xff]
  %v2306 = vld [vmem:[%s2304 + $0x8] sm:$0xff]
  %v2307 = vld [vmem:[%s2304 + $0x10] sm:$0xff]
  %v2308 = vld [vmem:[%s2304 + $0x18] sm:$0xff]
  %v2309 = vld [vmem:[%s2304 + $0x20] sm:$0xff]
  %v2310 = vld [vmem:[%s2304 + $0x28] sm:$0xff]
  %v2311 = vld [vmem:[%s2304 + $0x30] sm:$0xff]
  %v2312 = vld [vmem:[%s2304 + $0x38] sm:$0xff]
  %v2313 = vld [vmem:[%s2304 + $0x40] sm:$0xff]
  %v2314 = vld [vmem:[%s2304 + $0x48] sm:$0xff]
  %v2315 = vld [vmem:[%s2304 + $0x50] sm:$0xff]
  %v2316 = vld [vmem:[%s2304 + $0x58] sm:$0xff]
  %v2317 = vld [vmem:[%s2304 + $0x60] sm:$0xff]
  %v2318 = vld [vmem:[%s2304 + $0x68] sm:$0xff]
  %v2319 = vld [vmem:[%s2304 + $0x70] sm:$0xff]
  %v2320 = vld [vmem:[%s2304 + $0x78] sm:$0xff]
  %2321 = vmatpush.msra.mxu0 %v2320
  %2322 = vmatpush.msra.mxu0 %v2319
  %2323 = vmatpush.msra.mxu0 %v2318
  %2324 = vmatpush.msra.mxu0 %v2317
  %2325 = vmatpush.msra.mxu0 %v2316
  %2326 = vmatpush.msra.mxu0 %v2315
  %2327 = vmatpush.msra.mxu0 %v2314
  %2328 = vmatpush.msra.mxu0 %v2313
  %2329 = vmatpush.msra.mxu0 %v2312
  %2330 = vmatpush.msra.mxu0 %v2311
  %2331 = vmatpush.msra.mxu0 %v2310
  %2332 = vmatpush.msra.mxu0 %v2309
  %2333 = vmatpush.msra.mxu0 %v2308
  %2334 = vmatpush.msra.mxu0 %v2307
  %2335 = vmatpush.msra.mxu0 %v2306
  %2336 = vmatpush.msra.mxu0 %v2305
  %2337 = vmatmul.f32.gmra.mxu0 %v2240
  %v2338 = vpop.f32.mrf.mxu0
  %v2339 = vadd.f32 0.0, %v2338
  %2340 = vmatmul.f32.gmra.mxu0 %v2241
  %v2341 = vpop.f32.mrf.mxu0
  %v2342 = vadd.f32 0.0, %v2341
  %2343 = vmatmul.f32.gmra.mxu0 %v2242
  %v2344 = vpop.f32.mrf.mxu0
  %v2345 = vadd.f32 0.0, %v2344
  %2346 = vmatmul.f32.gmra.mxu0 %v2243
  %v2347 = vpop.f32.mrf.mxu0
  %v2348 = vadd.f32 0.0, %v2347
  %2349 = vmatmul.f32.gmra.mxu0 %v2244
  %v2350 = vpop.f32.mrf.mxu0
  %v2351 = vadd.f32 0.0, %v2350
  %2352 = vmatmul.f32.gmra.mxu0 %v2245
  %v2353 = vpop.f32.mrf.mxu0
  %v2354 = vadd.f32 0.0, %v2353
  %2355 = vmatmul.f32.gmra.mxu0 %v2246
  %v2356 = vpop.f32.mrf.mxu0
  %v2357 = vadd.f32 0.0, %v2356
  %2358 = vmatmul.f32.gmra.mxu0 %v2247
  %v2359 = vpop.f32.mrf.mxu0
  %v2360 = vadd.f32 0.0, %v2359
  %2361 = vmatmul.f32.gmra.mxu0 %v2248
  %v2362 = vpop.f32.mrf.mxu0
  %v2363 = vadd.f32 0.0, %v2362
  %2364 = vmatmul.f32.gmra.mxu0 %v2249
  %v2365 = vpop.f32.mrf.mxu0
  %v2366 = vadd.f32 0.0, %v2365
  %2367 = vmatmul.f32.gmra.mxu0 %v2250
  %v2368 = vpop.f32.mrf.mxu0
  %v2369 = vadd.f32 0.0, %v2368
  %2370 = vmatmul.f32.gmra.mxu0 %v2251
  %v2371 = vpop.f32.mrf.mxu0
  %v2372 = vadd.f32 0.0, %v2371
  %2373 = vmatmul.f32.gmra.mxu0 %v2252
  %v2374 = vpop.f32.mrf.mxu0
  %v2375 = vadd.f32 0.0, %v2374
  %2376 = vmatmul.f32.gmra.mxu0 %v2253
  %v2377 = vpop.f32.mrf.mxu0
  %v2378 = vadd.f32 0.0, %v2377
  %2379 = vmatmul.f32.gmra.mxu0 %v2254
  %v2380 = vpop.f32.mrf.mxu0
  %v2381 = vadd.f32 0.0, %v2380
  %2382 = vmatmul.f32.gmra.mxu0 %v2255
  %v2383 = vpop.f32.mrf.mxu0
  %v2384 = vadd.f32 0.0, %v2383
  %2385 = vmatmul.f32.gmra.mxu0 %v2256
  %v2386 = vpop.f32.mrf.mxu0
  %v2387 = vadd.f32 0.0, %v2386
  %2388 = vmatmul.f32.gmra.mxu0 %v2257
  %v2389 = vpop.f32.mrf.mxu0
  %v2390 = vadd.f32 0.0, %v2389
  %2391 = vmatmul.f32.gmra.mxu0 %v2258
  %v2392 = vpop.f32.mrf.mxu0
  %v2393 = vadd.f32 0.0, %v2392
  %2394 = vmatmul.f32.gmra.mxu0 %v2259
  %v2395 = vpop.f32.mrf.mxu0
  %v2396 = vadd.f32 0.0, %v2395
  %2397 = vmatmul.f32.gmra.mxu0 %v2260
  %v2398 = vpop.f32.mrf.mxu0
  %v2399 = vadd.f32 0.0, %v2398
  %2400 = vmatmul.f32.gmra.mxu0 %v2261
  %v2401 = vpop.f32.mrf.mxu0
  %v2402 = vadd.f32 0.0, %v2401
  %2403 = vmatmul.f32.gmra.mxu0 %v2262
  %v2404 = vpop.f32.mrf.mxu0
  %v2405 = vadd.f32 0.0, %v2404
  %2406 = vmatmul.f32.gmra.mxu0 %v2263
  %v2407 = vpop.f32.mrf.mxu0
  %v2408 = vadd.f32 0.0, %v2407
  %2409 = vmatmul.f32.gmra.mxu0 %v2264
  %v2410 = vpop.f32.mrf.mxu0
  %v2411 = vadd.f32 0.0, %v2410
  %2412 = vmatmul.f32.gmra.mxu0 %v2265
  %v2413 = vpop.f32.mrf.mxu0
  %v2414 = vadd.f32 0.0, %v2413
  %2415 = vmatmul.f32.gmra.mxu0 %v2266
  %v2416 = vpop.f32.mrf.mxu0
  %v2417 = vadd.f32 0.0, %v2416
  %2418 = vmatmul.f32.gmra.mxu0 %v2267
  %v2419 = vpop.f32.mrf.mxu0
  %v2420 = vadd.f32 0.0, %v2419
  %2421 = vmatmul.f32.gmra.mxu0 %v2268
  %v2422 = vpop.f32.mrf.mxu0
  %v2423 = vadd.f32 0.0, %v2422
  %2424 = vmatmul.f32.gmra.mxu0 %v2269
  %v2425 = vpop.f32.mrf.mxu0
  %v2426 = vadd.f32 0.0, %v2425
  %2427 = vmatmul.f32.gmra.mxu0 %v2270
  %v2428 = vpop.f32.mrf.mxu0
  %v2429 = vadd.f32 0.0, %v2428
  %2430 = vmatmul.f32.gmra.mxu0 %v2271
  %v2431 = vpop.f32.mrf.mxu0
  %v2432 = vadd.f32 0.0, %v2431
  %2433 = vmatmul.f32.gmra.mxu0 %v2272
  %v2434 = vpop.f32.mrf.mxu0
  %v2435 = vadd.f32 0.0, %v2434
  %2436 = vmatmul.f32.gmra.mxu0 %v2273
  %v2437 = vpop.f32.mrf.mxu0
  %v2438 = vadd.f32 0.0, %v2437
  %2439 = vmatmul.f32.gmra.mxu0 %v2274
  %v2440 = vpop.f32.mrf.mxu0
  %v2441 = vadd.f32 0.0, %v2440
  %2442 = vmatmul.f32.gmra.mxu0 %v2275
  %v2443 = vpop.f32.mrf.mxu0
  %v2444 = vadd.f32 0.0, %v2443
  %2445 = vmatmul.f32.gmra.mxu0 %v2276
  %v2446 = vpop.f32.mrf.mxu0
  %v2447 = vadd.f32 0.0, %v2446
  %2448 = vmatmul.f32.gmra.mxu0 %v2277
  %v2449 = vpop.f32.mrf.mxu0
  %v2450 = vadd.f32 0.0, %v2449
  %2451 = vmatmul.f32.gmra.mxu0 %v2278
  %v2452 = vpop.f32.mrf.mxu0
  %v2453 = vadd.f32 0.0, %v2452
  %2454 = vmatmul.f32.gmra.mxu0 %v2279
  %v2455 = vpop.f32.mrf.mxu0
  %v2456 = vadd.f32 0.0, %v2455
  %2457 = vmatmul.f32.gmra.mxu0 %v2280
  %v2458 = vpop.f32.mrf.mxu0
  %v2459 = vadd.f32 0.0, %v2458
  %2460 = vmatmul.f32.gmra.mxu0 %v2281
  %v2461 = vpop.f32.mrf.mxu0
  %v2462 = vadd.f32 0.0, %v2461
  %2463 = vmatmul.f32.gmra.mxu0 %v2282
  %v2464 = vpop.f32.mrf.mxu0
  %v2465 = vadd.f32 0.0, %v2464
  %2466 = vmatmul.f32.gmra.mxu0 %v2283
  %v2467 = vpop.f32.mrf.mxu0
  %v2468 = vadd.f32 0.0, %v2467
  %2469 = vmatmul.f32.gmra.mxu0 %v2284
  %v2470 = vpop.f32.mrf.mxu0
  %v2471 = vadd.f32 0.0, %v2470
  %2472 = vmatmul.f32.gmra.mxu0 %v2285
  %v2473 = vpop.f32.mrf.mxu0
  %v2474 = vadd.f32 0.0, %v2473
  %2475 = vmatmul.f32.gmra.mxu0 %v2286
  %v2476 = vpop.f32.mrf.mxu0
  %v2477 = vadd.f32 0.0, %v2476
  %2478 = vmatmul.f32.gmra.mxu0 %v2287
  %v2479 = vpop.f32.mrf.mxu0
  %v2480 = vadd.f32 0.0, %v2479
  %2481 = vmatmul.f32.gmra.mxu0 %v2288
  %v2482 = vpop.f32.mrf.mxu0
  %v2483 = vadd.f32 0.0, %v2482
  %2484 = vmatmul.f32.gmra.mxu0 %v2289
  %v2485 = vpop.f32.mrf.mxu0
  %v2486 = vadd.f32 0.0, %v2485
  %2487 = vmatmul.f32.gmra.mxu0 %v2290
  %v2488 = vpop.f32.mrf.mxu0
  %v2489 = vadd.f32 0.0, %v2488
  %2490 = vmatmul.f32.gmra.mxu0 %v2291
  %v2491 = vpop.f32.mrf.mxu0
  %v2492 = vadd.f32 0.0, %v2491
  %2493 = vmatmul.f32.gmra.mxu0 %v2292
  %v2494 = vpop.f32.mrf.mxu0
  %v2495 = vadd.f32 0.0, %v2494
  %2496 = vmatmul.f32.gmra.mxu0 %v2293
  %v2497 = vpop.f32.mrf.mxu0
  %v2498 = vadd.f32 0.0, %v2497
  %2499 = vmatmul.f32.gmra.mxu0 %v2294
  %v2500 = vpop.f32.mrf.mxu0
  %v2501 = vadd.f32 0.0, %v2500
  %2502 = vmatmul.f32.gmra.mxu0 %v2295
  %v2503 = vpop.f32.mrf.mxu0
  %v2504 = vadd.f32 0.0, %v2503
  %2505 = vmatmul.f32.gmra.mxu0 %v2296
  %v2506 = vpop.f32.mrf.mxu0
  %v2507 = vadd.f32 0.0, %v2506
  %2508 = vmatmul.f32.gmra.mxu0 %v2297
  %v2509 = vpop.f32.mrf.mxu0
  %v2510 = vadd.f32 0.0, %v2509
  %2511 = vmatmul.f32.gmra.mxu0 %v2298
  %v2512 = vpop.f32.mrf.mxu0
  %v2513 = vadd.f32 0.0, %v2512
  %2514 = vmatmul.f32.gmra.mxu0 %v2299
  %v2515 = vpop.f32.mrf.mxu0
  %v2516 = vadd.f32 0.0, %v2515
  %2517 = vmatmul.f32.gmra.mxu0 %v2300
  %v2518 = vpop.f32.mrf.mxu0
  %v2519 = vadd.f32 0.0, %v2518
  %2520 = vmatmul.f32.gmra.mxu0 %v2301
  %v2521 = vpop.f32.mrf.mxu0
  %v2522 = vadd.f32 0.0, %v2521
  %2523 = vmatmul.f32.gmra.mxu0 %v2302
  %v2524 = vpop.f32.mrf.mxu0
  %v2525 = vadd.f32 0.0, %v2524
  %2526 = vmatmul.f32.gmra.mxu0 %v2303
  %v2527 = vpop.f32.mrf.mxu0
  %v2528 = vadd.f32 0.0, %v2527
  %2529 = vdwg.mxu0
  %v2530 = vadd.f32 %v2175, %v2339
  %v2531 = vadd.f32 %v2176, %v2342
  %v2532 = vadd.f32 %v2177, %v2345
  %v2533 = vadd.f32 %v2178, %v2348
  %v2534 = vadd.f32 %v2179, %v2351
  %v2535 = vadd.f32 %v2180, %v2354
  %v2536 = vadd.f32 %v2181, %v2357
  %v2537 = vadd.f32 %v2182, %v2360
  %v2538 = vadd.f32 %v2183, %v2363
  %v2539 = vadd.f32 %v2184, %v2366
  %v2540 = vadd.f32 %v2185, %v2369
  %v2541 = vadd.f32 %v2186, %v2372
  %v2542 = vadd.f32 %v2187, %v2375
  %v2543 = vadd.f32 %v2188, %v2378
  %v2544 = vadd.f32 %v2189, %v2381
  %v2545 = vadd.f32 %v2190, %v2384
  %v2546 = vadd.f32 %v2191, %v2387
  %v2547 = vadd.f32 %v2192, %v2390
  %v2548 = vadd.f32 %v2193, %v2393
  %v2549 = vadd.f32 %v2194, %v2396
  %v2550 = vadd.f32 %v2195, %v2399
  %v2551 = vadd.f32 %v2196, %v2402
  %v2552 = vadd.f32 %v2197, %v2405
  %v2553 = vadd.f32 %v2198, %v2408
  %v2554 = vadd.f32 %v2199, %v2411
  %v2555 = vadd.f32 %v2200, %v2414
  %v2556 = vadd.f32 %v2201, %v2417
  %v2557 = vadd.f32 %v2202, %v2420
  %v2558 = vadd.f32 %v2203, %v2423
  %v2559 = vadd.f32 %v2204, %v2426
  %v2560 = vadd.f32 %v2205, %v2429
  %v2561 = vadd.f32 %v2206, %v2432
  %v2562 = vadd.f32 %v2207, %v2435
  %v2563 = vadd.f32 %v2208, %v2438
  %v2564 = vadd.f32 %v2209, %v2441
  %v2565 = vadd.f32 %v2210, %v2444
  %v2566 = vadd.f32 %v2211, %v2447
  %v2567 = vadd.f32 %v2212, %v2450
  %v2568 = vadd.f32 %v2213, %v2453
  %v2569 = vadd.f32 %v2214, %v2456
  %v2570 = vadd.f32 %v2215, %v2459
  %v2571 = vadd.f32 %v2216, %v2462
  %v2572 = vadd.f32 %v2217, %v2465
  %v2573 = vadd.f32 %v2218, %v2468
  %v2574 = vadd.f32 %v2219, %v2471
  %v2575 = vadd.f32 %v2220, %v2474
  %v2576 = vadd.f32 %v2221, %v2477
  %v2577 = vadd.f32 %v2222, %v2480
  %v2578 = vadd.f32 %v2223, %v2483
  %v2579 = vadd.f32 %v2224, %v2486
  %v2580 = vadd.f32 %v2225, %v2489
  %v2581 = vadd.f32 %v2226, %v2492
  %v2582 = vadd.f32 %v2227, %v2495
  %v2583 = vadd.f32 %v2228, %v2498
  %v2584 = vadd.f32 %v2229, %v2501
  %v2585 = vadd.f32 %v2230, %v2504
  %v2586 = vadd.f32 %v2231, %v2507
  %v2587 = vadd.f32 %v2232, %v2510
  %v2588 = vadd.f32 %v2233, %v2513
  %v2589 = vadd.f32 %v2234, %v2516
  %v2590 = vadd.f32 %v2235, %v2519
  %v2591 = vadd.f32 %v2236, %v2522
  %v2592 = vadd.f32 %v2237, %v2525
  %v2593 = vadd.f32 %v2238, %v2528
  %v2594 = vld [vmem:[%s2239 + $0x8] sm:$0xff]
  %v2595 = vld [vmem:[%s2239 + $0x10] sm:$0xff]
  %v2596 = vld [vmem:[%s2239 + $0x28] sm:$0xff]
  %v2597 = vld [vmem:[%s2239 + $0x30] sm:$0xff]
  %v2598 = vld [vmem:[%s2239 + $0x48] sm:$0xff]
  %v2599 = vld [vmem:[%s2239 + $0x50] sm:$0xff]
  %v2600 = vld [vmem:[%s2239 + $0x68] sm:$0xff]
  %v2601 = vld [vmem:[%s2239 + $0x70] sm:$0xff]
  %v2602 = vld [vmem:[%s2239 + $0x88] sm:$0xff]
  %v2603 = vld [vmem:[%s2239 + $0x90] sm:$0xff]
  %v2604 = vld [vmem:[%s2239 + $0xa8] sm:$0xff]
  %v2605 = vld [vmem:[%s2239 + $0xb0] sm:$0xff]
  %v2606 = vld [vmem:[%s2239 + $0xc8] sm:$0xff]
  %v2607 = vld [vmem:[%s2239 + $0xd0] sm:$0xff]
  %v2608 = vld [vmem:[%s2239 + $0xe8] sm:$0xff]
  %v2609 = vld [vmem:[%s2239 + $0xf0] sm:$0xff]
  %v2610 = vld [vmem:[%s2239 + $0x108] sm:$0xff]
  %v2611 = vld [vmem:[%s2239 + $0x110] sm:$0xff]
  %v2612 = vld [vmem:[%s2239 + $0x128] sm:$0xff]
  %v2613 = vld [vmem:[%s2239 + $0x130] sm:$0xff]
  %v2614 = vld [vmem:[%s2239 + $0x148] sm:$0xff]
  %v2615 = vld [vmem:[%s2239 + $0x150] sm:$0xff]
  %v2616 = vld [vmem:[%s2239 + $0x168] sm:$0xff]
  %v2617 = vld [vmem:[%s2239 + $0x170] sm:$0xff]
  %v2618 = vld [vmem:[%s2239 + $0x188] sm:$0xff]
  %v2619 = vld [vmem:[%s2239 + $0x190] sm:$0xff]
  %v2620 = vld [vmem:[%s2239 + $0x1a8] sm:$0xff]
  %v2621 = vld [vmem:[%s2239 + $0x1b0] sm:$0xff]
  %v2622 = vld [vmem:[%s2239 + $0x1c8] sm:$0xff]
  %v2623 = vld [vmem:[%s2239 + $0x1d0] sm:$0xff]
  %v2624 = vld [vmem:[%s2239 + $0x1e8] sm:$0xff]
  %v2625 = vld [vmem:[%s2239 + $0x1f0] sm:$0xff]
  %v2626 = vld [vmem:[%s2239 + $0x248] sm:$0xff]
  %v2627 = vld [vmem:[%s2239 + $0x250] sm:$0xff]
  %v2628 = vld [vmem:[%s2239 + $0x268] sm:$0xff]
  %v2629 = vld [vmem:[%s2239 + $0x270] sm:$0xff]
  %v2630 = vld [vmem:[%s2239 + $0x288] sm:$0xff]
  %v2631 = vld [vmem:[%s2239 + $0x290] sm:$0xff]
  %v2632 = vld [vmem:[%s2239 + $0x2a8] sm:$0xff]
  %v2633 = vld [vmem:[%s2239 + $0x2b0] sm:$0xff]
  %v2634 = vld [vmem:[%s2239 + $0x2c8] sm:$0xff]
  %v2635 = vld [vmem:[%s2239 + $0x2d0] sm:$0xff]
  %v2636 = vld [vmem:[%s2239 + $0x2e8] sm:$0xff]
  %v2637 = vld [vmem:[%s2239 + $0x2f0] sm:$0xff]
  %v2638 = vld [vmem:[%s2239 + $0x308] sm:$0xff]
  %v2639 = vld [vmem:[%s2239 + $0x310] sm:$0xff]
  %v2640 = vld [vmem:[%s2239 + $0x328] sm:$0xff]
  %v2641 = vld [vmem:[%s2239 + $0x330] sm:$0xff]
  %v2642 = vld [vmem:[%s2239 + $0x348] sm:$0xff]
  %v2643 = vld [vmem:[%s2239 + $0x350] sm:$0xff]
  %v2644 = vld [vmem:[%s2239 + $0x368] sm:$0xff]
  %v2645 = vld [vmem:[%s2239 + $0x370] sm:$0xff]
  %v2646 = vld [vmem:[%s2239 + $0x388] sm:$0xff]
  %v2647 = vld [vmem:[%s2239 + $0x390] sm:$0xff]
  %v2648 = vld [vmem:[%s2239 + $0x3a8] sm:$0xff]
  %v2649 = vld [vmem:[%s2239 + $0x3b0] sm:$0xff]
  %v2650 = vld [vmem:[%s2239 + $0x3c8] sm:$0xff]
  %v2651 = vld [vmem:[%s2239 + $0x3d0] sm:$0xff]
  %v2652 = vld [vmem:[%s2239 + $0x3e8] sm:$0xff]
  %v2653 = vld [vmem:[%s2239 + $0x3f0] sm:$0xff]
  %v2654 = vld [vmem:[%s2239 + $0x408] sm:$0xff]
  %v2655 = vld [vmem:[%s2239 + $0x410] sm:$0xff]
  %v2656 = vld [vmem:[%s2239 + $0x428] sm:$0xff]
  %v2657 = vld [vmem:[%s2239 + $0x430] sm:$0xff]
  %s2658 = scalar_lea.vmem %s1, 896
  %v2659 = vld [vmem:[%s2658] sm:$0xff]
  %v2660 = vld [vmem:[%s2658 + $0x8] sm:$0xff]
  %v2661 = vld [vmem:[%s2658 + $0x10] sm:$0xff]
  %v2662 = vld [vmem:[%s2658 + $0x18] sm:$0xff]
  %v2663 = vld [vmem:[%s2658 + $0x20] sm:$0xff]
  %v2664 = vld [vmem:[%s2658 + $0x28] sm:$0xff]
  %v2665 = vld [vmem:[%s2658 + $0x30] sm:$0xff]
  %v2666 = vld [vmem:[%s2658 + $0x38] sm:$0xff]
  %v2667 = vld [vmem:[%s2658 + $0x40] sm:$0xff]
  %v2668 = vld [vmem:[%s2658 + $0x48] sm:$0xff]
  %v2669 = vld [vmem:[%s2658 + $0x50] sm:$0xff]
  %v2670 = vld [vmem:[%s2658 + $0x58] sm:$0xff]
  %v2671 = vld [vmem:[%s2658 + $0x60] sm:$0xff]
  %v2672 = vld [vmem:[%s2658 + $0x68] sm:$0xff]
  %v2673 = vld [vmem:[%s2658 + $0x70] sm:$0xff]
  %v2674 = vld [vmem:[%s2658 + $0x78] sm:$0xff]
  %2675 = vmatpush.msra.mxu0 %v2674
  %2676 = vmatpush.msra.mxu0 %v2673
  %2677 = vmatpush.msra.mxu0 %v2672
  %2678 = vmatpush.msra.mxu0 %v2671
  %2679 = vmatpush.msra.mxu0 %v2670
  %2680 = vmatpush.msra.mxu0 %v2669
  %2681 = vmatpush.msra.mxu0 %v2668
  %2682 = vmatpush.msra.mxu0 %v2667
  %2683 = vmatpush.msra.mxu0 %v2666
  %2684 = vmatpush.msra.mxu0 %v2665
  %2685 = vmatpush.msra.mxu0 %v2664
  %2686 = vmatpush.msra.mxu0 %v2663
  %2687 = vmatpush.msra.mxu0 %v2662
  %2688 = vmatpush.msra.mxu0 %v2661
  %2689 = vmatpush.msra.mxu0 %v2660
  %2690 = vmatpush.msra.mxu0 %v2659
  %2691 = vmatmul.f32.gmra.mxu0 %v2594
  %v2692 = vpop.f32.mrf.mxu0
  %v2693 = vadd.f32 0.0, %v2692
  %2694 = vmatmul.f32.gmra.mxu0 %v2595
  %v2695 = vpop.f32.mrf.mxu0
  %v2696 = vadd.f32 0.0, %v2695
  %2697 = vmatmul.f32.gmra.mxu0 %v2596
  %v2698 = vpop.f32.mrf.mxu0
  %v2699 = vadd.f32 0.0, %v2698
  %2700 = vmatmul.f32.gmra.mxu0 %v2597
  %v2701 = vpop.f32.mrf.mxu0
  %v2702 = vadd.f32 0.0, %v2701
  %2703 = vmatmul.f32.gmra.mxu0 %v2598
  %v2704 = vpop.f32.mrf.mxu0
  %v2705 = vadd.f32 0.0, %v2704
  %2706 = vmatmul.f32.gmra.mxu0 %v2599
  %v2707 = vpop.f32.mrf.mxu0
  %v2708 = vadd.f32 0.0, %v2707
  %2709 = vmatmul.f32.gmra.mxu0 %v2600
  %v2710 = vpop.f32.mrf.mxu0
  %v2711 = vadd.f32 0.0, %v2710
  %2712 = vmatmul.f32.gmra.mxu0 %v2601
  %v2713 = vpop.f32.mrf.mxu0
  %v2714 = vadd.f32 0.0, %v2713
  %2715 = vmatmul.f32.gmra.mxu0 %v2602
  %v2716 = vpop.f32.mrf.mxu0
  %v2717 = vadd.f32 0.0, %v2716
  %2718 = vmatmul.f32.gmra.mxu0 %v2603
  %v2719 = vpop.f32.mrf.mxu0
  %v2720 = vadd.f32 0.0, %v2719
  %2721 = vmatmul.f32.gmra.mxu0 %v2604
  %v2722 = vpop.f32.mrf.mxu0
  %v2723 = vadd.f32 0.0, %v2722
  %2724 = vmatmul.f32.gmra.mxu0 %v2605
  %v2725 = vpop.f32.mrf.mxu0
  %v2726 = vadd.f32 0.0, %v2725
  %2727 = vmatmul.f32.gmra.mxu0 %v2606
  %v2728 = vpop.f32.mrf.mxu0
  %v2729 = vadd.f32 0.0, %v2728
  %2730 = vmatmul.f32.gmra.mxu0 %v2607
  %v2731 = vpop.f32.mrf.mxu0
  %v2732 = vadd.f32 0.0, %v2731
  %2733 = vmatmul.f32.gmra.mxu0 %v2608
  %v2734 = vpop.f32.mrf.mxu0
  %v2735 = vadd.f32 0.0, %v2734
  %2736 = vmatmul.f32.gmra.mxu0 %v2609
  %v2737 = vpop.f32.mrf.mxu0
  %v2738 = vadd.f32 0.0, %v2737
  %2739 = vmatmul.f32.gmra.mxu0 %v2610
  %v2740 = vpop.f32.mrf.mxu0
  %v2741 = vadd.f32 0.0, %v2740
  %2742 = vmatmul.f32.gmra.mxu0 %v2611
  %v2743 = vpop.f32.mrf.mxu0
  %v2744 = vadd.f32 0.0, %v2743
  %2745 = vmatmul.f32.gmra.mxu0 %v2612
  %v2746 = vpop.f32.mrf.mxu0
  %v2747 = vadd.f32 0.0, %v2746
  %2748 = vmatmul.f32.gmra.mxu0 %v2613
  %v2749 = vpop.f32.mrf.mxu0
  %v2750 = vadd.f32 0.0, %v2749
  %2751 = vmatmul.f32.gmra.mxu0 %v2614
  %v2752 = vpop.f32.mrf.mxu0
  %v2753 = vadd.f32 0.0, %v2752
  %2754 = vmatmul.f32.gmra.mxu0 %v2615
  %v2755 = vpop.f32.mrf.mxu0
  %v2756 = vadd.f32 0.0, %v2755
  %2757 = vmatmul.f32.gmra.mxu0 %v2616
  %v2758 = vpop.f32.mrf.mxu0
  %v2759 = vadd.f32 0.0, %v2758
  %2760 = vmatmul.f32.gmra.mxu0 %v2617
  %v2761 = vpop.f32.mrf.mxu0
  %v2762 = vadd.f32 0.0, %v2761
  %2763 = vmatmul.f32.gmra.mxu0 %v2618
  %v2764 = vpop.f32.mrf.mxu0
  %v2765 = vadd.f32 0.0, %v2764
  %2766 = vmatmul.f32.gmra.mxu0 %v2619
  %v2767 = vpop.f32.mrf.mxu0
  %v2768 = vadd.f32 0.0, %v2767
  %2769 = vmatmul.f32.gmra.mxu0 %v2620
  %v2770 = vpop.f32.mrf.mxu0
  %v2771 = vadd.f32 0.0, %v2770
  %2772 = vmatmul.f32.gmra.mxu0 %v2621
  %v2773 = vpop.f32.mrf.mxu0
  %v2774 = vadd.f32 0.0, %v2773
  %2775 = vmatmul.f32.gmra.mxu0 %v2622
  %v2776 = vpop.f32.mrf.mxu0
  %v2777 = vadd.f32 0.0, %v2776
  %2778 = vmatmul.f32.gmra.mxu0 %v2623
  %v2779 = vpop.f32.mrf.mxu0
  %v2780 = vadd.f32 0.0, %v2779
  %2781 = vmatmul.f32.gmra.mxu0 %v2624
  %v2782 = vpop.f32.mrf.mxu0
  %v2783 = vadd.f32 0.0, %v2782
  %2784 = vmatmul.f32.gmra.mxu0 %v2625
  %v2785 = vpop.f32.mrf.mxu0
  %v2786 = vadd.f32 0.0, %v2785
  %2787 = vmatmul.f32.gmra.mxu0 %v2626
  %v2788 = vpop.f32.mrf.mxu0
  %v2789 = vadd.f32 0.0, %v2788
  %2790 = vmatmul.f32.gmra.mxu0 %v2627
  %v2791 = vpop.f32.mrf.mxu0
  %v2792 = vadd.f32 0.0, %v2791
  %2793 = vmatmul.f32.gmra.mxu0 %v2628
  %v2794 = vpop.f32.mrf.mxu0
  %v2795 = vadd.f32 0.0, %v2794
  %2796 = vmatmul.f32.gmra.mxu0 %v2629
  %v2797 = vpop.f32.mrf.mxu0
  %v2798 = vadd.f32 0.0, %v2797
  %2799 = vmatmul.f32.gmra.mxu0 %v2630
  %v2800 = vpop.f32.mrf.mxu0
  %v2801 = vadd.f32 0.0, %v2800
  %2802 = vmatmul.f32.gmra.mxu0 %v2631
  %v2803 = vpop.f32.mrf.mxu0
  %v2804 = vadd.f32 0.0, %v2803
  %2805 = vmatmul.f32.gmra.mxu0 %v2632
  %v2806 = vpop.f32.mrf.mxu0
  %v2807 = vadd.f32 0.0, %v2806
  %2808 = vmatmul.f32.gmra.mxu0 %v2633
  %v2809 = vpop.f32.mrf.mxu0
  %v2810 = vadd.f32 0.0, %v2809
  %2811 = vmatmul.f32.gmra.mxu0 %v2634
  %v2812 = vpop.f32.mrf.mxu0
  %v2813 = vadd.f32 0.0, %v2812
  %2814 = vmatmul.f32.gmra.mxu0 %v2635
  %v2815 = vpop.f32.mrf.mxu0
  %v2816 = vadd.f32 0.0, %v2815
  %2817 = vmatmul.f32.gmra.mxu0 %v2636
  %v2818 = vpop.f32.mrf.mxu0
  %v2819 = vadd.f32 0.0, %v2818
  %2820 = vmatmul.f32.gmra.mxu0 %v2637
  %v2821 = vpop.f32.mrf.mxu0
  %v2822 = vadd.f32 0.0, %v2821
  %2823 = vmatmul.f32.gmra.mxu0 %v2638
  %v2824 = vpop.f32.mrf.mxu0
  %v2825 = vadd.f32 0.0, %v2824
  %2826 = vmatmul.f32.gmra.mxu0 %v2639
  %v2827 = vpop.f32.mrf.mxu0
  %v2828 = vadd.f32 0.0, %v2827
  %2829 = vmatmul.f32.gmra.mxu0 %v2640
  %v2830 = vpop.f32.mrf.mxu0
  %v2831 = vadd.f32 0.0, %v2830
  %2832 = vmatmul.f32.gmra.mxu0 %v2641
  %v2833 = vpop.f32.mrf.mxu0
  %v2834 = vadd.f32 0.0, %v2833
  %2835 = vmatmul.f32.gmra.mxu0 %v2642
  %v2836 = vpop.f32.mrf.mxu0
  %v2837 = vadd.f32 0.0, %v2836
  %2838 = vmatmul.f32.gmra.mxu0 %v2643
  %v2839 = vpop.f32.mrf.mxu0
  %v2840 = vadd.f32 0.0, %v2839
  %2841 = vmatmul.f32.gmra.mxu0 %v2644
  %v2842 = vpop.f32.mrf.mxu0
  %v2843 = vadd.f32 0.0, %v2842
  %2844 = vmatmul.f32.gmra.mxu0 %v2645
  %v2845 = vpop.f32.mrf.mxu0
  %v2846 = vadd.f32 0.0, %v2845
  %2847 = vmatmul.f32.gmra.mxu0 %v2646
  %v2848 = vpop.f32.mrf.mxu0
  %v2849 = vadd.f32 0.0, %v2848
  %2850 = vmatmul.f32.gmra.mxu0 %v2647
  %v2851 = vpop.f32.mrf.mxu0
  %v2852 = vadd.f32 0.0, %v2851
  %2853 = vmatmul.f32.gmra.mxu0 %v2648
  %v2854 = vpop.f32.mrf.mxu0
  %v2855 = vadd.f32 0.0, %v2854
  %2856 = vmatmul.f32.gmra.mxu0 %v2649
  %v2857 = vpop.f32.mrf.mxu0
  %v2858 = vadd.f32 0.0, %v2857
  %2859 = vmatmul.f32.gmra.mxu0 %v2650
  %v2860 = vpop.f32.mrf.mxu0
  %v2861 = vadd.f32 0.0, %v2860
  %2862 = vmatmul.f32.gmra.mxu0 %v2651
  %v2863 = vpop.f32.mrf.mxu0
  %v2864 = vadd.f32 0.0, %v2863
  %2865 = vmatmul.f32.gmra.mxu0 %v2652
  %v2866 = vpop.f32.mrf.mxu0
  %v2867 = vadd.f32 0.0, %v2866
  %2868 = vmatmul.f32.gmra.mxu0 %v2653
  %v2869 = vpop.f32.mrf.mxu0
  %v2870 = vadd.f32 0.0, %v2869
  %2871 = vmatmul.f32.gmra.mxu0 %v2654
  %v2872 = vpop.f32.mrf.mxu0
  %v2873 = vadd.f32 0.0, %v2872
  %2874 = vmatmul.f32.gmra.mxu0 %v2655
  %v2875 = vpop.f32.mrf.mxu0
  %v2876 = vadd.f32 0.0, %v2875
  %2877 = vmatmul.f32.gmra.mxu0 %v2656
  %v2878 = vpop.f32.mrf.mxu0
  %v2879 = vadd.f32 0.0, %v2878
  %2880 = vmatmul.f32.gmra.mxu0 %v2657
  %v2881 = vpop.f32.mrf.mxu0
  %v2882 = vadd.f32 0.0, %v2881
  %2883 = vdwg.mxu0
  %v2884 = vadd.f32 %v2530, %v2693
  %v2885 = vadd.f32 %v2531, %v2696
  %v2886 = vadd.f32 %v2532, %v2699
  %v2887 = vadd.f32 %v2533, %v2702
  %v2888 = vadd.f32 %v2534, %v2705
  %v2889 = vadd.f32 %v2535, %v2708
  %v2890 = vadd.f32 %v2536, %v2711
  %v2891 = vadd.f32 %v2537, %v2714
  %v2892 = vadd.f32 %v2538, %v2717
  %v2893 = vadd.f32 %v2539, %v2720
  %v2894 = vadd.f32 %v2540, %v2723
  %v2895 = vadd.f32 %v2541, %v2726
  %v2896 = vadd.f32 %v2542, %v2729
  %v2897 = vadd.f32 %v2543, %v2732
  %v2898 = vadd.f32 %v2544, %v2735
  %v2899 = vadd.f32 %v2545, %v2738
  %v2900 = vadd.f32 %v2546, %v2741
  %v2901 = vadd.f32 %v2547, %v2744
  %v2902 = vadd.f32 %v2548, %v2747
  %v2903 = vadd.f32 %v2549, %v2750
  %v2904 = vadd.f32 %v2550, %v2753
  %v2905 = vadd.f32 %v2551, %v2756
  %v2906 = vadd.f32 %v2552, %v2759
  %v2907 = vadd.f32 %v2553, %v2762
  %v2908 = vadd.f32 %v2554, %v2765
  %v2909 = vadd.f32 %v2555, %v2768
  %v2910 = vadd.f32 %v2556, %v2771
  %v2911 = vadd.f32 %v2557, %v2774
  %v2912 = vadd.f32 %v2558, %v2777
  %v2913 = vadd.f32 %v2559, %v2780
  %v2914 = vadd.f32 %v2560, %v2783
  %v2915 = vadd.f32 %v2561, %v2786
  %v2916 = vadd.f32 %v2562, %v2789
  %v2917 = vadd.f32 %v2563, %v2792
  %v2918 = vadd.f32 %v2564, %v2795
  %v2919 = vadd.f32 %v2565, %v2798
  %v2920 = vadd.f32 %v2566, %v2801
  %v2921 = vadd.f32 %v2567, %v2804
  %v2922 = vadd.f32 %v2568, %v2807
  %v2923 = vadd.f32 %v2569, %v2810
  %v2924 = vadd.f32 %v2570, %v2813
  %v2925 = vadd.f32 %v2571, %v2816
  %v2926 = vadd.f32 %v2572, %v2819
  %v2927 = vadd.f32 %v2573, %v2822
  %v2928 = vadd.f32 %v2574, %v2825
  %v2929 = vadd.f32 %v2575, %v2828
  %v2930 = vadd.f32 %v2576, %v2831
  %v2931 = vadd.f32 %v2577, %v2834
  %v2932 = vadd.f32 %v2578, %v2837
  %v2933 = vadd.f32 %v2579, %v2840
  %v2934 = vadd.f32 %v2580, %v2843
  %v2935 = vadd.f32 %v2581, %v2846
  %v2936 = vadd.f32 %v2582, %v2849
  %v2937 = vadd.f32 %v2583, %v2852
  %v2938 = vadd.f32 %v2584, %v2855
  %v2939 = vadd.f32 %v2585, %v2858
  %v2940 = vadd.f32 %v2586, %v2861
  %v2941 = vadd.f32 %v2587, %v2864
  %v2942 = vadd.f32 %v2588, %v2867
  %v2943 = vadd.f32 %v2589, %v2870
  %v2944 = vadd.f32 %v2590, %v2873
  %v2945 = vadd.f32 %v2591, %v2876
  %v2946 = vadd.f32 %v2592, %v2879
  %v2947 = vadd.f32 %v2593, %v2882
  %v2948 = vld [vmem:[%s2239 + $0x9] sm:$0xff]
  %v2949 = vld [vmem:[%s2239 + $0x11] sm:$0xff]
  %v2950 = vld [vmem:[%s2239 + $0x29] sm:$0xff]
  %v2951 = vld [vmem:[%s2239 + $0x31] sm:$0xff]
  %v2952 = vld [vmem:[%s2239 + $0x49] sm:$0xff]
  %v2953 = vld [vmem:[%s2239 + $0x51] sm:$0xff]
  %v2954 = vld [vmem:[%s2239 + $0x69] sm:$0xff]
  %v2955 = vld [vmem:[%s2239 + $0x71] sm:$0xff]
  %v2956 = vld [vmem:[%s2239 + $0x89] sm:$0xff]
  %v2957 = vld [vmem:[%s2239 + $0x91] sm:$0xff]
  %v2958 = vld [vmem:[%s2239 + $0xa9] sm:$0xff]
  %v2959 = vld [vmem:[%s2239 + $0xb1] sm:$0xff]
  %v2960 = vld [vmem:[%s2239 + $0xc9] sm:$0xff]
  %v2961 = vld [vmem:[%s2239 + $0xd1] sm:$0xff]
  %v2962 = vld [vmem:[%s2239 + $0xe9] sm:$0xff]
  %v2963 = vld [vmem:[%s2239 + $0xf1] sm:$0xff]
  %v2964 = vld [vmem:[%s2239 + $0x109] sm:$0xff]
  %v2965 = vld [vmem:[%s2239 + $0x111] sm:$0xff]
  %v2966 = vld [vmem:[%s2239 + $0x129] sm:$0xff]
  %v2967 = vld [vmem:[%s2239 + $0x131] sm:$0xff]
  %v2968 = vld [vmem:[%s2239 + $0x149] sm:$0xff]
  %v2969 = vld [vmem:[%s2239 + $0x151] sm:$0xff]
  %v2970 = vld [vmem:[%s2239 + $0x169] sm:$0xff]
  %v2971 = vld [vmem:[%s2239 + $0x171] sm:$0xff]
  %v2972 = vld [vmem:[%s2239 + $0x189] sm:$0xff]
  %v2973 = vld [vmem:[%s2239 + $0x191] sm:$0xff]
  %v2974 = vld [vmem:[%s2239 + $0x1a9] sm:$0xff]
  %v2975 = vld [vmem:[%s2239 + $0x1b1] sm:$0xff]
  %v2976 = vld [vmem:[%s2239 + $0x1c9] sm:$0xff]
  %v2977 = vld [vmem:[%s2239 + $0x1d1] sm:$0xff]
  %v2978 = vld [vmem:[%s2239 + $0x1e9] sm:$0xff]
  %v2979 = vld [vmem:[%s2239 + $0x1f1] sm:$0xff]
  %v2980 = vld [vmem:[%s2239 + $0x249] sm:$0xff]
  %v2981 = vld [vmem:[%s2239 + $0x251] sm:$0xff]
  %v2982 = vld [vmem:[%s2239 + $0x269] sm:$0xff]
  %v2983 = vld [vmem:[%s2239 + $0x271] sm:$0xff]
  %v2984 = vld [vmem:[%s2239 + $0x289] sm:$0xff]
  %v2985 = vld [vmem:[%s2239 + $0x291] sm:$0xff]
  %v2986 = vld [vmem:[%s2239 + $0x2a9] sm:$0xff]
  %v2987 = vld [vmem:[%s2239 + $0x2b1] sm:$0xff]
  %v2988 = vld [vmem:[%s2239 + $0x2c9] sm:$0xff]
  %v2989 = vld [vmem:[%s2239 + $0x2d1] sm:$0xff]
  %v2990 = vld [vmem:[%s2239 + $0x2e9] sm:$0xff]
  %v2991 = vld [vmem:[%s2239 + $0x2f1] sm:$0xff]
  %v2992 = vld [vmem:[%s2239 + $0x309] sm:$0xff]
  %v2993 = vld [vmem:[%s2239 + $0x311] sm:$0xff]
  %v2994 = vld [vmem:[%s2239 + $0x329] sm:$0xff]
  %v2995 = vld [vmem:[%s2239 + $0x331] sm:$0xff]
  %v2996 = vld [vmem:[%s2239 + $0x349] sm:$0xff]
  %v2997 = vld [vmem:[%s2239 + $0x351] sm:$0xff]
  %v2998 = vld [vmem:[%s2239 + $0x369] sm:$0xff]
  %v2999 = vld [vmem:[%s2239 + $0x371] sm:$0xff]
  %v3000 = vld [vmem:[%s2239 + $0x389] sm:$0xff]
  %v3001 = vld [vmem:[%s2239 + $0x391] sm:$0xff]
  %v3002 = vld [vmem:[%s2239 + $0x3a9] sm:$0xff]
  %v3003 = vld [vmem:[%s2239 + $0x3b1] sm:$0xff]
  %v3004 = vld [vmem:[%s2239 + $0x3c9] sm:$0xff]
  %v3005 = vld [vmem:[%s2239 + $0x3d1] sm:$0xff]
  %v3006 = vld [vmem:[%s2239 + $0x3e9] sm:$0xff]
  %v3007 = vld [vmem:[%s2239 + $0x3f1] sm:$0xff]
  %v3008 = vld [vmem:[%s2239 + $0x409] sm:$0xff]
  %v3009 = vld [vmem:[%s2239 + $0x411] sm:$0xff]
  %v3010 = vld [vmem:[%s2239 + $0x429] sm:$0xff]
  %v3011 = vld [vmem:[%s2239 + $0x431] sm:$0xff]
  %s3012 = scalar_lea.vmem %s1, 1024
  %v3013 = vld [vmem:[%s3012] sm:$0xff]
  %v3014 = vld [vmem:[%s3012 + $0x8] sm:$0xff]
  %v3015 = vld [vmem:[%s3012 + $0x10] sm:$0xff]
  %v3016 = vld [vmem:[%s3012 + $0x18] sm:$0xff]
  %v3017 = vld [vmem:[%s3012 + $0x20] sm:$0xff]
  %v3018 = vld [vmem:[%s3012 + $0x28] sm:$0xff]
  %v3019 = vld [vmem:[%s3012 + $0x30] sm:$0xff]
  %v3020 = vld [vmem:[%s3012 + $0x38] sm:$0xff]
  %v3021 = vld [vmem:[%s3012 + $0x40] sm:$0xff]
  %v3022 = vld [vmem:[%s3012 + $0x48] sm:$0xff]
  %v3023 = vld [vmem:[%s3012 + $0x50] sm:$0xff]
  %v3024 = vld [vmem:[%s3012 + $0x58] sm:$0xff]
  %v3025 = vld [vmem:[%s3012 + $0x60] sm:$0xff]
  %v3026 = vld [vmem:[%s3012 + $0x68] sm:$0xff]
  %v3027 = vld [vmem:[%s3012 + $0x70] sm:$0xff]
  %v3028 = vld [vmem:[%s3012 + $0x78] sm:$0xff]
  %3029 = vmatpush.msra.mxu0 %v3028
  %3030 = vmatpush.msra.mxu0 %v3027
  %3031 = vmatpush.msra.mxu0 %v3026
  %3032 = vmatpush.msra.mxu0 %v3025
  %3033 = vmatpush.msra.mxu0 %v3024
  %3034 = vmatpush.msra.mxu0 %v3023
  %3035 = vmatpush.msra.mxu0 %v3022
  %3036 = vmatpush.msra.mxu0 %v3021
  %3037 = vmatpush.msra.mxu0 %v3020
  %3038 = vmatpush.msra.mxu0 %v3019
  %3039 = vmatpush.msra.mxu0 %v3018
  %3040 = vmatpush.msra.mxu0 %v3017
  %3041 = vmatpush.msra.mxu0 %v3016
  %3042 = vmatpush.msra.mxu0 %v3015
  %3043 = vmatpush.msra.mxu0 %v3014
  %3044 = vmatpush.msra.mxu0 %v3013
  %3045 = vmatmul.f32.gmra.mxu0 %v2948
  %v3046 = vpop.f32.mrf.mxu0
  %v3047 = vadd.f32 0.0, %v3046
  %3048 = vmatmul.f32.gmra.mxu0 %v2949
  %v3049 = vpop.f32.mrf.mxu0
  %v3050 = vadd.f32 0.0, %v3049
  %3051 = vmatmul.f32.gmra.mxu0 %v2950
  %v3052 = vpop.f32.mrf.mxu0
  %v3053 = vadd.f32 0.0, %v3052
  %3054 = vmatmul.f32.gmra.mxu0 %v2951
  %v3055 = vpop.f32.mrf.mxu0
  %v3056 = vadd.f32 0.0, %v3055
  %3057 = vmatmul.f32.gmra.mxu0 %v2952
  %v3058 = vpop.f32.mrf.mxu0
  %v3059 = vadd.f32 0.0, %v3058
  %3060 = vmatmul.f32.gmra.mxu0 %v2953
  %v3061 = vpop.f32.mrf.mxu0
  %v3062 = vadd.f32 0.0, %v3061
  %3063 = vmatmul.f32.gmra.mxu0 %v2954
  %v3064 = vpop.f32.mrf.mxu0
  %v3065 = vadd.f32 0.0, %v3064
  %3066 = vmatmul.f32.gmra.mxu0 %v2955
  %v3067 = vpop.f32.mrf.mxu0
  %v3068 = vadd.f32 0.0, %v3067
  %3069 = vmatmul.f32.gmra.mxu0 %v2956
  %v3070 = vpop.f32.mrf.mxu0
  %v3071 = vadd.f32 0.0, %v3070
  %3072 = vmatmul.f32.gmra.mxu0 %v2957
  %v3073 = vpop.f32.mrf.mxu0
  %v3074 = vadd.f32 0.0, %v3073
  %3075 = vmatmul.f32.gmra.mxu0 %v2958
  %v3076 = vpop.f32.mrf.mxu0
  %v3077 = vadd.f32 0.0, %v3076
  %3078 = vmatmul.f32.gmra.mxu0 %v2959
  %v3079 = vpop.f32.mrf.mxu0
  %v3080 = vadd.f32 0.0, %v3079
  %3081 = vmatmul.f32.gmra.mxu0 %v2960
  %v3082 = vpop.f32.mrf.mxu0
  %v3083 = vadd.f32 0.0, %v3082
  %3084 = vmatmul.f32.gmra.mxu0 %v2961
  %v3085 = vpop.f32.mrf.mxu0
  %v3086 = vadd.f32 0.0, %v3085
  %3087 = vmatmul.f32.gmra.mxu0 %v2962
  %v3088 = vpop.f32.mrf.mxu0
  %v3089 = vadd.f32 0.0, %v3088
  %3090 = vmatmul.f32.gmra.mxu0 %v2963
  %v3091 = vpop.f32.mrf.mxu0
  %v3092 = vadd.f32 0.0, %v3091
  %3093 = vmatmul.f32.gmra.mxu0 %v2964
  %v3094 = vpop.f32.mrf.mxu0
  %v3095 = vadd.f32 0.0, %v3094
  %3096 = vmatmul.f32.gmra.mxu0 %v2965
  %v3097 = vpop.f32.mrf.mxu0
  %v3098 = vadd.f32 0.0, %v3097
  %3099 = vmatmul.f32.gmra.mxu0 %v2966
  %v3100 = vpop.f32.mrf.mxu0
  %v3101 = vadd.f32 0.0, %v3100
  %3102 = vmatmul.f32.gmra.mxu0 %v2967
  %v3103 = vpop.f32.mrf.mxu0
  %v3104 = vadd.f32 0.0, %v3103
  %3105 = vmatmul.f32.gmra.mxu0 %v2968
  %v3106 = vpop.f32.mrf.mxu0
  %v3107 = vadd.f32 0.0, %v3106
  %3108 = vmatmul.f32.gmra.mxu0 %v2969
  %v3109 = vpop.f32.mrf.mxu0
  %v3110 = vadd.f32 0.0, %v3109
  %3111 = vmatmul.f32.gmra.mxu0 %v2970
  %v3112 = vpop.f32.mrf.mxu0
  %v3113 = vadd.f32 0.0, %v3112
  %3114 = vmatmul.f32.gmra.mxu0 %v2971
  %v3115 = vpop.f32.mrf.mxu0
  %v3116 = vadd.f32 0.0, %v3115
  %3117 = vmatmul.f32.gmra.mxu0 %v2972
  %v3118 = vpop.f32.mrf.mxu0
  %v3119 = vadd.f32 0.0, %v3118
  %3120 = vmatmul.f32.gmra.mxu0 %v2973
  %v3121 = vpop.f32.mrf.mxu0
  %v3122 = vadd.f32 0.0, %v3121
  %3123 = vmatmul.f32.gmra.mxu0 %v2974
  %v3124 = vpop.f32.mrf.mxu0
  %v3125 = vadd.f32 0.0, %v3124
  %3126 = vmatmul.f32.gmra.mxu0 %v2975
  %v3127 = vpop.f32.mrf.mxu0
  %v3128 = vadd.f32 0.0, %v3127
  %3129 = vmatmul.f32.gmra.mxu0 %v2976
  %v3130 = vpop.f32.mrf.mxu0
  %v3131 = vadd.f32 0.0, %v3130
  %3132 = vmatmul.f32.gmra.mxu0 %v2977
  %v3133 = vpop.f32.mrf.mxu0
  %v3134 = vadd.f32 0.0, %v3133
  %3135 = vmatmul.f32.gmra.mxu0 %v2978
  %v3136 = vpop.f32.mrf.mxu0
  %v3137 = vadd.f32 0.0, %v3136
  %3138 = vmatmul.f32.gmra.mxu0 %v2979
  %v3139 = vpop.f32.mrf.mxu0
  %v3140 = vadd.f32 0.0, %v3139
  %3141 = vmatmul.f32.gmra.mxu0 %v2980
  %v3142 = vpop.f32.mrf.mxu0
  %v3143 = vadd.f32 0.0, %v3142
  %3144 = vmatmul.f32.gmra.mxu0 %v2981
  %v3145 = vpop.f32.mrf.mxu0
  %v3146 = vadd.f32 0.0, %v3145
  %3147 = vmatmul.f32.gmra.mxu0 %v2982
  %v3148 = vpop.f32.mrf.mxu0
  %v3149 = vadd.f32 0.0, %v3148
  %3150 = vmatmul.f32.gmra.mxu0 %v2983
  %v3151 = vpop.f32.mrf.mxu0
  %v3152 = vadd.f32 0.0, %v3151
  %3153 = vmatmul.f32.gmra.mxu0 %v2984
  %v3154 = vpop.f32.mrf.mxu0
  %v3155 = vadd.f32 0.0, %v3154
  %3156 = vmatmul.f32.gmra.mxu0 %v2985
  %v3157 = vpop.f32.mrf.mxu0
  %v3158 = vadd.f32 0.0, %v3157
  %3159 = vmatmul.f32.gmra.mxu0 %v2986
  %v3160 = vpop.f32.mrf.mxu0
  %v3161 = vadd.f32 0.0, %v3160
  %3162 = vmatmul.f32.gmra.mxu0 %v2987
  %v3163 = vpop.f32.mrf.mxu0
  %v3164 = vadd.f32 0.0, %v3163
  %3165 = vmatmul.f32.gmra.mxu0 %v2988
  %v3166 = vpop.f32.mrf.mxu0
  %v3167 = vadd.f32 0.0, %v3166
  %3168 = vmatmul.f32.gmra.mxu0 %v2989
  %v3169 = vpop.f32.mrf.mxu0
  %v3170 = vadd.f32 0.0, %v3169
  %3171 = vmatmul.f32.gmra.mxu0 %v2990
  %v3172 = vpop.f32.mrf.mxu0
  %v3173 = vadd.f32 0.0, %v3172
  %3174 = vmatmul.f32.gmra.mxu0 %v2991
  %v3175 = vpop.f32.mrf.mxu0
  %v3176 = vadd.f32 0.0, %v3175
  %3177 = vmatmul.f32.gmra.mxu0 %v2992
  %v3178 = vpop.f32.mrf.mxu0
  %v3179 = vadd.f32 0.0, %v3178
  %3180 = vmatmul.f32.gmra.mxu0 %v2993
  %v3181 = vpop.f32.mrf.mxu0
  %v3182 = vadd.f32 0.0, %v3181
  %3183 = vmatmul.f32.gmra.mxu0 %v2994
  %v3184 = vpop.f32.mrf.mxu0
  %v3185 = vadd.f32 0.0, %v3184
  %3186 = vmatmul.f32.gmra.mxu0 %v2995
  %v3187 = vpop.f32.mrf.mxu0
  %v3188 = vadd.f32 0.0, %v3187
  %3189 = vmatmul.f32.gmra.mxu0 %v2996
  %v3190 = vpop.f32.mrf.mxu0
  %v3191 = vadd.f32 0.0, %v3190
  %3192 = vmatmul.f32.gmra.mxu0 %v2997
  %v3193 = vpop.f32.mrf.mxu0
  %v3194 = vadd.f32 0.0, %v3193
  %3195 = vmatmul.f32.gmra.mxu0 %v2998
  %v3196 = vpop.f32.mrf.mxu0
  %v3197 = vadd.f32 0.0, %v3196
  %3198 = vmatmul.f32.gmra.mxu0 %v2999
  %v3199 = vpop.f32.mrf.mxu0
  %v3200 = vadd.f32 0.0, %v3199
  %3201 = vmatmul.f32.gmra.mxu0 %v3000
  %v3202 = vpop.f32.mrf.mxu0
  %v3203 = vadd.f32 0.0, %v3202
  %3204 = vmatmul.f32.gmra.mxu0 %v3001
  %v3205 = vpop.f32.mrf.mxu0
  %v3206 = vadd.f32 0.0, %v3205
  %3207 = vmatmul.f32.gmra.mxu0 %v3002
  %v3208 = vpop.f32.mrf.mxu0
  %v3209 = vadd.f32 0.0, %v3208
  %3210 = vmatmul.f32.gmra.mxu0 %v3003
  %v3211 = vpop.f32.mrf.mxu0
  %v3212 = vadd.f32 0.0, %v3211
  %3213 = vmatmul.f32.gmra.mxu0 %v3004
  %v3214 = vpop.f32.mrf.mxu0
  %v3215 = vadd.f32 0.0, %v3214
  %3216 = vmatmul.f32.gmra.mxu0 %v3005
  %v3217 = vpop.f32.mrf.mxu0
  %v3218 = vadd.f32 0.0, %v3217
  %3219 = vmatmul.f32.gmra.mxu0 %v3006
  %v3220 = vpop.f32.mrf.mxu0
  %v3221 = vadd.f32 0.0, %v3220
  %3222 = vmatmul.f32.gmra.mxu0 %v3007
  %v3223 = vpop.f32.mrf.mxu0
  %v3224 = vadd.f32 0.0, %v3223
  %3225 = vmatmul.f32.gmra.mxu0 %v3008
  %v3226 = vpop.f32.mrf.mxu0
  %v3227 = vadd.f32 0.0, %v3226
  %3228 = vmatmul.f32.gmra.mxu0 %v3009
  %v3229 = vpop.f32.mrf.mxu0
  %v3230 = vadd.f32 0.0, %v3229
  %3231 = vmatmul.f32.gmra.mxu0 %v3010
  %v3232 = vpop.f32.mrf.mxu0
  %v3233 = vadd.f32 0.0, %v3232
  %3234 = vmatmul.f32.gmra.mxu0 %v3011
  %v3235 = vpop.f32.mrf.mxu0
  %v3236 = vadd.f32 0.0, %v3235
  %3237 = vdwg.mxu0
  %v3238 = vadd.f32 %v2884, %v3047
  %v3239 = vadd.f32 %v2885, %v3050
  %v3240 = vadd.f32 %v2886, %v3053
  %v3241 = vadd.f32 %v2887, %v3056
  %v3242 = vadd.f32 %v2888, %v3059
  %v3243 = vadd.f32 %v2889, %v3062
  %v3244 = vadd.f32 %v2890, %v3065
  %v3245 = vadd.f32 %v2891, %v3068
  %v3246 = vadd.f32 %v2892, %v3071
  %v3247 = vadd.f32 %v2893, %v3074
  %v3248 = vadd.f32 %v2894, %v3077
  %v3249 = vadd.f32 %v2895, %v3080
  %v3250 = vadd.f32 %v2896, %v3083
  %v3251 = vadd.f32 %v2897, %v3086
  %v3252 = vadd.f32 %v2898, %v3089
  %v3253 = vadd.f32 %v2899, %v3092
  %v3254 = vadd.f32 %v2900, %v3095
  %v3255 = vadd.f32 %v2901, %v3098
  %v3256 = vadd.f32 %v2902, %v3101
  %v3257 = vadd.f32 %v2903, %v3104
  %v3258 = vadd.f32 %v2904, %v3107
  %v3259 = vadd.f32 %v2905, %v3110
  %v3260 = vadd.f32 %v2906, %v3113
  %v3261 = vadd.f32 %v2907, %v3116
  %v3262 = vadd.f32 %v2908, %v3119
  %v3263 = vadd.f32 %v2909, %v3122
  %v3264 = vadd.f32 %v2910, %v3125
  %v3265 = vadd.f32 %v2911, %v3128
  %v3266 = vadd.f32 %v2912, %v3131
  %v3267 = vadd.f32 %v2913, %v3134
  %v3268 = vadd.f32 %v2914, %v3137
  %v3269 = vadd.f32 %v2915, %v3140
  %v3270 = vadd.f32 %v2916, %v3143
  %v3271 = vadd.f32 %v2917, %v3146
  %v3272 = vadd.f32 %v2918, %v3149
  %v3273 = vadd.f32 %v2919, %v3152
  %v3274 = vadd.f32 %v2920, %v3155
  %v3275 = vadd.f32 %v2921, %v3158
  %v3276 = vadd.f32 %v2922, %v3161
  %v3277 = vadd.f32 %v2923, %v3164
  %v3278 = vadd.f32 %v2924, %v3167
  %v3279 = vadd.f32 %v2925, %v3170
  %v3280 = vadd.f32 %v2926, %v3173
  %v3281 = vadd.f32 %v2927, %v3176
  %v3282 = vadd.f32 %v2928, %v3179
  %v3283 = vadd.f32 %v2929, %v3182
  %v3284 = vadd.f32 %v2930, %v3185
  %v3285 = vadd.f32 %v2931, %v3188
  %v3286 = vadd.f32 %v2932, %v3191
  %v3287 = vadd.f32 %v2933, %v3194
  %v3288 = vadd.f32 %v2934, %v3197
  %v3289 = vadd.f32 %v2935, %v3200
  %v3290 = vadd.f32 %v2936, %v3203
  %v3291 = vadd.f32 %v2937, %v3206
  %v3292 = vadd.f32 %v2938, %v3209
  %v3293 = vadd.f32 %v2939, %v3212
  %v3294 = vadd.f32 %v2940, %v3215
  %v3295 = vadd.f32 %v2941, %v3218
  %v3296 = vadd.f32 %v2942, %v3221
  %v3297 = vadd.f32 %v2943, %v3224
  %v3298 = vadd.f32 %v2944, %v3227
  %v3299 = vadd.f32 %v2945, %v3230
  %v3300 = vadd.f32 %v2946, %v3233
  %v3301 = vadd.f32 %v2947, %v3236
  %v3302 = vld [vmem:[%s3] sm:$0x1]
  %v3303 = vld [vmem:[%s4] sm:$0x1]
  %v3304 = vadd.f32 %v3238, %v3239
  %v3305 = vadd.f32 %v3304, %v3240
  %v3306 = vadd.f32 %v3305, %v3241
  %v3307 = vadd.f32 %v3306, %v3242
  %v3308 = vadd.f32 %v3307, %v3243
  %v3309 = vadd.f32 %v3308, %v3244
  %v3310 = vadd.f32 %v3309, %v3245
  %v3311 = vadd.f32 %v3310, %v3246
  %v3312 = vadd.f32 %v3311, %v3247
  %v3313 = vadd.f32 %v3312, %v3248
  %v3314 = vadd.f32 %v3313, %v3249
  %v3315 = vadd.f32 %v3314, %v3250
  %v3316 = vadd.f32 %v3315, %v3251
  %v3317 = vadd.f32 %v3316, %v3252
  %v3318 = vadd.f32 %v3317, %v3253
  %v3319 = vadd.f32 %v3318, %v3254
  %v3320 = vadd.f32 %v3319, %v3255
  %v3321 = vadd.f32 %v3320, %v3256
  %v3322 = vadd.f32 %v3321, %v3257
  %v3323 = vadd.f32 %v3322, %v3258
  %v3324 = vadd.f32 %v3323, %v3259
  %v3325 = vadd.f32 %v3324, %v3260
  %v3326 = vadd.f32 %v3325, %v3261
  %v3327 = vadd.f32 %v3326, %v3262
  %v3328 = vadd.f32 %v3327, %v3263
  %v3329 = vadd.f32 %v3328, %v3264
  %v3330 = vadd.f32 %v3329, %v3265
  %v3331 = vadd.f32 %v3330, %v3266
  %v3332 = vadd.f32 %v3331, %v3267
  %v3333 = vadd.f32 %v3332, %v3268
  %v3334 = vadd.f32 %v3333, %v3269
  %v3335 = vadd.f32 %v3334, %v3270
  %v3336 = vadd.f32 %v3335, %v3271
  %v3337 = vadd.f32 %v3336, %v3272
  %v3338 = vadd.f32 %v3337, %v3273
  %v3339 = vadd.f32 %v3338, %v3274
  %v3340 = vadd.f32 %v3339, %v3275
  %v3341 = vadd.f32 %v3340, %v3276
  %v3342 = vadd.f32 %v3341, %v3277
  %v3343 = vadd.f32 %v3342, %v3278
  %v3344 = vadd.f32 %v3343, %v3279
  %v3345 = vadd.f32 %v3344, %v3280
  %v3346 = vadd.f32 %v3345, %v3281
  %v3347 = vadd.f32 %v3346, %v3282
  %v3348 = vadd.f32 %v3347, %v3283
  %v3349 = vadd.f32 %v3348, %v3284
  %v3350 = vadd.f32 %v3349, %v3285
  %v3351 = vadd.f32 %v3350, %v3286
  %v3352 = vadd.f32 %v3351, %v3287
  %v3353 = vadd.f32 %v3352, %v3288
  %v3354 = vadd.f32 %v3353, %v3289
  %v3355 = vadd.f32 %v3354, %v3290
  %v3356 = vadd.f32 %v3355, %v3291
  %v3357 = vadd.f32 %v3356, %v3292
  %v3358 = vadd.f32 %v3357, %v3293
  %v3359 = vadd.f32 %v3358, %v3294
  %v3360 = vadd.f32 %v3359, %v3295
  %v3361 = vadd.f32 %v3360, %v3296
  %v3362 = vadd.f32 %v3361, %v3297
  %v3363 = vadd.f32 %v3362, %v3298
  %v3364 = vadd.f32 %v3363, %v3299
  %v3365 = vadd.f32 %v3364, %v3300
  %v3366 = vadd.f32 %v3365, %v3301
  %v3367 = vrot.slane %v3366, 4
  %v3368 = vadd.f32 %v3366, %v3367
  %v3369 = vrot.slane %v3368, 2
  %v3370 = vadd.f32 %v3368, %v3369
  %v3371 = vrot.slane %v3370, 1
  %v3372 = vadd.f32 %v3370, %v3371
  %v3373 = vmul.f32 %v3372, 0.001953125
  %v3374 = vmul.f32 %v3238, %v3238
  %v3375 = vmul.f32 %v3239, %v3239
  %v3376 = vmul.f32 %v3240, %v3240
  %v3377 = vmul.f32 %v3241, %v3241
  %v3378 = vmul.f32 %v3242, %v3242
  %v3379 = vmul.f32 %v3243, %v3243
  %v3380 = vmul.f32 %v3244, %v3244
  %v3381 = vmul.f32 %v3245, %v3245
  %v3382 = vmul.f32 %v3246, %v3246
  %v3383 = vmul.f32 %v3247, %v3247
  %v3384 = vmul.f32 %v3248, %v3248
  %v3385 = vmul.f32 %v3249, %v3249
  %v3386 = vmul.f32 %v3250, %v3250
  %v3387 = vmul.f32 %v3251, %v3251
  %v3388 = vmul.f32 %v3252, %v3252
  %v3389 = vmul.f32 %v3253, %v3253
  %v3390 = vmul.f32 %v3254, %v3254
  %v3391 = vmul.f32 %v3255, %v3255
  %v3392 = vmul.f32 %v3256, %v3256
  %v3393 = vmul.f32 %v3257, %v3257
  %v3394 = vmul.f32 %v3258, %v3258
  %v3395 = vmul.f32 %v3259, %v3259
  %v3396 = vmul.f32 %v3260, %v3260
  %v3397 = vmul.f32 %v3261, %v3261
  %v3398 = vmul.f32 %v3262, %v3262
  %v3399 = vmul.f32 %v3263, %v3263
  %v3400 = vmul.f32 %v3264, %v3264
  %v3401 = vmul.f32 %v3265, %v3265
  %v3402 = vmul.f32 %v3266, %v3266
  %v3403 = vmul.f32 %v3267, %v3267
  %v3404 = vmul.f32 %v3268, %v3268
  %v3405 = vmul.f32 %v3269, %v3269
  %v3406 = vmul.f32 %v3270, %v3270
  %v3407 = vmul.f32 %v3271, %v3271
  %v3408 = vmul.f32 %v3272, %v3272
  %v3409 = vmul.f32 %v3273, %v3273
  %v3410 = vmul.f32 %v3274, %v3274
  %v3411 = vmul.f32 %v3275, %v3275
  %v3412 = vmul.f32 %v3276, %v3276
  %v3413 = vmul.f32 %v3277, %v3277
  %v3414 = vmul.f32 %v3278, %v3278
  %v3415 = vmul.f32 %v3279, %v3279
  %v3416 = vmul.f32 %v3280, %v3280
  %v3417 = vmul.f32 %v3281, %v3281
  %v3418 = vmul.f32 %v3282, %v3282
  %v3419 = vmul.f32 %v3283, %v3283
  %v3420 = vmul.f32 %v3284, %v3284
  %v3421 = vmul.f32 %v3285, %v3285
  %v3422 = vmul.f32 %v3286, %v3286
  %v3423 = vmul.f32 %v3287, %v3287
  %v3424 = vmul.f32 %v3288, %v3288
  %v3425 = vmul.f32 %v3289, %v3289
  %v3426 = vmul.f32 %v3290, %v3290
  %v3427 = vmul.f32 %v3291, %v3291
  %v3428 = vmul.f32 %v3292, %v3292
  %v3429 = vmul.f32 %v3293, %v3293
  %v3430 = vmul.f32 %v3294, %v3294
  %v3431 = vmul.f32 %v3295, %v3295
  %v3432 = vmul.f32 %v3296, %v3296
  %v3433 = vmul.f32 %v3297, %v3297
  %v3434 = vmul.f32 %v3298, %v3298
  %v3435 = vmul.f32 %v3299, %v3299
  %v3436 = vmul.f32 %v3300, %v3300
  %v3437 = vmul.f32 %v3301, %v3301
  %v3438 = vadd.f32 %v3374, %v3375
  %v3439 = vadd.f32 %v3438, %v3376
  %v3440 = vadd.f32 %v3439, %v3377
  %v3441 = vadd.f32 %v3440, %v3378
  %v3442 = vadd.f32 %v3441, %v3379
  %v3443 = vadd.f32 %v3442, %v3380
  %v3444 = vadd.f32 %v3443, %v3381
  %v3445 = vadd.f32 %v3444, %v3382
  %v3446 = vadd.f32 %v3445, %v3383
  %v3447 = vadd.f32 %v3446, %v3384
  %v3448 = vadd.f32 %v3447, %v3385
  %v3449 = vadd.f32 %v3448, %v3386
  %v3450 = vadd.f32 %v3449, %v3387
  %v3451 = vadd.f32 %v3450, %v3388
  %v3452 = vadd.f32 %v3451, %v3389
  %v3453 = vadd.f32 %v3452, %v3390
  %v3454 = vadd.f32 %v3453, %v3391
  %v3455 = vadd.f32 %v3454, %v3392
  %v3456 = vadd.f32 %v3455, %v3393
  %v3457 = vadd.f32 %v3456, %v3394
  %v3458 = vadd.f32 %v3457, %v3395
  %v3459 = vadd.f32 %v3458, %v3396
  %v3460 = vadd.f32 %v3459, %v3397
  %v3461 = vadd.f32 %v3460, %v3398
  %v3462 = vadd.f32 %v3461, %v3399
  %v3463 = vadd.f32 %v3462, %v3400
  %v3464 = vadd.f32 %v3463, %v3401
  %v3465 = vadd.f32 %v3464, %v3402
  %v3466 = vadd.f32 %v3465, %v3403
  %v3467 = vadd.f32 %v3466, %v3404
  %v3468 = vadd.f32 %v3467, %v3405
  %v3469 = vadd.f32 %v3468, %v3406
  %v3470 = vadd.f32 %v3469, %v3407
  %v3471 = vadd.f32 %v3470, %v3408
  %v3472 = vadd.f32 %v3471, %v3409
  %v3473 = vadd.f32 %v3472, %v3410
  %v3474 = vadd.f32 %v3473, %v3411
  %v3475 = vadd.f32 %v3474, %v3412
  %v3476 = vadd.f32 %v3475, %v3413
  %v3477 = vadd.f32 %v3476, %v3414
  %v3478 = vadd.f32 %v3477, %v3415
  %v3479 = vadd.f32 %v3478, %v3416
  %v3480 = vadd.f32 %v3479, %v3417
  %v3481 = vadd.f32 %v3480, %v3418
  %v3482 = vadd.f32 %v3481, %v3419
  %v3483 = vadd.f32 %v3482, %v3420
  %v3484 = vadd.f32 %v3483, %v3421
  %v3485 = vadd.f32 %v3484, %v3422
  %v3486 = vadd.f32 %v3485, %v3423
  %v3487 = vadd.f32 %v3486, %v3424
  %v3488 = vadd.f32 %v3487, %v3425
  %v3489 = vadd.f32 %v3488, %v3426
  %v3490 = vadd.f32 %v3489, %v3427
  %v3491 = vadd.f32 %v3490, %v3428
  %v3492 = vadd.f32 %v3491, %v3429
  %v3493 = vadd.f32 %v3492, %v3430
  %v3494 = vadd.f32 %v3493, %v3431
  %v3495 = vadd.f32 %v3494, %v3432
  %v3496 = vadd.f32 %v3495, %v3433
  %v3497 = vadd.f32 %v3496, %v3434
  %v3498 = vadd.f32 %v3497, %v3435
  %v3499 = vadd.f32 %v3498, %v3436
  %v3500 = vadd.f32 %v3499, %v3437
  %v3501 = vrot.slane %v3500, 4
  %v3502 = vadd.f32 %v3500, %v3501
  %v3503 = vrot.slane %v3502, 2
  %v3504 = vadd.f32 %v3502, %v3503
  %v3505 = vrot.slane %v3504, 1
  %v3506 = vadd.f32 %v3504, %v3505
  %v3507 = vmul.f32 %v3506, 0.001953125
  %v3508 = vmul.f32 %v3373, %v3373
  %v3509 = vsub.f32 %v3507, %v3508
  %v3510 = vadd.f32 %v3509, 1e-05
  %v3511 = vrsqrt.pop %v3510
  %v3512 = vmul.f32 %v3511, %v3510
  %v3513 = vmul.f32 %v3512, %v3511
  %v3514 = vmul.f32 0.5, %v3513
  %v3515 = vsub.f32 1.5, %v3514
  %v3516 = vmul.f32 %v3511, %v3515
  %vm3517 = vweird.f32 %v3510
  %vm3518 = vweird.f32 %v3511
  %vm3519 = vmor %vm3517, %vm3518
  %v3520 = vsel %vm3519, %v3511, %v3516
  %v3521 = vmul.f32 %v3520, %v3302
  %v3522 = vmul.f32 %v3373, %v3521
  %v3523 = vsub.f32 %v3303, %v3522
  %v3524 = vperm.slane %v3521, 0
  %v3525 = vmul.f32 %v3238, %v3524
  %v3526 = vmul.f32 %v3239, %v3524
  %v3527 = vmul.f32 %v3240, %v3524
  %v3528 = vmul.f32 %v3241, %v3524
  %v3529 = vmul.f32 %v3242, %v3524
  %v3530 = vmul.f32 %v3243, %v3524
  %v3531 = vmul.f32 %v3244, %v3524
  %v3532 = vmul.f32 %v3245, %v3524
  %v3533 = vmul.f32 %v3246, %v3524
  %v3534 = vmul.f32 %v3247, %v3524
  %v3535 = vmul.f32 %v3248, %v3524
  %v3536 = vmul.f32 %v3249, %v3524
  %v3537 = vmul.f32 %v3250, %v3524
  %v3538 = vmul.f32 %v3251, %v3524
  %v3539 = vmul.f32 %v3252, %v3524
  %v3540 = vmul.f32 %v3253, %v3524
  %v3541 = vmul.f32 %v3254, %v3524
  %v3542 = vmul.f32 %v3255, %v3524
  %v3543 = vmul.f32 %v3256, %v3524
  %v3544 = vmul.f32 %v3257, %v3524
  %v3545 = vmul.f32 %v3258, %v3524
  %v3546 = vmul.f32 %v3259, %v3524
  %v3547 = vmul.f32 %v3260, %v3524
  %v3548 = vmul.f32 %v3261, %v3524
  %v3549 = vmul.f32 %v3262, %v3524
  %v3550 = vmul.f32 %v3263, %v3524
  %v3551 = vmul.f32 %v3264, %v3524
  %v3552 = vmul.f32 %v3265, %v3524
  %v3553 = vmul.f32 %v3266, %v3524
  %v3554 = vmul.f32 %v3267, %v3524
  %v3555 = vmul.f32 %v3268, %v3524
  %v3556 = vmul.f32 %v3269, %v3524
  %v3557 = vmul.f32 %v3270, %v3524
  %v3558 = vmul.f32 %v3271, %v3524
  %v3559 = vmul.f32 %v3272, %v3524
  %v3560 = vmul.f32 %v3273, %v3524
  %v3561 = vmul.f32 %v3274, %v3524
  %v3562 = vmul.f32 %v3275, %v3524
  %v3563 = vmul.f32 %v3276, %v3524
  %v3564 = vmul.f32 %v3277, %v3524
  %v3565 = vmul.f32 %v3278, %v3524
  %v3566 = vmul.f32 %v3279, %v3524
  %v3567 = vmul.f32 %v3280, %v3524
  %v3568 = vmul.f32 %v3281, %v3524
  %v3569 = vmul.f32 %v3282, %v3524
  %v3570 = vmul.f32 %v3283, %v3524
  %v3571 = vmul.f32 %v3284, %v3524
  %v3572 = vmul.f32 %v3285, %v3524
  %v3573 = vmul.f32 %v3286, %v3524
  %v3574 = vmul.f32 %v3287, %v3524
  %v3575 = vmul.f32 %v3288, %v3524
  %v3576 = vmul.f32 %v3289, %v3524
  %v3577 = vmul.f32 %v3290, %v3524
  %v3578 = vmul.f32 %v3291, %v3524
  %v3579 = vmul.f32 %v3292, %v3524
  %v3580 = vmul.f32 %v3293, %v3524
  %v3581 = vmul.f32 %v3294, %v3524
  %v3582 = vmul.f32 %v3295, %v3524
  %v3583 = vmul.f32 %v3296, %v3524
  %v3584 = vmul.f32 %v3297, %v3524
  %v3585 = vmul.f32 %v3298, %v3524
  %v3586 = vmul.f32 %v3299, %v3524
  %v3587 = vmul.f32 %v3300, %v3524
  %v3588 = vmul.f32 %v3301, %v3524
  %v3590 = vperm.slane %v3523, 0
  %v3592 = vadd.f32 %v3525, %v3590
  %v3593 = vadd.f32 %v3526, %v3590
  %v3594 = vadd.f32 %v3527, %v3590
  %v3595 = vadd.f32 %v3528, %v3590
  %v3596 = vadd.f32 %v3529, %v3590
  %v3597 = vadd.f32 %v3530, %v3590
  %v3598 = vadd.f32 %v3531, %v3590
  %v3599 = vadd.f32 %v3532, %v3590
  %v3600 = vadd.f32 %v3533, %v3590
  %v3601 = vadd.f32 %v3534, %v3590
  %v3602 = vadd.f32 %v3535, %v3590
  %v3603 = vadd.f32 %v3536, %v3590
  %v3604 = vadd.f32 %v3537, %v3590
  %v3605 = vadd.f32 %v3538, %v3590
  %v3606 = vadd.f32 %v3539, %v3590
  %v3607 = vadd.f32 %v3540, %v3590
  %v3608 = vadd.f32 %v3541, %v3590
  %v3609 = vadd.f32 %v3542, %v3590
  %v3610 = vadd.f32 %v3543, %v3590
  %v3611 = vadd.f32 %v3544, %v3590
  %v3612 = vadd.f32 %v3545, %v3590
  %v3613 = vadd.f32 %v3546, %v3590
  %v3614 = vadd.f32 %v3547, %v3590
  %v3615 = vadd.f32 %v3548, %v3590
  %v3616 = vadd.f32 %v3549, %v3590
  %v3617 = vadd.f32 %v3550, %v3590
  %v3618 = vadd.f32 %v3551, %v3590
  %v3619 = vadd.f32 %v3552, %v3590
  %v3620 = vadd.f32 %v3553, %v3590
  %v3621 = vadd.f32 %v3554, %v3590
  %v3622 = vadd.f32 %v3555, %v3590
  %v3623 = vadd.f32 %v3556, %v3590
  %v3624 = vadd.f32 %v3557, %v3590
  %v3625 = vadd.f32 %v3558, %v3590
  %v3626 = vadd.f32 %v3559, %v3590
  %v3627 = vadd.f32 %v3560, %v3590
  %v3628 = vadd.f32 %v3561, %v3590
  %v3629 = vadd.f32 %v3562, %v3590
  %v3630 = vadd.f32 %v3563, %v3590
  %v3631 = vadd.f32 %v3564, %v3590
  %v3632 = vadd.f32 %v3565, %v3590
  %v3633 = vadd.f32 %v3566, %v3590
  %v3634 = vadd.f32 %v3567, %v3590
  %v3635 = vadd.f32 %v3568, %v3590
  %v3636 = vadd.f32 %v3569, %v3590
  %v3637 = vadd.f32 %v3570, %v3590
  %v3638 = vadd.f32 %v3571, %v3590
  %v3639 = vadd.f32 %v3572, %v3590
  %v3640 = vadd.f32 %v3573, %v3590
  %v3641 = vadd.f32 %v3574, %v3590
  %v3642 = vadd.f32 %v3575, %v3590
  %v3643 = vadd.f32 %v3576, %v3590
  %v3644 = vadd.f32 %v3577, %v3590
  %v3645 = vadd.f32 %v3578, %v3590
  %v3646 = vadd.f32 %v3579, %v3590
  %v3647 = vadd.f32 %v3580, %v3590
  %v3648 = vadd.f32 %v3581, %v3590
  %v3649 = vadd.f32 %v3582, %v3590
  %v3650 = vadd.f32 %v3583, %v3590
  %v3651 = vadd.f32 %v3584, %v3590
  %v3652 = vadd.f32 %v3585, %v3590
  %v3653 = vadd.f32 %v3586, %v3590
  %v3654 = vadd.f32 %v3587, %v3590
  %v3655 = vadd.f32 %v3588, %v3590
  %v3656 = vmax.f32 %v3592, 0.0
  %v3657 = vmax.f32 %v3593, 0.0
  %v3658 = vmax.f32 %v3594, 0.0
  %v3659 = vmax.f32 %v3595, 0.0
  %v3660 = vmax.f32 %v3596, 0.0
  %v3661 = vmax.f32 %v3597, 0.0
  %v3662 = vmax.f32 %v3598, 0.0
  %v3663 = vmax.f32 %v3599, 0.0
  %v3664 = vmax.f32 %v3600, 0.0
  %v3665 = vmax.f32 %v3601, 0.0
  %v3666 = vmax.f32 %v3602, 0.0
  %v3667 = vmax.f32 %v3603, 0.0
  %v3668 = vmax.f32 %v3604, 0.0
  %v3669 = vmax.f32 %v3605, 0.0
  %v3670 = vmax.f32 %v3606, 0.0
  %v3671 = vmax.f32 %v3607, 0.0
  %v3672 = vmax.f32 %v3608, 0.0
  %v3673 = vmax.f32 %v3609, 0.0
  %v3674 = vmax.f32 %v3610, 0.0
  %v3675 = vmax.f32 %v3611, 0.0
  %v3676 = vmax.f32 %v3612, 0.0
  %v3677 = vmax.f32 %v3613, 0.0
  %v3678 = vmax.f32 %v3614, 0.0
  %v3679 = vmax.f32 %v3615, 0.0
  %v3680 = vmax.f32 %v3616, 0.0
  %v3681 = vmax.f32 %v3617, 0.0
  %v3682 = vmax.f32 %v3618, 0.0
  %v3683 = vmax.f32 %v3619, 0.0
  %v3684 = vmax.f32 %v3620, 0.0
  %v3685 = vmax.f32 %v3621, 0.0
  %v3686 = vmax.f32 %v3622, 0.0
  %v3687 = vmax.f32 %v3623, 0.0
  %v3688 = vmax.f32 %v3624, 0.0
  %v3689 = vmax.f32 %v3625, 0.0
  %v3690 = vmax.f32 %v3626, 0.0
  %v3691 = vmax.f32 %v3627, 0.0
  %v3692 = vmax.f32 %v3628, 0.0
  %v3693 = vmax.f32 %v3629, 0.0
  %v3694 = vmax.f32 %v3630, 0.0
  %v3695 = vmax.f32 %v3631, 0.0
  %v3696 = vmax.f32 %v3632, 0.0
  %v3697 = vmax.f32 %v3633, 0.0
  %v3698 = vmax.f32 %v3634, 0.0
  %v3699 = vmax.f32 %v3635, 0.0
  %v3700 = vmax.f32 %v3636, 0.0
  %v3701 = vmax.f32 %v3637, 0.0
  %v3702 = vmax.f32 %v3638, 0.0
  %v3703 = vmax.f32 %v3639, 0.0
  %v3704 = vmax.f32 %v3640, 0.0
  %v3705 = vmax.f32 %v3641, 0.0
  %v3706 = vmax.f32 %v3642, 0.0
  %v3707 = vmax.f32 %v3643, 0.0
  %v3708 = vmax.f32 %v3644, 0.0
  %v3709 = vmax.f32 %v3645, 0.0
  %v3710 = vmax.f32 %v3646, 0.0
  %v3711 = vmax.f32 %v3647, 0.0
  %v3712 = vmax.f32 %v3648, 0.0
  %v3713 = vmax.f32 %v3649, 0.0
  %v3714 = vmax.f32 %v3650, 0.0
  %v3715 = vmax.f32 %v3651, 0.0
  %v3716 = vmax.f32 %v3652, 0.0
  %v3717 = vmax.f32 %v3653, 0.0
  %v3718 = vmax.f32 %v3654, 0.0
  %v3719 = vmax.f32 %v3655, 0.0
  %3720 = vst [vmem:[%s179 + $0x8] sm:$0xff] %v3656
  %3721 = vst [vmem:[%s179 + $0x10] sm:$0xff] %v3657
  %3722 = vst [vmem:[%s179 + $0x28] sm:$0xff] %v3658
  %3723 = vst [vmem:[%s179 + $0x30] sm:$0xff] %v3659
  %3724 = vst [vmem:[%s179 + $0x48] sm:$0xff] %v3660
  %3725 = vst [vmem:[%s179 + $0x50] sm:$0xff] %v3661
  %3726 = vst [vmem:[%s179 + $0x68] sm:$0xff] %v3662
  %3727 = vst [vmem:[%s179 + $0x70] sm:$0xff] %v3663
  %3728 = vst [vmem:[%s179 + $0x88] sm:$0xff] %v3664
  %3729 = vst [vmem:[%s179 + $0x90] sm:$0xff] %v3665
  %3730 = vst [vmem:[%s179 + $0xa8] sm:$0xff] %v3666
  %3731 = vst [vmem:[%s179 + $0xb0] sm:$0xff] %v3667
  %3732 = vst [vmem:[%s179 + $0xc8] sm:$0xff] %v3668
  %3733 = vst [vmem:[%s179 + $0xd0] sm:$0xff] %v3669
  %3734 = vst [vmem:[%s179 + $0xe8] sm:$0xff] %v3670
  %3735 = vst [vmem:[%s179 + $0xf0] sm:$0xff] %v3671
  %3736 = vst [vmem:[%s179 + $0x108] sm:$0xff] %v3672
  %3737 = vst [vmem:[%s179 + $0x110] sm:$0xff] %v3673
  %3738 = vst [vmem:[%s179 + $0x128] sm:$0xff] %v3674
  %3739 = vst [vmem:[%s179 + $0x130] sm:$0xff] %v3675
  %3740 = vst [vmem:[%s179 + $0x148] sm:$0xff] %v3676
  %3741 = vst [vmem:[%s179 + $0x150] sm:$0xff] %v3677
  %3742 = vst [vmem:[%s179 + $0x168] sm:$0xff] %v3678
  %3743 = vst [vmem:[%s179 + $0x170] sm:$0xff] %v3679
  %3744 = vst [vmem:[%s179 + $0x188] sm:$0xff] %v3680
  %3745 = vst [vmem:[%s179 + $0x190] sm:$0xff] %v3681
  %3746 = vst [vmem:[%s179 + $0x1a8] sm:$0xff] %v3682
  %3747 = vst [vmem:[%s179 + $0x1b0] sm:$0xff] %v3683
  %3748 = vst [vmem:[%s179 + $0x1c8] sm:$0xff] %v3684
  %3749 = vst [vmem:[%s179 + $0x1d0] sm:$0xff] %v3685
  %3750 = vst [vmem:[%s179 + $0x1e8] sm:$0xff] %v3686
  %3751 = vst [vmem:[%s179 + $0x1f0] sm:$0xff] %v3687
  %3752 = vst [vmem:[%s179 + $0x248] sm:$0xff] %v3688
  %3753 = vst [vmem:[%s179 + $0x250] sm:$0xff] %v3689
  %3754 = vst [vmem:[%s179 + $0x268] sm:$0xff] %v3690
  %3755 = vst [vmem:[%s179 + $0x270] sm:$0xff] %v3691
  %3756 = vst [vmem:[%s179 + $0x288] sm:$0xff] %v3692
  %3757 = vst [vmem:[%s179 + $0x290] sm:$0xff] %v3693
  %3758 = vst [vmem:[%s179 + $0x2a8] sm:$0xff] %v3694
  %3759 = vst [vmem:[%s179 + $0x2b0] sm:$0xff] %v3695
  %3760 = vst [vmem:[%s179 + $0x2c8] sm:$0xff] %v3696
  %3761 = vst [vmem:[%s179 + $0x2d0] sm:$0xff] %v3697
  %3762 = vst [vmem:[%s179 + $0x2e8] sm:$0xff] %v3698
  %3763 = vst [vmem:[%s179 + $0x2f0] sm:$0xff] %v3699
  %3764 = vst [vmem:[%s179 + $0x308] sm:$0xff] %v3700
  %3765 = vst [vmem:[%s179 + $0x310] sm:$0xff] %v3701
  %3766 = vst [vmem:[%s179 + $0x328] sm:$0xff] %v3702
  %3767 = vst [vmem:[%s179 + $0x330] sm:$0xff] %v3703
  %3768 = vst [vmem:[%s179 + $0x348] sm:$0xff] %v3704
  %3769 = vst [vmem:[%s179 + $0x350] sm:$0xff] %v3705
  %3770 = vst [vmem:[%s179 + $0x368] sm:$0xff] %v3706
  %3771 = vst [vmem:[%s179 + $0x370] sm:$0xff] %v3707
  %3772 = vst [vmem:[%s179 + $0x388] sm:$0xff] %v3708
  %3773 = vst [vmem:[%s179 + $0x390] sm:$0xff] %v3709
  %3774 = vst [vmem:[%s179 + $0x3a8] sm:$0xff] %v3710
  %3775 = vst [vmem:[%s179 + $0x3b0] sm:$0xff] %v3711
  %3776 = vst [vmem:[%s179 + $0x3c8] sm:$0xff] %v3712
  %3777 = vst [vmem:[%s179 + $0x3d0] sm:$0xff] %v3713
  %3778 = vst [vmem:[%s179 + $0x3e8] sm:$0xff] %v3714
  %3779 = vst [vmem:[%s179 + $0x3f0] sm:$0xff] %v3715
  %3780 = vst [vmem:[%s179 + $0x408] sm:$0xff] %v3716
  %3781 = vst [vmem:[%s179 + $0x410] sm:$0xff] %v3717
  %3782 = vst [vmem:[%s179 + $0x428] sm:$0xff] %v3718
  %3783 = vst [vmem:[%s179 + $0x430] sm:$0xff] %v3719
  %v3784 = vld [vmem:[#allocation2 + $0x7] sm:$0xff]
  %v3785 = vld [vmem:[#allocation2 + $0xf] sm:$0xff]
  %v3786 = vld [vmem:[#allocation2 + $0x27] sm:$0xff]
  %v3787 = vld [vmem:[#allocation2 + $0x2f] sm:$0xff]
  %v3788 = vld [vmem:[#allocation2 + $0x47] sm:$0xff]
  %v3789 = vld [vmem:[#allocation2 + $0x4f] sm:$0xff]
  %v3790 = vld [vmem:[#allocation2 + $0x67] sm:$0xff]
  %v3791 = vld [vmem:[#allocation2 + $0x6f] sm:$0xff]
  %v3792 = vld [vmem:[#allocation2 + $0x87] sm:$0xff]
  %v3793 = vld [vmem:[#allocation2 + $0x8f] sm:$0xff]
  %v3794 = vld [vmem:[#allocation2 + $0xa7] sm:$0xff]
  %v3795 = vld [vmem:[#allocation2 + $0xaf] sm:$0xff]
  %v3796 = vld [vmem:[#allocation2 + $0xc7] sm:$0xff]
  %v3797 = vld [vmem:[#allocation2 + $0xcf] sm:$0xff]
  %v3798 = vld [vmem:[#allocation2 + $0xe7] sm:$0xff]
  %v3799 = vld [vmem:[#allocation2 + $0xef] sm:$0xff]
  %v3800 = vld [vmem:[#allocation2 + $0x107] sm:$0xff]
  %v3801 = vld [vmem:[#allocation2 + $0x10f] sm:$0xff]
  %v3802 = vld [vmem:[#allocation2 + $0x127] sm:$0xff]
  %v3803 = vld [vmem:[#allocation2 + $0x12f] sm:$0xff]
  %v3804 = vld [vmem:[#allocation2 + $0x147] sm:$0xff]
  %v3805 = vld [vmem:[#allocation2 + $0x14f] sm:$0xff]
  %v3806 = vld [vmem:[#allocation2 + $0x167] sm:$0xff]
  %v3807 = vld [vmem:[#allocation2 + $0x16f] sm:$0xff]
  %v3808 = vld [vmem:[#allocation2 + $0x187] sm:$0xff]
  %v3809 = vld [vmem:[#allocation2 + $0x18f] sm:$0xff]
  %v3810 = vld [vmem:[#allocation2 + $0x1a7] sm:$0xff]
  %v3811 = vld [vmem:[#allocation2 + $0x1af] sm:$0xff]
  %v3812 = vld [vmem:[#allocation2 + $0x1c7] sm:$0xff]
  %v3813 = vld [vmem:[#allocation2 + $0x1cf] sm:$0xff]
  %v3814 = vld [vmem:[#allocation2 + $0x1e7] sm:$0xff]
  %v3815 = vld [vmem:[#allocation2 + $0x1ef] sm:$0xff]
  %v3816 = vld [vmem:[#allocation2 + $0x247] sm:$0xff]
  %v3817 = vld [vmem:[#allocation2 + $0x24f] sm:$0xff]
  %v3818 = vld [vmem:[#allocation2 + $0x267] sm:$0xff]
  %v3819 = vld [vmem:[#allocation2 + $0x26f] sm:$0xff]
  %v3820 = vld [vmem:[#allocation2 + $0x287] sm:$0xff]
  %v3821 = vld [vmem:[#allocation2 + $0x28f] sm:$0xff]
  %v3822 = vld [vmem:[#allocation2 + $0x2a7] sm:$0xff]
  %v3823 = vld [vmem:[#allocation2 + $0x2af] sm:$0xff]
  %v3824 = vld [vmem:[#allocation2 + $0x2c7] sm:$0xff]
  %v3825 = vld [vmem:[#allocation2 + $0x2cf] sm:$0xff]
  %v3826 = vld [vmem:[#allocation2 + $0x2e7] sm:$0xff]
  %v3827 = vld [vmem:[#allocation2 + $0x2ef] sm:$0xff]
  %v3828 = vld [vmem:[#allocation2 + $0x307] sm:$0xff]
  %v3829 = vld [vmem:[#allocation2 + $0x30f] sm:$0xff]
  %v3830 = vld [vmem:[#allocation2 + $0x327] sm:$0xff]
  %v3831 = vld [vmem:[#allocation2 + $0x32f] sm:$0xff]
  %v3832 = vld [vmem:[#allocation2 + $0x347] sm:$0xff]
  %v3833 = vld [vmem:[#allocation2 + $0x34f] sm:$0xff]
  %v3834 = vld [vmem:[#allocation2 + $0x367] sm:$0xff]
  %v3835 = vld [vmem:[#allocation2 + $0x36f] sm:$0xff]
  %v3836 = vld [vmem:[#allocation2 + $0x387] sm:$0xff]
  %v3837 = vld [vmem:[#allocation2 + $0x38f] sm:$0xff]
  %v3838 = vld [vmem:[#allocation2 + $0x3a7] sm:$0xff]
  %v3839 = vld [vmem:[#allocation2 + $0x3af] sm:$0xff]
  %v3840 = vld [vmem:[#allocation2 + $0x3c7] sm:$0xff]
  %v3841 = vld [vmem:[#allocation2 + $0x3cf] sm:$0xff]
  %v3842 = vld [vmem:[#allocation2 + $0x3e7] sm:$0xff]
  %v3843 = vld [vmem:[#allocation2 + $0x3ef] sm:$0xff]
  %v3844 = vld [vmem:[#allocation2 + $0x407] sm:$0xff]
  %v3845 = vld [vmem:[#allocation2 + $0x40f] sm:$0xff]
  %v3846 = vld [vmem:[#allocation2 + $0x427] sm:$0xff]
  %v3847 = vld [vmem:[#allocation2 + $0x42f] sm:$0xff]
  %v3848 = vld [vmem:[%s2] sm:$0xff]
  %v3849 = vld [vmem:[%s2 + $0x8] sm:$0xff]
  %v3850 = vld [vmem:[%s2 + $0x10] sm:$0xff]
  %v3851 = vld [vmem:[%s2 + $0x18] sm:$0xff]
  %v3852 = vld [vmem:[%s2 + $0x20] sm:$0xff]
  %v3853 = vld [vmem:[%s2 + $0x28] sm:$0xff]
  %v3854 = vld [vmem:[%s2 + $0x30] sm:$0xff]
  %v3855 = vld [vmem:[%s2 + $0x38] sm:$0xff]
  %v3856 = vld [vmem:[%s2 + $0x40] sm:$0xff]
  %v3857 = vld [vmem:[%s2 + $0x48] sm:$0xff]
  %v3858 = vld [vmem:[%s2 + $0x50] sm:$0xff]
  %v3859 = vld [vmem:[%s2 + $0x58] sm:$0xff]
  %v3860 = vld [vmem:[%s2 + $0x60] sm:$0xff]
  %v3861 = vld [vmem:[%s2 + $0x68] sm:$0xff]
  %v3862 = vld [vmem:[%s2 + $0x70] sm:$0xff]
  %v3863 = vld [vmem:[%s2 + $0x78] sm:$0xff]
  %v3864 = vld [vmem:[#allocation2 + $0x8] sm:$0xff]
  %v3865 = vld [vmem:[#allocation2 + $0x10] sm:$0xff]
  %v3866 = vld [vmem:[#allocation2 + $0x28] sm:$0xff]
  %v3867 = vld [vmem:[#allocation2 + $0x30] sm:$0xff]
  %v3868 = vld [vmem:[#allocation2 + $0x48] sm:$0xff]
  %v3869 = vld [vmem:[#allocation2 + $0x50] sm:$0xff]
  %v3870 = vld [vmem:[#allocation2 + $0x68] sm:$0xff]
  %v3871 = vld [vmem:[#allocation2 + $0x70] sm:$0xff]
  %v3872 = vld [vmem:[#allocation2 + $0x88] sm:$0xff]
  %v3873 = vld [vmem:[#allocation2 + $0x90] sm:$0xff]
  %v3874 = vld [vmem:[#allocation2 + $0xa8] sm:$0xff]
  %v3875 = vld [vmem:[#allocation2 + $0xb0] sm:$0xff]
  %v3876 = vld [vmem:[#allocation2 + $0xc8] sm:$0xff]
  %v3877 = vld [vmem:[#allocation2 + $0xd0] sm:$0xff]
  %v3878 = vld [vmem:[#allocation2 + $0xe8] sm:$0xff]
  %v3879 = vld [vmem:[#allocation2 + $0xf0] sm:$0xff]
  %v3880 = vld [vmem:[#allocation2 + $0x108] sm:$0xff]
  %v3881 = vld [vmem:[#allocation2 + $0x110] sm:$0xff]
  %v3882 = vld [vmem:[#allocation2 + $0x128] sm:$0xff]
  %v3883 = vld [vmem:[#allocation2 + $0x130] sm:$0xff]
  %v3884 = vld [vmem:[#allocation2 + $0x148] sm:$0xff]
  %v3885 = vld [vmem:[#allocation2 + $0x150] sm:$0xff]
  %v3886 = vld [vmem:[#allocation2 + $0x168] sm:$0xff]
  %v3887 = vld [vmem:[#allocation2 + $0x170] sm:$0xff]
  %v3888 = vld [vmem:[#allocation2 + $0x188] sm:$0xff]
  %v3889 = vld [vmem:[#allocation2 + $0x190] sm:$0xff]
  %v3890 = vld [vmem:[#allocation2 + $0x1a8] sm:$0xff]
  %v3891 = vld [vmem:[#allocation2 + $0x1b0] sm:$0xff]
  %v3892 = vld [vmem:[#allocation2 + $0x1c8] sm:$0xff]
  %v3893 = vld [vmem:[#allocation2 + $0x1d0] sm:$0xff]
  %v3894 = vld [vmem:[#allocation2 + $0x1e8] sm:$0xff]
  %v3895 = vld [vmem:[#allocation2 + $0x1f0] sm:$0xff]
  %v3896 = vld [vmem:[#allocation2 + $0x248] sm:$0xff]
  %v3897 = vld [vmem:[#allocation2 + $0x250] sm:$0xff]
  %v3898 = vld [vmem:[#allocation2 + $0x268] sm:$0xff]
  %v3899 = vld [vmem:[#allocation2 + $0x270] sm:$0xff]
  %v3900 = vld [vmem:[#allocation2 + $0x288] sm:$0xff]
  %v3901 = vld [vmem:[#allocation2 + $0x290] sm:$0xff]
  %v3902 = vld [vmem:[#allocation2 + $0x2a8] sm:$0xff]
  %v3903 = vld [vmem:[#allocation2 + $0x2b0] sm:$0xff]
  %v3904 = vld [vmem:[#allocation2 + $0x2c8] sm:$0xff]
  %v3905 = vld [vmem:[#allocation2 + $0x2d0] sm:$0xff]
  %v3906 = vld [vmem:[#allocation2 + $0x2e8] sm:$0xff]
  %v3907 = vld [vmem:[#allocation2 + $0x2f0] sm:$0xff]
  %v3908 = vld [vmem:[#allocation2 + $0x308] sm:$0xff]
  %v3909 = vld [vmem:[#allocation2 + $0x310] sm:$0xff]
  %v3910 = vld [vmem:[#allocation2 + $0x328] sm:$0xff]
  %v3911 = vld [vmem:[#allocation2 + $0x330] sm:$0xff]
  %v3912 = vld [vmem:[#allocation2 + $0x348] sm:$0xff]
  %v3913 = vld [vmem:[#allocation2 + $0x350] sm:$0xff]
  %v3914 = vld [vmem:[#allocation2 + $0x368] sm:$0xff]
  %v3915 = vld [vmem:[#allocation2 + $0x370] sm:$0xff]
  %v3916 = vld [vmem:[#allocation2 + $0x388] sm:$0xff]
  %v3917 = vld [vmem:[#allocation2 + $0x390] sm:$0xff]
  %v3918 = vld [vmem:[#allocation2 + $0x3a8] sm:$0xff]
  %v3919 = vld [vmem:[#allocation2 + $0x3b0] sm:$0xff]
  %v3920 = vld [vmem:[#allocation2 + $0x3c8] sm:$0xff]
  %v3921 = vld [vmem:[#allocation2 + $0x3d0] sm:$0xff]
  %v3922 = vld [vmem:[#allocation2 + $0x3e8] sm:$0xff]
  %v3923 = vld [vmem:[#allocation2 + $0x3f0] sm:$0xff]
  %v3924 = vld [vmem:[#allocation2 + $0x408] sm:$0xff]
  %v3925 = vld [vmem:[#allocation2 + $0x410] sm:$0xff]
  %v3926 = vld [vmem:[#allocation2 + $0x428] sm:$0xff]
  %v3927 = vld [vmem:[#allocation2 + $0x430] sm:$0xff]
  %s3928 = scalar_lea.vmem %s2, 128
  %v3929 = vld [vmem:[%s3928] sm:$0xff]
  %v3930 = vld [vmem:[%s3928 + $0x8] sm:$0xff]
  %v3931 = vld [vmem:[%s3928 + $0x10] sm:$0xff]
  %v3932 = vld [vmem:[%s3928 + $0x18] sm:$0xff]
  %v3933 = vld [vmem:[%s3928 + $0x20] sm:$0xff]
  %v3934 = vld [vmem:[%s3928 + $0x28] sm:$0xff]
  %v3935 = vld [vmem:[%s3928 + $0x30] sm:$0xff]
  %v3936 = vld [vmem:[%s3928 + $0x38] sm:$0xff]
  %v3937 = vld [vmem:[%s3928 + $0x40] sm:$0xff]
  %v3938 = vld [vmem:[%s3928 + $0x48] sm:$0xff]
  %v3939 = vld [vmem:[%s3928 + $0x50] sm:$0xff]
  %v3940 = vld [vmem:[%s3928 + $0x58] sm:$0xff]
  %v3941 = vld [vmem:[%s3928 + $0x60] sm:$0xff]
  %v3942 = vld [vmem:[%s3928 + $0x68] sm:$0xff]
  %v3943 = vld [vmem:[%s3928 + $0x70] sm:$0xff]
  %v3944 = vld [vmem:[%s3928 + $0x78] sm:$0xff]
  %3945 = vmatpush.msra.mxu0 %v3944
  %3946 = vmatpush.msra.mxu0 %v3943
  %3947 = vmatpush.msra.mxu0 %v3942
  %3948 = vmatpush.msra.mxu0 %v3941
  %3949 = vmatpush.msra.mxu0 %v3940
  %3950 = vmatpush.msra.mxu0 %v3939
  %3951 = vmatpush.msra.mxu0 %v3938
  %3952 = vmatpush.msra.mxu0 %v3937
  %3953 = vmatpush.msra.mxu0 %v3936
  %3954 = vmatpush.msra.mxu0 %v3935
  %3955 = vmatpush.msra.mxu0 %v3934
  %3956 = vmatpush.msra.mxu0 %v3933
  %3957 = vmatpush.msra.mxu0 %v3932
  %3958 = vmatpush.msra.mxu0 %v3931
  %3959 = vmatpush.msra.mxu0 %v3930
  %3960 = vmatpush.msra.mxu0 %v3929
  %3961 = vmatmul.f32.gmra.mxu0 %v3864
  %v3962 = vpop.f32.mrf.mxu0
  %v3963 = vadd.f32 0.0, %v3962
  %3964 = vmatmul.f32.gmra.mxu0 %v3865
  %v3965 = vpop.f32.mrf.mxu0
  %v3966 = vadd.f32 0.0, %v3965
  %3967 = vmatmul.f32.gmra.mxu0 %v3866
  %v3968 = vpop.f32.mrf.mxu0
  %v3969 = vadd.f32 0.0, %v3968
  %3970 = vmatmul.f32.gmra.mxu0 %v3867
  %v3971 = vpop.f32.mrf.mxu0
  %v3972 = vadd.f32 0.0, %v3971
  %3973 = vmatmul.f32.gmra.mxu0 %v3868
  %v3974 = vpop.f32.mrf.mxu0
  %v3975 = vadd.f32 0.0, %v3974
  %3976 = vmatmul.f32.gmra.mxu0 %v3869
  %v3977 = vpop.f32.mrf.mxu0
  %v3978 = vadd.f32 0.0, %v3977
  %3979 = vmatmul.f32.gmra.mxu0 %v3870
  %v3980 = vpop.f32.mrf.mxu0
  %v3981 = vadd.f32 0.0, %v3980
  %3982 = vmatmul.f32.gmra.mxu0 %v3871
  %v3983 = vpop.f32.mrf.mxu0
  %v3984 = vadd.f32 0.0, %v3983
  %3985 = vmatmul.f32.gmra.mxu0 %v3872
  %v3986 = vpop.f32.mrf.mxu0
  %v3987 = vadd.f32 0.0, %v3986
  %3988 = vmatmul.f32.gmra.mxu0 %v3873
  %v3989 = vpop.f32.mrf.mxu0
  %v3990 = vadd.f32 0.0, %v3989
  %3991 = vmatmul.f32.gmra.mxu0 %v3874
  %v3992 = vpop.f32.mrf.mxu0
  %v3993 = vadd.f32 0.0, %v3992
  %3994 = vmatmul.f32.gmra.mxu0 %v3875
  %v3995 = vpop.f32.mrf.mxu0
  %v3996 = vadd.f32 0.0, %v3995
  %3997 = vmatmul.f32.gmra.mxu0 %v3876
  %v3998 = vpop.f32.mrf.mxu0
  %v3999 = vadd.f32 0.0, %v3998
  %4000 = vmatmul.f32.gmra.mxu0 %v3877
  %v4001 = vpop.f32.mrf.mxu0
  %v4002 = vadd.f32 0.0, %v4001
  %4003 = vmatmul.f32.gmra.mxu0 %v3878
  %v4004 = vpop.f32.mrf.mxu0
  %v4005 = vadd.f32 0.0, %v4004
  %4006 = vmatmul.f32.gmra.mxu0 %v3879
  %v4007 = vpop.f32.mrf.mxu0
  %v4008 = vadd.f32 0.0, %v4007
  %4009 = vmatmul.f32.gmra.mxu0 %v3880
  %v4010 = vpop.f32.mrf.mxu0
  %v4011 = vadd.f32 0.0, %v4010
  %4012 = vmatmul.f32.gmra.mxu0 %v3881
  %v4013 = vpop.f32.mrf.mxu0
  %v4014 = vadd.f32 0.0, %v4013
  %4015 = vmatmul.f32.gmra.mxu0 %v3882
  %v4016 = vpop.f32.mrf.mxu0
  %v4017 = vadd.f32 0.0, %v4016
  %4018 = vmatmul.f32.gmra.mxu0 %v3883
  %v4019 = vpop.f32.mrf.mxu0
  %v4020 = vadd.f32 0.0, %v4019
  %4021 = vmatmul.f32.gmra.mxu0 %v3884
  %v4022 = vpop.f32.mrf.mxu0
  %v4023 = vadd.f32 0.0, %v4022
  %4024 = vmatmul.f32.gmra.mxu0 %v3885
  %v4025 = vpop.f32.mrf.mxu0
  %v4026 = vadd.f32 0.0, %v4025
  %4027 = vmatmul.f32.gmra.mxu0 %v3886
  %v4028 = vpop.f32.mrf.mxu0
  %v4029 = vadd.f32 0.0, %v4028
  %4030 = vmatmul.f32.gmra.mxu0 %v3887
  %v4031 = vpop.f32.mrf.mxu0
  %v4032 = vadd.f32 0.0, %v4031
  %4033 = vmatmul.f32.gmra.mxu0 %v3888
  %v4034 = vpop.f32.mrf.mxu0
  %v4035 = vadd.f32 0.0, %v4034
  %4036 = vmatmul.f32.gmra.mxu0 %v3889
  %v4037 = vpop.f32.mrf.mxu0
  %v4038 = vadd.f32 0.0, %v4037
  %4039 = vmatmul.f32.gmra.mxu0 %v3890
  %v4040 = vpop.f32.mrf.mxu0
  %v4041 = vadd.f32 0.0, %v4040
  %4042 = vmatmul.f32.gmra.mxu0 %v3891
  %v4043 = vpop.f32.mrf.mxu0
  %v4044 = vadd.f32 0.0, %v4043
  %4045 = vmatmul.f32.gmra.mxu0 %v3892
  %v4046 = vpop.f32.mrf.mxu0
  %v4047 = vadd.f32 0.0, %v4046
  %4048 = vmatmul.f32.gmra.mxu0 %v3893
  %v4049 = vpop.f32.mrf.mxu0
  %v4050 = vadd.f32 0.0, %v4049
  %4051 = vmatmul.f32.gmra.mxu0 %v3894
  %v4052 = vpop.f32.mrf.mxu0
  %v4053 = vadd.f32 0.0, %v4052
  %4054 = vmatmul.f32.gmra.mxu0 %v3895
  %v4055 = vpop.f32.mrf.mxu0
  %v4056 = vadd.f32 0.0, %v4055
  %4057 = vmatmul.f32.gmra.mxu0 %v3896
  %v4058 = vpop.f32.mrf.mxu0
  %v4059 = vadd.f32 0.0, %v4058
  %4060 = vmatmul.f32.gmra.mxu0 %v3897
  %v4061 = vpop.f32.mrf.mxu0
  %v4062 = vadd.f32 0.0, %v4061
  %4063 = vmatmul.f32.gmra.mxu0 %v3898
  %v4064 = vpop.f32.mrf.mxu0
  %v4065 = vadd.f32 0.0, %v4064
  %4066 = vmatmul.f32.gmra.mxu0 %v3899
  %v4067 = vpop.f32.mrf.mxu0
  %v4068 = vadd.f32 0.0, %v4067
  %4069 = vmatmul.f32.gmra.mxu0 %v3900
  %v4070 = vpop.f32.mrf.mxu0
  %v4071 = vadd.f32 0.0, %v4070
  %4072 = vmatmul.f32.gmra.mxu0 %v3901
  %v4073 = vpop.f32.mrf.mxu0
  %v4074 = vadd.f32 0.0, %v4073
  %4075 = vmatmul.f32.gmra.mxu0 %v3902
  %v4076 = vpop.f32.mrf.mxu0
  %v4077 = vadd.f32 0.0, %v4076
  %4078 = vmatmul.f32.gmra.mxu0 %v3903
  %v4079 = vpop.f32.mrf.mxu0
  %v4080 = vadd.f32 0.0, %v4079
  %4081 = vmatmul.f32.gmra.mxu0 %v3904
  %v4082 = vpop.f32.mrf.mxu0
  %v4083 = vadd.f32 0.0, %v4082
  %4084 = vmatmul.f32.gmra.mxu0 %v3905
  %v4085 = vpop.f32.mrf.mxu0
  %v4086 = vadd.f32 0.0, %v4085
  %4087 = vmatmul.f32.gmra.mxu0 %v3906
  %v4088 = vpop.f32.mrf.mxu0
  %v4089 = vadd.f32 0.0, %v4088
  %4090 = vmatmul.f32.gmra.mxu0 %v3907
  %v4091 = vpop.f32.mrf.mxu0
  %v4092 = vadd.f32 0.0, %v4091
  %4093 = vmatmul.f32.gmra.mxu0 %v3908
  %v4094 = vpop.f32.mrf.mxu0
  %v4095 = vadd.f32 0.0, %v4094
  %4096 = vmatmul.f32.gmra.mxu0 %v3909
  %v4097 = vpop.f32.mrf.mxu0
  %v4098 = vadd.f32 0.0, %v4097
  %4099 = vmatmul.f32.gmra.mxu0 %v3910
  %v4100 = vpop.f32.mrf.mxu0
  %v4101 = vadd.f32 0.0, %v4100
  %4102 = vmatmul.f32.gmra.mxu0 %v3911
  %v4103 = vpop.f32.mrf.mxu0
  %v4104 = vadd.f32 0.0, %v4103
  %4105 = vmatmul.f32.gmra.mxu0 %v3912
  %v4106 = vpop.f32.mrf.mxu0
  %v4107 = vadd.f32 0.0, %v4106
  %4108 = vmatmul.f32.gmra.mxu0 %v3913
  %v4109 = vpop.f32.mrf.mxu0
  %v4110 = vadd.f32 0.0, %v4109
  %4111 = vmatmul.f32.gmra.mxu0 %v3914
  %v4112 = vpop.f32.mrf.mxu0
  %v4113 = vadd.f32 0.0, %v4112
  %4114 = vmatmul.f32.gmra.mxu0 %v3915
  %v4115 = vpop.f32.mrf.mxu0
  %v4116 = vadd.f32 0.0, %v4115
  %4117 = vmatmul.f32.gmra.mxu0 %v3916
  %v4118 = vpop.f32.mrf.mxu0
  %v4119 = vadd.f32 0.0, %v4118
  %4120 = vmatmul.f32.gmra.mxu0 %v3917
  %v4121 = vpop.f32.mrf.mxu0
  %v4122 = vadd.f32 0.0, %v4121
  %4123 = vmatmul.f32.gmra.mxu0 %v3918
  %v4124 = vpop.f32.mrf.mxu0
  %v4125 = vadd.f32 0.0, %v4124
  %4126 = vmatmul.f32.gmra.mxu0 %v3919
  %v4127 = vpop.f32.mrf.mxu0
  %v4128 = vadd.f32 0.0, %v4127
  %4129 = vmatmul.f32.gmra.mxu0 %v3920
  %v4130 = vpop.f32.mrf.mxu0
  %v4131 = vadd.f32 0.0, %v4130
  %4132 = vmatmul.f32.gmra.mxu0 %v3921
  %v4133 = vpop.f32.mrf.mxu0
  %v4134 = vadd.f32 0.0, %v4133
  %4135 = vmatmul.f32.gmra.mxu0 %v3922
  %v4136 = vpop.f32.mrf.mxu0
  %v4137 = vadd.f32 0.0, %v4136
  %4138 = vmatmul.f32.gmra.mxu0 %v3923
  %v4139 = vpop.f32.mrf.mxu0
  %v4140 = vadd.f32 0.0, %v4139
  %4141 = vmatmul.f32.gmra.mxu0 %v3924
  %v4142 = vpop.f32.mrf.mxu0
  %v4143 = vadd.f32 0.0, %v4142
  %4144 = vmatmul.f32.gmra.mxu0 %v3925
  %v4145 = vpop.f32.mrf.mxu0
  %v4146 = vadd.f32 0.0, %v4145
  %4147 = vmatmul.f32.gmra.mxu0 %v3926
  %v4148 = vpop.f32.mrf.mxu0
  %v4149 = vadd.f32 0.0, %v4148
  %4150 = vmatmul.f32.gmra.mxu0 %v3927
  %v4151 = vpop.f32.mrf.mxu0
  %v4152 = vadd.f32 0.0, %v4151
  %4153 = vdwg.mxu0
  %4154 = vmatpush.msra.mxu0 %v3863
  %4155 = vmatpush.msra.mxu0 %v3862
  %4156 = vmatpush.msra.mxu0 %v3861
  %4157 = vmatpush.msra.mxu0 %v3860
  %4158 = vmatpush.msra.mxu0 %v3859
  %4159 = vmatpush.msra.mxu0 %v3858
  %4160 = vmatpush.msra.mxu0 %v3857
  %4161 = vmatpush.msra.mxu0 %v3856
  %4162 = vmatpush.msra.mxu0 %v3855
  %4163 = vmatpush.msra.mxu0 %v3854
  %4164 = vmatpush.msra.mxu0 %v3853
  %4165 = vmatpush.msra.mxu0 %v3852
  %4166 = vmatpush.msra.mxu0 %v3851
  %4167 = vmatpush.msra.mxu0 %v3850
  %4168 = vmatpush.msra.mxu0 %v3849
  %4169 = vmatpush.msra.mxu0 %v3848
  %4170 = vmatmul.f32.gmra.mxu0 %v3784
  %v4171 = vpop.f32.mrf.mxu0
  %v4172 = vadd.f32 %v3963, %v4171
  %4173 = vmatmul.f32.gmra.mxu0 %v3785
  %v4174 = vpop.f32.mrf.mxu0
  %v4175 = vadd.f32 %v3966, %v4174
  %4176 = vmatmul.f32.gmra.mxu0 %v3786
  %v4177 = vpop.f32.mrf.mxu0
  %v4178 = vadd.f32 %v3969, %v4177
  %4179 = vmatmul.f32.gmra.mxu0 %v3787
  %v4180 = vpop.f32.mrf.mxu0
  %v4181 = vadd.f32 %v3972, %v4180
  %4182 = vmatmul.f32.gmra.mxu0 %v3788
  %v4183 = vpop.f32.mrf.mxu0
  %v4184 = vadd.f32 %v3975, %v4183
  %4185 = vmatmul.f32.gmra.mxu0 %v3789
  %v4186 = vpop.f32.mrf.mxu0
  %v4187 = vadd.f32 %v3978, %v4186
  %4188 = vmatmul.f32.gmra.mxu0 %v3790
  %v4189 = vpop.f32.mrf.mxu0
  %v4190 = vadd.f32 %v3981, %v4189
  %4191 = vmatmul.f32.gmra.mxu0 %v3791
  %v4192 = vpop.f32.mrf.mxu0
  %v4193 = vadd.f32 %v3984, %v4192
  %4194 = vmatmul.f32.gmra.mxu0 %v3792
  %v4195 = vpop.f32.mrf.mxu0
  %v4196 = vadd.f32 %v3987, %v4195
  %4197 = vmatmul.f32.gmra.mxu0 %v3793
  %v4198 = vpop.f32.mrf.mxu0
  %v4199 = vadd.f32 %v3990, %v4198
  %4200 = vmatmul.f32.gmra.mxu0 %v3794
  %v4201 = vpop.f32.mrf.mxu0
  %v4202 = vadd.f32 %v3993, %v4201
  %4203 = vmatmul.f32.gmra.mxu0 %v3795
  %v4204 = vpop.f32.mrf.mxu0
  %v4205 = vadd.f32 %v3996, %v4204
  %4206 = vmatmul.f32.gmra.mxu0 %v3796
  %v4207 = vpop.f32.mrf.mxu0
  %v4208 = vadd.f32 %v3999, %v4207
  %4209 = vmatmul.f32.gmra.mxu0 %v3797
  %v4210 = vpop.f32.mrf.mxu0
  %v4211 = vadd.f32 %v4002, %v4210
  %4212 = vmatmul.f32.gmra.mxu0 %v3798
  %v4213 = vpop.f32.mrf.mxu0
  %v4214 = vadd.f32 %v4005, %v4213
  %4215 = vmatmul.f32.gmra.mxu0 %v3799
  %v4216 = vpop.f32.mrf.mxu0
  %v4217 = vadd.f32 %v4008, %v4216
  %4218 = vmatmul.f32.gmra.mxu0 %v3800
  %v4219 = vpop.f32.mrf.mxu0
  %v4220 = vadd.f32 %v4011, %v4219
  %4221 = vmatmul.f32.gmra.mxu0 %v3801
  %v4222 = vpop.f32.mrf.mxu0
  %v4223 = vadd.f32 %v4014, %v4222
  %4224 = vmatmul.f32.gmra.mxu0 %v3802
  %v4225 = vpop.f32.mrf.mxu0
  %v4226 = vadd.f32 %v4017, %v4225
  %4227 = vmatmul.f32.gmra.mxu0 %v3803
  %v4228 = vpop.f32.mrf.mxu0
  %v4229 = vadd.f32 %v4020, %v4228
  %4230 = vmatmul.f32.gmra.mxu0 %v3804
  %v4231 = vpop.f32.mrf.mxu0
  %v4232 = vadd.f32 %v4023, %v4231
  %4233 = vmatmul.f32.gmra.mxu0 %v3805
  %v4234 = vpop.f32.mrf.mxu0
  %v4235 = vadd.f32 %v4026, %v4234
  %4236 = vmatmul.f32.gmra.mxu0 %v3806
  %v4237 = vpop.f32.mrf.mxu0
  %v4238 = vadd.f32 %v4029, %v4237
  %4239 = vmatmul.f32.gmra.mxu0 %v3807
  %v4240 = vpop.f32.mrf.mxu0
  %v4241 = vadd.f32 %v4032, %v4240
  %4242 = vmatmul.f32.gmra.mxu0 %v3808
  %v4243 = vpop.f32.mrf.mxu0
  %v4244 = vadd.f32 %v4035, %v4243
  %4245 = vmatmul.f32.gmra.mxu0 %v3809
  %v4246 = vpop.f32.mrf.mxu0
  %v4247 = vadd.f32 %v4038, %v4246
  %4248 = vmatmul.f32.gmra.mxu0 %v3810
  %v4249 = vpop.f32.mrf.mxu0
  %v4250 = vadd.f32 %v4041, %v4249
  %4251 = vmatmul.f32.gmra.mxu0 %v3811
  %v4252 = vpop.f32.mrf.mxu0
  %v4253 = vadd.f32 %v4044, %v4252
  %4254 = vmatmul.f32.gmra.mxu0 %v3812
  %v4255 = vpop.f32.mrf.mxu0
  %v4256 = vadd.f32 %v4047, %v4255
  %4257 = vmatmul.f32.gmra.mxu0 %v3813
  %v4258 = vpop.f32.mrf.mxu0
  %v4259 = vadd.f32 %v4050, %v4258
  %4260 = vmatmul.f32.gmra.mxu0 %v3814
  %v4261 = vpop.f32.mrf.mxu0
  %v4262 = vadd.f32 %v4053, %v4261
  %4263 = vmatmul.f32.gmra.mxu0 %v3815
  %v4264 = vpop.f32.mrf.mxu0
  %v4265 = vadd.f32 %v4056, %v4264
  %4266 = vmatmul.f32.gmra.mxu0 %v3816
  %v4267 = vpop.f32.mrf.mxu0
  %v4268 = vadd.f32 %v4059, %v4267
  %4269 = vmatmul.f32.gmra.mxu0 %v3817
  %v4270 = vpop.f32.mrf.mxu0
  %v4271 = vadd.f32 %v4062, %v4270
  %4272 = vmatmul.f32.gmra.mxu0 %v3818
  %v4273 = vpop.f32.mrf.mxu0
  %v4274 = vadd.f32 %v4065, %v4273
  %4275 = vmatmul.f32.gmra.mxu0 %v3819
  %v4276 = vpop.f32.mrf.mxu0
  %v4277 = vadd.f32 %v4068, %v4276
  %4278 = vmatmul.f32.gmra.mxu0 %v3820
  %v4279 = vpop.f32.mrf.mxu0
  %v4280 = vadd.f32 %v4071, %v4279
  %4281 = vmatmul.f32.gmra.mxu0 %v3821
  %v4282 = vpop.f32.mrf.mxu0
  %v4283 = vadd.f32 %v4074, %v4282
  %4284 = vmatmul.f32.gmra.mxu0 %v3822
  %v4285 = vpop.f32.mrf.mxu0
  %v4286 = vadd.f32 %v4077, %v4285
  %4287 = vmatmul.f32.gmra.mxu0 %v3823
  %v4288 = vpop.f32.mrf.mxu0
  %v4289 = vadd.f32 %v4080, %v4288
  %4290 = vmatmul.f32.gmra.mxu0 %v3824
  %v4291 = vpop.f32.mrf.mxu0
  %v4292 = vadd.f32 %v4083, %v4291
  %4293 = vmatmul.f32.gmra.mxu0 %v3825
  %v4294 = vpop.f32.mrf.mxu0
  %v4295 = vadd.f32 %v4086, %v4294
  %4296 = vmatmul.f32.gmra.mxu0 %v3826
  %v4297 = vpop.f32.mrf.mxu0
  %v4298 = vadd.f32 %v4089, %v4297
  %4299 = vmatmul.f32.gmra.mxu0 %v3827
  %v4300 = vpop.f32.mrf.mxu0
  %v4301 = vadd.f32 %v4092, %v4300
  %4302 = vmatmul.f32.gmra.mxu0 %v3828
  %v4303 = vpop.f32.mrf.mxu0
  %v4304 = vadd.f32 %v4095, %v4303
  %4305 = vmatmul.f32.gmra.mxu0 %v3829
  %v4306 = vpop.f32.mrf.mxu0
  %v4307 = vadd.f32 %v4098, %v4306
  %4308 = vmatmul.f32.gmra.mxu0 %v3830
  %v4309 = vpop.f32.mrf.mxu0
  %v4310 = vadd.f32 %v4101, %v4309
  %4311 = vmatmul.f32.gmra.mxu0 %v3831
  %v4312 = vpop.f32.mrf.mxu0
  %v4313 = vadd.f32 %v4104, %v4312
  %4314 = vmatmul.f32.gmra.mxu0 %v3832
  %v4315 = vpop.f32.mrf.mxu0
  %v4316 = vadd.f32 %v4107, %v4315
  %4317 = vmatmul.f32.gmra.mxu0 %v3833
  %v4318 = vpop.f32.mrf.mxu0
  %v4319 = vadd.f32 %v4110, %v4318
  %4320 = vmatmul.f32.gmra.mxu0 %v3834
  %v4321 = vpop.f32.mrf.mxu0
  %v4322 = vadd.f32 %v4113, %v4321
  %4323 = vmatmul.f32.gmra.mxu0 %v3835
  %v4324 = vpop.f32.mrf.mxu0
  %v4325 = vadd.f32 %v4116, %v4324
  %4326 = vmatmul.f32.gmra.mxu0 %v3836
  %v4327 = vpop.f32.mrf.mxu0
  %v4328 = vadd.f32 %v4119, %v4327
  %4329 = vmatmul.f32.gmra.mxu0 %v3837
  %v4330 = vpop.f32.mrf.mxu0
  %v4331 = vadd.f32 %v4122, %v4330
  %4332 = vmatmul.f32.gmra.mxu0 %v3838
  %v4333 = vpop.f32.mrf.mxu0
  %v4334 = vadd.f32 %v4125, %v4333
  %4335 = vmatmul.f32.gmra.mxu0 %v3839
  %v4336 = vpop.f32.mrf.mxu0
  %v4337 = vadd.f32 %v4128, %v4336
  %4338 = vmatmul.f32.gmra.mxu0 %v3840
  %v4339 = vpop.f32.mrf.mxu0
  %v4340 = vadd.f32 %v4131, %v4339
  %4341 = vmatmul.f32.gmra.mxu0 %v3841
  %v4342 = vpop.f32.mrf.mxu0
  %v4343 = vadd.f32 %v4134, %v4342
  %4344 = vmatmul.f32.gmra.mxu0 %v3842
  %v4345 = vpop.f32.mrf.mxu0
  %v4346 = vadd.f32 %v4137, %v4345
  %4347 = vmatmul.f32.gmra.mxu0 %v3843
  %v4348 = vpop.f32.mrf.mxu0
  %v4349 = vadd.f32 %v4140, %v4348
  %4350 = vmatmul.f32.gmra.mxu0 %v3844
  %v4351 = vpop.f32.mrf.mxu0
  %v4352 = vadd.f32 %v4143, %v4351
  %4353 = vmatmul.f32.gmra.mxu0 %v3845
  %v4354 = vpop.f32.mrf.mxu0
  %v4355 = vadd.f32 %v4146, %v4354
  %4356 = vmatmul.f32.gmra.mxu0 %v3846
  %v4357 = vpop.f32.mrf.mxu0
  %v4358 = vadd.f32 %v4149, %v4357
  %4359 = vmatmul.f32.gmra.mxu0 %v3847
  %v4360 = vpop.f32.mrf.mxu0
  %v4361 = vadd.f32 %v4152, %v4360
  %4362 = vdwg.mxu0
  %v4363 = vld [vmem:[#allocation2 + $0x9] sm:$0xff]
  %v4364 = vld [vmem:[#allocation2 + $0x11] sm:$0xff]
  %v4365 = vld [vmem:[#allocation2 + $0x29] sm:$0xff]
  %v4366 = vld [vmem:[#allocation2 + $0x31] sm:$0xff]
  %v4367 = vld [vmem:[#allocation2 + $0x49] sm:$0xff]
  %v4368 = vld [vmem:[#allocation2 + $0x51] sm:$0xff]
  %v4369 = vld [vmem:[#allocation2 + $0x69] sm:$0xff]
  %v4370 = vld [vmem:[#allocation2 + $0x71] sm:$0xff]
  %v4371 = vld [vmem:[#allocation2 + $0x89] sm:$0xff]
  %v4372 = vld [vmem:[#allocation2 + $0x91] sm:$0xff]
  %v4373 = vld [vmem:[#allocation2 + $0xa9] sm:$0xff]
  %v4374 = vld [vmem:[#allocation2 + $0xb1] sm:$0xff]
  %v4375 = vld [vmem:[#allocation2 + $0xc9] sm:$0xff]
  %v4376 = vld [vmem:[#allocation2 + $0xd1] sm:$0xff]
  %v4377 = vld [vmem:[#allocation2 + $0xe9] sm:$0xff]
  %v4378 = vld [vmem:[#allocation2 + $0xf1] sm:$0xff]
  %v4379 = vld [vmem:[#allocation2 + $0x109] sm:$0xff]
  %v4380 = vld [vmem:[#allocation2 + $0x111] sm:$0xff]
  %v4381 = vld [vmem:[#allocation2 + $0x129] sm:$0xff]
  %v4382 = vld [vmem:[#allocation2 + $0x131] sm:$0xff]
  %v4383 = vld [vmem:[#allocation2 + $0x149] sm:$0xff]
  %v4384 = vld [vmem:[#allocation2 + $0x151] sm:$0xff]
  %v4385 = vld [vmem:[#allocation2 + $0x169] sm:$0xff]
  %v4386 = vld [vmem:[#allocation2 + $0x171] sm:$0xff]
  %v4387 = vld [vmem:[#allocation2 + $0x189] sm:$0xff]
  %v4388 = vld [vmem:[#allocation2 + $0x191] sm:$0xff]
  %v4389 = vld [vmem:[#allocation2 + $0x1a9] sm:$0xff]
  %v4390 = vld [vmem:[#allocation2 + $0x1b1] sm:$0xff]
  %v4391 = vld [vmem:[#allocation2 + $0x1c9] sm:$0xff]
  %v4392 = vld [vmem:[#allocation2 + $0x1d1] sm:$0xff]
  %v4393 = vld [vmem:[#allocation2 + $0x1e9] sm:$0xff]
  %v4394 = vld [vmem:[#allocation2 + $0x1f1] sm:$0xff]
  %v4395 = vld [vmem:[#allocation2 + $0x249] sm:$0xff]
  %v4396 = vld [vmem:[#allocation2 + $0x251] sm:$0xff]
  %v4397 = vld [vmem:[#allocation2 + $0x269] sm:$0xff]
  %v4398 = vld [vmem:[#allocation2 + $0x271] sm:$0xff]
  %v4399 = vld [vmem:[#allocation2 + $0x289] sm:$0xff]
  %v4400 = vld [vmem:[#allocation2 + $0x291] sm:$0xff]
  %v4401 = vld [vmem:[#allocation2 + $0x2a9] sm:$0xff]
  %v4402 = vld [vmem:[#allocation2 + $0x2b1] sm:$0xff]
  %v4403 = vld [vmem:[#allocation2 + $0x2c9] sm:$0xff]
  %v4404 = vld [vmem:[#allocation2 + $0x2d1] sm:$0xff]
  %v4405 = vld [vmem:[#allocation2 + $0x2e9] sm:$0xff]
  %v4406 = vld [vmem:[#allocation2 + $0x2f1] sm:$0xff]
  %v4407 = vld [vmem:[#allocation2 + $0x309] sm:$0xff]
  %v4408 = vld [vmem:[#allocation2 + $0x311] sm:$0xff]
  %v4409 = vld [vmem:[#allocation2 + $0x329] sm:$0xff]
  %v4410 = vld [vmem:[#allocation2 + $0x331] sm:$0xff]
  %v4411 = vld [vmem:[#allocation2 + $0x349] sm:$0xff]
  %v4412 = vld [vmem:[#allocation2 + $0x351] sm:$0xff]
  %v4413 = vld [vmem:[#allocation2 + $0x369] sm:$0xff]
  %v4414 = vld [vmem:[#allocation2 + $0x371] sm:$0xff]
  %v4415 = vld [vmem:[#allocation2 + $0x389] sm:$0xff]
  %v4416 = vld [vmem:[#allocation2 + $0x391] sm:$0xff]
  %v4417 = vld [vmem:[#allocation2 + $0x3a9] sm:$0xff]
  %v4418 = vld [vmem:[#allocation2 + $0x3b1] sm:$0xff]
  %v4419 = vld [vmem:[#allocation2 + $0x3c9] sm:$0xff]
  %v4420 = vld [vmem:[#allocation2 + $0x3d1] sm:$0xff]
  %v4421 = vld [vmem:[#allocation2 + $0x3e9] sm:$0xff]
  %v4422 = vld [vmem:[#allocation2 + $0x3f1] sm:$0xff]
  %v4423 = vld [vmem:[#allocation2 + $0x409] sm:$0xff]
  %v4424 = vld [vmem:[#allocation2 + $0x411] sm:$0xff]
  %v4425 = vld [vmem:[#allocation2 + $0x429] sm:$0xff]
  %v4426 = vld [vmem:[#allocation2 + $0x431] sm:$0xff]
  %s4427 = scalar_lea.vmem %s2, 256
  %v4428 = vld [vmem:[%s4427] sm:$0xff]
  %v4429 = vld [vmem:[%s4427 + $0x8] sm:$0xff]
  %v4430 = vld [vmem:[%s4427 + $0x10] sm:$0xff]
  %v4431 = vld [vmem:[%s4427 + $0x18] sm:$0xff]
  %v4432 = vld [vmem:[%s4427 + $0x20] sm:$0xff]
  %v4433 = vld [vmem:[%s4427 + $0x28] sm:$0xff]
  %v4434 = vld [vmem:[%s4427 + $0x30] sm:$0xff]
  %v4435 = vld [vmem:[%s4427 + $0x38] sm:$0xff]
  %v4436 = vld [vmem:[%s4427 + $0x40] sm:$0xff]
  %v4437 = vld [vmem:[%s4427 + $0x48] sm:$0xff]
  %v4438 = vld [vmem:[%s4427 + $0x50] sm:$0xff]
  %v4439 = vld [vmem:[%s4427 + $0x58] sm:$0xff]
  %v4440 = vld [vmem:[%s4427 + $0x60] sm:$0xff]
  %v4441 = vld [vmem:[%s4427 + $0x68] sm:$0xff]
  %v4442 = vld [vmem:[%s4427 + $0x70] sm:$0xff]
  %v4443 = vld [vmem:[%s4427 + $0x78] sm:$0xff]
  %4444 = vmatpush.msra.mxu0 %v4443
  %4445 = vmatpush.msra.mxu0 %v4442
  %4446 = vmatpush.msra.mxu0 %v4441
  %4447 = vmatpush.msra.mxu0 %v4440
  %4448 = vmatpush.msra.mxu0 %v4439
  %4449 = vmatpush.msra.mxu0 %v4438
  %4450 = vmatpush.msra.mxu0 %v4437
  %4451 = vmatpush.msra.mxu0 %v4436
  %4452 = vmatpush.msra.mxu0 %v4435
  %4453 = vmatpush.msra.mxu0 %v4434
  %4454 = vmatpush.msra.mxu0 %v4433
  %4455 = vmatpush.msra.mxu0 %v4432
  %4456 = vmatpush.msra.mxu0 %v4431
  %4457 = vmatpush.msra.mxu0 %v4430
  %4458 = vmatpush.msra.mxu0 %v4429
  %4459 = vmatpush.msra.mxu0 %v4428
  %4460 = vmatmul.f32.gmra.mxu0 %v4363
  %v4461 = vpop.f32.mrf.mxu0
  %v4462 = vadd.f32 0.0, %v4461
  %4463 = vmatmul.f32.gmra.mxu0 %v4364
  %v4464 = vpop.f32.mrf.mxu0
  %v4465 = vadd.f32 0.0, %v4464
  %4466 = vmatmul.f32.gmra.mxu0 %v4365
  %v4467 = vpop.f32.mrf.mxu0
  %v4468 = vadd.f32 0.0, %v4467
  %4469 = vmatmul.f32.gmra.mxu0 %v4366
  %v4470 = vpop.f32.mrf.mxu0
  %v4471 = vadd.f32 0.0, %v4470
  %4472 = vmatmul.f32.gmra.mxu0 %v4367
  %v4473 = vpop.f32.mrf.mxu0
  %v4474 = vadd.f32 0.0, %v4473
  %4475 = vmatmul.f32.gmra.mxu0 %v4368
  %v4476 = vpop.f32.mrf.mxu0
  %v4477 = vadd.f32 0.0, %v4476
  %4478 = vmatmul.f32.gmra.mxu0 %v4369
  %v4479 = vpop.f32.mrf.mxu0
  %v4480 = vadd.f32 0.0, %v4479
  %4481 = vmatmul.f32.gmra.mxu0 %v4370
  %v4482 = vpop.f32.mrf.mxu0
  %v4483 = vadd.f32 0.0, %v4482
  %4484 = vmatmul.f32.gmra.mxu0 %v4371
  %v4485 = vpop.f32.mrf.mxu0
  %v4486 = vadd.f32 0.0, %v4485
  %4487 = vmatmul.f32.gmra.mxu0 %v4372
  %v4488 = vpop.f32.mrf.mxu0
  %v4489 = vadd.f32 0.0, %v4488
  %4490 = vmatmul.f32.gmra.mxu0 %v4373
  %v4491 = vpop.f32.mrf.mxu0
  %v4492 = vadd.f32 0.0, %v4491
  %4493 = vmatmul.f32.gmra.mxu0 %v4374
  %v4494 = vpop.f32.mrf.mxu0
  %v4495 = vadd.f32 0.0, %v4494
  %4496 = vmatmul.f32.gmra.mxu0 %v4375
  %v4497 = vpop.f32.mrf.mxu0
  %v4498 = vadd.f32 0.0, %v4497
  %4499 = vmatmul.f32.gmra.mxu0 %v4376
  %v4500 = vpop.f32.mrf.mxu0
  %v4501 = vadd.f32 0.0, %v4500
  %4502 = vmatmul.f32.gmra.mxu0 %v4377
  %v4503 = vpop.f32.mrf.mxu0
  %v4504 = vadd.f32 0.0, %v4503
  %4505 = vmatmul.f32.gmra.mxu0 %v4378
  %v4506 = vpop.f32.mrf.mxu0
  %v4507 = vadd.f32 0.0, %v4506
  %4508 = vmatmul.f32.gmra.mxu0 %v4379
  %v4509 = vpop.f32.mrf.mxu0
  %v4510 = vadd.f32 0.0, %v4509
  %4511 = vmatmul.f32.gmra.mxu0 %v4380
  %v4512 = vpop.f32.mrf.mxu0
  %v4513 = vadd.f32 0.0, %v4512
  %4514 = vmatmul.f32.gmra.mxu0 %v4381
  %v4515 = vpop.f32.mrf.mxu0
  %v4516 = vadd.f32 0.0, %v4515
  %4517 = vmatmul.f32.gmra.mxu0 %v4382
  %v4518 = vpop.f32.mrf.mxu0
  %v4519 = vadd.f32 0.0, %v4518
  %4520 = vmatmul.f32.gmra.mxu0 %v4383
  %v4521 = vpop.f32.mrf.mxu0
  %v4522 = vadd.f32 0.0, %v4521
  %4523 = vmatmul.f32.gmra.mxu0 %v4384
  %v4524 = vpop.f32.mrf.mxu0
  %v4525 = vadd.f32 0.0, %v4524
  %4526 = vmatmul.f32.gmra.mxu0 %v4385
  %v4527 = vpop.f32.mrf.mxu0
  %v4528 = vadd.f32 0.0, %v4527
  %4529 = vmatmul.f32.gmra.mxu0 %v4386
  %v4530 = vpop.f32.mrf.mxu0
  %v4531 = vadd.f32 0.0, %v4530
  %4532 = vmatmul.f32.gmra.mxu0 %v4387
  %v4533 = vpop.f32.mrf.mxu0
  %v4534 = vadd.f32 0.0, %v4533
  %4535 = vmatmul.f32.gmra.mxu0 %v4388
  %v4536 = vpop.f32.mrf.mxu0
  %v4537 = vadd.f32 0.0, %v4536
  %4538 = vmatmul.f32.gmra.mxu0 %v4389
  %v4539 = vpop.f32.mrf.mxu0
  %v4540 = vadd.f32 0.0, %v4539
  %4541 = vmatmul.f32.gmra.mxu0 %v4390
  %v4542 = vpop.f32.mrf.mxu0
  %v4543 = vadd.f32 0.0, %v4542
  %4544 = vmatmul.f32.gmra.mxu0 %v4391
  %v4545 = vpop.f32.mrf.mxu0
  %v4546 = vadd.f32 0.0, %v4545
  %4547 = vmatmul.f32.gmra.mxu0 %v4392
  %v4548 = vpop.f32.mrf.mxu0
  %v4549 = vadd.f32 0.0, %v4548
  %4550 = vmatmul.f32.gmra.mxu0 %v4393
  %v4551 = vpop.f32.mrf.mxu0
  %v4552 = vadd.f32 0.0, %v4551
  %4553 = vmatmul.f32.gmra.mxu0 %v4394
  %v4554 = vpop.f32.mrf.mxu0
  %v4555 = vadd.f32 0.0, %v4554
  %4556 = vmatmul.f32.gmra.mxu0 %v4395
  %v4557 = vpop.f32.mrf.mxu0
  %v4558 = vadd.f32 0.0, %v4557
  %4559 = vmatmul.f32.gmra.mxu0 %v4396
  %v4560 = vpop.f32.mrf.mxu0
  %v4561 = vadd.f32 0.0, %v4560
  %4562 = vmatmul.f32.gmra.mxu0 %v4397
  %v4563 = vpop.f32.mrf.mxu0
  %v4564 = vadd.f32 0.0, %v4563
  %4565 = vmatmul.f32.gmra.mxu0 %v4398
  %v4566 = vpop.f32.mrf.mxu0
  %v4567 = vadd.f32 0.0, %v4566
  %4568 = vmatmul.f32.gmra.mxu0 %v4399
  %v4569 = vpop.f32.mrf.mxu0
  %v4570 = vadd.f32 0.0, %v4569
  %4571 = vmatmul.f32.gmra.mxu0 %v4400
  %v4572 = vpop.f32.mrf.mxu0
  %v4573 = vadd.f32 0.0, %v4572
  %4574 = vmatmul.f32.gmra.mxu0 %v4401
  %v4575 = vpop.f32.mrf.mxu0
  %v4576 = vadd.f32 0.0, %v4575
  %4577 = vmatmul.f32.gmra.mxu0 %v4402
  %v4578 = vpop.f32.mrf.mxu0
  %v4579 = vadd.f32 0.0, %v4578
  %4580 = vmatmul.f32.gmra.mxu0 %v4403
  %v4581 = vpop.f32.mrf.mxu0
  %v4582 = vadd.f32 0.0, %v4581
  %4583 = vmatmul.f32.gmra.mxu0 %v4404
  %v4584 = vpop.f32.mrf.mxu0
  %v4585 = vadd.f32 0.0, %v4584
  %4586 = vmatmul.f32.gmra.mxu0 %v4405
  %v4587 = vpop.f32.mrf.mxu0
  %v4588 = vadd.f32 0.0, %v4587
  %4589 = vmatmul.f32.gmra.mxu0 %v4406
  %v4590 = vpop.f32.mrf.mxu0
  %v4591 = vadd.f32 0.0, %v4590
  %4592 = vmatmul.f32.gmra.mxu0 %v4407
  %v4593 = vpop.f32.mrf.mxu0
  %v4594 = vadd.f32 0.0, %v4593
  %4595 = vmatmul.f32.gmra.mxu0 %v4408
  %v4596 = vpop.f32.mrf.mxu0
  %v4597 = vadd.f32 0.0, %v4596
  %4598 = vmatmul.f32.gmra.mxu0 %v4409
  %v4599 = vpop.f32.mrf.mxu0
  %v4600 = vadd.f32 0.0, %v4599
  %4601 = vmatmul.f32.gmra.mxu0 %v4410
  %v4602 = vpop.f32.mrf.mxu0
  %v4603 = vadd.f32 0.0, %v4602
  %4604 = vmatmul.f32.gmra.mxu0 %v4411
  %v4605 = vpop.f32.mrf.mxu0
  %v4606 = vadd.f32 0.0, %v4605
  %4607 = vmatmul.f32.gmra.mxu0 %v4412
  %v4608 = vpop.f32.mrf.mxu0
  %v4609 = vadd.f32 0.0, %v4608
  %4610 = vmatmul.f32.gmra.mxu0 %v4413
  %v4611 = vpop.f32.mrf.mxu0
  %v4612 = vadd.f32 0.0, %v4611
  %4613 = vmatmul.f32.gmra.mxu0 %v4414
  %v4614 = vpop.f32.mrf.mxu0
  %v4615 = vadd.f32 0.0, %v4614
  %4616 = vmatmul.f32.gmra.mxu0 %v4415
  %v4617 = vpop.f32.mrf.mxu0
  %v4618 = vadd.f32 0.0, %v4617
  %4619 = vmatmul.f32.gmra.mxu0 %v4416
  %v4620 = vpop.f32.mrf.mxu0
  %v4621 = vadd.f32 0.0, %v4620
  %4622 = vmatmul.f32.gmra.mxu0 %v4417
  %v4623 = vpop.f32.mrf.mxu0
  %v4624 = vadd.f32 0.0, %v4623
  %4625 = vmatmul.f32.gmra.mxu0 %v4418
  %v4626 = vpop.f32.mrf.mxu0
  %v4627 = vadd.f32 0.0, %v4626
  %4628 = vmatmul.f32.gmra.mxu0 %v4419
  %v4629 = vpop.f32.mrf.mxu0
  %v4630 = vadd.f32 0.0, %v4629
  %4631 = vmatmul.f32.gmra.mxu0 %v4420
  %v4632 = vpop.f32.mrf.mxu0
  %v4633 = vadd.f32 0.0, %v4632
  %4634 = vmatmul.f32.gmra.mxu0 %v4421
  %v4635 = vpop.f32.mrf.mxu0
  %v4636 = vadd.f32 0.0, %v4635
  %4637 = vmatmul.f32.gmra.mxu0 %v4422
  %v4638 = vpop.f32.mrf.mxu0
  %v4639 = vadd.f32 0.0, %v4638
  %4640 = vmatmul.f32.gmra.mxu0 %v4423
  %v4641 = vpop.f32.mrf.mxu0
  %v4642 = vadd.f32 0.0, %v4641
  %4643 = vmatmul.f32.gmra.mxu0 %v4424
  %v4644 = vpop.f32.mrf.mxu0
  %v4645 = vadd.f32 0.0, %v4644
  %4646 = vmatmul.f32.gmra.mxu0 %v4425
  %v4647 = vpop.f32.mrf.mxu0
  %v4648 = vadd.f32 0.0, %v4647
  %4649 = vmatmul.f32.gmra.mxu0 %v4426
  %v4650 = vpop.f32.mrf.mxu0
  %v4651 = vadd.f32 0.0, %v4650
  %4652 = vdwg.mxu0
  %v4653 = vadd.f32 %v4172, %v4462
  %v4654 = vadd.f32 %v4175, %v4465
  %v4655 = vadd.f32 %v4178, %v4468
  %v4656 = vadd.f32 %v4181, %v4471
  %v4657 = vadd.f32 %v4184, %v4474
  %v4658 = vadd.f32 %v4187, %v4477
  %v4659 = vadd.f32 %v4190, %v4480
  %v4660 = vadd.f32 %v4193, %v4483
  %v4661 = vadd.f32 %v4196, %v4486
  %v4662 = vadd.f32 %v4199, %v4489
  %v4663 = vadd.f32 %v4202, %v4492
  %v4664 = vadd.f32 %v4205, %v4495
  %v4665 = vadd.f32 %v4208, %v4498
  %v4666 = vadd.f32 %v4211, %v4501
  %v4667 = vadd.f32 %v4214, %v4504
  %v4668 = vadd.f32 %v4217, %v4507
  %v4669 = vadd.f32 %v4220, %v4510
  %v4670 = vadd.f32 %v4223, %v4513
  %v4671 = vadd.f32 %v4226, %v4516
  %v4672 = vadd.f32 %v4229, %v4519
  %v4673 = vadd.f32 %v4232, %v4522
  %v4674 = vadd.f32 %v4235, %v4525
  %v4675 = vadd.f32 %v4238, %v4528
  %v4676 = vadd.f32 %v4241, %v4531
  %v4677 = vadd.f32 %v4244, %v4534
  %v4678 = vadd.f32 %v4247, %v4537
  %v4679 = vadd.f32 %v4250, %v4540
  %v4680 = vadd.f32 %v4253, %v4543
  %v4681 = vadd.f32 %v4256, %v4546
  %v4682 = vadd.f32 %v4259, %v4549
  %v4683 = vadd.f32 %v4262, %v4552
  %v4684 = vadd.f32 %v4265, %v4555
  %v4685 = vadd.f32 %v4268, %v4558
  %v4686 = vadd.f32 %v4271, %v4561
  %v4687 = vadd.f32 %v4274, %v4564
  %v4688 = vadd.f32 %v4277, %v4567
  %v4689 = vadd.f32 %v4280, %v4570
  %v4690 = vadd.f32 %v4283, %v4573
  %v4691 = vadd.f32 %v4286, %v4576
  %v4692 = vadd.f32 %v4289, %v4579
  %v4693 = vadd.f32 %v4292, %v4582
  %v4694 = vadd.f32 %v4295, %v4585
  %v4695 = vadd.f32 %v4298, %v4588
  %v4696 = vadd.f32 %v4301, %v4591
  %v4697 = vadd.f32 %v4304, %v4594
  %v4698 = vadd.f32 %v4307, %v4597
  %v4699 = vadd.f32 %v4310, %v4600
  %v4700 = vadd.f32 %v4313, %v4603
  %v4701 = vadd.f32 %v4316, %v4606
  %v4702 = vadd.f32 %v4319, %v4609
  %v4703 = vadd.f32 %v4322, %v4612
  %v4704 = vadd.f32 %v4325, %v4615
  %v4705 = vadd.f32 %v4328, %v4618
  %v4706 = vadd.f32 %v4331, %v4621
  %v4707 = vadd.f32 %v4334, %v4624
  %v4708 = vadd.f32 %v4337, %v4627
  %v4709 = vadd.f32 %v4340, %v4630
  %v4710 = vadd.f32 %v4343, %v4633
  %v4711 = vadd.f32 %v4346, %v4636
  %v4712 = vadd.f32 %v4349, %v4639
  %v4713 = vadd.f32 %v4352, %v4642
  %v4714 = vadd.f32 %v4355, %v4645
  %v4715 = vadd.f32 %v4358, %v4648
  %v4716 = vadd.f32 %v4361, %v4651
  %v4717 = vld [vmem:[%s179 + $0x7] sm:$0xff]
  %v4718 = vld [vmem:[%s179 + $0xf] sm:$0xff]
  %v4719 = vld [vmem:[%s179 + $0x27] sm:$0xff]
  %v4720 = vld [vmem:[%s179 + $0x2f] sm:$0xff]
  %v4721 = vld [vmem:[%s179 + $0x47] sm:$0xff]
  %v4722 = vld [vmem:[%s179 + $0x4f] sm:$0xff]
  %v4723 = vld [vmem:[%s179 + $0x67] sm:$0xff]
  %v4724 = vld [vmem:[%s179 + $0x6f] sm:$0xff]
  %v4725 = vld [vmem:[%s179 + $0x87] sm:$0xff]
  %v4726 = vld [vmem:[%s179 + $0x8f] sm:$0xff]
  %v4727 = vld [vmem:[%s179 + $0xa7] sm:$0xff]
  %v4728 = vld [vmem:[%s179 + $0xaf] sm:$0xff]
  %v4729 = vld [vmem:[%s179 + $0xc7] sm:$0xff]
  %v4730 = vld [vmem:[%s179 + $0xcf] sm:$0xff]
  %v4731 = vld [vmem:[%s179 + $0xe7] sm:$0xff]
  %v4732 = vld [vmem:[%s179 + $0xef] sm:$0xff]
  %v4733 = vld [vmem:[%s179 + $0x107] sm:$0xff]
  %v4734 = vld [vmem:[%s179 + $0x10f] sm:$0xff]
  %v4735 = vld [vmem:[%s179 + $0x127] sm:$0xff]
  %v4736 = vld [vmem:[%s179 + $0x12f] sm:$0xff]
  %v4737 = vld [vmem:[%s179 + $0x147] sm:$0xff]
  %v4738 = vld [vmem:[%s179 + $0x14f] sm:$0xff]
  %v4739 = vld [vmem:[%s179 + $0x167] sm:$0xff]
  %v4740 = vld [vmem:[%s179 + $0x16f] sm:$0xff]
  %v4741 = vld [vmem:[%s179 + $0x187] sm:$0xff]
  %v4742 = vld [vmem:[%s179 + $0x18f] sm:$0xff]
  %v4743 = vld [vmem:[%s179 + $0x1a7] sm:$0xff]
  %v4744 = vld [vmem:[%s179 + $0x1af] sm:$0xff]
  %v4745 = vld [vmem:[%s179 + $0x1c7] sm:$0xff]
  %v4746 = vld [vmem:[%s179 + $0x1cf] sm:$0xff]
  %v4747 = vld [vmem:[%s179 + $0x1e7] sm:$0xff]
  %v4748 = vld [vmem:[%s179 + $0x1ef] sm:$0xff]
  %v4749 = vld [vmem:[%s179 + $0x247] sm:$0xff]
  %v4750 = vld [vmem:[%s179 + $0x24f] sm:$0xff]
  %v4751 = vld [vmem:[%s179 + $0x267] sm:$0xff]
  %v4752 = vld [vmem:[%s179 + $0x26f] sm:$0xff]
  %v4753 = vld [vmem:[%s179 + $0x287] sm:$0xff]
  %v4754 = vld [vmem:[%s179 + $0x28f] sm:$0xff]
  %v4755 = vld [vmem:[%s179 + $0x2a7] sm:$0xff]
  %v4756 = vld [vmem:[%s179 + $0x2af] sm:$0xff]
  %v4757 = vld [vmem:[%s179 + $0x2c7] sm:$0xff]
  %v4758 = vld [vmem:[%s179 + $0x2cf] sm:$0xff]
  %v4759 = vld [vmem:[%s179 + $0x2e7] sm:$0xff]
  %v4760 = vld [vmem:[%s179 + $0x2ef] sm:$0xff]
  %v4761 = vld [vmem:[%s179 + $0x307] sm:$0xff]
  %v4762 = vld [vmem:[%s179 + $0x30f] sm:$0xff]
  %v4763 = vld [vmem:[%s179 + $0x327] sm:$0xff]
  %v4764 = vld [vmem:[%s179 + $0x32f] sm:$0xff]
  %v4765 = vld [vmem:[%s179 + $0x347] sm:$0xff]
  %v4766 = vld [vmem:[%s179 + $0x34f] sm:$0xff]
  %v4767 = vld [vmem:[%s179 + $0x367] sm:$0xff]
  %v4768 = vld [vmem:[%s179 + $0x36f] sm:$0xff]
  %v4769 = vld [vmem:[%s179 + $0x387] sm:$0xff]
  %v4770 = vld [vmem:[%s179 + $0x38f] sm:$0xff]
  %v4771 = vld [vmem:[%s179 + $0x3a7] sm:$0xff]
  %v4772 = vld [vmem:[%s179 + $0x3af] sm:$0xff]
  %v4773 = vld [vmem:[%s179 + $0x3c7] sm:$0xff]
  %v4774 = vld [vmem:[%s179 + $0x3cf] sm:$0xff]
  %v4775 = vld [vmem:[%s179 + $0x3e7] sm:$0xff]
  %v4776 = vld [vmem:[%s179 + $0x3ef] sm:$0xff]
  %v4777 = vld [vmem:[%s179 + $0x407] sm:$0xff]
  %v4778 = vld [vmem:[%s179 + $0x40f] sm:$0xff]
  %v4779 = vld [vmem:[%s179 + $0x427] sm:$0xff]
  %v4780 = vld [vmem:[%s179 + $0x42f] sm:$0xff]
  %s4781 = scalar_lea.vmem %s2, 384
  %v4782 = vld [vmem:[%s4781] sm:$0xff]
  %v4783 = vld [vmem:[%s4781 + $0x8] sm:$0xff]
  %v4784 = vld [vmem:[%s4781 + $0x10] sm:$0xff]
  %v4785 = vld [vmem:[%s4781 + $0x18] sm:$0xff]
  %v4786 = vld [vmem:[%s4781 + $0x20] sm:$0xff]
  %v4787 = vld [vmem:[%s4781 + $0x28] sm:$0xff]
  %v4788 = vld [vmem:[%s4781 + $0x30] sm:$0xff]
  %v4789 = vld [vmem:[%s4781 + $0x38] sm:$0xff]
  %v4790 = vld [vmem:[%s4781 + $0x40] sm:$0xff]
  %v4791 = vld [vmem:[%s4781 + $0x48] sm:$0xff]
  %v4792 = vld [vmem:[%s4781 + $0x50] sm:$0xff]
  %v4793 = vld [vmem:[%s4781 + $0x58] sm:$0xff]
  %v4794 = vld [vmem:[%s4781 + $0x60] sm:$0xff]
  %v4795 = vld [vmem:[%s4781 + $0x68] sm:$0xff]
  %v4796 = vld [vmem:[%s4781 + $0x70] sm:$0xff]
  %v4797 = vld [vmem:[%s4781 + $0x78] sm:$0xff]
  %4798 = vmatpush.msra.mxu0 %v4797
  %4799 = vmatpush.msra.mxu0 %v4796
  %4800 = vmatpush.msra.mxu0 %v4795
  %4801 = vmatpush.msra.mxu0 %v4794
  %4802 = vmatpush.msra.mxu0 %v4793
  %4803 = vmatpush.msra.mxu0 %v4792
  %4804 = vmatpush.msra.mxu0 %v4791
  %4805 = vmatpush.msra.mxu0 %v4790
  %4806 = vmatpush.msra.mxu0 %v4789
  %4807 = vmatpush.msra.mxu0 %v4788
  %4808 = vmatpush.msra.mxu0 %v4787
  %4809 = vmatpush.msra.mxu0 %v4786
  %4810 = vmatpush.msra.mxu0 %v4785
  %4811 = vmatpush.msra.mxu0 %v4784
  %4812 = vmatpush.msra.mxu0 %v4783
  %4813 = vmatpush.msra.mxu0 %v4782
  %4814 = vmatmul.f32.gmra.mxu0 %v4717
  %v4815 = vpop.f32.mrf.mxu0
  %v4816 = vadd.f32 0.0, %v4815
  %4817 = vmatmul.f32.gmra.mxu0 %v4718
  %v4818 = vpop.f32.mrf.mxu0
  %v4819 = vadd.f32 0.0, %v4818
  %4820 = vmatmul.f32.gmra.mxu0 %v4719
  %v4821 = vpop.f32.mrf.mxu0
  %v4822 = vadd.f32 0.0, %v4821
  %4823 = vmatmul.f32.gmra.mxu0 %v4720
  %v4824 = vpop.f32.mrf.mxu0
  %v4825 = vadd.f32 0.0, %v4824
  %4826 = vmatmul.f32.gmra.mxu0 %v4721
  %v4827 = vpop.f32.mrf.mxu0
  %v4828 = vadd.f32 0.0, %v4827
  %4829 = vmatmul.f32.gmra.mxu0 %v4722
  %v4830 = vpop.f32.mrf.mxu0
  %v4831 = vadd.f32 0.0, %v4830
  %4832 = vmatmul.f32.gmra.mxu0 %v4723
  %v4833 = vpop.f32.mrf.mxu0
  %v4834 = vadd.f32 0.0, %v4833
  %4835 = vmatmul.f32.gmra.mxu0 %v4724
  %v4836 = vpop.f32.mrf.mxu0
  %v4837 = vadd.f32 0.0, %v4836
  %4838 = vmatmul.f32.gmra.mxu0 %v4725
  %v4839 = vpop.f32.mrf.mxu0
  %v4840 = vadd.f32 0.0, %v4839
  %4841 = vmatmul.f32.gmra.mxu0 %v4726
  %v4842 = vpop.f32.mrf.mxu0
  %v4843 = vadd.f32 0.0, %v4842
  %4844 = vmatmul.f32.gmra.mxu0 %v4727
  %v4845 = vpop.f32.mrf.mxu0
  %v4846 = vadd.f32 0.0, %v4845
  %4847 = vmatmul.f32.gmra.mxu0 %v4728
  %v4848 = vpop.f32.mrf.mxu0
  %v4849 = vadd.f32 0.0, %v4848
  %4850 = vmatmul.f32.gmra.mxu0 %v4729
  %v4851 = vpop.f32.mrf.mxu0
  %v4852 = vadd.f32 0.0, %v4851
  %4853 = vmatmul.f32.gmra.mxu0 %v4730
  %v4854 = vpop.f32.mrf.mxu0
  %v4855 = vadd.f32 0.0, %v4854
  %4856 = vmatmul.f32.gmra.mxu0 %v4731
  %v4857 = vpop.f32.mrf.mxu0
  %v4858 = vadd.f32 0.0, %v4857
  %4859 = vmatmul.f32.gmra.mxu0 %v4732
  %v4860 = vpop.f32.mrf.mxu0
  %v4861 = vadd.f32 0.0, %v4860
  %4862 = vmatmul.f32.gmra.mxu0 %v4733
  %v4863 = vpop.f32.mrf.mxu0
  %v4864 = vadd.f32 0.0, %v4863
  %4865 = vmatmul.f32.gmra.mxu0 %v4734
  %v4866 = vpop.f32.mrf.mxu0
  %v4867 = vadd.f32 0.0, %v4866
  %4868 = vmatmul.f32.gmra.mxu0 %v4735
  %v4869 = vpop.f32.mrf.mxu0
  %v4870 = vadd.f32 0.0, %v4869
  %4871 = vmatmul.f32.gmra.mxu0 %v4736
  %v4872 = vpop.f32.mrf.mxu0
  %v4873 = vadd.f32 0.0, %v4872
  %4874 = vmatmul.f32.gmra.mxu0 %v4737
  %v4875 = vpop.f32.mrf.mxu0
  %v4876 = vadd.f32 0.0, %v4875
  %4877 = vmatmul.f32.gmra.mxu0 %v4738
  %v4878 = vpop.f32.mrf.mxu0
  %v4879 = vadd.f32 0.0, %v4878
  %4880 = vmatmul.f32.gmra.mxu0 %v4739
  %v4881 = vpop.f32.mrf.mxu0
  %v4882 = vadd.f32 0.0, %v4881
  %4883 = vmatmul.f32.gmra.mxu0 %v4740
  %v4884 = vpop.f32.mrf.mxu0
  %v4885 = vadd.f32 0.0, %v4884
  %4886 = vmatmul.f32.gmra.mxu0 %v4741
  %v4887 = vpop.f32.mrf.mxu0
  %v4888 = vadd.f32 0.0, %v4887
  %4889 = vmatmul.f32.gmra.mxu0 %v4742
  %v4890 = vpop.f32.mrf.mxu0
  %v4891 = vadd.f32 0.0, %v4890
  %4892 = vmatmul.f32.gmra.mxu0 %v4743
  %v4893 = vpop.f32.mrf.mxu0
  %v4894 = vadd.f32 0.0, %v4893
  %4895 = vmatmul.f32.gmra.mxu0 %v4744
  %v4896 = vpop.f32.mrf.mxu0
  %v4897 = vadd.f32 0.0, %v4896
  %4898 = vmatmul.f32.gmra.mxu0 %v4745
  %v4899 = vpop.f32.mrf.mxu0
  %v4900 = vadd.f32 0.0, %v4899
  %4901 = vmatmul.f32.gmra.mxu0 %v4746
  %v4902 = vpop.f32.mrf.mxu0
  %v4903 = vadd.f32 0.0, %v4902
  %4904 = vmatmul.f32.gmra.mxu0 %v4747
  %v4905 = vpop.f32.mrf.mxu0
  %v4906 = vadd.f32 0.0, %v4905
  %4907 = vmatmul.f32.gmra.mxu0 %v4748
  %v4908 = vpop.f32.mrf.mxu0
  %v4909 = vadd.f32 0.0, %v4908
  %4910 = vmatmul.f32.gmra.mxu0 %v4749
  %v4911 = vpop.f32.mrf.mxu0
  %v4912 = vadd.f32 0.0, %v4911
  %4913 = vmatmul.f32.gmra.mxu0 %v4750
  %v4914 = vpop.f32.mrf.mxu0
  %v4915 = vadd.f32 0.0, %v4914
  %4916 = vmatmul.f32.gmra.mxu0 %v4751
  %v4917 = vpop.f32.mrf.mxu0
  %v4918 = vadd.f32 0.0, %v4917
  %4919 = vmatmul.f32.gmra.mxu0 %v4752
  %v4920 = vpop.f32.mrf.mxu0
  %v4921 = vadd.f32 0.0, %v4920
  %4922 = vmatmul.f32.gmra.mxu0 %v4753
  %v4923 = vpop.f32.mrf.mxu0
  %v4924 = vadd.f32 0.0, %v4923
  %4925 = vmatmul.f32.gmra.mxu0 %v4754
  %v4926 = vpop.f32.mrf.mxu0
  %v4927 = vadd.f32 0.0, %v4926
  %4928 = vmatmul.f32.gmra.mxu0 %v4755
  %v4929 = vpop.f32.mrf.mxu0
  %v4930 = vadd.f32 0.0, %v4929
  %4931 = vmatmul.f32.gmra.mxu0 %v4756
  %v4932 = vpop.f32.mrf.mxu0
  %v4933 = vadd.f32 0.0, %v4932
  %4934 = vmatmul.f32.gmra.mxu0 %v4757
  %v4935 = vpop.f32.mrf.mxu0
  %v4936 = vadd.f32 0.0, %v4935
  %4937 = vmatmul.f32.gmra.mxu0 %v4758
  %v4938 = vpop.f32.mrf.mxu0
  %v4939 = vadd.f32 0.0, %v4938
  %4940 = vmatmul.f32.gmra.mxu0 %v4759
  %v4941 = vpop.f32.mrf.mxu0
  %v4942 = vadd.f32 0.0, %v4941
  %4943 = vmatmul.f32.gmra.mxu0 %v4760
  %v4944 = vpop.f32.mrf.mxu0
  %v4945 = vadd.f32 0.0, %v4944
  %4946 = vmatmul.f32.gmra.mxu0 %v4761
  %v4947 = vpop.f32.mrf.mxu0
  %v4948 = vadd.f32 0.0, %v4947
  %4949 = vmatmul.f32.gmra.mxu0 %v4762
  %v4950 = vpop.f32.mrf.mxu0
  %v4951 = vadd.f32 0.0, %v4950
  %4952 = vmatmul.f32.gmra.mxu0 %v4763
  %v4953 = vpop.f32.mrf.mxu0
  %v4954 = vadd.f32 0.0, %v4953
  %4955 = vmatmul.f32.gmra.mxu0 %v4764
  %v4956 = vpop.f32.mrf.mxu0
  %v4957 = vadd.f32 0.0, %v4956
  %4958 = vmatmul.f32.gmra.mxu0 %v4765
  %v4959 = vpop.f32.mrf.mxu0
  %v4960 = vadd.f32 0.0, %v4959
  %4961 = vmatmul.f32.gmra.mxu0 %v4766
  %v4962 = vpop.f32.mrf.mxu0
  %v4963 = vadd.f32 0.0, %v4962
  %4964 = vmatmul.f32.gmra.mxu0 %v4767
  %v4965 = vpop.f32.mrf.mxu0
  %v4966 = vadd.f32 0.0, %v4965
  %4967 = vmatmul.f32.gmra.mxu0 %v4768
  %v4968 = vpop.f32.mrf.mxu0
  %v4969 = vadd.f32 0.0, %v4968
  %4970 = vmatmul.f32.gmra.mxu0 %v4769
  %v4971 = vpop.f32.mrf.mxu0
  %v4972 = vadd.f32 0.0, %v4971
  %4973 = vmatmul.f32.gmra.mxu0 %v4770
  %v4974 = vpop.f32.mrf.mxu0
  %v4975 = vadd.f32 0.0, %v4974
  %4976 = vmatmul.f32.gmra.mxu0 %v4771
  %v4977 = vpop.f32.mrf.mxu0
  %v4978 = vadd.f32 0.0, %v4977
  %4979 = vmatmul.f32.gmra.mxu0 %v4772
  %v4980 = vpop.f32.mrf.mxu0
  %v4981 = vadd.f32 0.0, %v4980
  %4982 = vmatmul.f32.gmra.mxu0 %v4773
  %v4983 = vpop.f32.mrf.mxu0
  %v4984 = vadd.f32 0.0, %v4983
  %4985 = vmatmul.f32.gmra.mxu0 %v4774
  %v4986 = vpop.f32.mrf.mxu0
  %v4987 = vadd.f32 0.0, %v4986
  %4988 = vmatmul.f32.gmra.mxu0 %v4775
  %v4989 = vpop.f32.mrf.mxu0
  %v4990 = vadd.f32 0.0, %v4989
  %4991 = vmatmul.f32.gmra.mxu0 %v4776
  %v4992 = vpop.f32.mrf.mxu0
  %v4993 = vadd.f32 0.0, %v4992
  %4994 = vmatmul.f32.gmra.mxu0 %v4777
  %v4995 = vpop.f32.mrf.mxu0
  %v4996 = vadd.f32 0.0, %v4995
  %4997 = vmatmul.f32.gmra.mxu0 %v4778
  %v4998 = vpop.f32.mrf.mxu0
  %v4999 = vadd.f32 0.0, %v4998
  %5000 = vmatmul.f32.gmra.mxu0 %v4779
  %v5001 = vpop.f32.mrf.mxu0
  %v5002 = vadd.f32 0.0, %v5001
  %5003 = vmatmul.f32.gmra.mxu0 %v4780
  %v5004 = vpop.f32.mrf.mxu0
  %v5005 = vadd.f32 0.0, %v5004
  %5006 = vdwg.mxu0
  %v5007 = vadd.f32 %v4653, %v4816
  %v5008 = vadd.f32 %v4654, %v4819
  %v5009 = vadd.f32 %v4655, %v4822
  %v5010 = vadd.f32 %v4656, %v4825
  %v5011 = vadd.f32 %v4657, %v4828
  %v5012 = vadd.f32 %v4658, %v4831
  %v5013 = vadd.f32 %v4659, %v4834
  %v5014 = vadd.f32 %v4660, %v4837
  %v5015 = vadd.f32 %v4661, %v4840
  %v5016 = vadd.f32 %v4662, %v4843
  %v5017 = vadd.f32 %v4663, %v4846
  %v5018 = vadd.f32 %v4664, %v4849
  %v5019 = vadd.f32 %v4665, %v4852
  %v5020 = vadd.f32 %v4666, %v4855
  %v5021 = vadd.f32 %v4667, %v4858
  %v5022 = vadd.f32 %v4668, %v4861
  %v5023 = vadd.f32 %v4669, %v4864
  %v5024 = vadd.f32 %v4670, %v4867
  %v5025 = vadd.f32 %v4671, %v4870
  %v5026 = vadd.f32 %v4672, %v4873
  %v5027 = vadd.f32 %v4673, %v4876
  %v5028 = vadd.f32 %v4674, %v4879
  %v5029 = vadd.f32 %v4675, %v4882
  %v5030 = vadd.f32 %v4676, %v4885
  %v5031 = vadd.f32 %v4677, %v4888
  %v5032 = vadd.f32 %v4678, %v4891
  %v5033 = vadd.f32 %v4679, %v4894
  %v5034 = vadd.f32 %v4680, %v4897
  %v5035 = vadd.f32 %v4681, %v4900
  %v5036 = vadd.f32 %v4682, %v4903
  %v5037 = vadd.f32 %v4683, %v4906
  %v5038 = vadd.f32 %v4684, %v4909
  %v5039 = vadd.f32 %v4685, %v4912
  %v5040 = vadd.f32 %v4686, %v4915
  %v5041 = vadd.f32 %v4687, %v4918
  %v5042 = vadd.f32 %v4688, %v4921
  %v5043 = vadd.f32 %v4689, %v4924
  %v5044 = vadd.f32 %v4690, %v4927
  %v5045 = vadd.f32 %v4691, %v4930
  %v5046 = vadd.f32 %v4692, %v4933
  %v5047 = vadd.f32 %v4693, %v4936
  %v5048 = vadd.f32 %v4694, %v4939
  %v5049 = vadd.f32 %v4695, %v4942
  %v5050 = vadd.f32 %v4696, %v4945
  %v5051 = vadd.f32 %v4697, %v4948
  %v5052 = vadd.f32 %v4698, %v4951
  %v5053 = vadd.f32 %v4699, %v4954
  %v5054 = vadd.f32 %v4700, %v4957
  %v5055 = vadd.f32 %v4701, %v4960
  %v5056 = vadd.f32 %v4702, %v4963
  %v5057 = vadd.f32 %v4703, %v4966
  %v5058 = vadd.f32 %v4704, %v4969
  %v5059 = vadd.f32 %v4705, %v4972
  %v5060 = vadd.f32 %v4706, %v4975
  %v5061 = vadd.f32 %v4707, %v4978
  %v5062 = vadd.f32 %v4708, %v4981
  %v5063 = vadd.f32 %v4709, %v4984
  %v5064 = vadd.f32 %v4710, %v4987
  %v5065 = vadd.f32 %v4711, %v4990
  %v5066 = vadd.f32 %v4712, %v4993
  %v5067 = vadd.f32 %v4713, %v4996
  %v5068 = vadd.f32 %v4714, %v4999
  %v5069 = vadd.f32 %v4715, %v5002
  %v5070 = vadd.f32 %v4716, %v5005
  %v5071 = vld [vmem:[%s179 + $0x8] sm:$0xff]
  %v5072 = vld [vmem:[%s179 + $0x10] sm:$0xff]
  %v5073 = vld [vmem:[%s179 + $0x28] sm:$0xff]
  %v5074 = vld [vmem:[%s179 + $0x30] sm:$0xff]
  %v5075 = vld [vmem:[%s179 + $0x48] sm:$0xff]
  %v5076 = vld [vmem:[%s179 + $0x50] sm:$0xff]
  %v5077 = vld [vmem:[%s179 + $0x68] sm:$0xff]
  %v5078 = vld [vmem:[%s179 + $0x70] sm:$0xff]
  %v5079 = vld [vmem:[%s179 + $0x88] sm:$0xff]
  %v5080 = vld [vmem:[%s179 + $0x90] sm:$0xff]
  %v5081 = vld [vmem:[%s179 + $0xa8] sm:$0xff]
  %v5082 = vld [vmem:[%s179 + $0xb0] sm:$0xff]
  %v5083 = vld [vmem:[%s179 + $0xc8] sm:$0xff]
  %v5084 = vld [vmem:[%s179 + $0xd0] sm:$0xff]
  %v5085 = vld [vmem:[%s179 + $0xe8] sm:$0xff]
  %v5086 = vld [vmem:[%s179 + $0xf0] sm:$0xff]
  %v5087 = vld [vmem:[%s179 + $0x108] sm:$0xff]
  %v5088 = vld [vmem:[%s179 + $0x110] sm:$0xff]
  %v5089 = vld [vmem:[%s179 + $0x128] sm:$0xff]
  %v5090 = vld [vmem:[%s179 + $0x130] sm:$0xff]
  %v5091 = vld [vmem:[%s179 + $0x148] sm:$0xff]
  %v5092 = vld [vmem:[%s179 + $0x150] sm:$0xff]
  %v5093 = vld [vmem:[%s179 + $0x168] sm:$0xff]
  %v5094 = vld [vmem:[%s179 + $0x170] sm:$0xff]
  %v5095 = vld [vmem:[%s179 + $0x188] sm:$0xff]
  %v5096 = vld [vmem:[%s179 + $0x190] sm:$0xff]
  %v5097 = vld [vmem:[%s179 + $0x1a8] sm:$0xff]
  %v5098 = vld [vmem:[%s179 + $0x1b0] sm:$0xff]
  %v5099 = vld [vmem:[%s179 + $0x1c8] sm:$0xff]
  %v5100 = vld [vmem:[%s179 + $0x1d0] sm:$0xff]
  %v5101 = vld [vmem:[%s179 + $0x1e8] sm:$0xff]
  %v5102 = vld [vmem:[%s179 + $0x1f0] sm:$0xff]
  %v5103 = vld [vmem:[%s179 + $0x248] sm:$0xff]
  %v5104 = vld [vmem:[%s179 + $0x250] sm:$0xff]
  %v5105 = vld [vmem:[%s179 + $0x268] sm:$0xff]
  %v5106 = vld [vmem:[%s179 + $0x270] sm:$0xff]
  %v5107 = vld [vmem:[%s179 + $0x288] sm:$0xff]
  %v5108 = vld [vmem:[%s179 + $0x290] sm:$0xff]
  %v5109 = vld [vmem:[%s179 + $0x2a8] sm:$0xff]
  %v5110 = vld [vmem:[%s179 + $0x2b0] sm:$0xff]
  %v5111 = vld [vmem:[%s179 + $0x2c8] sm:$0xff]
  %v5112 = vld [vmem:[%s179 + $0x2d0] sm:$0xff]
  %v5113 = vld [vmem:[%s179 + $0x2e8] sm:$0xff]
  %v5114 = vld [vmem:[%s179 + $0x2f0] sm:$0xff]
  %v5115 = vld [vmem:[%s179 + $0x308] sm:$0xff]
  %v5116 = vld [vmem:[%s179 + $0x310] sm:$0xff]
  %v5117 = vld [vmem:[%s179 + $0x328] sm:$0xff]
  %v5118 = vld [vmem:[%s179 + $0x330] sm:$0xff]
  %v5119 = vld [vmem:[%s179 + $0x348] sm:$0xff]
  %v5120 = vld [vmem:[%s179 + $0x350] sm:$0xff]
  %v5121 = vld [vmem:[%s179 + $0x368] sm:$0xff]
  %v5122 = vld [vmem:[%s179 + $0x370] sm:$0xff]
  %v5123 = vld [vmem:[%s179 + $0x388] sm:$0xff]
  %v5124 = vld [vmem:[%s179 + $0x390] sm:$0xff]
  %v5125 = vld [vmem:[%s179 + $0x3a8] sm:$0xff]
  %v5126 = vld [vmem:[%s179 + $0x3b0] sm:$0xff]
  %v5127 = vld [vmem:[%s179 + $0x3c8] sm:$0xff]
  %v5128 = vld [vmem:[%s179 + $0x3d0] sm:$0xff]
  %v5129 = vld [vmem:[%s179 + $0x3e8] sm:$0xff]
  %v5130 = vld [vmem:[%s179 + $0x3f0] sm:$0xff]
  %v5131 = vld [vmem:[%s179 + $0x408] sm:$0xff]
  %v5132 = vld [vmem:[%s179 + $0x410] sm:$0xff]
  %v5133 = vld [vmem:[%s179 + $0x428] sm:$0xff]
  %v5134 = vld [vmem:[%s179 + $0x430] sm:$0xff]
  %s5135 = scalar_lea.vmem %s2, 512
  %v5136 = vld [vmem:[%s5135] sm:$0xff]
  %v5137 = vld [vmem:[%s5135 + $0x8] sm:$0xff]
  %v5138 = vld [vmem:[%s5135 + $0x10] sm:$0xff]
  %v5139 = vld [vmem:[%s5135 + $0x18] sm:$0xff]
  %v5140 = vld [vmem:[%s5135 + $0x20] sm:$0xff]
  %v5141 = vld [vmem:[%s5135 + $0x28] sm:$0xff]
  %v5142 = vld [vmem:[%s5135 + $0x30] sm:$0xff]
  %v5143 = vld [vmem:[%s5135 + $0x38] sm:$0xff]
  %v5144 = vld [vmem:[%s5135 + $0x40] sm:$0xff]
  %v5145 = vld [vmem:[%s5135 + $0x48] sm:$0xff]
  %v5146 = vld [vmem:[%s5135 + $0x50] sm:$0xff]
  %v5147 = vld [vmem:[%s5135 + $0x58] sm:$0xff]
  %v5148 = vld [vmem:[%s5135 + $0x60] sm:$0xff]
  %v5149 = vld [vmem:[%s5135 + $0x68] sm:$0xff]
  %v5150 = vld [vmem:[%s5135 + $0x70] sm:$0xff]
  %v5151 = vld [vmem:[%s5135 + $0x78] sm:$0xff]
  %5152 = vmatpush.msra.mxu0 %v5151
  %5153 = vmatpush.msra.mxu0 %v5150
  %5154 = vmatpush.msra.mxu0 %v5149
  %5155 = vmatpush.msra.mxu0 %v5148
  %5156 = vmatpush.msra.mxu0 %v5147
  %5157 = vmatpush.msra.mxu0 %v5146
  %5158 = vmatpush.msra.mxu0 %v5145
  %5159 = vmatpush.msra.mxu0 %v5144
  %5160 = vmatpush.msra.mxu0 %v5143
  %5161 = vmatpush.msra.mxu0 %v5142
  %5162 = vmatpush.msra.mxu0 %v5141
  %5163 = vmatpush.msra.mxu0 %v5140
  %5164 = vmatpush.msra.mxu0 %v5139
  %5165 = vmatpush.msra.mxu0 %v5138
  %5166 = vmatpush.msra.mxu0 %v5137
  %5167 = vmatpush.msra.mxu0 %v5136
  %5168 = vmatmul.f32.gmra.mxu0 %v5071
  %v5169 = vpop.f32.mrf.mxu0
  %v5170 = vadd.f32 0.0, %v5169
  %5171 = vmatmul.f32.gmra.mxu0 %v5072
  %v5172 = vpop.f32.mrf.mxu0
  %v5173 = vadd.f32 0.0, %v5172
  %5174 = vmatmul.f32.gmra.mxu0 %v5073
  %v5175 = vpop.f32.mrf.mxu0
  %v5176 = vadd.f32 0.0, %v5175
  %5177 = vmatmul.f32.gmra.mxu0 %v5074
  %v5178 = vpop.f32.mrf.mxu0
  %v5179 = vadd.f32 0.0, %v5178
  %5180 = vmatmul.f32.gmra.mxu0 %v5075
  %v5181 = vpop.f32.mrf.mxu0
  %v5182 = vadd.f32 0.0, %v5181
  %5183 = vmatmul.f32.gmra.mxu0 %v5076
  %v5184 = vpop.f32.mrf.mxu0
  %v5185 = vadd.f32 0.0, %v5184
  %5186 = vmatmul.f32.gmra.mxu0 %v5077
  %v5187 = vpop.f32.mrf.mxu0
  %v5188 = vadd.f32 0.0, %v5187
  %5189 = vmatmul.f32.gmra.mxu0 %v5078
  %v5190 = vpop.f32.mrf.mxu0
  %v5191 = vadd.f32 0.0, %v5190
  %5192 = vmatmul.f32.gmra.mxu0 %v5079
  %v5193 = vpop.f32.mrf.mxu0
  %v5194 = vadd.f32 0.0, %v5193
  %5195 = vmatmul.f32.gmra.mxu0 %v5080
  %v5196 = vpop.f32.mrf.mxu0
  %v5197 = vadd.f32 0.0, %v5196
  %5198 = vmatmul.f32.gmra.mxu0 %v5081
  %v5199 = vpop.f32.mrf.mxu0
  %v5200 = vadd.f32 0.0, %v5199
  %5201 = vmatmul.f32.gmra.mxu0 %v5082
  %v5202 = vpop.f32.mrf.mxu0
  %v5203 = vadd.f32 0.0, %v5202
  %5204 = vmatmul.f32.gmra.mxu0 %v5083
  %v5205 = vpop.f32.mrf.mxu0
  %v5206 = vadd.f32 0.0, %v5205
  %5207 = vmatmul.f32.gmra.mxu0 %v5084
  %v5208 = vpop.f32.mrf.mxu0
  %v5209 = vadd.f32 0.0, %v5208
  %5210 = vmatmul.f32.gmra.mxu0 %v5085
  %v5211 = vpop.f32.mrf.mxu0
  %v5212 = vadd.f32 0.0, %v5211
  %5213 = vmatmul.f32.gmra.mxu0 %v5086
  %v5214 = vpop.f32.mrf.mxu0
  %v5215 = vadd.f32 0.0, %v5214
  %5216 = vmatmul.f32.gmra.mxu0 %v5087
  %v5217 = vpop.f32.mrf.mxu0
  %v5218 = vadd.f32 0.0, %v5217
  %5219 = vmatmul.f32.gmra.mxu0 %v5088
  %v5220 = vpop.f32.mrf.mxu0
  %v5221 = vadd.f32 0.0, %v5220
  %5222 = vmatmul.f32.gmra.mxu0 %v5089
  %v5223 = vpop.f32.mrf.mxu0
  %v5224 = vadd.f32 0.0, %v5223
  %5225 = vmatmul.f32.gmra.mxu0 %v5090
  %v5226 = vpop.f32.mrf.mxu0
  %v5227 = vadd.f32 0.0, %v5226
  %5228 = vmatmul.f32.gmra.mxu0 %v5091
  %v5229 = vpop.f32.mrf.mxu0
  %v5230 = vadd.f32 0.0, %v5229
  %5231 = vmatmul.f32.gmra.mxu0 %v5092
  %v5232 = vpop.f32.mrf.mxu0
  %v5233 = vadd.f32 0.0, %v5232
  %5234 = vmatmul.f32.gmra.mxu0 %v5093
  %v5235 = vpop.f32.mrf.mxu0
  %v5236 = vadd.f32 0.0, %v5235
  %5237 = vmatmul.f32.gmra.mxu0 %v5094
  %v5238 = vpop.f32.mrf.mxu0
  %v5239 = vadd.f32 0.0, %v5238
  %5240 = vmatmul.f32.gmra.mxu0 %v5095
  %v5241 = vpop.f32.mrf.mxu0
  %v5242 = vadd.f32 0.0, %v5241
  %5243 = vmatmul.f32.gmra.mxu0 %v5096
  %v5244 = vpop.f32.mrf.mxu0
  %v5245 = vadd.f32 0.0, %v5244
  %5246 = vmatmul.f32.gmra.mxu0 %v5097
  %v5247 = vpop.f32.mrf.mxu0
  %v5248 = vadd.f32 0.0, %v5247
  %5249 = vmatmul.f32.gmra.mxu0 %v5098
  %v5250 = vpop.f32.mrf.mxu0
  %v5251 = vadd.f32 0.0, %v5250
  %5252 = vmatmul.f32.gmra.mxu0 %v5099
  %v5253 = vpop.f32.mrf.mxu0
  %v5254 = vadd.f32 0.0, %v5253
  %5255 = vmatmul.f32.gmra.mxu0 %v5100
  %v5256 = vpop.f32.mrf.mxu0
  %v5257 = vadd.f32 0.0, %v5256
  %5258 = vmatmul.f32.gmra.mxu0 %v5101
  %v5259 = vpop.f32.mrf.mxu0
  %v5260 = vadd.f32 0.0, %v5259
  %5261 = vmatmul.f32.gmra.mxu0 %v5102
  %v5262 = vpop.f32.mrf.mxu0
  %v5263 = vadd.f32 0.0, %v5262
  %5264 = vmatmul.f32.gmra.mxu0 %v5103
  %v5265 = vpop.f32.mrf.mxu0
  %v5266 = vadd.f32 0.0, %v5265
  %5267 = vmatmul.f32.gmra.mxu0 %v5104
  %v5268 = vpop.f32.mrf.mxu0
  %v5269 = vadd.f32 0.0, %v5268
  %5270 = vmatmul.f32.gmra.mxu0 %v5105
  %v5271 = vpop.f32.mrf.mxu0
  %v5272 = vadd.f32 0.0, %v5271
  %5273 = vmatmul.f32.gmra.mxu0 %v5106
  %v5274 = vpop.f32.mrf.mxu0
  %v5275 = vadd.f32 0.0, %v5274
  %5276 = vmatmul.f32.gmra.mxu0 %v5107
  %v5277 = vpop.f32.mrf.mxu0
  %v5278 = vadd.f32 0.0, %v5277
  %5279 = vmatmul.f32.gmra.mxu0 %v5108
  %v5280 = vpop.f32.mrf.mxu0
  %v5281 = vadd.f32 0.0, %v5280
  %5282 = vmatmul.f32.gmra.mxu0 %v5109
  %v5283 = vpop.f32.mrf.mxu0
  %v5284 = vadd.f32 0.0, %v5283
  %5285 = vmatmul.f32.gmra.mxu0 %v5110
  %v5286 = vpop.f32.mrf.mxu0
  %v5287 = vadd.f32 0.0, %v5286
  %5288 = vmatmul.f32.gmra.mxu0 %v5111
  %v5289 = vpop.f32.mrf.mxu0
  %v5290 = vadd.f32 0.0, %v5289
  %5291 = vmatmul.f32.gmra.mxu0 %v5112
  %v5292 = vpop.f32.mrf.mxu0
  %v5293 = vadd.f32 0.0, %v5292
  %5294 = vmatmul.f32.gmra.mxu0 %v5113
  %v5295 = vpop.f32.mrf.mxu0
  %v5296 = vadd.f32 0.0, %v5295
  %5297 = vmatmul.f32.gmra.mxu0 %v5114
  %v5298 = vpop.f32.mrf.mxu0
  %v5299 = vadd.f32 0.0, %v5298
  %5300 = vmatmul.f32.gmra.mxu0 %v5115
  %v5301 = vpop.f32.mrf.mxu0
  %v5302 = vadd.f32 0.0, %v5301
  %5303 = vmatmul.f32.gmra.mxu0 %v5116
  %v5304 = vpop.f32.mrf.mxu0
  %v5305 = vadd.f32 0.0, %v5304
  %5306 = vmatmul.f32.gmra.mxu0 %v5117
  %v5307 = vpop.f32.mrf.mxu0
  %v5308 = vadd.f32 0.0, %v5307
  %5309 = vmatmul.f32.gmra.mxu0 %v5118
  %v5310 = vpop.f32.mrf.mxu0
  %v5311 = vadd.f32 0.0, %v5310
  %5312 = vmatmul.f32.gmra.mxu0 %v5119
  %v5313 = vpop.f32.mrf.mxu0
  %v5314 = vadd.f32 0.0, %v5313
  %5315 = vmatmul.f32.gmra.mxu0 %v5120
  %v5316 = vpop.f32.mrf.mxu0
  %v5317 = vadd.f32 0.0, %v5316
  %5318 = vmatmul.f32.gmra.mxu0 %v5121
  %v5319 = vpop.f32.mrf.mxu0
  %v5320 = vadd.f32 0.0, %v5319
  %5321 = vmatmul.f32.gmra.mxu0 %v5122
  %v5322 = vpop.f32.mrf.mxu0
  %v5323 = vadd.f32 0.0, %v5322
  %5324 = vmatmul.f32.gmra.mxu0 %v5123
  %v5325 = vpop.f32.mrf.mxu0
  %v5326 = vadd.f32 0.0, %v5325
  %5327 = vmatmul.f32.gmra.mxu0 %v5124
  %v5328 = vpop.f32.mrf.mxu0
  %v5329 = vadd.f32 0.0, %v5328
  %5330 = vmatmul.f32.gmra.mxu0 %v5125
  %v5331 = vpop.f32.mrf.mxu0
  %v5332 = vadd.f32 0.0, %v5331
  %5333 = vmatmul.f32.gmra.mxu0 %v5126
  %v5334 = vpop.f32.mrf.mxu0
  %v5335 = vadd.f32 0.0, %v5334
  %5336 = vmatmul.f32.gmra.mxu0 %v5127
  %v5337 = vpop.f32.mrf.mxu0
  %v5338 = vadd.f32 0.0, %v5337
  %5339 = vmatmul.f32.gmra.mxu0 %v5128
  %v5340 = vpop.f32.mrf.mxu0
  %v5341 = vadd.f32 0.0, %v5340
  %5342 = vmatmul.f32.gmra.mxu0 %v5129
  %v5343 = vpop.f32.mrf.mxu0
  %v5344 = vadd.f32 0.0, %v5343
  %5345 = vmatmul.f32.gmra.mxu0 %v5130
  %v5346 = vpop.f32.mrf.mxu0
  %v5347 = vadd.f32 0.0, %v5346
  %5348 = vmatmul.f32.gmra.mxu0 %v5131
  %v5349 = vpop.f32.mrf.mxu0
  %v5350 = vadd.f32 0.0, %v5349
  %5351 = vmatmul.f32.gmra.mxu0 %v5132
  %v5352 = vpop.f32.mrf.mxu0
  %v5353 = vadd.f32 0.0, %v5352
  %5354 = vmatmul.f32.gmra.mxu0 %v5133
  %v5355 = vpop.f32.mrf.mxu0
  %v5356 = vadd.f32 0.0, %v5355
  %5357 = vmatmul.f32.gmra.mxu0 %v5134
  %v5358 = vpop.f32.mrf.mxu0
  %v5359 = vadd.f32 0.0, %v5358
  %5360 = vdwg.mxu0
  %v5361 = vadd.f32 %v5007, %v5170
  %v5362 = vadd.f32 %v5008, %v5173
  %v5363 = vadd.f32 %v5009, %v5176
  %v5364 = vadd.f32 %v5010, %v5179
  %v5365 = vadd.f32 %v5011, %v5182
  %v5366 = vadd.f32 %v5012, %v5185
  %v5367 = vadd.f32 %v5013, %v5188
  %v5368 = vadd.f32 %v5014, %v5191
  %v5369 = vadd.f32 %v5015, %v5194
  %v5370 = vadd.f32 %v5016, %v5197
  %v5371 = vadd.f32 %v5017, %v5200
  %v5372 = vadd.f32 %v5018, %v5203
  %v5373 = vadd.f32 %v5019, %v5206
  %v5374 = vadd.f32 %v5020, %v5209
  %v5375 = vadd.f32 %v5021, %v5212
  %v5376 = vadd.f32 %v5022, %v5215
  %v5377 = vadd.f32 %v5023, %v5218
  %v5378 = vadd.f32 %v5024, %v5221
  %v5379 = vadd.f32 %v5025, %v5224
  %v5380 = vadd.f32 %v5026, %v5227
  %v5381 = vadd.f32 %v5027, %v5230
  %v5382 = vadd.f32 %v5028, %v5233
  %v5383 = vadd.f32 %v5029, %v5236
  %v5384 = vadd.f32 %v5030, %v5239
  %v5385 = vadd.f32 %v5031, %v5242
  %v5386 = vadd.f32 %v5032, %v5245
  %v5387 = vadd.f32 %v5033, %v5248
  %v5388 = vadd.f32 %v5034, %v5251
  %v5389 = vadd.f32 %v5035, %v5254
  %v5390 = vadd.f32 %v5036, %v5257
  %v5391 = vadd.f32 %v5037, %v5260
  %v5392 = vadd.f32 %v5038, %v5263
  %v5393 = vadd.f32 %v5039, %v5266
  %v5394 = vadd.f32 %v5040, %v5269
  %v5395 = vadd.f32 %v5041, %v5272
  %v5396 = vadd.f32 %v5042, %v5275
  %v5397 = vadd.f32 %v5043, %v5278
  %v5398 = vadd.f32 %v5044, %v5281
  %v5399 = vadd.f32 %v5045, %v5284
  %v5400 = vadd.f32 %v5046, %v5287
  %v5401 = vadd.f32 %v5047, %v5290
  %v5402 = vadd.f32 %v5048, %v5293
  %v5403 = vadd.f32 %v5049, %v5296
  %v5404 = vadd.f32 %v5050, %v5299
  %v5405 = vadd.f32 %v5051, %v5302
  %v5406 = vadd.f32 %v5052, %v5305
  %v5407 = vadd.f32 %v5053, %v5308
  %v5408 = vadd.f32 %v5054, %v5311
  %v5409 = vadd.f32 %v5055, %v5314
  %v5410 = vadd.f32 %v5056, %v5317
  %v5411 = vadd.f32 %v5057, %v5320
  %v5412 = vadd.f32 %v5058, %v5323
  %v5413 = vadd.f32 %v5059, %v5326
  %v5414 = vadd.f32 %v5060, %v5329
  %v5415 = vadd.f32 %v5061, %v5332
  %v5416 = vadd.f32 %v5062, %v5335
  %v5417 = vadd.f32 %v5063, %v5338
  %v5418 = vadd.f32 %v5064, %v5341
  %v5419 = vadd.f32 %v5065, %v5344
  %v5420 = vadd.f32 %v5066, %v5347
  %v5421 = vadd.f32 %v5067, %v5350
  %v5422 = vadd.f32 %v5068, %v5353
  %v5423 = vadd.f32 %v5069, %v5356
  %v5424 = vadd.f32 %v5070, %v5359
  %v5425 = vld [vmem:[%s179 + $0x9] sm:$0xff]
  %v5426 = vld [vmem:[%s179 + $0x11] sm:$0xff]
  %v5427 = vld [vmem:[%s179 + $0x29] sm:$0xff]
  %v5428 = vld [vmem:[%s179 + $0x31] sm:$0xff]
  %v5429 = vld [vmem:[%s179 + $0x49] sm:$0xff]
  %v5430 = vld [vmem:[%s179 + $0x51] sm:$0xff]
  %v5431 = vld [vmem:[%s179 + $0x69] sm:$0xff]
  %v5432 = vld [vmem:[%s179 + $0x71] sm:$0xff]
  %v5433 = vld [vmem:[%s179 + $0x89] sm:$0xff]
  %v5434 = vld [vmem:[%s179 + $0x91] sm:$0xff]
  %v5435 = vld [vmem:[%s179 + $0xa9] sm:$0xff]
  %v5436 = vld [vmem:[%s179 + $0xb1] sm:$0xff]
  %v5437 = vld [vmem:[%s179 + $0xc9] sm:$0xff]
  %v5438 = vld [vmem:[%s179 + $0xd1] sm:$0xff]
  %v5439 = vld [vmem:[%s179 + $0xe9] sm:$0xff]
  %v5440 = vld [vmem:[%s179 + $0xf1] sm:$0xff]
  %v5441 = vld [vmem:[%s179 + $0x109] sm:$0xff]
  %v5442 = vld [vmem:[%s179 + $0x111] sm:$0xff]
  %v5443 = vld [vmem:[%s179 + $0x129] sm:$0xff]
  %v5444 = vld [vmem:[%s179 + $0x131] sm:$0xff]
  %v5445 = vld [vmem:[%s179 + $0x149] sm:$0xff]
  %v5446 = vld [vmem:[%s179 + $0x151] sm:$0xff]
  %v5447 = vld [vmem:[%s179 + $0x169] sm:$0xff]
  %v5448 = vld [vmem:[%s179 + $0x171] sm:$0xff]
  %v5449 = vld [vmem:[%s179 + $0x189] sm:$0xff]
  %v5450 = vld [vmem:[%s179 + $0x191] sm:$0xff]
  %v5451 = vld [vmem:[%s179 + $0x1a9] sm:$0xff]
  %v5452 = vld [vmem:[%s179 + $0x1b1] sm:$0xff]
  %v5453 = vld [vmem:[%s179 + $0x1c9] sm:$0xff]
  %v5454 = vld [vmem:[%s179 + $0x1d1] sm:$0xff]
  %v5455 = vld [vmem:[%s179 + $0x1e9] sm:$0xff]
  %v5456 = vld [vmem:[%s179 + $0x1f1] sm:$0xff]
  %v5457 = vld [vmem:[%s179 + $0x249] sm:$0xff]
  %v5458 = vld [vmem:[%s179 + $0x251] sm:$0xff]
  %v5459 = vld [vmem:[%s179 + $0x269] sm:$0xff]
  %v5460 = vld [vmem:[%s179 + $0x271] sm:$0xff]
  %v5461 = vld [vmem:[%s179 + $0x289] sm:$0xff]
  %v5462 = vld [vmem:[%s179 + $0x291] sm:$0xff]
  %v5463 = vld [vmem:[%s179 + $0x2a9] sm:$0xff]
  %v5464 = vld [vmem:[%s179 + $0x2b1] sm:$0xff]
  %v5465 = vld [vmem:[%s179 + $0x2c9] sm:$0xff]
  %v5466 = vld [vmem:[%s179 + $0x2d1] sm:$0xff]
  %v5467 = vld [vmem:[%s179 + $0x2e9] sm:$0xff]
  %v5468 = vld [vmem:[%s179 + $0x2f1] sm:$0xff]
  %v5469 = vld [vmem:[%s179 + $0x309] sm:$0xff]
  %v5470 = vld [vmem:[%s179 + $0x311] sm:$0xff]
  %v5471 = vld [vmem:[%s179 + $0x329] sm:$0xff]
  %v5472 = vld [vmem:[%s179 + $0x331] sm:$0xff]
  %v5473 = vld [vmem:[%s179 + $0x349] sm:$0xff]
  %v5474 = vld [vmem:[%s179 + $0x351] sm:$0xff]
  %v5475 = vld [vmem:[%s179 + $0x369] sm:$0xff]
  %v5476 = vld [vmem:[%s179 + $0x371] sm:$0xff]
  %v5477 = vld [vmem:[%s179 + $0x389] sm:$0xff]
  %v5478 = vld [vmem:[%s179 + $0x391] sm:$0xff]
  %v5479 = vld [vmem:[%s179 + $0x3a9] sm:$0xff]
  %v5480 = vld [vmem:[%s179 + $0x3b1] sm:$0xff]
  %v5481 = vld [vmem:[%s179 + $0x3c9] sm:$0xff]
  %v5482 = vld [vmem:[%s179 + $0x3d1] sm:$0xff]
  %v5483 = vld [vmem:[%s179 + $0x3e9] sm:$0xff]
  %v5484 = vld [vmem:[%s179 + $0x3f1] sm:$0xff]
  %v5485 = vld [vmem:[%s179 + $0x409] sm:$0xff]
  %v5486 = vld [vmem:[%s179 + $0x411] sm:$0xff]
  %v5487 = vld [vmem:[%s179 + $0x429] sm:$0xff]
  %v5488 = vld [vmem:[%s179 + $0x431] sm:$0xff]
  %s5489 = scalar_lea.vmem %s2, 640
  %v5490 = vld [vmem:[%s5489] sm:$0xff]
  %v5491 = vld [vmem:[%s5489 + $0x8] sm:$0xff]
  %v5492 = vld [vmem:[%s5489 + $0x10] sm:$0xff]
  %v5493 = vld [vmem:[%s5489 + $0x18] sm:$0xff]
  %v5494 = vld [vmem:[%s5489 + $0x20] sm:$0xff]
  %v5495 = vld [vmem:[%s5489 + $0x28] sm:$0xff]
  %v5496 = vld [vmem:[%s5489 + $0x30] sm:$0xff]
  %v5497 = vld [vmem:[%s5489 + $0x38] sm:$0xff]
  %v5498 = vld [vmem:[%s5489 + $0x40] sm:$0xff]
  %v5499 = vld [vmem:[%s5489 + $0x48] sm:$0xff]
  %v5500 = vld [vmem:[%s5489 + $0x50] sm:$0xff]
  %v5501 = vld [vmem:[%s5489 + $0x58] sm:$0xff]
  %v5502 = vld [vmem:[%s5489 + $0x60] sm:$0xff]
  %v5503 = vld [vmem:[%s5489 + $0x68] sm:$0xff]
  %v5504 = vld [vmem:[%s5489 + $0x70] sm:$0xff]
  %v5505 = vld [vmem:[%s5489 + $0x78] sm:$0xff]
  %5506 = vmatpush.msra.mxu0 %v5505
  %5507 = vmatpush.msra.mxu0 %v5504
  %5508 = vmatpush.msra.mxu0 %v5503
  %5509 = vmatpush.msra.mxu0 %v5502
  %5510 = vmatpush.msra.mxu0 %v5501
  %5511 = vmatpush.msra.mxu0 %v5500
  %5512 = vmatpush.msra.mxu0 %v5499
  %5513 = vmatpush.msra.mxu0 %v5498
  %5514 = vmatpush.msra.mxu0 %v5497
  %5515 = vmatpush.msra.mxu0 %v5496
  %5516 = vmatpush.msra.mxu0 %v5495
  %5517 = vmatpush.msra.mxu0 %v5494
  %5518 = vmatpush.msra.mxu0 %v5493
  %5519 = vmatpush.msra.mxu0 %v5492
  %5520 = vmatpush.msra.mxu0 %v5491
  %5521 = vmatpush.msra.mxu0 %v5490
  %5522 = vmatmul.f32.gmra.mxu0 %v5425
  %v5523 = vpop.f32.mrf.mxu0
  %v5524 = vadd.f32 0.0, %v5523
  %5525 = vmatmul.f32.gmra.mxu0 %v5426
  %v5526 = vpop.f32.mrf.mxu0
  %v5527 = vadd.f32 0.0, %v5526
  %5528 = vmatmul.f32.gmra.mxu0 %v5427
  %v5529 = vpop.f32.mrf.mxu0
  %v5530 = vadd.f32 0.0, %v5529
  %5531 = vmatmul.f32.gmra.mxu0 %v5428
  %v5532 = vpop.f32.mrf.mxu0
  %v5533 = vadd.f32 0.0, %v5532
  %5534 = vmatmul.f32.gmra.mxu0 %v5429
  %v5535 = vpop.f32.mrf.mxu0
  %v5536 = vadd.f32 0.0, %v5535
  %5537 = vmatmul.f32.gmra.mxu0 %v5430
  %v5538 = vpop.f32.mrf.mxu0
  %v5539 = vadd.f32 0.0, %v5538
  %5540 = vmatmul.f32.gmra.mxu0 %v5431
  %v5541 = vpop.f32.mrf.mxu0
  %v5542 = vadd.f32 0.0, %v5541
  %5543 = vmatmul.f32.gmra.mxu0 %v5432
  %v5544 = vpop.f32.mrf.mxu0
  %v5545 = vadd.f32 0.0, %v5544
  %5546 = vmatmul.f32.gmra.mxu0 %v5433
  %v5547 = vpop.f32.mrf.mxu0
  %v5548 = vadd.f32 0.0, %v5547
  %5549 = vmatmul.f32.gmra.mxu0 %v5434
  %v5550 = vpop.f32.mrf.mxu0
  %v5551 = vadd.f32 0.0, %v5550
  %5552 = vmatmul.f32.gmra.mxu0 %v5435
  %v5553 = vpop.f32.mrf.mxu0
  %v5554 = vadd.f32 0.0, %v5553
  %5555 = vmatmul.f32.gmra.mxu0 %v5436
  %v5556 = vpop.f32.mrf.mxu0
  %v5557 = vadd.f32 0.0, %v5556
  %5558 = vmatmul.f32.gmra.mxu0 %v5437
  %v5559 = vpop.f32.mrf.mxu0
  %v5560 = vadd.f32 0.0, %v5559
  %5561 = vmatmul.f32.gmra.mxu0 %v5438
  %v5562 = vpop.f32.mrf.mxu0
  %v5563 = vadd.f32 0.0, %v5562
  %5564 = vmatmul.f32.gmra.mxu0 %v5439
  %v5565 = vpop.f32.mrf.mxu0
  %v5566 = vadd.f32 0.0, %v5565
  %5567 = vmatmul.f32.gmra.mxu0 %v5440
  %v5568 = vpop.f32.mrf.mxu0
  %v5569 = vadd.f32 0.0, %v5568
  %5570 = vmatmul.f32.gmra.mxu0 %v5441
  %v5571 = vpop.f32.mrf.mxu0
  %v5572 = vadd.f32 0.0, %v5571
  %5573 = vmatmul.f32.gmra.mxu0 %v5442
  %v5574 = vpop.f32.mrf.mxu0
  %v5575 = vadd.f32 0.0, %v5574
  %5576 = vmatmul.f32.gmra.mxu0 %v5443
  %v5577 = vpop.f32.mrf.mxu0
  %v5578 = vadd.f32 0.0, %v5577
  %5579 = vmatmul.f32.gmra.mxu0 %v5444
  %v5580 = vpop.f32.mrf.mxu0
  %v5581 = vadd.f32 0.0, %v5580
  %5582 = vmatmul.f32.gmra.mxu0 %v5445
  %v5583 = vpop.f32.mrf.mxu0
  %v5584 = vadd.f32 0.0, %v5583
  %5585 = vmatmul.f32.gmra.mxu0 %v5446
  %v5586 = vpop.f32.mrf.mxu0
  %v5587 = vadd.f32 0.0, %v5586
  %5588 = vmatmul.f32.gmra.mxu0 %v5447
  %v5589 = vpop.f32.mrf.mxu0
  %v5590 = vadd.f32 0.0, %v5589
  %5591 = vmatmul.f32.gmra.mxu0 %v5448
  %v5592 = vpop.f32.mrf.mxu0
  %v5593 = vadd.f32 0.0, %v5592
  %5594 = vmatmul.f32.gmra.mxu0 %v5449
  %v5595 = vpop.f32.mrf.mxu0
  %v5596 = vadd.f32 0.0, %v5595
  %5597 = vmatmul.f32.gmra.mxu0 %v5450
  %v5598 = vpop.f32.mrf.mxu0
  %v5599 = vadd.f32 0.0, %v5598
  %5600 = vmatmul.f32.gmra.mxu0 %v5451
  %v5601 = vpop.f32.mrf.mxu0
  %v5602 = vadd.f32 0.0, %v5601
  %5603 = vmatmul.f32.gmra.mxu0 %v5452
  %v5604 = vpop.f32.mrf.mxu0
  %v5605 = vadd.f32 0.0, %v5604
  %5606 = vmatmul.f32.gmra.mxu0 %v5453
  %v5607 = vpop.f32.mrf.mxu0
  %v5608 = vadd.f32 0.0, %v5607
  %5609 = vmatmul.f32.gmra.mxu0 %v5454
  %v5610 = vpop.f32.mrf.mxu0
  %v5611 = vadd.f32 0.0, %v5610
  %5612 = vmatmul.f32.gmra.mxu0 %v5455
  %v5613 = vpop.f32.mrf.mxu0
  %v5614 = vadd.f32 0.0, %v5613
  %5615 = vmatmul.f32.gmra.mxu0 %v5456
  %v5616 = vpop.f32.mrf.mxu0
  %v5617 = vadd.f32 0.0, %v5616
  %5618 = vmatmul.f32.gmra.mxu0 %v5457
  %v5619 = vpop.f32.mrf.mxu0
  %v5620 = vadd.f32 0.0, %v5619
  %5621 = vmatmul.f32.gmra.mxu0 %v5458
  %v5622 = vpop.f32.mrf.mxu0
  %v5623 = vadd.f32 0.0, %v5622
  %5624 = vmatmul.f32.gmra.mxu0 %v5459
  %v5625 = vpop.f32.mrf.mxu0
  %v5626 = vadd.f32 0.0, %v5625
  %5627 = vmatmul.f32.gmra.mxu0 %v5460
  %v5628 = vpop.f32.mrf.mxu0
  %v5629 = vadd.f32 0.0, %v5628
  %5630 = vmatmul.f32.gmra.mxu0 %v5461
  %v5631 = vpop.f32.mrf.mxu0
  %v5632 = vadd.f32 0.0, %v5631
  %5633 = vmatmul.f32.gmra.mxu0 %v5462
  %v5634 = vpop.f32.mrf.mxu0
  %v5635 = vadd.f32 0.0, %v5634
  %5636 = vmatmul.f32.gmra.mxu0 %v5463
  %v5637 = vpop.f32.mrf.mxu0
  %v5638 = vadd.f32 0.0, %v5637
  %5639 = vmatmul.f32.gmra.mxu0 %v5464
  %v5640 = vpop.f32.mrf.mxu0
  %v5641 = vadd.f32 0.0, %v5640
  %5642 = vmatmul.f32.gmra.mxu0 %v5465
  %v5643 = vpop.f32.mrf.mxu0
  %v5644 = vadd.f32 0.0, %v5643
  %5645 = vmatmul.f32.gmra.mxu0 %v5466
  %v5646 = vpop.f32.mrf.mxu0
  %v5647 = vadd.f32 0.0, %v5646
  %5648 = vmatmul.f32.gmra.mxu0 %v5467
  %v5649 = vpop.f32.mrf.mxu0
  %v5650 = vadd.f32 0.0, %v5649
  %5651 = vmatmul.f32.gmra.mxu0 %v5468
  %v5652 = vpop.f32.mrf.mxu0
  %v5653 = vadd.f32 0.0, %v5652
  %5654 = vmatmul.f32.gmra.mxu0 %v5469
  %v5655 = vpop.f32.mrf.mxu0
  %v5656 = vadd.f32 0.0, %v5655
  %5657 = vmatmul.f32.gmra.mxu0 %v5470
  %v5658 = vpop.f32.mrf.mxu0
  %v5659 = vadd.f32 0.0, %v5658
  %5660 = vmatmul.f32.gmra.mxu0 %v5471
  %v5661 = vpop.f32.mrf.mxu0
  %v5662 = vadd.f32 0.0, %v5661
  %5663 = vmatmul.f32.gmra.mxu0 %v5472
  %v5664 = vpop.f32.mrf.mxu0
  %v5665 = vadd.f32 0.0, %v5664
  %5666 = vmatmul.f32.gmra.mxu0 %v5473
  %v5667 = vpop.f32.mrf.mxu0
  %v5668 = vadd.f32 0.0, %v5667
  %5669 = vmatmul.f32.gmra.mxu0 %v5474
  %v5670 = vpop.f32.mrf.mxu0
  %v5671 = vadd.f32 0.0, %v5670
  %5672 = vmatmul.f32.gmra.mxu0 %v5475
  %v5673 = vpop.f32.mrf.mxu0
  %v5674 = vadd.f32 0.0, %v5673
  %5675 = vmatmul.f32.gmra.mxu0 %v5476
  %v5676 = vpop.f32.mrf.mxu0
  %v5677 = vadd.f32 0.0, %v5676
  %5678 = vmatmul.f32.gmra.mxu0 %v5477
  %v5679 = vpop.f32.mrf.mxu0
  %v5680 = vadd.f32 0.0, %v5679
  %5681 = vmatmul.f32.gmra.mxu0 %v5478
  %v5682 = vpop.f32.mrf.mxu0
  %v5683 = vadd.f32 0.0, %v5682
  %5684 = vmatmul.f32.gmra.mxu0 %v5479
  %v5685 = vpop.f32.mrf.mxu0
  %v5686 = vadd.f32 0.0, %v5685
  %5687 = vmatmul.f32.gmra.mxu0 %v5480
  %v5688 = vpop.f32.mrf.mxu0
  %v5689 = vadd.f32 0.0, %v5688
  %5690 = vmatmul.f32.gmra.mxu0 %v5481
  %v5691 = vpop.f32.mrf.mxu0
  %v5692 = vadd.f32 0.0, %v5691
  %5693 = vmatmul.f32.gmra.mxu0 %v5482
  %v5694 = vpop.f32.mrf.mxu0
  %v5695 = vadd.f32 0.0, %v5694
  %5696 = vmatmul.f32.gmra.mxu0 %v5483
  %v5697 = vpop.f32.mrf.mxu0
  %v5698 = vadd.f32 0.0, %v5697
  %5699 = vmatmul.f32.gmra.mxu0 %v5484
  %v5700 = vpop.f32.mrf.mxu0
  %v5701 = vadd.f32 0.0, %v5700
  %5702 = vmatmul.f32.gmra.mxu0 %v5485
  %v5703 = vpop.f32.mrf.mxu0
  %v5704 = vadd.f32 0.0, %v5703
  %5705 = vmatmul.f32.gmra.mxu0 %v5486
  %v5706 = vpop.f32.mrf.mxu0
  %v5707 = vadd.f32 0.0, %v5706
  %5708 = vmatmul.f32.gmra.mxu0 %v5487
  %v5709 = vpop.f32.mrf.mxu0
  %v5710 = vadd.f32 0.0, %v5709
  %5711 = vmatmul.f32.gmra.mxu0 %v5488
  %v5712 = vpop.f32.mrf.mxu0
  %v5713 = vadd.f32 0.0, %v5712
  %5714 = vdwg.mxu0
  %v5715 = vadd.f32 %v5361, %v5524
  %v5716 = vadd.f32 %v5362, %v5527
  %v5717 = vadd.f32 %v5363, %v5530
  %v5718 = vadd.f32 %v5364, %v5533
  %v5719 = vadd.f32 %v5365, %v5536
  %v5720 = vadd.f32 %v5366, %v5539
  %v5721 = vadd.f32 %v5367, %v5542
  %v5722 = vadd.f32 %v5368, %v5545
  %v5723 = vadd.f32 %v5369, %v5548
  %v5724 = vadd.f32 %v5370, %v5551
  %v5725 = vadd.f32 %v5371, %v5554
  %v5726 = vadd.f32 %v5372, %v5557
  %v5727 = vadd.f32 %v5373, %v5560
  %v5728 = vadd.f32 %v5374, %v5563
  %v5729 = vadd.f32 %v5375, %v5566
  %v5730 = vadd.f32 %v5376, %v5569
  %v5731 = vadd.f32 %v5377, %v5572
  %v5732 = vadd.f32 %v5378, %v5575
  %v5733 = vadd.f32 %v5379, %v5578
  %v5734 = vadd.f32 %v5380, %v5581
  %v5735 = vadd.f32 %v5381, %v5584
  %v5736 = vadd.f32 %v5382, %v5587
  %v5737 = vadd.f32 %v5383, %v5590
  %v5738 = vadd.f32 %v5384, %v5593
  %v5739 = vadd.f32 %v5385, %v5596
  %v5740 = vadd.f32 %v5386, %v5599
  %v5741 = vadd.f32 %v5387, %v5602
  %v5742 = vadd.f32 %v5388, %v5605
  %v5743 = vadd.f32 %v5389, %v5608
  %v5744 = vadd.f32 %v5390, %v5611
  %v5745 = vadd.f32 %v5391, %v5614
  %v5746 = vadd.f32 %v5392, %v5617
  %v5747 = vadd.f32 %v5393, %v5620
  %v5748 = vadd.f32 %v5394, %v5623
  %v5749 = vadd.f32 %v5395, %v5626
  %v5750 = vadd.f32 %v5396, %v5629
  %v5751 = vadd.f32 %v5397, %v5632
  %v5752 = vadd.f32 %v5398, %v5635
  %v5753 = vadd.f32 %v5399, %v5638
  %v5754 = vadd.f32 %v5400, %v5641
  %v5755 = vadd.f32 %v5401, %v5644
  %v5756 = vadd.f32 %v5402, %v5647
  %v5757 = vadd.f32 %v5403, %v5650
  %v5758 = vadd.f32 %v5404, %v5653
  %v5759 = vadd.f32 %v5405, %v5656
  %v5760 = vadd.f32 %v5406, %v5659
  %v5761 = vadd.f32 %v5407, %v5662
  %v5762 = vadd.f32 %v5408, %v5665
  %v5763 = vadd.f32 %v5409, %v5668
  %v5764 = vadd.f32 %v5410, %v5671
  %v5765 = vadd.f32 %v5411, %v5674
  %v5766 = vadd.f32 %v5412, %v5677
  %v5767 = vadd.f32 %v5413, %v5680
  %v5768 = vadd.f32 %v5414, %v5683
  %v5769 = vadd.f32 %v5415, %v5686
  %v5770 = vadd.f32 %v5416, %v5689
  %v5771 = vadd.f32 %v5417, %v5692
  %v5772 = vadd.f32 %v5418, %v5695
  %v5773 = vadd.f32 %v5419, %v5698
  %v5774 = vadd.f32 %v5420, %v5701
  %v5775 = vadd.f32 %v5421, %v5704
  %v5776 = vadd.f32 %v5422, %v5707
  %v5777 = vadd.f32 %v5423, %v5710
  %v5778 = vadd.f32 %v5424, %v5713
  %v5779 = vld [vmem:[%s2239 + $0x7] sm:$0xff]
  %v5780 = vld [vmem:[%s2239 + $0xf] sm:$0xff]
  %v5781 = vld [vmem:[%s2239 + $0x27] sm:$0xff]
  %v5782 = vld [vmem:[%s2239 + $0x2f] sm:$0xff]
  %v5783 = vld [vmem:[%s2239 + $0x47] sm:$0xff]
  %v5784 = vld [vmem:[%s2239 + $0x4f] sm:$0xff]
  %v5785 = vld [vmem:[%s2239 + $0x67] sm:$0xff]
  %v5786 = vld [vmem:[%s2239 + $0x6f] sm:$0xff]
  %v5787 = vld [vmem:[%s2239 + $0x87] sm:$0xff]
  %v5788 = vld [vmem:[%s2239 + $0x8f] sm:$0xff]
  %v5789 = vld [vmem:[%s2239 + $0xa7] sm:$0xff]
  %v5790 = vld [vmem:[%s2239 + $0xaf] sm:$0xff]
  %v5791 = vld [vmem:[%s2239 + $0xc7] sm:$0xff]
  %v5792 = vld [vmem:[%s2239 + $0xcf] sm:$0xff]
  %v5793 = vld [vmem:[%s2239 + $0xe7] sm:$0xff]
  %v5794 = vld [vmem:[%s2239 + $0xef] sm:$0xff]
  %v5795 = vld [vmem:[%s2239 + $0x107] sm:$0xff]
  %v5796 = vld [vmem:[%s2239 + $0x10f] sm:$0xff]
  %v5797 = vld [vmem:[%s2239 + $0x127] sm:$0xff]
  %v5798 = vld [vmem:[%s2239 + $0x12f] sm:$0xff]
  %v5799 = vld [vmem:[%s2239 + $0x147] sm:$0xff]
  %v5800 = vld [vmem:[%s2239 + $0x14f] sm:$0xff]
  %v5801 = vld [vmem:[%s2239 + $0x167] sm:$0xff]
  %v5802 = vld [vmem:[%s2239 + $0x16f] sm:$0xff]
  %v5803 = vld [vmem:[%s2239 + $0x187] sm:$0xff]
  %v5804 = vld [vmem:[%s2239 + $0x18f] sm:$0xff]
  %v5805 = vld [vmem:[%s2239 + $0x1a7] sm:$0xff]
  %v5806 = vld [vmem:[%s2239 + $0x1af] sm:$0xff]
  %v5807 = vld [vmem:[%s2239 + $0x1c7] sm:$0xff]
  %v5808 = vld [vmem:[%s2239 + $0x1cf] sm:$0xff]
  %v5809 = vld [vmem:[%s2239 + $0x1e7] sm:$0xff]
  %v5810 = vld [vmem:[%s2239 + $0x1ef] sm:$0xff]
  %v5811 = vld [vmem:[%s2239 + $0x247] sm:$0xff]
  %v5812 = vld [vmem:[%s2239 + $0x24f] sm:$0xff]
  %v5813 = vld [vmem:[%s2239 + $0x267] sm:$0xff]
  %v5814 = vld [vmem:[%s2239 + $0x26f] sm:$0xff]
  %v5815 = vld [vmem:[%s2239 + $0x287] sm:$0xff]
  %v5816 = vld [vmem:[%s2239 + $0x28f] sm:$0xff]
  %v5817 = vld [vmem:[%s2239 + $0x2a7] sm:$0xff]
  %v5818 = vld [vmem:[%s2239 + $0x2af] sm:$0xff]
  %v5819 = vld [vmem:[%s2239 + $0x2c7] sm:$0xff]
  %v5820 = vld [vmem:[%s2239 + $0x2cf] sm:$0xff]
  %v5821 = vld [vmem:[%s2239 + $0x2e7] sm:$0xff]
  %v5822 = vld [vmem:[%s2239 + $0x2ef] sm:$0xff]
  %v5823 = vld [vmem:[%s2239 + $0x307] sm:$0xff]
  %v5824 = vld [vmem:[%s2239 + $0x30f] sm:$0xff]
  %v5825 = vld [vmem:[%s2239 + $0x327] sm:$0xff]
  %v5826 = vld [vmem:[%s2239 + $0x32f] sm:$0xff]
  %v5827 = vld [vmem:[%s2239 + $0x347] sm:$0xff]
  %v5828 = vld [vmem:[%s2239 + $0x34f] sm:$0xff]
  %v5829 = vld [vmem:[%s2239 + $0x367] sm:$0xff]
  %v5830 = vld [vmem:[%s2239 + $0x36f] sm:$0xff]
  %v5831 = vld [vmem:[%s2239 + $0x387] sm:$0xff]
  %v5832 = vld [vmem:[%s2239 + $0x38f] sm:$0xff]
  %v5833 = vld [vmem:[%s2239 + $0x3a7] sm:$0xff]
  %v5834 = vld [vmem:[%s2239 + $0x3af] sm:$0xff]
  %v5835 = vld [vmem:[%s2239 + $0x3c7] sm:$0xff]
  %v5836 = vld [vmem:[%s2239 + $0x3cf] sm:$0xff]
  %v5837 = vld [vmem:[%s2239 + $0x3e7] sm:$0xff]
  %v5838 = vld [vmem:[%s2239 + $0x3ef] sm:$0xff]
  %v5839 = vld [vmem:[%s2239 + $0x407] sm:$0xff]
  %v5840 = vld [vmem:[%s2239 + $0x40f] sm:$0xff]
  %v5841 = vld [vmem:[%s2239 + $0x427] sm:$0xff]
  %v5842 = vld [vmem:[%s2239 + $0x42f] sm:$0xff]
  %s5843 = scalar_lea.vmem %s2, 768
  %v5844 = vld [vmem:[%s5843] sm:$0xff]
  %v5845 = vld [vmem:[%s5843 + $0x8] sm:$0xff]
  %v5846 = vld [vmem:[%s5843 + $0x10] sm:$0xff]
  %v5847 = vld [vmem:[%s5843 + $0x18] sm:$0xff]
  %v5848 = vld [vmem:[%s5843 + $0x20] sm:$0xff]
  %v5849 = vld [vmem:[%s5843 + $0x28] sm:$0xff]
  %v5850 = vld [vmem:[%s5843 + $0x30] sm:$0xff]
  %v5851 = vld [vmem:[%s5843 + $0x38] sm:$0xff]
  %v5852 = vld [vmem:[%s5843 + $0x40] sm:$0xff]
  %v5853 = vld [vmem:[%s5843 + $0x48] sm:$0xff]
  %v5854 = vld [vmem:[%s5843 + $0x50] sm:$0xff]
  %v5855 = vld [vmem:[%s5843 + $0x58] sm:$0xff]
  %v5856 = vld [vmem:[%s5843 + $0x60] sm:$0xff]
  %v5857 = vld [vmem:[%s5843 + $0x68] sm:$0xff]
  %v5858 = vld [vmem:[%s5843 + $0x70] sm:$0xff]
  %v5859 = vld [vmem:[%s5843 + $0x78] sm:$0xff]
  %5860 = vmatpush.msra.mxu0 %v5859
  %5861 = vmatpush.msra.mxu0 %v5858
  %5862 = vmatpush.msra.mxu0 %v5857
  %5863 = vmatpush.msra.mxu0 %v5856
  %5864 = vmatpush.msra.mxu0 %v5855
  %5865 = vmatpush.msra.mxu0 %v5854
  %5866 = vmatpush.msra.mxu0 %v5853
  %5867 = vmatpush.msra.mxu0 %v5852
  %5868 = vmatpush.msra.mxu0 %v5851
  %5869 = vmatpush.msra.mxu0 %v5850
  %5870 = vmatpush.msra.mxu0 %v5849
  %5871 = vmatpush.msra.mxu0 %v5848
  %5872 = vmatpush.msra.mxu0 %v5847
  %5873 = vmatpush.msra.mxu0 %v5846
  %5874 = vmatpush.msra.mxu0 %v5845
  %5875 = vmatpush.msra.mxu0 %v5844
  %5876 = vmatmul.f32.gmra.mxu0 %v5779
  %v5877 = vpop.f32.mrf.mxu0
  %v5878 = vadd.f32 0.0, %v5877
  %5879 = vmatmul.f32.gmra.mxu0 %v5780
  %v5880 = vpop.f32.mrf.mxu0
  %v5881 = vadd.f32 0.0, %v5880
  %5882 = vmatmul.f32.gmra.mxu0 %v5781
  %v5883 = vpop.f32.mrf.mxu0
  %v5884 = vadd.f32 0.0, %v5883
  %5885 = vmatmul.f32.gmra.mxu0 %v5782
  %v5886 = vpop.f32.mrf.mxu0
  %v5887 = vadd.f32 0.0, %v5886
  %5888 = vmatmul.f32.gmra.mxu0 %v5783
  %v5889 = vpop.f32.mrf.mxu0
  %v5890 = vadd.f32 0.0, %v5889
  %5891 = vmatmul.f32.gmra.mxu0 %v5784
  %v5892 = vpop.f32.mrf.mxu0
  %v5893 = vadd.f32 0.0, %v5892
  %5894 = vmatmul.f32.gmra.mxu0 %v5785
  %v5895 = vpop.f32.mrf.mxu0
  %v5896 = vadd.f32 0.0, %v5895
  %5897 = vmatmul.f32.gmra.mxu0 %v5786
  %v5898 = vpop.f32.mrf.mxu0
  %v5899 = vadd.f32 0.0, %v5898
  %5900 = vmatmul.f32.gmra.mxu0 %v5787
  %v5901 = vpop.f32.mrf.mxu0
  %v5902 = vadd.f32 0.0, %v5901
  %5903 = vmatmul.f32.gmra.mxu0 %v5788
  %v5904 = vpop.f32.mrf.mxu0
  %v5905 = vadd.f32 0.0, %v5904
  %5906 = vmatmul.f32.gmra.mxu0 %v5789
  %v5907 = vpop.f32.mrf.mxu0
  %v5908 = vadd.f32 0.0, %v5907
  %5909 = vmatmul.f32.gmra.mxu0 %v5790
  %v5910 = vpop.f32.mrf.mxu0
  %v5911 = vadd.f32 0.0, %v5910
  %5912 = vmatmul.f32.gmra.mxu0 %v5791
  %v5913 = vpop.f32.mrf.mxu0
  %v5914 = vadd.f32 0.0, %v5913
  %5915 = vmatmul.f32.gmra.mxu0 %v5792
  %v5916 = vpop.f32.mrf.mxu0
  %v5917 = vadd.f32 0.0, %v5916
  %5918 = vmatmul.f32.gmra.mxu0 %v5793
  %v5919 = vpop.f32.mrf.mxu0
  %v5920 = vadd.f32 0.0, %v5919
  %5921 = vmatmul.f32.gmra.mxu0 %v5794
  %v5922 = vpop.f32.mrf.mxu0
  %v5923 = vadd.f32 0.0, %v5922
  %5924 = vmatmul.f32.gmra.mxu0 %v5795
  %v5925 = vpop.f32.mrf.mxu0
  %v5926 = vadd.f32 0.0, %v5925
  %5927 = vmatmul.f32.gmra.mxu0 %v5796
  %v5928 = vpop.f32.mrf.mxu0
  %v5929 = vadd.f32 0.0, %v5928
  %5930 = vmatmul.f32.gmra.mxu0 %v5797
  %v5931 = vpop.f32.mrf.mxu0
  %v5932 = vadd.f32 0.0, %v5931
  %5933 = vmatmul.f32.gmra.mxu0 %v5798
  %v5934 = vpop.f32.mrf.mxu0
  %v5935 = vadd.f32 0.0, %v5934
  %5936 = vmatmul.f32.gmra.mxu0 %v5799
  %v5937 = vpop.f32.mrf.mxu0
  %v5938 = vadd.f32 0.0, %v5937
  %5939 = vmatmul.f32.gmra.mxu0 %v5800
  %v5940 = vpop.f32.mrf.mxu0
  %v5941 = vadd.f32 0.0, %v5940
  %5942 = vmatmul.f32.gmra.mxu0 %v5801
  %v5943 = vpop.f32.mrf.mxu0
  %v5944 = vadd.f32 0.0, %v5943
  %5945 = vmatmul.f32.gmra.mxu0 %v5802
  %v5946 = vpop.f32.mrf.mxu0
  %v5947 = vadd.f32 0.0, %v5946
  %5948 = vmatmul.f32.gmra.mxu0 %v5803
  %v5949 = vpop.f32.mrf.mxu0
  %v5950 = vadd.f32 0.0, %v5949
  %5951 = vmatmul.f32.gmra.mxu0 %v5804
  %v5952 = vpop.f32.mrf.mxu0
  %v5953 = vadd.f32 0.0, %v5952
  %5954 = vmatmul.f32.gmra.mxu0 %v5805
  %v5955 = vpop.f32.mrf.mxu0
  %v5956 = vadd.f32 0.0, %v5955
  %5957 = vmatmul.f32.gmra.mxu0 %v5806
  %v5958 = vpop.f32.mrf.mxu0
  %v5959 = vadd.f32 0.0, %v5958
  %5960 = vmatmul.f32.gmra.mxu0 %v5807
  %v5961 = vpop.f32.mrf.mxu0
  %v5962 = vadd.f32 0.0, %v5961
  %5963 = vmatmul.f32.gmra.mxu0 %v5808
  %v5964 = vpop.f32.mrf.mxu0
  %v5965 = vadd.f32 0.0, %v5964
  %5966 = vmatmul.f32.gmra.mxu0 %v5809
  %v5967 = vpop.f32.mrf.mxu0
  %v5968 = vadd.f32 0.0, %v5967
  %5969 = vmatmul.f32.gmra.mxu0 %v5810
  %v5970 = vpop.f32.mrf.mxu0
  %v5971 = vadd.f32 0.0, %v5970
  %5972 = vmatmul.f32.gmra.mxu0 %v5811
  %v5973 = vpop.f32.mrf.mxu0
  %v5974 = vadd.f32 0.0, %v5973
  %5975 = vmatmul.f32.gmra.mxu0 %v5812
  %v5976 = vpop.f32.mrf.mxu0
  %v5977 = vadd.f32 0.0, %v5976
  %5978 = vmatmul.f32.gmra.mxu0 %v5813
  %v5979 = vpop.f32.mrf.mxu0
  %v5980 = vadd.f32 0.0, %v5979
  %5981 = vmatmul.f32.gmra.mxu0 %v5814
  %v5982 = vpop.f32.mrf.mxu0
  %v5983 = vadd.f32 0.0, %v5982
  %5984 = vmatmul.f32.gmra.mxu0 %v5815
  %v5985 = vpop.f32.mrf.mxu0
  %v5986 = vadd.f32 0.0, %v5985
  %5987 = vmatmul.f32.gmra.mxu0 %v5816
  %v5988 = vpop.f32.mrf.mxu0
  %v5989 = vadd.f32 0.0, %v5988
  %5990 = vmatmul.f32.gmra.mxu0 %v5817
  %v5991 = vpop.f32.mrf.mxu0
  %v5992 = vadd.f32 0.0, %v5991
  %5993 = vmatmul.f32.gmra.mxu0 %v5818
  %v5994 = vpop.f32.mrf.mxu0
  %v5995 = vadd.f32 0.0, %v5994
  %5996 = vmatmul.f32.gmra.mxu0 %v5819
  %v5997 = vpop.f32.mrf.mxu0
  %v5998 = vadd.f32 0.0, %v5997
  %5999 = vmatmul.f32.gmra.mxu0 %v5820
  %v6000 = vpop.f32.mrf.mxu0
  %v6001 = vadd.f32 0.0, %v6000
  %6002 = vmatmul.f32.gmra.mxu0 %v5821
  %v6003 = vpop.f32.mrf.mxu0
  %v6004 = vadd.f32 0.0, %v6003
  %6005 = vmatmul.f32.gmra.mxu0 %v5822
  %v6006 = vpop.f32.mrf.mxu0
  %v6007 = vadd.f32 0.0, %v6006
  %6008 = vmatmul.f32.gmra.mxu0 %v5823
  %v6009 = vpop.f32.mrf.mxu0
  %v6010 = vadd.f32 0.0, %v6009
  %6011 = vmatmul.f32.gmra.mxu0 %v5824
  %v6012 = vpop.f32.mrf.mxu0
  %v6013 = vadd.f32 0.0, %v6012
  %6014 = vmatmul.f32.gmra.mxu0 %v5825
  %v6015 = vpop.f32.mrf.mxu0
  %v6016 = vadd.f32 0.0, %v6015
  %6017 = vmatmul.f32.gmra.mxu0 %v5826
  %v6018 = vpop.f32.mrf.mxu0
  %v6019 = vadd.f32 0.0, %v6018
  %6020 = vmatmul.f32.gmra.mxu0 %v5827
  %v6021 = vpop.f32.mrf.mxu0
  %v6022 = vadd.f32 0.0, %v6021
  %6023 = vmatmul.f32.gmra.mxu0 %v5828
  %v6024 = vpop.f32.mrf.mxu0
  %v6025 = vadd.f32 0.0, %v6024
  %6026 = vmatmul.f32.gmra.mxu0 %v5829
  %v6027 = vpop.f32.mrf.mxu0
  %v6028 = vadd.f32 0.0, %v6027
  %6029 = vmatmul.f32.gmra.mxu0 %v5830
  %v6030 = vpop.f32.mrf.mxu0
  %v6031 = vadd.f32 0.0, %v6030
  %6032 = vmatmul.f32.gmra.mxu0 %v5831
  %v6033 = vpop.f32.mrf.mxu0
  %v6034 = vadd.f32 0.0, %v6033
  %6035 = vmatmul.f32.gmra.mxu0 %v5832
  %v6036 = vpop.f32.mrf.mxu0
  %v6037 = vadd.f32 0.0, %v6036
  %6038 = vmatmul.f32.gmra.mxu0 %v5833
  %v6039 = vpop.f32.mrf.mxu0
  %v6040 = vadd.f32 0.0, %v6039
  %6041 = vmatmul.f32.gmra.mxu0 %v5834
  %v6042 = vpop.f32.mrf.mxu0
  %v6043 = vadd.f32 0.0, %v6042
  %6044 = vmatmul.f32.gmra.mxu0 %v5835
  %v6045 = vpop.f32.mrf.mxu0
  %v6046 = vadd.f32 0.0, %v6045
  %6047 = vmatmul.f32.gmra.mxu0 %v5836
  %v6048 = vpop.f32.mrf.mxu0
  %v6049 = vadd.f32 0.0, %v6048
  %6050 = vmatmul.f32.gmra.mxu0 %v5837
  %v6051 = vpop.f32.mrf.mxu0
  %v6052 = vadd.f32 0.0, %v6051
  %6053 = vmatmul.f32.gmra.mxu0 %v5838
  %v6054 = vpop.f32.mrf.mxu0
  %v6055 = vadd.f32 0.0, %v6054
  %6056 = vmatmul.f32.gmra.mxu0 %v5839
  %v6057 = vpop.f32.mrf.mxu0
  %v6058 = vadd.f32 0.0, %v6057
  %6059 = vmatmul.f32.gmra.mxu0 %v5840
  %v6060 = vpop.f32.mrf.mxu0
  %v6061 = vadd.f32 0.0, %v6060
  %6062 = vmatmul.f32.gmra.mxu0 %v5841
  %v6063 = vpop.f32.mrf.mxu0
  %v6064 = vadd.f32 0.0, %v6063
  %6065 = vmatmul.f32.gmra.mxu0 %v5842
  %v6066 = vpop.f32.mrf.mxu0
  %v6067 = vadd.f32 0.0, %v6066
  %6068 = vdwg.mxu0
  %v6069 = vadd.f32 %v5715, %v5878
  %v6070 = vadd.f32 %v5716, %v5881
  %v6071 = vadd.f32 %v5717, %v5884
  %v6072 = vadd.f32 %v5718, %v5887
  %v6073 = vadd.f32 %v5719, %v5890
  %v6074 = vadd.f32 %v5720, %v5893
  %v6075 = vadd.f32 %v5721, %v5896
  %v6076 = vadd.f32 %v5722, %v5899
  %v6077 = vadd.f32 %v5723, %v5902
  %v6078 = vadd.f32 %v5724, %v5905
  %v6079 = vadd.f32 %v5725, %v5908
  %v6080 = vadd.f32 %v5726, %v5911
  %v6081 = vadd.f32 %v5727, %v5914
  %v6082 = vadd.f32 %v5728, %v5917
  %v6083 = vadd.f32 %v5729, %v5920
  %v6084 = vadd.f32 %v5730, %v5923
  %v6085 = vadd.f32 %v5731, %v5926
  %v6086 = vadd.f32 %v5732, %v5929
  %v6087 = vadd.f32 %v5733, %v5932
  %v6088 = vadd.f32 %v5734, %v5935
  %v6089 = vadd.f32 %v5735, %v5938
  %v6090 = vadd.f32 %v5736, %v5941
  %v6091 = vadd.f32 %v5737, %v5944
  %v6092 = vadd.f32 %v5738, %v5947
  %v6093 = vadd.f32 %v5739, %v5950
  %v6094 = vadd.f32 %v5740, %v5953
  %v6095 = vadd.f32 %v5741, %v5956
  %v6096 = vadd.f32 %v5742, %v5959
  %v6097 = vadd.f32 %v5743, %v5962
  %v6098 = vadd.f32 %v5744, %v5965
  %v6099 = vadd.f32 %v5745, %v5968
  %v6100 = vadd.f32 %v5746, %v5971
  %v6101 = vadd.f32 %v5747, %v5974
  %v6102 = vadd.f32 %v5748, %v5977
  %v6103 = vadd.f32 %v5749, %v5980
  %v6104 = vadd.f32 %v5750, %v5983
  %v6105 = vadd.f32 %v5751, %v5986
  %v6106 = vadd.f32 %v5752, %v5989
  %v6107 = vadd.f32 %v5753, %v5992
  %v6108 = vadd.f32 %v5754, %v5995
  %v6109 = vadd.f32 %v5755, %v5998
  %v6110 = vadd.f32 %v5756, %v6001
  %v6111 = vadd.f32 %v5757, %v6004
  %v6112 = vadd.f32 %v5758, %v6007
  %v6113 = vadd.f32 %v5759, %v6010
  %v6114 = vadd.f32 %v5760, %v6013
  %v6115 = vadd.f32 %v5761, %v6016
  %v6116 = vadd.f32 %v5762, %v6019
  %v6117 = vadd.f32 %v5763, %v6022
  %v6118 = vadd.f32 %v5764, %v6025
  %v6119 = vadd.f32 %v5765, %v6028
  %v6120 = vadd.f32 %v5766, %v6031
  %v6121 = vadd.f32 %v5767, %v6034
  %v6122 = vadd.f32 %v5768, %v6037
  %v6123 = vadd.f32 %v5769, %v6040
  %v6124 = vadd.f32 %v5770, %v6043
  %v6125 = vadd.f32 %v5771, %v6046
  %v6126 = vadd.f32 %v5772, %v6049
  %v6127 = vadd.f32 %v5773, %v6052
  %v6128 = vadd.f32 %v5774, %v6055
  %v6129 = vadd.f32 %v5775, %v6058
  %v6130 = vadd.f32 %v5776, %v6061
  %v6131 = vadd.f32 %v5777, %v6064
  %v6132 = vadd.f32 %v5778, %v6067
  %v6133 = vld [vmem:[%s2239 + $0x8] sm:$0xff]
  %v6134 = vld [vmem:[%s2239 + $0x10] sm:$0xff]
  %v6135 = vld [vmem:[%s2239 + $0x28] sm:$0xff]
  %v6136 = vld [vmem:[%s2239 + $0x30] sm:$0xff]
  %v6137 = vld [vmem:[%s2239 + $0x48] sm:$0xff]
  %v6138 = vld [vmem:[%s2239 + $0x50] sm:$0xff]
  %v6139 = vld [vmem:[%s2239 + $0x68] sm:$0xff]
  %v6140 = vld [vmem:[%s2239 + $0x70] sm:$0xff]
  %v6141 = vld [vmem:[%s2239 + $0x88] sm:$0xff]
  %v6142 = vld [vmem:[%s2239 + $0x90] sm:$0xff]
  %v6143 = vld [vmem:[%s2239 + $0xa8] sm:$0xff]
  %v6144 = vld [vmem:[%s2239 + $0xb0] sm:$0xff]
  %v6145 = vld [vmem:[%s2239 + $0xc8] sm:$0xff]
  %v6146 = vld [vmem:[%s2239 + $0xd0] sm:$0xff]
  %v6147 = vld [vmem:[%s2239 + $0xe8] sm:$0xff]
  %v6148 = vld [vmem:[%s2239 + $0xf0] sm:$0xff]
  %v6149 = vld [vmem:[%s2239 + $0x108] sm:$0xff]
  %v6150 = vld [vmem:[%s2239 + $0x110] sm:$0xff]
  %v6151 = vld [vmem:[%s2239 + $0x128] sm:$0xff]
  %v6152 = vld [vmem:[%s2239 + $0x130] sm:$0xff]
  %v6153 = vld [vmem:[%s2239 + $0x148] sm:$0xff]
  %v6154 = vld [vmem:[%s2239 + $0x150] sm:$0xff]
  %v6155 = vld [vmem:[%s2239 + $0x168] sm:$0xff]
  %v6156 = vld [vmem:[%s2239 + $0x170] sm:$0xff]
  %v6157 = vld [vmem:[%s2239 + $0x188] sm:$0xff]
  %v6158 = vld [vmem:[%s2239 + $0x190] sm:$0xff]
  %v6159 = vld [vmem:[%s2239 + $0x1a8] sm:$0xff]
  %v6160 = vld [vmem:[%s2239 + $0x1b0] sm:$0xff]
  %v6161 = vld [vmem:[%s2239 + $0x1c8] sm:$0xff]
  %v6162 = vld [vmem:[%s2239 + $0x1d0] sm:$0xff]
  %v6163 = vld [vmem:[%s2239 + $0x1e8] sm:$0xff]
  %v6164 = vld [vmem:[%s2239 + $0x1f0] sm:$0xff]
  %v6165 = vld [vmem:[%s2239 + $0x248] sm:$0xff]
  %v6166 = vld [vmem:[%s2239 + $0x250] sm:$0xff]
  %v6167 = vld [vmem:[%s2239 + $0x268] sm:$0xff]
  %v6168 = vld [vmem:[%s2239 + $0x270] sm:$0xff]
  %v6169 = vld [vmem:[%s2239 + $0x288] sm:$0xff]
  %v6170 = vld [vmem:[%s2239 + $0x290] sm:$0xff]
  %v6171 = vld [vmem:[%s2239 + $0x2a8] sm:$0xff]
  %v6172 = vld [vmem:[%s2239 + $0x2b0] sm:$0xff]
  %v6173 = vld [vmem:[%s2239 + $0x2c8] sm:$0xff]
  %v6174 = vld [vmem:[%s2239 + $0x2d0] sm:$0xff]
  %v6175 = vld [vmem:[%s2239 + $0x2e8] sm:$0xff]
  %v6176 = vld [vmem:[%s2239 + $0x2f0] sm:$0xff]
  %v6177 = vld [vmem:[%s2239 + $0x308] sm:$0xff]
  %v6178 = vld [vmem:[%s2239 + $0x310] sm:$0xff]
  %v6179 = vld [vmem:[%s2239 + $0x328] sm:$0xff]
  %v6180 = vld [vmem:[%s2239 + $0x330] sm:$0xff]
  %v6181 = vld [vmem:[%s2239 + $0x348] sm:$0xff]
  %v6182 = vld [vmem:[%s2239 + $0x350] sm:$0xff]
  %v6183 = vld [vmem:[%s2239 + $0x368] sm:$0xff]
  %v6184 = vld [vmem:[%s2239 + $0x370] sm:$0xff]
  %v6185 = vld [vmem:[%s2239 + $0x388] sm:$0xff]
  %v6186 = vld [vmem:[%s2239 + $0x390] sm:$0xff]
  %v6187 = vld [vmem:[%s2239 + $0x3a8] sm:$0xff]
  %v6188 = vld [vmem:[%s2239 + $0x3b0] sm:$0xff]
  %v6189 = vld [vmem:[%s2239 + $0x3c8] sm:$0xff]
  %v6190 = vld [vmem:[%s2239 + $0x3d0] sm:$0xff]
  %v6191 = vld [vmem:[%s2239 + $0x3e8] sm:$0xff]
  %v6192 = vld [vmem:[%s2239 + $0x3f0] sm:$0xff]
  %v6193 = vld [vmem:[%s2239 + $0x408] sm:$0xff]
  %v6194 = vld [vmem:[%s2239 + $0x410] sm:$0xff]
  %v6195 = vld [vmem:[%s2239 + $0x428] sm:$0xff]
  %v6196 = vld [vmem:[%s2239 + $0x430] sm:$0xff]
  %s6197 = scalar_lea.vmem %s2, 896
  %v6198 = vld [vmem:[%s6197] sm:$0xff]
  %v6199 = vld [vmem:[%s6197 + $0x8] sm:$0xff]
  %v6200 = vld [vmem:[%s6197 + $0x10] sm:$0xff]
  %v6201 = vld [vmem:[%s6197 + $0x18] sm:$0xff]
  %v6202 = vld [vmem:[%s6197 + $0x20] sm:$0xff]
  %v6203 = vld [vmem:[%s6197 + $0x28] sm:$0xff]
  %v6204 = vld [vmem:[%s6197 + $0x30] sm:$0xff]
  %v6205 = vld [vmem:[%s6197 + $0x38] sm:$0xff]
  %v6206 = vld [vmem:[%s6197 + $0x40] sm:$0xff]
  %v6207 = vld [vmem:[%s6197 + $0x48] sm:$0xff]
  %v6208 = vld [vmem:[%s6197 + $0x50] sm:$0xff]
  %v6209 = vld [vmem:[%s6197 + $0x58] sm:$0xff]
  %v6210 = vld [vmem:[%s6197 + $0x60] sm:$0xff]
  %v6211 = vld [vmem:[%s6197 + $0x68] sm:$0xff]
  %v6212 = vld [vmem:[%s6197 + $0x70] sm:$0xff]
  %v6213 = vld [vmem:[%s6197 + $0x78] sm:$0xff]
  %6214 = vmatpush.msra.mxu0 %v6213
  %6215 = vmatpush.msra.mxu0 %v6212
  %6216 = vmatpush.msra.mxu0 %v6211
  %6217 = vmatpush.msra.mxu0 %v6210
  %6218 = vmatpush.msra.mxu0 %v6209
  %6219 = vmatpush.msra.mxu0 %v6208
  %6220 = vmatpush.msra.mxu0 %v6207
  %6221 = vmatpush.msra.mxu0 %v6206
  %6222 = vmatpush.msra.mxu0 %v6205
  %6223 = vmatpush.msra.mxu0 %v6204
  %6224 = vmatpush.msra.mxu0 %v6203
  %6225 = vmatpush.msra.mxu0 %v6202
  %6226 = vmatpush.msra.mxu0 %v6201
  %6227 = vmatpush.msra.mxu0 %v6200
  %6228 = vmatpush.msra.mxu0 %v6199
  %6229 = vmatpush.msra.mxu0 %v6198
  %6230 = vmatmul.f32.gmra.mxu0 %v6133
  %v6231 = vpop.f32.mrf.mxu0
  %v6232 = vadd.f32 0.0, %v6231
  %6233 = vmatmul.f32.gmra.mxu0 %v6134
  %v6234 = vpop.f32.mrf.mxu0
  %v6235 = vadd.f32 0.0, %v6234
  %6236 = vmatmul.f32.gmra.mxu0 %v6135
  %v6237 = vpop.f32.mrf.mxu0
  %v6238 = vadd.f32 0.0, %v6237
  %6239 = vmatmul.f32.gmra.mxu0 %v6136
  %v6240 = vpop.f32.mrf.mxu0
  %v6241 = vadd.f32 0.0, %v6240
  %6242 = vmatmul.f32.gmra.mxu0 %v6137
  %v6243 = vpop.f32.mrf.mxu0
  %v6244 = vadd.f32 0.0, %v6243
  %6245 = vmatmul.f32.gmra.mxu0 %v6138
  %v6246 = vpop.f32.mrf.mxu0
  %v6247 = vadd.f32 0.0, %v6246
  %6248 = vmatmul.f32.gmra.mxu0 %v6139
  %v6249 = vpop.f32.mrf.mxu0
  %v6250 = vadd.f32 0.0, %v6249
  %6251 = vmatmul.f32.gmra.mxu0 %v6140
  %v6252 = vpop.f32.mrf.mxu0
  %v6253 = vadd.f32 0.0, %v6252
  %6254 = vmatmul.f32.gmra.mxu0 %v6141
  %v6255 = vpop.f32.mrf.mxu0
  %v6256 = vadd.f32 0.0, %v6255
  %6257 = vmatmul.f32.gmra.mxu0 %v6142
  %v6258 = vpop.f32.mrf.mxu0
  %v6259 = vadd.f32 0.0, %v6258
  %6260 = vmatmul.f32.gmra.mxu0 %v6143
  %v6261 = vpop.f32.mrf.mxu0
  %v6262 = vadd.f32 0.0, %v6261
  %6263 = vmatmul.f32.gmra.mxu0 %v6144
  %v6264 = vpop.f32.mrf.mxu0
  %v6265 = vadd.f32 0.0, %v6264
  %6266 = vmatmul.f32.gmra.mxu0 %v6145
  %v6267 = vpop.f32.mrf.mxu0
  %v6268 = vadd.f32 0.0, %v6267
  %6269 = vmatmul.f32.gmra.mxu0 %v6146
  %v6270 = vpop.f32.mrf.mxu0
  %v6271 = vadd.f32 0.0, %v6270
  %6272 = vmatmul.f32.gmra.mxu0 %v6147
  %v6273 = vpop.f32.mrf.mxu0
  %v6274 = vadd.f32 0.0, %v6273
  %6275 = vmatmul.f32.gmra.mxu0 %v6148
  %v6276 = vpop.f32.mrf.mxu0
  %v6277 = vadd.f32 0.0, %v6276
  %6278 = vmatmul.f32.gmra.mxu0 %v6149
  %v6279 = vpop.f32.mrf.mxu0
  %v6280 = vadd.f32 0.0, %v6279
  %6281 = vmatmul.f32.gmra.mxu0 %v6150
  %v6282 = vpop.f32.mrf.mxu0
  %v6283 = vadd.f32 0.0, %v6282
  %6284 = vmatmul.f32.gmra.mxu0 %v6151
  %v6285 = vpop.f32.mrf.mxu0
  %v6286 = vadd.f32 0.0, %v6285
  %6287 = vmatmul.f32.gmra.mxu0 %v6152
  %v6288 = vpop.f32.mrf.mxu0
  %v6289 = vadd.f32 0.0, %v6288
  %6290 = vmatmul.f32.gmra.mxu0 %v6153
  %v6291 = vpop.f32.mrf.mxu0
  %v6292 = vadd.f32 0.0, %v6291
  %6293 = vmatmul.f32.gmra.mxu0 %v6154
  %v6294 = vpop.f32.mrf.mxu0
  %v6295 = vadd.f32 0.0, %v6294
  %6296 = vmatmul.f32.gmra.mxu0 %v6155
  %v6297 = vpop.f32.mrf.mxu0
  %v6298 = vadd.f32 0.0, %v6297
  %6299 = vmatmul.f32.gmra.mxu0 %v6156
  %v6300 = vpop.f32.mrf.mxu0
  %v6301 = vadd.f32 0.0, %v6300
  %6302 = vmatmul.f32.gmra.mxu0 %v6157
  %v6303 = vpop.f32.mrf.mxu0
  %v6304 = vadd.f32 0.0, %v6303
  %6305 = vmatmul.f32.gmra.mxu0 %v6158
  %v6306 = vpop.f32.mrf.mxu0
  %v6307 = vadd.f32 0.0, %v6306
  %6308 = vmatmul.f32.gmra.mxu0 %v6159
  %v6309 = vpop.f32.mrf.mxu0
  %v6310 = vadd.f32 0.0, %v6309
  %6311 = vmatmul.f32.gmra.mxu0 %v6160
  %v6312 = vpop.f32.mrf.mxu0
  %v6313 = vadd.f32 0.0, %v6312
  %6314 = vmatmul.f32.gmra.mxu0 %v6161
  %v6315 = vpop.f32.mrf.mxu0
  %v6316 = vadd.f32 0.0, %v6315
  %6317 = vmatmul.f32.gmra.mxu0 %v6162
  %v6318 = vpop.f32.mrf.mxu0
  %v6319 = vadd.f32 0.0, %v6318
  %6320 = vmatmul.f32.gmra.mxu0 %v6163
  %v6321 = vpop.f32.mrf.mxu0
  %v6322 = vadd.f32 0.0, %v6321
  %6323 = vmatmul.f32.gmra.mxu0 %v6164
  %v6324 = vpop.f32.mrf.mxu0
  %v6325 = vadd.f32 0.0, %v6324
  %6326 = vmatmul.f32.gmra.mxu0 %v6165
  %v6327 = vpop.f32.mrf.mxu0
  %v6328 = vadd.f32 0.0, %v6327
  %6329 = vmatmul.f32.gmra.mxu0 %v6166
  %v6330 = vpop.f32.mrf.mxu0
  %v6331 = vadd.f32 0.0, %v6330
  %6332 = vmatmul.f32.gmra.mxu0 %v6167
  %v6333 = vpop.f32.mrf.mxu0
  %v6334 = vadd.f32 0.0, %v6333
  %6335 = vmatmul.f32.gmra.mxu0 %v6168
  %v6336 = vpop.f32.mrf.mxu0
  %v6337 = vadd.f32 0.0, %v6336
  %6338 = vmatmul.f32.gmra.mxu0 %v6169
  %v6339 = vpop.f32.mrf.mxu0
  %v6340 = vadd.f32 0.0, %v6339
  %6341 = vmatmul.f32.gmra.mxu0 %v6170
  %v6342 = vpop.f32.mrf.mxu0
  %v6343 = vadd.f32 0.0, %v6342
  %6344 = vmatmul.f32.gmra.mxu0 %v6171
  %v6345 = vpop.f32.mrf.mxu0
  %v6346 = vadd.f32 0.0, %v6345
  %6347 = vmatmul.f32.gmra.mxu0 %v6172
  %v6348 = vpop.f32.mrf.mxu0
  %v6349 = vadd.f32 0.0, %v6348
  %6350 = vmatmul.f32.gmra.mxu0 %v6173
  %v6351 = vpop.f32.mrf.mxu0
  %v6352 = vadd.f32 0.0, %v6351
  %6353 = vmatmul.f32.gmra.mxu0 %v6174
  %v6354 = vpop.f32.mrf.mxu0
  %v6355 = vadd.f32 0.0, %v6354
  %6356 = vmatmul.f32.gmra.mxu0 %v6175
  %v6357 = vpop.f32.mrf.mxu0
  %v6358 = vadd.f32 0.0, %v6357
  %6359 = vmatmul.f32.gmra.mxu0 %v6176
  %v6360 = vpop.f32.mrf.mxu0
  %v6361 = vadd.f32 0.0, %v6360
  %6362 = vmatmul.f32.gmra.mxu0 %v6177
  %v6363 = vpop.f32.mrf.mxu0
  %v6364 = vadd.f32 0.0, %v6363
  %6365 = vmatmul.f32.gmra.mxu0 %v6178
  %v6366 = vpop.f32.mrf.mxu0
  %v6367 = vadd.f32 0.0, %v6366
  %6368 = vmatmul.f32.gmra.mxu0 %v6179
  %v6369 = vpop.f32.mrf.mxu0
  %v6370 = vadd.f32 0.0, %v6369
  %6371 = vmatmul.f32.gmra.mxu0 %v6180
  %v6372 = vpop.f32.mrf.mxu0
  %v6373 = vadd.f32 0.0, %v6372
  %6374 = vmatmul.f32.gmra.mxu0 %v6181
  %v6375 = vpop.f32.mrf.mxu0
  %v6376 = vadd.f32 0.0, %v6375
  %6377 = vmatmul.f32.gmra.mxu0 %v6182
  %v6378 = vpop.f32.mrf.mxu0
  %v6379 = vadd.f32 0.0, %v6378
  %6380 = vmatmul.f32.gmra.mxu0 %v6183
  %v6381 = vpop.f32.mrf.mxu0
  %v6382 = vadd.f32 0.0, %v6381
  %6383 = vmatmul.f32.gmra.mxu0 %v6184
  %v6384 = vpop.f32.mrf.mxu0
  %v6385 = vadd.f32 0.0, %v6384
  %6386 = vmatmul.f32.gmra.mxu0 %v6185
  %v6387 = vpop.f32.mrf.mxu0
  %v6388 = vadd.f32 0.0, %v6387
  %6389 = vmatmul.f32.gmra.mxu0 %v6186
  %v6390 = vpop.f32.mrf.mxu0
  %v6391 = vadd.f32 0.0, %v6390
  %6392 = vmatmul.f32.gmra.mxu0 %v6187
  %v6393 = vpop.f32.mrf.mxu0
  %v6394 = vadd.f32 0.0, %v6393
  %6395 = vmatmul.f32.gmra.mxu0 %v6188
  %v6396 = vpop.f32.mrf.mxu0
  %v6397 = vadd.f32 0.0, %v6396
  %6398 = vmatmul.f32.gmra.mxu0 %v6189
  %v6399 = vpop.f32.mrf.mxu0
  %v6400 = vadd.f32 0.0, %v6399
  %6401 = vmatmul.f32.gmra.mxu0 %v6190
  %v6402 = vpop.f32.mrf.mxu0
  %v6403 = vadd.f32 0.0, %v6402
  %6404 = vmatmul.f32.gmra.mxu0 %v6191
  %v6405 = vpop.f32.mrf.mxu0
  %v6406 = vadd.f32 0.0, %v6405
  %6407 = vmatmul.f32.gmra.mxu0 %v6192
  %v6408 = vpop.f32.mrf.mxu0
  %v6409 = vadd.f32 0.0, %v6408
  %6410 = vmatmul.f32.gmra.mxu0 %v6193
  %v6411 = vpop.f32.mrf.mxu0
  %v6412 = vadd.f32 0.0, %v6411
  %6413 = vmatmul.f32.gmra.mxu0 %v6194
  %v6414 = vpop.f32.mrf.mxu0
  %v6415 = vadd.f32 0.0, %v6414
  %6416 = vmatmul.f32.gmra.mxu0 %v6195
  %v6417 = vpop.f32.mrf.mxu0
  %v6418 = vadd.f32 0.0, %v6417
  %6419 = vmatmul.f32.gmra.mxu0 %v6196
  %v6420 = vpop.f32.mrf.mxu0
  %v6421 = vadd.f32 0.0, %v6420
  %6422 = vdwg.mxu0
  %v6423 = vadd.f32 %v6069, %v6232
  %v6424 = vadd.f32 %v6070, %v6235
  %v6425 = vadd.f32 %v6071, %v6238
  %v6426 = vadd.f32 %v6072, %v6241
  %v6427 = vadd.f32 %v6073, %v6244
  %v6428 = vadd.f32 %v6074, %v6247
  %v6429 = vadd.f32 %v6075, %v6250
  %v6430 = vadd.f32 %v6076, %v6253
  %v6431 = vadd.f32 %v6077, %v6256
  %v6432 = vadd.f32 %v6078, %v6259
  %v6433 = vadd.f32 %v6079, %v6262
  %v6434 = vadd.f32 %v6080, %v6265
  %v6435 = vadd.f32 %v6081, %v6268
  %v6436 = vadd.f32 %v6082, %v6271
  %v6437 = vadd.f32 %v6083, %v6274
  %v6438 = vadd.f32 %v6084, %v6277
  %v6439 = vadd.f32 %v6085, %v6280
  %v6440 = vadd.f32 %v6086, %v6283
  %v6441 = vadd.f32 %v6087, %v6286
  %v6442 = vadd.f32 %v6088, %v6289
  %v6443 = vadd.f32 %v6089, %v6292
  %v6444 = vadd.f32 %v6090, %v6295
  %v6445 = vadd.f32 %v6091, %v6298
  %v6446 = vadd.f32 %v6092, %v6301
  %v6447 = vadd.f32 %v6093, %v6304
  %v6448 = vadd.f32 %v6094, %v6307
  %v6449 = vadd.f32 %v6095, %v6310
  %v6450 = vadd.f32 %v6096, %v6313
  %v6451 = vadd.f32 %v6097, %v6316
  %v6452 = vadd.f32 %v6098, %v6319
  %v6453 = vadd.f32 %v6099, %v6322
  %v6454 = vadd.f32 %v6100, %v6325
  %v6455 = vadd.f32 %v6101, %v6328
  %v6456 = vadd.f32 %v6102, %v6331
  %v6457 = vadd.f32 %v6103, %v6334
  %v6458 = vadd.f32 %v6104, %v6337
  %v6459 = vadd.f32 %v6105, %v6340
  %v6460 = vadd.f32 %v6106, %v6343
  %v6461 = vadd.f32 %v6107, %v6346
  %v6462 = vadd.f32 %v6108, %v6349
  %v6463 = vadd.f32 %v6109, %v6352
  %v6464 = vadd.f32 %v6110, %v6355
  %v6465 = vadd.f32 %v6111, %v6358
  %v6466 = vadd.f32 %v6112, %v6361
  %v6467 = vadd.f32 %v6113, %v6364
  %v6468 = vadd.f32 %v6114, %v6367
  %v6469 = vadd.f32 %v6115, %v6370
  %v6470 = vadd.f32 %v6116, %v6373
  %v6471 = vadd.f32 %v6117, %v6376
  %v6472 = vadd.f32 %v6118, %v6379
  %v6473 = vadd.f32 %v6119, %v6382
  %v6474 = vadd.f32 %v6120, %v6385
  %v6475 = vadd.f32 %v6121, %v6388
  %v6476 = vadd.f32 %v6122, %v6391
  %v6477 = vadd.f32 %v6123, %v6394
  %v6478 = vadd.f32 %v6124, %v6397
  %v6479 = vadd.f32 %v6125, %v6400
  %v6480 = vadd.f32 %v6126, %v6403
  %v6481 = vadd.f32 %v6127, %v6406
  %v6482 = vadd.f32 %v6128, %v6409
  %v6483 = vadd.f32 %v6129, %v6412
  %v6484 = vadd.f32 %v6130, %v6415
  %v6485 = vadd.f32 %v6131, %v6418
  %v6486 = vadd.f32 %v6132, %v6421
  %v6487 = vld [vmem:[%s2239 + $0x9] sm:$0xff]
  %v6488 = vld [vmem:[%s2239 + $0x11] sm:$0xff]
  %v6489 = vld [vmem:[%s2239 + $0x29] sm:$0xff]
  %v6490 = vld [vmem:[%s2239 + $0x31] sm:$0xff]
  %v6491 = vld [vmem:[%s2239 + $0x49] sm:$0xff]
  %v6492 = vld [vmem:[%s2239 + $0x51] sm:$0xff]
  %v6493 = vld [vmem:[%s2239 + $0x69] sm:$0xff]
  %v6494 = vld [vmem:[%s2239 + $0x71] sm:$0xff]
  %v6495 = vld [vmem:[%s2239 + $0x89] sm:$0xff]
  %v6496 = vld [vmem:[%s2239 + $0x91] sm:$0xff]
  %v6497 = vld [vmem:[%s2239 + $0xa9] sm:$0xff]
  %v6498 = vld [vmem:[%s2239 + $0xb1] sm:$0xff]
  %v6499 = vld [vmem:[%s2239 + $0xc9] sm:$0xff]
  %v6500 = vld [vmem:[%s2239 + $0xd1] sm:$0xff]
  %v6501 = vld [vmem:[%s2239 + $0xe9] sm:$0xff]
  %v6502 = vld [vmem:[%s2239 + $0xf1] sm:$0xff]
  %v6503 = vld [vmem:[%s2239 + $0x109] sm:$0xff]
  %v6504 = vld [vmem:[%s2239 + $0x111] sm:$0xff]
  %v6505 = vld [vmem:[%s2239 + $0x129] sm:$0xff]
  %v6506 = vld [vmem:[%s2239 + $0x131] sm:$0xff]
  %v6507 = vld [vmem:[%s2239 + $0x149] sm:$0xff]
  %v6508 = vld [vmem:[%s2239 + $0x151] sm:$0xff]
  %v6509 = vld [vmem:[%s2239 + $0x169] sm:$0xff]
  %v6510 = vld [vmem:[%s2239 + $0x171] sm:$0xff]
  %v6511 = vld [vmem:[%s2239 + $0x189] sm:$0xff]
  %v6512 = vld [vmem:[%s2239 + $0x191] sm:$0xff]
  %v6513 = vld [vmem:[%s2239 + $0x1a9] sm:$0xff]
  %v6514 = vld [vmem:[%s2239 + $0x1b1] sm:$0xff]
  %v6515 = vld [vmem:[%s2239 + $0x1c9] sm:$0xff]
  %v6516 = vld [vmem:[%s2239 + $0x1d1] sm:$0xff]
  %v6517 = vld [vmem:[%s2239 + $0x1e9] sm:$0xff]
  %v6518 = vld [vmem:[%s2239 + $0x1f1] sm:$0xff]
  %v6519 = vld [vmem:[%s2239 + $0x249] sm:$0xff]
  %v6520 = vld [vmem:[%s2239 + $0x251] sm:$0xff]
  %v6521 = vld [vmem:[%s2239 + $0x269] sm:$0xff]
  %v6522 = vld [vmem:[%s2239 + $0x271] sm:$0xff]
  %v6523 = vld [vmem:[%s2239 + $0x289] sm:$0xff]
  %v6524 = vld [vmem:[%s2239 + $0x291] sm:$0xff]
  %v6525 = vld [vmem:[%s2239 + $0x2a9] sm:$0xff]
  %v6526 = vld [vmem:[%s2239 + $0x2b1] sm:$0xff]
  %v6527 = vld [vmem:[%s2239 + $0x2c9] sm:$0xff]
  %v6528 = vld [vmem:[%s2239 + $0x2d1] sm:$0xff]
  %v6529 = vld [vmem:[%s2239 + $0x2e9] sm:$0xff]
  %v6530 = vld [vmem:[%s2239 + $0x2f1] sm:$0xff]
  %v6531 = vld [vmem:[%s2239 + $0x309] sm:$0xff]
  %v6532 = vld [vmem:[%s2239 + $0x311] sm:$0xff]
  %v6533 = vld [vmem:[%s2239 + $0x329] sm:$0xff]
  %v6534 = vld [vmem:[%s2239 + $0x331] sm:$0xff]
  %v6535 = vld [vmem:[%s2239 + $0x349] sm:$0xff]
  %v6536 = vld [vmem:[%s2239 + $0x351] sm:$0xff]
  %v6537 = vld [vmem:[%s2239 + $0x369] sm:$0xff]
  %v6538 = vld [vmem:[%s2239 + $0x371] sm:$0xff]
  %v6539 = vld [vmem:[%s2239 + $0x389] sm:$0xff]
  %v6540 = vld [vmem:[%s2239 + $0x391] sm:$0xff]
  %v6541 = vld [vmem:[%s2239 + $0x3a9] sm:$0xff]
  %v6542 = vld [vmem:[%s2239 + $0x3b1] sm:$0xff]
  %v6543 = vld [vmem:[%s2239 + $0x3c9] sm:$0xff]
  %v6544 = vld [vmem:[%s2239 + $0x3d1] sm:$0xff]
  %v6545 = vld [vmem:[%s2239 + $0x3e9] sm:$0xff]
  %v6546 = vld [vmem:[%s2239 + $0x3f1] sm:$0xff]
  %v6547 = vld [vmem:[%s2239 + $0x409] sm:$0xff]
  %v6548 = vld [vmem:[%s2239 + $0x411] sm:$0xff]
  %v6549 = vld [vmem:[%s2239 + $0x429] sm:$0xff]
  %v6550 = vld [vmem:[%s2239 + $0x431] sm:$0xff]
  %s6551 = scalar_lea.vmem %s2, 1024
  %v6552 = vld [vmem:[%s6551] sm:$0xff]
  %v6553 = vld [vmem:[%s6551 + $0x8] sm:$0xff]
  %v6554 = vld [vmem:[%s6551 + $0x10] sm:$0xff]
  %v6555 = vld [vmem:[%s6551 + $0x18] sm:$0xff]
  %v6556 = vld [vmem:[%s6551 + $0x20] sm:$0xff]
  %v6557 = vld [vmem:[%s6551 + $0x28] sm:$0xff]
  %v6558 = vld [vmem:[%s6551 + $0x30] sm:$0xff]
  %v6559 = vld [vmem:[%s6551 + $0x38] sm:$0xff]
  %v6560 = vld [vmem:[%s6551 + $0x40] sm:$0xff]
  %v6561 = vld [vmem:[%s6551 + $0x48] sm:$0xff]
  %v6562 = vld [vmem:[%s6551 + $0x50] sm:$0xff]
  %v6563 = vld [vmem:[%s6551 + $0x58] sm:$0xff]
  %v6564 = vld [vmem:[%s6551 + $0x60] sm:$0xff]
  %v6565 = vld [vmem:[%s6551 + $0x68] sm:$0xff]
  %v6566 = vld [vmem:[%s6551 + $0x70] sm:$0xff]
  %v6567 = vld [vmem:[%s6551 + $0x78] sm:$0xff]
  %6568 = vmatpush.msra.mxu0 %v6567
  %6569 = vmatpush.msra.mxu0 %v6566
  %6570 = vmatpush.msra.mxu0 %v6565
  %6571 = vmatpush.msra.mxu0 %v6564
  %6572 = vmatpush.msra.mxu0 %v6563
  %6573 = vmatpush.msra.mxu0 %v6562
  %6574 = vmatpush.msra.mxu0 %v6561
  %6575 = vmatpush.msra.mxu0 %v6560
  %6576 = vmatpush.msra.mxu0 %v6559
  %6577 = vmatpush.msra.mxu0 %v6558
  %6578 = vmatpush.msra.mxu0 %v6557
  %6579 = vmatpush.msra.mxu0 %v6556
  %6580 = vmatpush.msra.mxu0 %v6555
  %6581 = vmatpush.msra.mxu0 %v6554
  %6582 = vmatpush.msra.mxu0 %v6553
  %6583 = vmatpush.msra.mxu0 %v6552
  %6584 = vmatmul.f32.gmra.mxu0 %v6487
  %v6585 = vpop.f32.mrf.mxu0
  %v6586 = vadd.f32 0.0, %v6585
  %6587 = vmatmul.f32.gmra.mxu0 %v6488
  %v6588 = vpop.f32.mrf.mxu0
  %v6589 = vadd.f32 0.0, %v6588
  %6590 = vmatmul.f32.gmra.mxu0 %v6489
  %v6591 = vpop.f32.mrf.mxu0
  %v6592 = vadd.f32 0.0, %v6591
  %6593 = vmatmul.f32.gmra.mxu0 %v6490
  %v6594 = vpop.f32.mrf.mxu0
  %v6595 = vadd.f32 0.0, %v6594
  %6596 = vmatmul.f32.gmra.mxu0 %v6491
  %v6597 = vpop.f32.mrf.mxu0
  %v6598 = vadd.f32 0.0, %v6597
  %6599 = vmatmul.f32.gmra.mxu0 %v6492
  %v6600 = vpop.f32.mrf.mxu0
  %v6601 = vadd.f32 0.0, %v6600
  %6602 = vmatmul.f32.gmra.mxu0 %v6493
  %v6603 = vpop.f32.mrf.mxu0
  %v6604 = vadd.f32 0.0, %v6603
  %6605 = vmatmul.f32.gmra.mxu0 %v6494
  %v6606 = vpop.f32.mrf.mxu0
  %v6607 = vadd.f32 0.0, %v6606
  %6608 = vmatmul.f32.gmra.mxu0 %v6495
  %v6609 = vpop.f32.mrf.mxu0
  %v6610 = vadd.f32 0.0, %v6609
  %6611 = vmatmul.f32.gmra.mxu0 %v6496
  %v6612 = vpop.f32.mrf.mxu0
  %v6613 = vadd.f32 0.0, %v6612
  %6614 = vmatmul.f32.gmra.mxu0 %v6497
  %v6615 = vpop.f32.mrf.mxu0
  %v6616 = vadd.f32 0.0, %v6615
  %6617 = vmatmul.f32.gmra.mxu0 %v6498
  %v6618 = vpop.f32.mrf.mxu0
  %v6619 = vadd.f32 0.0, %v6618
  %6620 = vmatmul.f32.gmra.mxu0 %v6499
  %v6621 = vpop.f32.mrf.mxu0
  %v6622 = vadd.f32 0.0, %v6621
  %6623 = vmatmul.f32.gmra.mxu0 %v6500
  %v6624 = vpop.f32.mrf.mxu0
  %v6625 = vadd.f32 0.0, %v6624
  %6626 = vmatmul.f32.gmra.mxu0 %v6501
  %v6627 = vpop.f32.mrf.mxu0
  %v6628 = vadd.f32 0.0, %v6627
  %6629 = vmatmul.f32.gmra.mxu0 %v6502
  %v6630 = vpop.f32.mrf.mxu0
  %v6631 = vadd.f32 0.0, %v6630
  %6632 = vmatmul.f32.gmra.mxu0 %v6503
  %v6633 = vpop.f32.mrf.mxu0
  %v6634 = vadd.f32 0.0, %v6633
  %6635 = vmatmul.f32.gmra.mxu0 %v6504
  %v6636 = vpop.f32.mrf.mxu0
  %v6637 = vadd.f32 0.0, %v6636
  %6638 = vmatmul.f32.gmra.mxu0 %v6505
  %v6639 = vpop.f32.mrf.mxu0
  %v6640 = vadd.f32 0.0, %v6639
  %6641 = vmatmul.f32.gmra.mxu0 %v6506
  %v6642 = vpop.f32.mrf.mxu0
  %v6643 = vadd.f32 0.0, %v6642
  %6644 = vmatmul.f32.gmra.mxu0 %v6507
  %v6645 = vpop.f32.mrf.mxu0
  %v6646 = vadd.f32 0.0, %v6645
  %6647 = vmatmul.f32.gmra.mxu0 %v6508
  %v6648 = vpop.f32.mrf.mxu0
  %v6649 = vadd.f32 0.0, %v6648
  %6650 = vmatmul.f32.gmra.mxu0 %v6509
  %v6651 = vpop.f32.mrf.mxu0
  %v6652 = vadd.f32 0.0, %v6651
  %6653 = vmatmul.f32.gmra.mxu0 %v6510
  %v6654 = vpop.f32.mrf.mxu0
  %v6655 = vadd.f32 0.0, %v6654
  %6656 = vmatmul.f32.gmra.mxu0 %v6511
  %v6657 = vpop.f32.mrf.mxu0
  %v6658 = vadd.f32 0.0, %v6657
  %6659 = vmatmul.f32.gmra.mxu0 %v6512
  %v6660 = vpop.f32.mrf.mxu0
  %v6661 = vadd.f32 0.0, %v6660
  %6662 = vmatmul.f32.gmra.mxu0 %v6513
  %v6663 = vpop.f32.mrf.mxu0
  %v6664 = vadd.f32 0.0, %v6663
  %6665 = vmatmul.f32.gmra.mxu0 %v6514
  %v6666 = vpop.f32.mrf.mxu0
  %v6667 = vadd.f32 0.0, %v6666
  %6668 = vmatmul.f32.gmra.mxu0 %v6515
  %v6669 = vpop.f32.mrf.mxu0
  %v6670 = vadd.f32 0.0, %v6669
  %6671 = vmatmul.f32.gmra.mxu0 %v6516
  %v6672 = vpop.f32.mrf.mxu0
  %v6673 = vadd.f32 0.0, %v6672
  %6674 = vmatmul.f32.gmra.mxu0 %v6517
  %v6675 = vpop.f32.mrf.mxu0
  %v6676 = vadd.f32 0.0, %v6675
  %6677 = vmatmul.f32.gmra.mxu0 %v6518
  %v6678 = vpop.f32.mrf.mxu0
  %v6679 = vadd.f32 0.0, %v6678
  %6680 = vmatmul.f32.gmra.mxu0 %v6519
  %v6681 = vpop.f32.mrf.mxu0
  %v6682 = vadd.f32 0.0, %v6681
  %6683 = vmatmul.f32.gmra.mxu0 %v6520
  %v6684 = vpop.f32.mrf.mxu0
  %v6685 = vadd.f32 0.0, %v6684
  %6686 = vmatmul.f32.gmra.mxu0 %v6521
  %v6687 = vpop.f32.mrf.mxu0
  %v6688 = vadd.f32 0.0, %v6687
  %6689 = vmatmul.f32.gmra.mxu0 %v6522
  %v6690 = vpop.f32.mrf.mxu0
  %v6691 = vadd.f32 0.0, %v6690
  %6692 = vmatmul.f32.gmra.mxu0 %v6523
  %v6693 = vpop.f32.mrf.mxu0
  %v6694 = vadd.f32 0.0, %v6693
  %6695 = vmatmul.f32.gmra.mxu0 %v6524
  %v6696 = vpop.f32.mrf.mxu0
  %v6697 = vadd.f32 0.0, %v6696
  %6698 = vmatmul.f32.gmra.mxu0 %v6525
  %v6699 = vpop.f32.mrf.mxu0
  %v6700 = vadd.f32 0.0, %v6699
  %6701 = vmatmul.f32.gmra.mxu0 %v6526
  %v6702 = vpop.f32.mrf.mxu0
  %v6703 = vadd.f32 0.0, %v6702
  %6704 = vmatmul.f32.gmra.mxu0 %v6527
  %v6705 = vpop.f32.mrf.mxu0
  %v6706 = vadd.f32 0.0, %v6705
  %6707 = vmatmul.f32.gmra.mxu0 %v6528
  %v6708 = vpop.f32.mrf.mxu0
  %v6709 = vadd.f32 0.0, %v6708
  %6710 = vmatmul.f32.gmra.mxu0 %v6529
  %v6711 = vpop.f32.mrf.mxu0
  %v6712 = vadd.f32 0.0, %v6711
  %6713 = vmatmul.f32.gmra.mxu0 %v6530
  %v6714 = vpop.f32.mrf.mxu0
  %v6715 = vadd.f32 0.0, %v6714
  %6716 = vmatmul.f32.gmra.mxu0 %v6531
  %v6717 = vpop.f32.mrf.mxu0
  %v6718 = vadd.f32 0.0, %v6717
  %6719 = vmatmul.f32.gmra.mxu0 %v6532
  %v6720 = vpop.f32.mrf.mxu0
  %v6721 = vadd.f32 0.0, %v6720
  %6722 = vmatmul.f32.gmra.mxu0 %v6533
  %v6723 = vpop.f32.mrf.mxu0
  %v6724 = vadd.f32 0.0, %v6723
  %6725 = vmatmul.f32.gmra.mxu0 %v6534
  %v6726 = vpop.f32.mrf.mxu0
  %v6727 = vadd.f32 0.0, %v6726
  %6728 = vmatmul.f32.gmra.mxu0 %v6535
  %v6729 = vpop.f32.mrf.mxu0
  %v6730 = vadd.f32 0.0, %v6729
  %6731 = vmatmul.f32.gmra.mxu0 %v6536
  %v6732 = vpop.f32.mrf.mxu0
  %v6733 = vadd.f32 0.0, %v6732
  %6734 = vmatmul.f32.gmra.mxu0 %v6537
  %v6735 = vpop.f32.mrf.mxu0
  %v6736 = vadd.f32 0.0, %v6735
  %6737 = vmatmul.f32.gmra.mxu0 %v6538
  %v6738 = vpop.f32.mrf.mxu0
  %v6739 = vadd.f32 0.0, %v6738
  %6740 = vmatmul.f32.gmra.mxu0 %v6539
  %v6741 = vpop.f32.mrf.mxu0
  %v6742 = vadd.f32 0.0, %v6741
  %6743 = vmatmul.f32.gmra.mxu0 %v6540
  %v6744 = vpop.f32.mrf.mxu0
  %v6745 = vadd.f32 0.0, %v6744
  %6746 = vmatmul.f32.gmra.mxu0 %v6541
  %v6747 = vpop.f32.mrf.mxu0
  %v6748 = vadd.f32 0.0, %v6747
  %6749 = vmatmul.f32.gmra.mxu0 %v6542
  %v6750 = vpop.f32.mrf.mxu0
  %v6751 = vadd.f32 0.0, %v6750
  %6752 = vmatmul.f32.gmra.mxu0 %v6543
  %v6753 = vpop.f32.mrf.mxu0
  %v6754 = vadd.f32 0.0, %v6753
  %6755 = vmatmul.f32.gmra.mxu0 %v6544
  %v6756 = vpop.f32.mrf.mxu0
  %v6757 = vadd.f32 0.0, %v6756
  %6758 = vmatmul.f32.gmra.mxu0 %v6545
  %v6759 = vpop.f32.mrf.mxu0
  %v6760 = vadd.f32 0.0, %v6759
  %6761 = vmatmul.f32.gmra.mxu0 %v6546
  %v6762 = vpop.f32.mrf.mxu0
  %v6763 = vadd.f32 0.0, %v6762
  %6764 = vmatmul.f32.gmra.mxu0 %v6547
  %v6765 = vpop.f32.mrf.mxu0
  %v6766 = vadd.f32 0.0, %v6765
  %6767 = vmatmul.f32.gmra.mxu0 %v6548
  %v6768 = vpop.f32.mrf.mxu0
  %v6769 = vadd.f32 0.0, %v6768
  %6770 = vmatmul.f32.gmra.mxu0 %v6549
  %v6771 = vpop.f32.mrf.mxu0
  %v6772 = vadd.f32 0.0, %v6771
  %6773 = vmatmul.f32.gmra.mxu0 %v6550
  %v6774 = vpop.f32.mrf.mxu0
  %v6775 = vadd.f32 0.0, %v6774
  %6776 = vdwg.mxu0
  %v6777 = vadd.f32 %v6423, %v6586
  %v6778 = vadd.f32 %v6424, %v6589
  %v6779 = vadd.f32 %v6425, %v6592
  %v6780 = vadd.f32 %v6426, %v6595
  %v6781 = vadd.f32 %v6427, %v6598
  %v6782 = vadd.f32 %v6428, %v6601
  %v6783 = vadd.f32 %v6429, %v6604
  %v6784 = vadd.f32 %v6430, %v6607
  %v6785 = vadd.f32 %v6431, %v6610
  %v6786 = vadd.f32 %v6432, %v6613
  %v6787 = vadd.f32 %v6433, %v6616
  %v6788 = vadd.f32 %v6434, %v6619
  %v6789 = vadd.f32 %v6435, %v6622
  %v6790 = vadd.f32 %v6436, %v6625
  %v6791 = vadd.f32 %v6437, %v6628
  %v6792 = vadd.f32 %v6438, %v6631
  %v6793 = vadd.f32 %v6439, %v6634
  %v6794 = vadd.f32 %v6440, %v6637
  %v6795 = vadd.f32 %v6441, %v6640
  %v6796 = vadd.f32 %v6442, %v6643
  %v6797 = vadd.f32 %v6443, %v6646
  %v6798 = vadd.f32 %v6444, %v6649
  %v6799 = vadd.f32 %v6445, %v6652
  %v6800 = vadd.f32 %v6446, %v6655
  %v6801 = vadd.f32 %v6447, %v6658
  %v6802 = vadd.f32 %v6448, %v6661
  %v6803 = vadd.f32 %v6449, %v6664
  %v6804 = vadd.f32 %v6450, %v6667
  %v6805 = vadd.f32 %v6451, %v6670
  %v6806 = vadd.f32 %v6452, %v6673
  %v6807 = vadd.f32 %v6453, %v6676
  %v6808 = vadd.f32 %v6454, %v6679
  %v6809 = vadd.f32 %v6455, %v6682
  %v6810 = vadd.f32 %v6456, %v6685
  %v6811 = vadd.f32 %v6457, %v6688
  %v6812 = vadd.f32 %v6458, %v6691
  %v6813 = vadd.f32 %v6459, %v6694
  %v6814 = vadd.f32 %v6460, %v6697
  %v6815 = vadd.f32 %v6461, %v6700
  %v6816 = vadd.f32 %v6462, %v6703
  %v6817 = vadd.f32 %v6463, %v6706
  %v6818 = vadd.f32 %v6464, %v6709
  %v6819 = vadd.f32 %v6465, %v6712
  %v6820 = vadd.f32 %v6466, %v6715
  %v6821 = vadd.f32 %v6467, %v6718
  %v6822 = vadd.f32 %v6468, %v6721
  %v6823 = vadd.f32 %v6469, %v6724
  %v6824 = vadd.f32 %v6470, %v6727
  %v6825 = vadd.f32 %v6471, %v6730
  %v6826 = vadd.f32 %v6472, %v6733
  %v6827 = vadd.f32 %v6473, %v6736
  %v6828 = vadd.f32 %v6474, %v6739
  %v6829 = vadd.f32 %v6475, %v6742
  %v6830 = vadd.f32 %v6476, %v6745
  %v6831 = vadd.f32 %v6477, %v6748
  %v6832 = vadd.f32 %v6478, %v6751
  %v6833 = vadd.f32 %v6479, %v6754
  %v6834 = vadd.f32 %v6480, %v6757
  %v6835 = vadd.f32 %v6481, %v6760
  %v6836 = vadd.f32 %v6482, %v6763
  %v6837 = vadd.f32 %v6483, %v6766
  %v6838 = vadd.f32 %v6484, %v6769
  %v6839 = vadd.f32 %v6485, %v6772
  %v6840 = vadd.f32 %v6486, %v6775
  %v6841 = vld [vmem:[%s5] sm:$0x1]
  %v6842 = vld [vmem:[%s6] sm:$0x1]
  %v6843 = vadd.f32 %v6777, %v6778
  %v6844 = vadd.f32 %v6843, %v6779
  %v6845 = vadd.f32 %v6844, %v6780
  %v6846 = vadd.f32 %v6845, %v6781
  %v6847 = vadd.f32 %v6846, %v6782
  %v6848 = vadd.f32 %v6847, %v6783
  %v6849 = vadd.f32 %v6848, %v6784
  %v6850 = vadd.f32 %v6849, %v6785
  %v6851 = vadd.f32 %v6850, %v6786
  %v6852 = vadd.f32 %v6851, %v6787
  %v6853 = vadd.f32 %v6852, %v6788
  %v6854 = vadd.f32 %v6853, %v6789
  %v6855 = vadd.f32 %v6854, %v6790
  %v6856 = vadd.f32 %v6855, %v6791
  %v6857 = vadd.f32 %v6856, %v6792
  %v6858 = vadd.f32 %v6857, %v6793
  %v6859 = vadd.f32 %v6858, %v6794
  %v6860 = vadd.f32 %v6859, %v6795
  %v6861 = vadd.f32 %v6860, %v6796
  %v6862 = vadd.f32 %v6861, %v6797
  %v6863 = vadd.f32 %v6862, %v6798
  %v6864 = vadd.f32 %v6863, %v6799
  %v6865 = vadd.f32 %v6864, %v6800
  %v6866 = vadd.f32 %v6865, %v6801
  %v6867 = vadd.f32 %v6866, %v6802
  %v6868 = vadd.f32 %v6867, %v6803
  %v6869 = vadd.f32 %v6868, %v6804
  %v6870 = vadd.f32 %v6869, %v6805
  %v6871 = vadd.f32 %v6870, %v6806
  %v6872 = vadd.f32 %v6871, %v6807
  %v6873 = vadd.f32 %v6872, %v6808
  %v6874 = vadd.f32 %v6873, %v6809
  %v6875 = vadd.f32 %v6874, %v6810
  %v6876 = vadd.f32 %v6875, %v6811
  %v6877 = vadd.f32 %v6876, %v6812
  %v6878 = vadd.f32 %v6877, %v6813
  %v6879 = vadd.f32 %v6878, %v6814
  %v6880 = vadd.f32 %v6879, %v6815
  %v6881 = vadd.f32 %v6880, %v6816
  %v6882 = vadd.f32 %v6881, %v6817
  %v6883 = vadd.f32 %v6882, %v6818
  %v6884 = vadd.f32 %v6883, %v6819
  %v6885 = vadd.f32 %v6884, %v6820
  %v6886 = vadd.f32 %v6885, %v6821
  %v6887 = vadd.f32 %v6886, %v6822
  %v6888 = vadd.f32 %v6887, %v6823
  %v6889 = vadd.f32 %v6888, %v6824
  %v6890 = vadd.f32 %v6889, %v6825
  %v6891 = vadd.f32 %v6890, %v6826
  %v6892 = vadd.f32 %v6891, %v6827
  %v6893 = vadd.f32 %v6892, %v6828
  %v6894 = vadd.f32 %v6893, %v6829
  %v6895 = vadd.f32 %v6894, %v6830
  %v6896 = vadd.f32 %v6895, %v6831
  %v6897 = vadd.f32 %v6896, %v6832
  %v6898 = vadd.f32 %v6897, %v6833
  %v6899 = vadd.f32 %v6898, %v6834
  %v6900 = vadd.f32 %v6899, %v6835
  %v6901 = vadd.f32 %v6900, %v6836
  %v6902 = vadd.f32 %v6901, %v6837
  %v6903 = vadd.f32 %v6902, %v6838
  %v6904 = vadd.f32 %v6903, %v6839
  %v6905 = vadd.f32 %v6904, %v6840
  %v6906 = vrot.slane %v6905, 4
  %v6907 = vadd.f32 %v6905, %v6906
  %v6908 = vrot.slane %v6907, 2
  %v6909 = vadd.f32 %v6907, %v6908
  %v6910 = vrot.slane %v6909, 1
  %v6911 = vadd.f32 %v6909, %v6910
  %v6912 = vmul.f32 %v6911, 0.001953125
  %v6913 = vmul.f32 %v6777, %v6777
  %v6914 = vmul.f32 %v6778, %v6778
  %v6915 = vmul.f32 %v6779, %v6779
  %v6916 = vmul.f32 %v6780, %v6780
  %v6917 = vmul.f32 %v6781, %v6781
  %v6918 = vmul.f32 %v6782, %v6782
  %v6919 = vmul.f32 %v6783, %v6783
  %v6920 = vmul.f32 %v6784, %v6784
  %v6921 = vmul.f32 %v6785, %v6785
  %v6922 = vmul.f32 %v6786, %v6786
  %v6923 = vmul.f32 %v6787, %v6787
  %v6924 = vmul.f32 %v6788, %v6788
  %v6925 = vmul.f32 %v6789, %v6789
  %v6926 = vmul.f32 %v6790, %v6790
  %v6927 = vmul.f32 %v6791, %v6791
  %v6928 = vmul.f32 %v6792, %v6792
  %v6929 = vmul.f32 %v6793, %v6793
  %v6930 = vmul.f32 %v6794, %v6794
  %v6931 = vmul.f32 %v6795, %v6795
  %v6932 = vmul.f32 %v6796, %v6796
  %v6933 = vmul.f32 %v6797, %v6797
  %v6934 = vmul.f32 %v6798, %v6798
  %v6935 = vmul.f32 %v6799, %v6799
  %v6936 = vmul.f32 %v6800, %v6800
  %v6937 = vmul.f32 %v6801, %v6801
  %v6938 = vmul.f32 %v6802, %v6802
  %v6939 = vmul.f32 %v6803, %v6803
  %v6940 = vmul.f32 %v6804, %v6804
  %v6941 = vmul.f32 %v6805, %v6805
  %v6942 = vmul.f32 %v6806, %v6806
  %v6943 = vmul.f32 %v6807, %v6807
  %v6944 = vmul.f32 %v6808, %v6808
  %v6945 = vmul.f32 %v6809, %v6809
  %v6946 = vmul.f32 %v6810, %v6810
  %v6947 = vmul.f32 %v6811, %v6811
  %v6948 = vmul.f32 %v6812, %v6812
  %v6949 = vmul.f32 %v6813, %v6813
  %v6950 = vmul.f32 %v6814, %v6814
  %v6951 = vmul.f32 %v6815, %v6815
  %v6952 = vmul.f32 %v6816, %v6816
  %v6953 = vmul.f32 %v6817, %v6817
  %v6954 = vmul.f32 %v6818, %v6818
  %v6955 = vmul.f32 %v6819, %v6819
  %v6956 = vmul.f32 %v6820, %v6820
  %v6957 = vmul.f32 %v6821, %v6821
  %v6958 = vmul.f32 %v6822, %v6822
  %v6959 = vmul.f32 %v6823, %v6823
  %v6960 = vmul.f32 %v6824, %v6824
  %v6961 = vmul.f32 %v6825, %v6825
  %v6962 = vmul.f32 %v6826, %v6826
  %v6963 = vmul.f32 %v6827, %v6827
  %v6964 = vmul.f32 %v6828, %v6828
  %v6965 = vmul.f32 %v6829, %v6829
  %v6966 = vmul.f32 %v6830, %v6830
  %v6967 = vmul.f32 %v6831, %v6831
  %v6968 = vmul.f32 %v6832, %v6832
  %v6969 = vmul.f32 %v6833, %v6833
  %v6970 = vmul.f32 %v6834, %v6834
  %v6971 = vmul.f32 %v6835, %v6835
  %v6972 = vmul.f32 %v6836, %v6836
  %v6973 = vmul.f32 %v6837, %v6837
  %v6974 = vmul.f32 %v6838, %v6838
  %v6975 = vmul.f32 %v6839, %v6839
  %v6976 = vmul.f32 %v6840, %v6840
  %v6977 = vadd.f32 %v6913, %v6914
  %v6978 = vadd.f32 %v6977, %v6915
  %v6979 = vadd.f32 %v6978, %v6916
  %v6980 = vadd.f32 %v6979, %v6917
  %v6981 = vadd.f32 %v6980, %v6918
  %v6982 = vadd.f32 %v6981, %v6919
  %v6983 = vadd.f32 %v6982, %v6920
  %v6984 = vadd.f32 %v6983, %v6921
  %v6985 = vadd.f32 %v6984, %v6922
  %v6986 = vadd.f32 %v6985, %v6923
  %v6987 = vadd.f32 %v6986, %v6924
  %v6988 = vadd.f32 %v6987, %v6925
  %v6989 = vadd.f32 %v6988, %v6926
  %v6990 = vadd.f32 %v6989, %v6927
  %v6991 = vadd.f32 %v6990, %v6928
  %v6992 = vadd.f32 %v6991, %v6929
  %v6993 = vadd.f32 %v6992, %v6930
  %v6994 = vadd.f32 %v6993, %v6931
  %v6995 = vadd.f32 %v6994, %v6932
  %v6996 = vadd.f32 %v6995, %v6933
  %v6997 = vadd.f32 %v6996, %v6934
  %v6998 = vadd.f32 %v6997, %v6935
  %v6999 = vadd.f32 %v6998, %v6936
  %v7000 = vadd.f32 %v6999, %v6937
  %v7001 = vadd.f32 %v7000, %v6938
  %v7002 = vadd.f32 %v7001, %v6939
  %v7003 = vadd.f32 %v7002, %v6940
  %v7004 = vadd.f32 %v7003, %v6941
  %v7005 = vadd.f32 %v7004, %v6942
  %v7006 = vadd.f32 %v7005, %v6943
  %v7007 = vadd.f32 %v7006, %v6944
  %v7008 = vadd.f32 %v7007, %v6945
  %v7009 = vadd.f32 %v7008, %v6946
  %v7010 = vadd.f32 %v7009, %v6947
  %v7011 = vadd.f32 %v7010, %v6948
  %v7012 = vadd.f32 %v7011, %v6949
  %v7013 = vadd.f32 %v7012, %v6950
  %v7014 = vadd.f32 %v7013, %v6951
  %v7015 = vadd.f32 %v7014, %v6952
  %v7016 = vadd.f32 %v7015, %v6953
  %v7017 = vadd.f32 %v7016, %v6954
  %v7018 = vadd.f32 %v7017, %v6955
  %v7019 = vadd.f32 %v7018, %v6956
  %v7020 = vadd.f32 %v7019, %v6957
  %v7021 = vadd.f32 %v7020, %v6958
  %v7022 = vadd.f32 %v7021, %v6959
  %v7023 = vadd.f32 %v7022, %v6960
  %v7024 = vadd.f32 %v7023, %v6961
  %v7025 = vadd.f32 %v7024, %v6962
  %v7026 = vadd.f32 %v7025, %v6963
  %v7027 = vadd.f32 %v7026, %v6964
  %v7028 = vadd.f32 %v7027, %v6965
  %v7029 = vadd.f32 %v7028, %v6966
  %v7030 = vadd.f32 %v7029, %v6967
  %v7031 = vadd.f32 %v7030, %v6968
  %v7032 = vadd.f32 %v7031, %v6969
  %v7033 = vadd.f32 %v7032, %v6970
  %v7034 = vadd.f32 %v7033, %v6971
  %v7035 = vadd.f32 %v7034, %v6972
  %v7036 = vadd.f32 %v7035, %v6973
  %v7037 = vadd.f32 %v7036, %v6974
  %v7038 = vadd.f32 %v7037, %v6975
  %v7039 = vadd.f32 %v7038, %v6976
  %v7040 = vrot.slane %v7039, 4
  %v7041 = vadd.f32 %v7039, %v7040
  %v7042 = vrot.slane %v7041, 2
  %v7043 = vadd.f32 %v7041, %v7042
  %v7044 = vrot.slane %v7043, 1
  %v7045 = vadd.f32 %v7043, %v7044
  %v7046 = vmul.f32 %v7045, 0.001953125
  %v7047 = vmul.f32 %v6912, %v6912
  %v7048 = vsub.f32 %v7046, %v7047
  %v7049 = vadd.f32 %v7048, 1e-05
  %v7050 = vrsqrt.pop %v7049
  %v7051 = vmul.f32 %v7050, %v7049
  %v7052 = vmul.f32 %v7051, %v7050
  %v7053 = vmul.f32 0.5, %v7052
  %v7054 = vsub.f32 1.5, %v7053
  %v7055 = vmul.f32 %v7050, %v7054
  %vm7056 = vweird.f32 %v7049
  %vm7057 = vweird.f32 %v7050
  %vm7058 = vmor %vm7056, %vm7057
  %v7059 = vsel %vm7058, %v7050, %v7055
  %v7060 = vmul.f32 %v7059, %v6841
  %v7061 = vmul.f32 %v6912, %v7060
  %v7062 = vsub.f32 %v6842, %v7061
  %v7063 = vperm.slane %v7060, 0
  %v7064 = vmul.f32 %v6777, %v7063
  %v7065 = vmul.f32 %v6778, %v7063
  %v7066 = vmul.f32 %v6779, %v7063
  %v7067 = vmul.f32 %v6780, %v7063
  %v7068 = vmul.f32 %v6781, %v7063
  %v7069 = vmul.f32 %v6782, %v7063
  %v7070 = vmul.f32 %v6783, %v7063
  %v7071 = vmul.f32 %v6784, %v7063
  %v7072 = vmul.f32 %v6785, %v7063
  %v7073 = vmul.f32 %v6786, %v7063
  %v7074 = vmul.f32 %v6787, %v7063
  %v7075 = vmul.f32 %v6788, %v7063
  %v7076 = vmul.f32 %v6789, %v7063
  %v7077 = vmul.f32 %v6790, %v7063
  %v7078 = vmul.f32 %v6791, %v7063
  %v7079 = vmul.f32 %v6792, %v7063
  %v7080 = vmul.f32 %v6793, %v7063
  %v7081 = vmul.f32 %v6794, %v7063
  %v7082 = vmul.f32 %v6795, %v7063
  %v7083 = vmul.f32 %v6796, %v7063
  %v7084 = vmul.f32 %v6797, %v7063
  %v7085 = vmul.f32 %v6798, %v7063
  %v7086 = vmul.f32 %v6799, %v7063
  %v7087 = vmul.f32 %v6800, %v7063
  %v7088 = vmul.f32 %v6801, %v7063
  %v7089 = vmul.f32 %v6802, %v7063
  %v7090 = vmul.f32 %v6803, %v7063
  %v7091 = vmul.f32 %v6804, %v7063
  %v7092 = vmul.f32 %v6805, %v7063
  %v7093 = vmul.f32 %v6806, %v7063
  %v7094 = vmul.f32 %v6807, %v7063
  %v7095 = vmul.f32 %v6808, %v7063
  %v7096 = vmul.f32 %v6809, %v7063
  %v7097 = vmul.f32 %v6810, %v7063
  %v7098 = vmul.f32 %v6811, %v7063
  %v7099 = vmul.f32 %v6812, %v7063
  %v7100 = vmul.f32 %v6813, %v7063
  %v7101 = vmul.f32 %v6814, %v7063
  %v7102 = vmul.f32 %v6815, %v7063
  %v7103 = vmul.f32 %v6816, %v7063
  %v7104 = vmul.f32 %v6817, %v7063
  %v7105 = vmul.f32 %v6818, %v7063
  %v7106 = vmul.f32 %v6819, %v7063
  %v7107 = vmul.f32 %v6820, %v7063
  %v7108 = vmul.f32 %v6821, %v7063
  %v7109 = vmul.f32 %v6822, %v7063
  %v7110 = vmul.f32 %v6823, %v7063
  %v7111 = vmul.f32 %v6824, %v7063
  %v7112 = vmul.f32 %v6825, %v7063
  %v7113 = vmul.f32 %v6826, %v7063
  %v7114 = vmul.f32 %v6827, %v7063
  %v7115 = vmul.f32 %v6828, %v7063
  %v7116 = vmul.f32 %v6829, %v7063
  %v7117 = vmul.f32 %v6830, %v7063
  %v7118 = vmul.f32 %v6831, %v7063
  %v7119 = vmul.f32 %v6832, %v7063
  %v7120 = vmul.f32 %v6833, %v7063
  %v7121 = vmul.f32 %v6834, %v7063
  %v7122 = vmul.f32 %v6835, %v7063
  %v7123 = vmul.f32 %v6836, %v7063
  %v7124 = vmul.f32 %v6837, %v7063
  %v7125 = vmul.f32 %v6838, %v7063
  %v7126 = vmul.f32 %v6839, %v7063
  %v7127 = vmul.f32 %v6840, %v7063
  %v7129 = vperm.slane %v7062, 0
  %v7131 = vadd.f32 %v7064, %v7129
  %v7132 = vadd.f32 %v7065, %v7129
  %v7133 = vadd.f32 %v7066, %v7129
  %v7134 = vadd.f32 %v7067, %v7129
  %v7135 = vadd.f32 %v7068, %v7129
  %v7136 = vadd.f32 %v7069, %v7129
  %v7137 = vadd.f32 %v7070, %v7129
  %v7138 = vadd.f32 %v7071, %v7129
  %v7139 = vadd.f32 %v7072, %v7129
  %v7140 = vadd.f32 %v7073, %v7129
  %v7141 = vadd.f32 %v7074, %v7129
  %v7142 = vadd.f32 %v7075, %v7129
  %v7143 = vadd.f32 %v7076, %v7129
  %v7144 = vadd.f32 %v7077, %v7129
  %v7145 = vadd.f32 %v7078, %v7129
  %v7146 = vadd.f32 %v7079, %v7129
  %v7147 = vadd.f32 %v7080, %v7129
  %v7148 = vadd.f32 %v7081, %v7129
  %v7149 = vadd.f32 %v7082, %v7129
  %v7150 = vadd.f32 %v7083, %v7129
  %v7151 = vadd.f32 %v7084, %v7129
  %v7152 = vadd.f32 %v7085, %v7129
  %v7153 = vadd.f32 %v7086, %v7129
  %v7154 = vadd.f32 %v7087, %v7129
  %v7155 = vadd.f32 %v7088, %v7129
  %v7156 = vadd.f32 %v7089, %v7129
  %v7157 = vadd.f32 %v7090, %v7129
  %v7158 = vadd.f32 %v7091, %v7129
  %v7159 = vadd.f32 %v7092, %v7129
  %v7160 = vadd.f32 %v7093, %v7129
  %v7161 = vadd.f32 %v7094, %v7129
  %v7162 = vadd.f32 %v7095, %v7129
  %v7163 = vadd.f32 %v7096, %v7129
  %v7164 = vadd.f32 %v7097, %v7129
  %v7165 = vadd.f32 %v7098, %v7129
  %v7166 = vadd.f32 %v7099, %v7129
  %v7167 = vadd.f32 %v7100, %v7129
  %v7168 = vadd.f32 %v7101, %v7129
  %v7169 = vadd.f32 %v7102, %v7129
  %v7170 = vadd.f32 %v7103, %v7129
  %v7171 = vadd.f32 %v7104, %v7129
  %v7172 = vadd.f32 %v7105, %v7129
  %v7173 = vadd.f32 %v7106, %v7129
  %v7174 = vadd.f32 %v7107, %v7129
  %v7175 = vadd.f32 %v7108, %v7129
  %v7176 = vadd.f32 %v7109, %v7129
  %v7177 = vadd.f32 %v7110, %v7129
  %v7178 = vadd.f32 %v7111, %v7129
  %v7179 = vadd.f32 %v7112, %v7129
  %v7180 = vadd.f32 %v7113, %v7129
  %v7181 = vadd.f32 %v7114, %v7129
  %v7182 = vadd.f32 %v7115, %v7129
  %v7183 = vadd.f32 %v7116, %v7129
  %v7184 = vadd.f32 %v7117, %v7129
  %v7185 = vadd.f32 %v7118, %v7129
  %v7186 = vadd.f32 %v7119, %v7129
  %v7187 = vadd.f32 %v7120, %v7129
  %v7188 = vadd.f32 %v7121, %v7129
  %v7189 = vadd.f32 %v7122, %v7129
  %v7190 = vadd.f32 %v7123, %v7129
  %v7191 = vadd.f32 %v7124, %v7129
  %v7192 = vadd.f32 %v7125, %v7129
  %v7193 = vadd.f32 %v7126, %v7129
  %v7194 = vadd.f32 %v7127, %v7129
  %v7195 = vld [vmem:[%s0] sm:$0xff]
  %v7196 = vld [vmem:[%s0 + $0x8] sm:$0xff]
  %v7197 = vld [vmem:[%s0 + $0x10] sm:$0xff]
  %v7198 = vld [vmem:[%s0 + $0x18] sm:$0xff]
  %v7199 = vld [vmem:[%s0 + $0x20] sm:$0xff]
  %v7200 = vld [vmem:[%s0 + $0x28] sm:$0xff]
  %v7201 = vld [vmem:[%s0 + $0x30] sm:$0xff]
  %v7202 = vld [vmem:[%s0 + $0x38] sm:$0xff]
  %v7203 = vld [vmem:[%s0 + $0x40] sm:$0xff]
  %v7204 = vld [vmem:[%s0 + $0x48] sm:$0xff]
  %v7205 = vld [vmem:[%s0 + $0x50] sm:$0xff]
  %v7206 = vld [vmem:[%s0 + $0x58] sm:$0xff]
  %v7207 = vld [vmem:[%s0 + $0x60] sm:$0xff]
  %v7208 = vld [vmem:[%s0 + $0x68] sm:$0xff]
  %v7209 = vld [vmem:[%s0 + $0x70] sm:$0xff]
  %v7210 = vld [vmem:[%s0 + $0x78] sm:$0xff]
  %v7211 = vld [vmem:[%s0 + $0x80] sm:$0xff]
  %v7212 = vld [vmem:[%s0 + $0x88] sm:$0xff]
  %v7213 = vld [vmem:[%s0 + $0x90] sm:$0xff]
  %v7214 = vld [vmem:[%s0 + $0x98] sm:$0xff]
  %v7215 = vld [vmem:[%s0 + $0xa0] sm:$0xff]
  %v7216 = vld [vmem:[%s0 + $0xa8] sm:$0xff]
  %v7217 = vld [vmem:[%s0 + $0xb0] sm:$0xff]
  %v7218 = vld [vmem:[%s0 + $0xb8] sm:$0xff]
  %v7219 = vld [vmem:[%s0 + $0xc0] sm:$0xff]
  %v7220 = vld [vmem:[%s0 + $0xc8] sm:$0xff]
  %v7221 = vld [vmem:[%s0 + $0xd0] sm:$0xff]
  %v7222 = vld [vmem:[%s0 + $0xd8] sm:$0xff]
  %v7223 = vld [vmem:[%s0 + $0xe0] sm:$0xff]
  %v7224 = vld [vmem:[%s0 + $0xe8] sm:$0xff]
  %v7225 = vld [vmem:[%s0 + $0xf0] sm:$0xff]
  %v7226 = vld [vmem:[%s0 + $0xf8] sm:$0xff]
  %v7227 = vld [vmem:[%s0 + $0x100] sm:$0xff]
  %v7228 = vld [vmem:[%s0 + $0x108] sm:$0xff]
  %v7229 = vld [vmem:[%s0 + $0x110] sm:$0xff]
  %v7230 = vld [vmem:[%s0 + $0x118] sm:$0xff]
  %v7231 = vld [vmem:[%s0 + $0x120] sm:$0xff]
  %v7232 = vld [vmem:[%s0 + $0x128] sm:$0xff]
  %v7233 = vld [vmem:[%s0 + $0x130] sm:$0xff]
  %v7234 = vld [vmem:[%s0 + $0x138] sm:$0xff]
  %v7235 = vld [vmem:[%s0 + $0x140] sm:$0xff]
  %v7236 = vld [vmem:[%s0 + $0x148] sm:$0xff]
  %v7237 = vld [vmem:[%s0 + $0x150] sm:$0xff]
  %v7238 = vld [vmem:[%s0 + $0x158] sm:$0xff]
  %v7239 = vld [vmem:[%s0 + $0x160] sm:$0xff]
  %v7240 = vld [vmem:[%s0 + $0x168] sm:$0xff]
  %v7241 = vld [vmem:[%s0 + $0x170] sm:$0xff]
  %v7242 = vld [vmem:[%s0 + $0x178] sm:$0xff]
  %v7243 = vld [vmem:[%s0 + $0x180] sm:$0xff]
  %v7244 = vld [vmem:[%s0 + $0x188] sm:$0xff]
  %v7245 = vld [vmem:[%s0 + $0x190] sm:$0xff]
  %v7246 = vld [vmem:[%s0 + $0x198] sm:$0xff]
  %v7247 = vld [vmem:[%s0 + $0x1a0] sm:$0xff]
  %v7248 = vld [vmem:[%s0 + $0x1a8] sm:$0xff]
  %v7249 = vld [vmem:[%s0 + $0x1b0] sm:$0xff]
  %v7250 = vld [vmem:[%s0 + $0x1b8] sm:$0xff]
  %v7251 = vld [vmem:[%s0 + $0x1c0] sm:$0xff]
  %v7252 = vld [vmem:[%s0 + $0x1c8] sm:$0xff]
  %v7253 = vld [vmem:[%s0 + $0x1d0] sm:$0xff]
  %v7254 = vld [vmem:[%s0 + $0x1d8] sm:$0xff]
  %v7255 = vld [vmem:[%s0 + $0x1e0] sm:$0xff]
  %v7256 = vld [vmem:[%s0 + $0x1e8] sm:$0xff]
  %v7257 = vld [vmem:[%s0 + $0x1f0] sm:$0xff]
  %v7258 = vld [vmem:[%s0 + $0x1f8] sm:$0xff]
  %v7259 = vadd.f32 %v7131, %v7195
  %v7260 = vadd.f32 %v7132, %v7196
  %v7261 = vadd.f32 %v7133, %v7197
  %v7262 = vadd.f32 %v7134, %v7198
  %v7263 = vadd.f32 %v7135, %v7199
  %v7264 = vadd.f32 %v7136, %v7200
  %v7265 = vadd.f32 %v7137, %v7201
  %v7266 = vadd.f32 %v7138, %v7202
  %v7267 = vadd.f32 %v7139, %v7203
  %v7268 = vadd.f32 %v7140, %v7204
  %v7269 = vadd.f32 %v7141, %v7205
  %v7270 = vadd.f32 %v7142, %v7206
  %v7271 = vadd.f32 %v7143, %v7207
  %v7272 = vadd.f32 %v7144, %v7208
  %v7273 = vadd.f32 %v7145, %v7209
  %v7274 = vadd.f32 %v7146, %v7210
  %v7275 = vadd.f32 %v7147, %v7211
  %v7276 = vadd.f32 %v7148, %v7212
  %v7277 = vadd.f32 %v7149, %v7213
  %v7278 = vadd.f32 %v7150, %v7214
  %v7279 = vadd.f32 %v7151, %v7215
  %v7280 = vadd.f32 %v7152, %v7216
  %v7281 = vadd.f32 %v7153, %v7217
  %v7282 = vadd.f32 %v7154, %v7218
  %v7283 = vadd.f32 %v7155, %v7219
  %v7284 = vadd.f32 %v7156, %v7220
  %v7285 = vadd.f32 %v7157, %v7221
  %v7286 = vadd.f32 %v7158, %v7222
  %v7287 = vadd.f32 %v7159, %v7223
  %v7288 = vadd.f32 %v7160, %v7224
  %v7289 = vadd.f32 %v7161, %v7225
  %v7290 = vadd.f32 %v7162, %v7226
  %v7291 = vadd.f32 %v7163, %v7227
  %v7292 = vadd.f32 %v7164, %v7228
  %v7293 = vadd.f32 %v7165, %v7229
  %v7294 = vadd.f32 %v7166, %v7230
  %v7295 = vadd.f32 %v7167, %v7231
  %v7296 = vadd.f32 %v7168, %v7232
  %v7297 = vadd.f32 %v7169, %v7233
  %v7298 = vadd.f32 %v7170, %v7234
  %v7299 = vadd.f32 %v7171, %v7235
  %v7300 = vadd.f32 %v7172, %v7236
  %v7301 = vadd.f32 %v7173, %v7237
  %v7302 = vadd.f32 %v7174, %v7238
  %v7303 = vadd.f32 %v7175, %v7239
  %v7304 = vadd.f32 %v7176, %v7240
  %v7305 = vadd.f32 %v7177, %v7241
  %v7306 = vadd.f32 %v7178, %v7242
  %v7307 = vadd.f32 %v7179, %v7243
  %v7308 = vadd.f32 %v7180, %v7244
  %v7309 = vadd.f32 %v7181, %v7245
  %v7310 = vadd.f32 %v7182, %v7246
  %v7311 = vadd.f32 %v7183, %v7247
  %v7312 = vadd.f32 %v7184, %v7248
  %v7313 = vadd.f32 %v7185, %v7249
  %v7314 = vadd.f32 %v7186, %v7250
  %v7315 = vadd.f32 %v7187, %v7251
  %v7316 = vadd.f32 %v7188, %v7252
  %v7317 = vadd.f32 %v7189, %v7253
  %v7318 = vadd.f32 %v7190, %v7254
  %v7319 = vadd.f32 %v7191, %v7255
  %v7320 = vadd.f32 %v7192, %v7256
  %v7321 = vadd.f32 %v7193, %v7257
  %v7322 = vadd.f32 %v7194, %v7258
  %v7323 = vmax.f32 %v7259, 0.0
  %v7324 = vmax.f32 %v7260, 0.0
  %v7325 = vmax.f32 %v7261, 0.0
  %v7326 = vmax.f32 %v7262, 0.0
  %v7327 = vmax.f32 %v7263, 0.0
  %v7328 = vmax.f32 %v7264, 0.0
  %v7329 = vmax.f32 %v7265, 0.0
  %v7330 = vmax.f32 %v7266, 0.0
  %v7331 = vmax.f32 %v7267, 0.0
  %v7332 = vmax.f32 %v7268, 0.0
  %v7333 = vmax.f32 %v7269, 0.0
  %v7334 = vmax.f32 %v7270, 0.0
  %v7335 = vmax.f32 %v7271, 0.0
  %v7336 = vmax.f32 %v7272, 0.0
  %v7337 = vmax.f32 %v7273, 0.0
  %v7338 = vmax.f32 %v7274, 0.0
  %v7339 = vmax.f32 %v7275, 0.0
  %v7340 = vmax.f32 %v7276, 0.0
  %v7341 = vmax.f32 %v7277, 0.0
  %v7342 = vmax.f32 %v7278, 0.0
  %v7343 = vmax.f32 %v7279, 0.0
  %v7344 = vmax.f32 %v7280, 0.0
  %v7345 = vmax.f32 %v7281, 0.0
  %v7346 = vmax.f32 %v7282, 0.0
  %v7347 = vmax.f32 %v7283, 0.0
  %v7348 = vmax.f32 %v7284, 0.0
  %v7349 = vmax.f32 %v7285, 0.0
  %v7350 = vmax.f32 %v7286, 0.0
  %v7351 = vmax.f32 %v7287, 0.0
  %v7352 = vmax.f32 %v7288, 0.0
  %v7353 = vmax.f32 %v7289, 0.0
  %v7354 = vmax.f32 %v7290, 0.0
  %v7355 = vmax.f32 %v7291, 0.0
  %v7356 = vmax.f32 %v7292, 0.0
  %v7357 = vmax.f32 %v7293, 0.0
  %v7358 = vmax.f32 %v7294, 0.0
  %v7359 = vmax.f32 %v7295, 0.0
  %v7360 = vmax.f32 %v7296, 0.0
  %v7361 = vmax.f32 %v7297, 0.0
  %v7362 = vmax.f32 %v7298, 0.0
  %v7363 = vmax.f32 %v7299, 0.0
  %v7364 = vmax.f32 %v7300, 0.0
  %v7365 = vmax.f32 %v7301, 0.0
  %v7366 = vmax.f32 %v7302, 0.0
  %v7367 = vmax.f32 %v7303, 0.0
  %v7368 = vmax.f32 %v7304, 0.0
  %v7369 = vmax.f32 %v7305, 0.0
  %v7370 = vmax.f32 %v7306, 0.0
  %v7371 = vmax.f32 %v7307, 0.0
  %v7372 = vmax.f32 %v7308, 0.0
  %v7373 = vmax.f32 %v7309, 0.0
  %v7374 = vmax.f32 %v7310, 0.0
  %v7375 = vmax.f32 %v7311, 0.0
  %v7376 = vmax.f32 %v7312, 0.0
  %v7377 = vmax.f32 %v7313, 0.0
  %v7378 = vmax.f32 %v7314, 0.0
  %v7379 = vmax.f32 %v7315, 0.0
  %v7380 = vmax.f32 %v7316, 0.0
  %v7381 = vmax.f32 %v7317, 0.0
  %v7382 = vmax.f32 %v7318, 0.0
  %v7383 = vmax.f32 %v7319, 0.0
  %v7384 = vmax.f32 %v7320, 0.0
  %v7385 = vmax.f32 %v7321, 0.0
  %v7386 = vmax.f32 %v7322, 0.0
  %7387 = vst [vmem:[%s7] sm:$0xff] %v7323
  %7388 = vst [vmem:[%s7 + $0x8] sm:$0xff] %v7324
  %7389 = vst [vmem:[%s7 + $0x10] sm:$0xff] %v7325
  %7390 = vst [vmem:[%s7 + $0x18] sm:$0xff] %v7326
  %7391 = vst [vmem:[%s7 + $0x20] sm:$0xff] %v7327
  %7392 = vst [vmem:[%s7 + $0x28] sm:$0xff] %v7328
  %7393 = vst [vmem:[%s7 + $0x30] sm:$0xff] %v7329
  %7394 = vst [vmem:[%s7 + $0x38] sm:$0xff] %v7330
  %7395 = vst [vmem:[%s7 + $0x40] sm:$0xff] %v7331
  %7396 = vst [vmem:[%s7 + $0x48] sm:$0xff] %v7332
  %7397 = vst [vmem:[%s7 + $0x50] sm:$0xff] %v7333
  %7398 = vst [vmem:[%s7 + $0x58] sm:$0xff] %v7334
  %7399 = vst [vmem:[%s7 + $0x60] sm:$0xff] %v7335
  %7400 = vst [vmem:[%s7 + $0x68] sm:$0xff] %v7336
  %7401 = vst [vmem:[%s7 + $0x70] sm:$0xff] %v7337
  %7402 = vst [vmem:[%s7 + $0x78] sm:$0xff] %v7338
  %7403 = vst [vmem:[%s7 + $0x80] sm:$0xff] %v7339
  %7404 = vst [vmem:[%s7 + $0x88] sm:$0xff] %v7340
  %7405 = vst [vmem:[%s7 + $0x90] sm:$0xff] %v7341
  %7406 = vst [vmem:[%s7 + $0x98] sm:$0xff] %v7342
  %7407 = vst [vmem:[%s7 + $0xa0] sm:$0xff] %v7343
  %7408 = vst [vmem:[%s7 + $0xa8] sm:$0xff] %v7344
  %7409 = vst [vmem:[%s7 + $0xb0] sm:$0xff] %v7345
  %7410 = vst [vmem:[%s7 + $0xb8] sm:$0xff] %v7346
  %7411 = vst [vmem:[%s7 + $0xc0] sm:$0xff] %v7347
  %7412 = vst [vmem:[%s7 + $0xc8] sm:$0xff] %v7348
  %7413 = vst [vmem:[%s7 + $0xd0] sm:$0xff] %v7349
  %7414 = vst [vmem:[%s7 + $0xd8] sm:$0xff] %v7350
  %7415 = vst [vmem:[%s7 + $0xe0] sm:$0xff] %v7351
  %7416 = vst [vmem:[%s7 + $0xe8] sm:$0xff] %v7352
  %7417 = vst [vmem:[%s7 + $0xf0] sm:$0xff] %v7353
  %7418 = vst [vmem:[%s7 + $0xf8] sm:$0xff] %v7354
  %7419 = vst [vmem:[%s7 + $0x100] sm:$0xff] %v7355
  %7420 = vst [vmem:[%s7 + $0x108] sm:$0xff] %v7356
  %7421 = vst [vmem:[%s7 + $0x110] sm:$0xff] %v7357
  %7422 = vst [vmem:[%s7 + $0x118] sm:$0xff] %v7358
  %7423 = vst [vmem:[%s7 + $0x120] sm:$0xff] %v7359
  %7424 = vst [vmem:[%s7 + $0x128] sm:$0xff] %v7360
  %7425 = vst [vmem:[%s7 + $0x130] sm:$0xff] %v7361
  %7426 = vst [vmem:[%s7 + $0x138] sm:$0xff] %v7362
  %7427 = vst [vmem:[%s7 + $0x140] sm:$0xff] %v7363
  %7428 = vst [vmem:[%s7 + $0x148] sm:$0xff] %v7364
  %7429 = vst [vmem:[%s7 + $0x150] sm:$0xff] %v7365
  %7430 = vst [vmem:[%s7 + $0x158] sm:$0xff] %v7366
  %7431 = vst [vmem:[%s7 + $0x160] sm:$0xff] %v7367
  %7432 = vst [vmem:[%s7 + $0x168] sm:$0xff] %v7368
  %7433 = vst [vmem:[%s7 + $0x170] sm:$0xff] %v7369
  %7434 = vst [vmem:[%s7 + $0x178] sm:$0xff] %v7370
  %7435 = vst [vmem:[%s7 + $0x180] sm:$0xff] %v7371
  %7436 = vst [vmem:[%s7 + $0x188] sm:$0xff] %v7372
  %7437 = vst [vmem:[%s7 + $0x190] sm:$0xff] %v7373
  %7438 = vst [vmem:[%s7 + $0x198] sm:$0xff] %v7374
  %7439 = vst [vmem:[%s7 + $0x1a0] sm:$0xff] %v7375
  %7440 = vst [vmem:[%s7 + $0x1a8] sm:$0xff] %v7376
  %7441 = vst [vmem:[%s7 + $0x1b0] sm:$0xff] %v7377
  %7442 = vst [vmem:[%s7 + $0x1b8] sm:$0xff] %v7378
  %7443 = vst [vmem:[%s7 + $0x1c0] sm:$0xff] %v7379
  %7444 = vst [vmem:[%s7 + $0x1c8] sm:$0xff] %v7380
  %7445 = vst [vmem:[%s7 + $0x1d0] sm:$0xff] %v7381
  %7446 = vst [vmem:[%s7 + $0x1d8] sm:$0xff] %v7382
  %7447 = vst [vmem:[%s7 + $0x1e0] sm:$0xff] %v7383
  %7448 = vst [vmem:[%s7 + $0x1e8] sm:$0xff] %v7384
  %7449 = vst [vmem:[%s7 + $0x1f0] sm:$0xff] %v7385
  %7450 = vst [vmem:[%s7 + $0x1f8] sm:$0xff] %v7386
  // Predicated region
  $region30: #{residual_block.1} parent=0 // pred_check
    _
  $region31: #{residual_block.1} parent=0 // pred_check_branch
    %7452 = sbr.rel (0) target = $region33
  $region32: #{residual_block.1} parent=0 // pred_region
    _
  $region33: #{residual_block.1} parent=0 // pred_fallthru
    _
  // Predicated region
  $region34: #{residual_block.1} parent=0 // pred_check
    _
  $region35: #{residual_block.1} parent=0 // pred_check_branch
    %7454 = sbr.rel (0) target = $region37
  $region36: #{residual_block.1} parent=0 // pred_region
    _
  $region37: #{residual_block.1} parent=0 // pred_fallthru
    _

</llo_original>
